<compile_context>
chip_gen: v7x
topology: tpu7x:2x2x1
jax: 0.10.0
libtpu: 0.0.40
codegen_flags: <defaults>
</compile_context>

<pallas_src>
import functools

import jax
import jax.numpy as jnp
from jax import lax
from jax.experimental import pallas as pl
from jax.experimental.pallas import tpu as pltpu

POOL_WIN = 6
POOL_STRIDE = 4


# --------------------------------------------------------------------------
# Single fused kernel: conv1+pool1 -> conv2+pool2 -> MLP head
# --------------------------------------------------------------------------
def fused_net_kernel(xc_ref, xf_ref,
                     w1c_ref, b1c_ref, w2c_ref, b2c_ref,
                     w1m_ref, b1m_ref, w1f_ref, b1f_ref,
                     w2a_ref, w2b_ref, b2m_ref,
                     w3_ref, b3_ref, w4_ref, b4_ref, w5_ref, b5_ref,
                     o_ref,
                     y1_s, y2_s, p2_s):
    relu = lambda v: jnp.maximum(v, 0.0)
    dot = lambda a, b: jnp.dot(a, b, preferred_element_type=jnp.float32)

    N = xc_ref.shape[0]
    KW1 = w1c_ref.shape[0]
    KW2 = w2c_ref.shape[0]
    OW1, C1 = y1_s.shape
    OW2, C2 = y2_s.shape
    P1 = OW2 + KW2 - 1                 # conv2 input width (= pool1 output width)
    P2 = w1m_ref.shape[0]              # pool2 output width

    # ---- conv / pool stages (N is tiny & static -> unrolled per-sample) ----
    for n in range(N):
        x_n = xc_ref[n]                                    # (W, KH1*Cin)

        # conv1: KW1 matmuls with K = KH1*Cin (kernel height folded in packing)
        acc1 = dot(x_n[0:OW1, :], w1c_ref[0])
        for kw in range(1, KW1):
            acc1 = acc1 + dot(x_n[kw:kw + OW1, :], w1c_ref[kw])
        y1_s[...] = relu(acc1 + b1c_ref[...])              # (OW1, C1)

        # max-pool (1,6)/stride(1,4): max tree over 6 strided views, dense out
        p1 = y1_s[pl.ds(0, P1, stride=POOL_STRIDE), :]
        for j in range(1, POOL_WIN):
            p1 = jnp.maximum(p1, y1_s[pl.ds(j, P1, stride=POOL_STRIDE), :])

        # conv2 (kernel height 1): KW2 matmuls with K = C1
        acc2 = dot(p1[0:OW2, :], w2c_ref[0])
        for kw in range(1, KW2):
            acc2 = acc2 + dot(p1[kw:kw + OW2, :], w2c_ref[kw])
        y2_s[...] = relu(acc2 + b2c_ref[...])              # (OW2, C2)

        p2 = y2_s[pl.ds(0, P2, stride=POOL_STRIDE), :]
        for j in range(1, POOL_WIN):
            p2 = jnp.maximum(p2, y2_s[pl.ds(j, P2, stride=POOL_STRIDE), :])

        # stage pooled features for the batched MLP (dense (P2, C2) store)
        p2_s[n * P2:(n + 1) * P2, :] = p2

    # ---- MLP head on the whole batch (weights pre-transposed / packed) ----
    # h = xflat @ W_1.T + b_1, with PyTorch's NCHW flatten order absorbed into
    # the (P2, C2, 512) packing of W_1 -> no in-kernel flatten needed.
    h = dot(p2_s[pl.ds(0, N, stride=P2), :], w1m_ref[0])
    for w in range(1, P2):
        h = h + dot(p2_s[pl.ds(w, N, stride=P2), :], w1m_ref[w])
    h = relu(h + b1m_ref[...])

    # TODO(synk): nn.Dropout2d(p=0.5) is identity in eval mode; train-mode
    # channel dropout is intentionally not modelled here.
    hf = relu(dot(xf_ref[...], w1f_ref[...]) + b1f_ref[...])

    # F.linear(cat([h, hf], 1), W_2) == h @ W_2[:, :512].T + hf @ W_2[:, 512:].T
    h2 = relu(dot(h, w2a_ref[...]) + dot(hf, w2b_ref[...]) + b2m_ref[...])
    h3 = relu(dot(h2, w3_ref[...]) + b3_ref[...])
    h4 = relu(dot(h3, w4_ref[...]) + b4_ref[...])

    # final layer padded to a lane-dense (multiple of 128) width; wrapper slices
    o_ref[...] = dot(h4, w5_ref[...]) + b5_ref[...]


# --------------------------------------------------------------------------
# One-time parameter repacking (hoisted out of the per-call forward)
# --------------------------------------------------------------------------
def pack_params(p):
    c1w = p["conv1_w"]                       # (C1, Cin, KH1, KW1)  OIHW
    c2w = p["conv2_w"]                       # (C2, C1, 1,  KW2)
    C1, Cin, KH1, KW1 = c1w.shape
    C2, _, KH2, KW2 = c2w.shape
    assert KH2 == 1
    hsz = p["W_1"].shape[0]                  # 512
    d_flat = p["W_1"].shape[1]
    P2 = d_flat // C2
    num_output = p["W_5"].shape[0]
    out_pad = ((num_output + 127) // 128) * 128

    w5 = jnp.zeros((p["W_5"].shape[1], out_pad), jnp.float32)
    w5 = w5.at[:, :num_output].set(p["W_5"].T)
    b5 = jnp.zeros((1, out_pad), jnp.float32)
    b5 = b5.at[:, :num_output].set(p["b_5"][None, :])

    return dict(
        # conv1 weights: (KW1, KH1*Cin, C1) — kernel height folded into K
        w1c=jnp.transpose(c1w, (3, 2, 1, 0)).reshape(KW1, KH1 * Cin, C1),
        b1c=p["conv1_b"].reshape(1, C1),
        # conv2 weights: (KW2, C1, C2)
        w2c=jnp.transpose(c2w[:, :, 0, :], (2, 1, 0)),
        b2c=p["conv2_b"].reshape(1, C2),
        # W_1 packed as (P2, C2, 512): absorbs the torch NCHW flatten order
        # (flat index = c*P2 + w), so the kernel needs no flatten at all.
        w1m=jnp.transpose(p["W_1"].reshape(hsz, C2, P2), (2, 1, 0)),
        b1m=p["b_1"].reshape(1, hsz),
        w1f=p["W_1_full"].T,
        b1f=p["b_1_full"].reshape(1, hsz),
        # split W_2 so the concat([h, hf]) becomes two matmuls
        w2a=p["W_2"][:, :hsz].T,
        w2b=p["W_2"][:, hsz:].T,
        b2m=p["b_2"].reshape(1, -1),
        w3=p["W_3"].T, b3=p["b_3"].reshape(1, -1),
        w4=p["W_4"].T, b4=p["b_4"].reshape(1, -1),
        w5=w5, b5=b5,
    )


_ARG_ORDER = ("w1c", "b1c", "w2c", "b2c", "w1m", "b1m", "w1f", "b1f",
              "w2a", "w2b", "b2m", "w3", "b3", "w4", "b4", "w5", "b5")


# --------------------------------------------------------------------------
# Forward: one layout op on the input + ONE fused pallas_call
# --------------------------------------------------------------------------
@functools.partial(jax.jit, static_argnames=("num_output",))
def net_forward(x_full, x, pp, num_output):
    x = x.astype(jnp.float32)
    x_full = x_full.astype(jnp.float32)
    N, Cin, H, W = x.shape

    KW1 = pp["w1c"].shape[0]
    C1 = pp["w1c"].shape[2]
    KW2, _, C2 = pp["w2c"].shape
    P2 = pp["w1m"].shape[0]
    out_pad = pp["w5"].shape[1]

    assert pp["w1c"].shape[1] == H * Cin, "conv1 kernel height must equal input H"
    OW1 = W - KW1 + 1
    P1 = (OW1 - POOL_WIN) // POOL_STRIDE + 1
    OW2 = P1 - KW2 + 1
    assert (OW2 - POOL_WIN) // POOL_STRIDE + 1 == P2

    # Single per-call layout op: NCHW -> (N, W, H*Cin), folding the conv1
    # kernel height (== H) into the contraction dim.
    xc = jnp.transpose(x, (0, 3, 2, 1)).reshape(N, W, H * Cin)

    out_padded = pl.pallas_call(
        fused_net_kernel,
        out_shape=jax.ShapeDtypeStruct((N, out_pad), jnp.float32),
        scratch_shapes=[
            pltpu.VMEM((OW1, C1), jnp.float32),      # conv1+relu output
            pltpu.VMEM((OW2, C2), jnp.float32),      # conv2+relu output
            pltpu.VMEM((N * P2, C2), jnp.float32),   # pooled conv features
        ],
    )(xc, x_full, *(pp[k] for k in _ARG_ORDER))
    return out_padded[:, :num_output]


# --------------------------------------------------------------------------
# Deterministic parameter init (kaiming-normal-like; synthetic, no checkpoint)
# --------------------------------------------------------------------------
def init_params(key, num_output, d_full, d_flat, cin):
    ks = jax.random.split(key, 8)

    def kaiming(k, shape, fan_in):
        return (jnp.sqrt(2.0 / fan_in) * jax.random.normal(k, shape)).astype(jnp.float32)

    p = {}
    p["conv1_w"] = kaiming(ks[0], (64, cin, 2, 10), cin * 2 * 10)   # OIHW
    p["conv1_b"] = jnp.full((64,), 0.1, jnp.float32)
    p["conv2_w"] = kaiming(ks[1], (128, 64, 1, 5), 64 * 1 * 5)
    p["conv2_b"] = jnp.full((128,), -0.05, jnp.float32)
    p["W_1_full"] = kaiming(ks[2], (512, d_full), d_full)
    p["b_1_full"] = jnp.zeros((512,), jnp.float32)
    p["W_1"] = kaiming(ks[3], (512, d_flat), d_flat)
    p["b_1"] = jnp.zeros((512,), jnp.float32)
    p["W_2"] = kaiming(ks[4], (256, 512 + 512), 1024)
    p["b_2"] = jnp.zeros((256,), jnp.float32)
    p["W_3"] = kaiming(ks[5], (128, 256), 256)
    p["b_3"] = jnp.zeros((128,), jnp.float32)
    p["W_4"] = kaiming(ks[6], (64, 128), 128)
    p["b_4"] = jnp.zeros((64,), jnp.float32)
    p["W_5"] = kaiming(ks[7], (num_output, 64), 64)
    p["b_5"] = jnp.zeros((num_output,), jnp.float32)
    return p


# --------------------------------------------------------------------------
# Pure-JAX reference (correctness check only; consumes the raw torch layout)
# --------------------------------------------------------------------------
def reference_forward(x_full, x, p):
    relu = lambda v: jnp.maximum(v, 0.0)
    dn = ("NCHW", "OIHW", "NCHW")
    y = lax.conv_general_dilated(x, p["conv1_w"], (1, 1), "VALID", dimension_numbers=dn)
    y = relu(y + p["conv1_b"][None, :, None, None])
    y = lax.reduce_window(y, -jnp.inf, lax.max, (1, 1, 1, 6), (1, 1, 1, 4), "VALID")
    y = lax.conv_general_dilated(y, p["conv2_w"], (1, 1), "VALID", dimension_numbers=dn)
    y = relu(y + p["conv2_b"][None, :, None, None])
    y = lax.reduce_window(y, -jnp.inf, lax.max, (1, 1, 1, 6), (1, 1, 1, 4), "VALID")
    y = y.reshape(y.shape[0], -1)
    h = relu(y @ p["W_1"].T + p["b_1"])
    hf = relu(x_full @ p["W_1_full"].T + p["b_1_full"])
    h2 = relu(jnp.concatenate([h, hf], axis=1) @ p["W_2"].T + p["b_2"])
    h3 = relu(h2 @ p["W_3"].T + p["b_3"])
    h4 = relu(h3 @ p["W_4"].T + p["b_4"])
    return h4 @ p["W_5"].T + p["b_5"]


if __name__ == "__main__":
    # Small shapes consistent with the module:
    #   len(shifts) = len(range(150, 721, 30)) = 20 input channels, kernel (2,10)
    #   needs H >= 2, W >= 10.  x_full's 25000 features scaled down to 2048.
    N, CIN, H, W = 2, 20, 2, 77
    D_FULL = 2048
    NUM_OUTPUT = 10

    OW1 = W - 10 + 1                                 # 68
    P1 = (OW1 - POOL_WIN) // POOL_STRIDE + 1         # 16
    OW2 = P1 - 5 + 1                                 # 12
    P2 = (OW2 - POOL_WIN) // POOL_STRIDE + 1         # 2
    D_FLAT = 128 * 1 * P2                            # 256 (stands in for 199680)

    key = jax.random.PRNGKey(0)
    kx, kf, kp = jax.random.split(key, 3)
    x = jax.random.normal(kx, (N, CIN, H, W), jnp.float32)
    x_full = jax.random.normal(kf, (N, D_FULL), jnp.float32)

    params = init_params(kp, NUM_OUTPUT, D_FULL, D_FLAT, CIN)
    packed = pack_params(params)                     # one-time preprocessing

    out = jax.block_until_ready(net_forward(x_full, x, packed, num_output=NUM_OUTPUT))
    ref = jax.block_until_ready(reference_forward(x_full, x, params))

    assert out.shape == (N, NUM_OUTPUT), out.shape
    assert jnp.allclose(out, ref, rtol=1e-3, atol=1e-2), (out, ref)
    print("KERNEL_OK")
</pallas_src>

<mosaic_0001>
module attributes {stable_mosaic.version = 11 : i64} {
  func.func @fused_net_kernel(%arg0: memref<2x77x40xf32, #tpu.memory_space<vmem>>, %arg1: memref<2x2048xf32, #tpu.memory_space<vmem>>, %arg2: memref<10x40x64xf32, #tpu.memory_space<vmem>>, %arg3: memref<1x64xf32, #tpu.memory_space<vmem>>, %arg4: memref<5x64x128xf32, #tpu.memory_space<vmem>>, %arg5: memref<1x128xf32, #tpu.memory_space<vmem>>, %arg6: memref<2x128x512xf32, #tpu.memory_space<vmem>>, %arg7: memref<1x512xf32, #tpu.memory_space<vmem>>, %arg8: memref<2048x512xf32, #tpu.memory_space<vmem>>, %arg9: memref<1x512xf32, #tpu.memory_space<vmem>>, %arg10: memref<512x256xf32, #tpu.memory_space<vmem>>, %arg11: memref<512x256xf32, #tpu.memory_space<vmem>>, %arg12: memref<1x256xf32, #tpu.memory_space<vmem>>, %arg13: memref<256x128xf32, #tpu.memory_space<vmem>>, %arg14: memref<1x128xf32, #tpu.memory_space<vmem>>, %arg15: memref<128x64xf32, #tpu.memory_space<vmem>>, %arg16: memref<1x64xf32, #tpu.memory_space<vmem>>, %arg17: memref<64x128xf32, #tpu.memory_space<vmem>>, %arg18: memref<1x128xf32, #tpu.memory_space<vmem>>, %arg19: memref<2x128xf32, #tpu.memory_space<vmem>>, %arg20: memref<68x64xf32, #tpu.memory_space<vmem>>, %arg21: memref<12x128xf32, #tpu.memory_space<vmem>>, %arg22: memref<4x128xf32, #tpu.memory_space<vmem>>) attributes {dimension_semantics = [], scalar_prefetch = 0 : i64, scratch_operands = 3 : i64, tpu.core_type = #tpu.core_type<tc>} {
    %c0 = arith.constant 0 : index
    %c0_0 = arith.constant 0 : index
    %c0_1 = arith.constant 0 : index
    %0 = vector.load %arg0[%c0, %c0_0, %c0_1] : memref<2x77x40xf32, #tpu.memory_space<vmem>>, vector<1x77x40xf32>
    %1 = vector.shape_cast %0 : vector<1x77x40xf32> to vector<77x40xf32>
    %2 = vector.extract_strided_slice %1 {offsets = [0, 0], sizes = [68, 40], strides = [1, 1]} : vector<77x40xf32> to vector<68x40xf32>
    %c0_2 = arith.constant 0 : index
    %c0_3 = arith.constant 0 : index
    %c0_4 = arith.constant 0 : index
    %3 = vector.load %arg2[%c0_2, %c0_3, %c0_4] : memref<10x40x64xf32, #tpu.memory_space<vmem>>, vector<1x40x64xf32>
    %4 = vector.shape_cast %3 : vector<1x40x64xf32> to vector<40x64xf32>
    %cst = arith.constant dense<0.000000e+00> : vector<68x64xf32>
    %5 = tpu.matmul %2, %4, %cst {dimension_numbers = #tpu.dot_dimension_numbers<[1], [0], [0], [1], [0, 0, 1, 1], [], []>} : vector<68x40xf32>, vector<40x64xf32>, vector<68x64xf32> -> vector<68x64xf32>
    %6 = vector.extract_strided_slice %1 {offsets = [1, 0], sizes = [68, 40], strides = [1, 1]} : vector<77x40xf32> to vector<68x40xf32>
    %c1 = arith.constant 1 : index
    %c0_5 = arith.constant 0 : index
    %c0_6 = arith.constant 0 : index
    %7 = vector.load %arg2[%c1, %c0_5, %c0_6] : memref<10x40x64xf32, #tpu.memory_space<vmem>>, vector<1x40x64xf32>
    %8 = vector.shape_cast %7 : vector<1x40x64xf32> to vector<40x64xf32>
    %cst_7 = arith.constant dense<0.000000e+00> : vector<68x64xf32>
    %9 = tpu.matmul %6, %8, %cst_7 {dimension_numbers = #tpu.dot_dimension_numbers<[1], [0], [0], [1], [0, 0, 1, 1], [], []>} : vector<68x40xf32>, vector<40x64xf32>, vector<68x64xf32> -> vector<68x64xf32>
    %10 = arith.addf %5, %9 : vector<68x64xf32>
    %11 = vector.extract_strided_slice %1 {offsets = [2, 0], sizes = [68, 40], strides = [1, 1]} : vector<77x40xf32> to vector<68x40xf32>
    %c2 = arith.constant 2 : index
    %c0_8 = arith.constant 0 : index
    %c0_9 = arith.constant 0 : index
    %12 = vector.load %arg2[%c2, %c0_8, %c0_9] : memref<10x40x64xf32, #tpu.memory_space<vmem>>, vector<1x40x64xf32>
    %13 = vector.shape_cast %12 : vector<1x40x64xf32> to vector<40x64xf32>
    %cst_10 = arith.constant dense<0.000000e+00> : vector<68x64xf32>
    %14 = tpu.matmul %11, %13, %cst_10 {dimension_numbers = #tpu.dot_dimension_numbers<[1], [0], [0], [1], [0, 0, 1, 1], [], []>} : vector<68x40xf32>, vector<40x64xf32>, vector<68x64xf32> -> vector<68x64xf32>
    %15 = arith.addf %10, %14 : vector<68x64xf32>
    %16 = vector.extract_strided_slice %1 {offsets = [3, 0], sizes = [68, 40], strides = [1, 1]} : vector<77x40xf32> to vector<68x40xf32>
    %c3 = arith.constant 3 : index
    %c0_11 = arith.constant 0 : index
    %c0_12 = arith.constant 0 : index
    %17 = vector.load %arg2[%c3, %c0_11, %c0_12] : memref<10x40x64xf32, #tpu.memory_space<vmem>>, vector<1x40x64xf32>
    %18 = vector.shape_cast %17 : vector<1x40x64xf32> to vector<40x64xf32>
    %cst_13 = arith.constant dense<0.000000e+00> : vector<68x64xf32>
    %19 = tpu.matmul %16, %18, %cst_13 {dimension_numbers = #tpu.dot_dimension_numbers<[1], [0], [0], [1], [0, 0, 1, 1], [], []>} : vector<68x40xf32>, vector<40x64xf32>, vector<68x64xf32> -> vector<68x64xf32>
    %20 = arith.addf %15, %19 : vector<68x64xf32>
    %21 = vector.extract_strided_slice %1 {offsets = [4, 0], sizes = [68, 40], strides = [1, 1]} : vector<77x40xf32> to vector<68x40xf32>
    %c4 = arith.constant 4 : index
    %c0_14 = arith.constant 0 : index
    %c0_15 = arith.constant 0 : index
    %22 = vector.load %arg2[%c4, %c0_14, %c0_15] : memref<10x40x64xf32, #tpu.memory_space<vmem>>, vector<1x40x64xf32>
    %23 = vector.shape_cast %22 : vector<1x40x64xf32> to vector<40x64xf32>
    %cst_16 = arith.constant dense<0.000000e+00> : vector<68x64xf32>
    %24 = tpu.matmul %21, %23, %cst_16 {dimension_numbers = #tpu.dot_dimension_numbers<[1], [0], [0], [1], [0, 0, 1, 1], [], []>} : vector<68x40xf32>, vector<40x64xf32>, vector<68x64xf32> -> vector<68x64xf32>
    %25 = arith.addf %20, %24 : vector<68x64xf32>
    %26 = vector.extract_strided_slice %1 {offsets = [5, 0], sizes = [68, 40], strides = [1, 1]} : vector<77x40xf32> to vector<68x40xf32>
    %c5 = arith.constant 5 : index
    %c0_17 = arith.constant 0 : index
    %c0_18 = arith.constant 0 : index
    %27 = vector.load %arg2[%c5, %c0_17, %c0_18] : memref<10x40x64xf32, #tpu.memory_space<vmem>>, vector<1x40x64xf32>
    %28 = vector.shape_cast %27 : vector<1x40x64xf32> to vector<40x64xf32>
    %cst_19 = arith.constant dense<0.000000e+00> : vector<68x64xf32>
    %29 = tpu.matmul %26, %28, %cst_19 {dimension_numbers = #tpu.dot_dimension_numbers<[1], [0], [0], [1], [0, 0, 1, 1], [], []>} : vector<68x40xf32>, vector<40x64xf32>, vector<68x64xf32> -> vector<68x64xf32>
    %30 = arith.addf %25, %29 : vector<68x64xf32>
    %31 = vector.extract_strided_slice %1 {offsets = [6, 0], sizes = [68, 40], strides = [1, 1]} : vector<77x40xf32> to vector<68x40xf32>
    %c6 = arith.constant 6 : index
    %c0_20 = arith.constant 0 : index
    %c0_21 = arith.constant 0 : index
    %32 = vector.load %arg2[%c6, %c0_20, %c0_21] : memref<10x40x64xf32, #tpu.memory_space<vmem>>, vector<1x40x64xf32>
    %33 = vector.shape_cast %32 : vector<1x40x64xf32> to vector<40x64xf32>
    %cst_22 = arith.constant dense<0.000000e+00> : vector<68x64xf32>
    %34 = tpu.matmul %31, %33, %cst_22 {dimension_numbers = #tpu.dot_dimension_numbers<[1], [0], [0], [1], [0, 0, 1, 1], [], []>} : vector<68x40xf32>, vector<40x64xf32>, vector<68x64xf32> -> vector<68x64xf32>
    %35 = arith.addf %30, %34 : vector<68x64xf32>
    %36 = vector.extract_strided_slice %1 {offsets = [7, 0], sizes = [68, 40], strides = [1, 1]} : vector<77x40xf32> to vector<68x40xf32>
    %c7 = arith.constant 7 : index
    %c0_23 = arith.constant 0 : index
    %c0_24 = arith.constant 0 : index
    %37 = vector.load %arg2[%c7, %c0_23, %c0_24] : memref<10x40x64xf32, #tpu.memory_space<vmem>>, vector<1x40x64xf32>
    %38 = vector.shape_cast %37 : vector<1x40x64xf32> to vector<40x64xf32>
    %cst_25 = arith.constant dense<0.000000e+00> : vector<68x64xf32>
    %39 = tpu.matmul %36, %38, %cst_25 {dimension_numbers = #tpu.dot_dimension_numbers<[1], [0], [0], [1], [0, 0, 1, 1], [], []>} : vector<68x40xf32>, vector<40x64xf32>, vector<68x64xf32> -> vector<68x64xf32>
    %40 = arith.addf %35, %39 : vector<68x64xf32>
    %41 = vector.extract_strided_slice %1 {offsets = [8, 0], sizes = [68, 40], strides = [1, 1]} : vector<77x40xf32> to vector<68x40xf32>
    %c8 = arith.constant 8 : index
    %c0_26 = arith.constant 0 : index
    %c0_27 = arith.constant 0 : index
    %42 = vector.load %arg2[%c8, %c0_26, %c0_27] : memref<10x40x64xf32, #tpu.memory_space<vmem>>, vector<1x40x64xf32>
    %43 = vector.shape_cast %42 : vector<1x40x64xf32> to vector<40x64xf32>
    %cst_28 = arith.constant dense<0.000000e+00> : vector<68x64xf32>
    %44 = tpu.matmul %41, %43, %cst_28 {dimension_numbers = #tpu.dot_dimension_numbers<[1], [0], [0], [1], [0, 0, 1, 1], [], []>} : vector<68x40xf32>, vector<40x64xf32>, vector<68x64xf32> -> vector<68x64xf32>
    %45 = arith.addf %40, %44 : vector<68x64xf32>
    %46 = vector.extract_strided_slice %1 {offsets = [9, 0], sizes = [68, 40], strides = [1, 1]} : vector<77x40xf32> to vector<68x40xf32>
    %c9 = arith.constant 9 : index
    %c0_29 = arith.constant 0 : index
    %c0_30 = arith.constant 0 : index
    %47 = vector.load %arg2[%c9, %c0_29, %c0_30] : memref<10x40x64xf32, #tpu.memory_space<vmem>>, vector<1x40x64xf32>
    %48 = vector.shape_cast %47 : vector<1x40x64xf32> to vector<40x64xf32>
    %cst_31 = arith.constant dense<0.000000e+00> : vector<68x64xf32>
    %49 = tpu.matmul %46, %48, %cst_31 {dimension_numbers = #tpu.dot_dimension_numbers<[1], [0], [0], [1], [0, 0, 1, 1], [], []>} : vector<68x40xf32>, vector<40x64xf32>, vector<68x64xf32> -> vector<68x64xf32>
    %50 = arith.addf %45, %49 : vector<68x64xf32>
    %c0_32 = arith.constant 0 : index
    %c0_33 = arith.constant 0 : index
    %51 = vector.load %arg3[%c0_32, %c0_33] : memref<1x64xf32, #tpu.memory_space<vmem>>, vector<1x64xf32>
    %52 = vector.broadcast %51 : vector<1x64xf32> to vector<68x64xf32>
    %53 = arith.addf %50, %52 : vector<68x64xf32>
    %cst_34 = arith.constant 0.000000e+00 : f32
    %54 = vector.broadcast %cst_34 : f32 to vector<68x64xf32>
    %55 = arith.maximumf %53, %54 : vector<68x64xf32>
    %c0_35 = arith.constant 0 : index
    %c0_36 = arith.constant 0 : index
    %56 = vector.load %arg20[%c0_35, %c0_36] : memref<68x64xf32, #tpu.memory_space<vmem>>, vector<68x64xf32>
    tpu.vector_store %arg20[%c0_35, %c0_36], %55 {strides = array<i32>} : memref<68x64xf32, #tpu.memory_space<vmem>>, vector<68x64xf32>,
    %c0_37 = arith.constant 0 : index
    %c0_38 = arith.constant 0 : index
    %57 = tpu.strided_load %arg20[%c0_37, %c0_38] {strides = array<i32: 4, 1>} : memref<68x64xf32, #tpu.memory_space<vmem>>, vector<16x64xf32>
    %c1_39 = arith.constant 1 : index
    %c0_40 = arith.constant 0 : index
    %58 = tpu.strided_load %arg20[%c1_39, %c0_40] {strides = array<i32: 4, 1>} : memref<68x64xf32, #tpu.memory_space<vmem>>, vector<16x64xf32>
    %59 = arith.maximumf %57, %58 : vector<16x64xf32>
    %c2_41 = arith.constant 2 : index
    %c0_42 = arith.constant 0 : index
    %60 = tpu.strided_load %arg20[%c2_41, %c0_42] {strides = array<i32: 4, 1>} : memref<68x64xf32, #tpu.memory_space<vmem>>, vector<16x64xf32>
    %61 = arith.maximumf %59, %60 : vector<16x64xf32>
    %c3_43 = arith.constant 3 : index
    %c0_44 = arith.constant 0 : index
    %62 = tpu.strided_load %arg20[%c3_43, %c0_44] {strides = array<i32: 4, 1>} : memref<68x64xf32, #tpu.memory_space<vmem>>, vector<16x64xf32>
    %63 = arith.maximumf %61, %62 : vector<16x64xf32>
    %c4_45 = arith.constant 4 : index
    %c0_46 = arith.constant 0 : index
    %64 = tpu.strided_load %arg20[%c4_45, %c0_46] {strides = array<i32: 4, 1>} : memref<68x64xf32, #tpu.memory_space<vmem>>, vector<16x64xf32>
    %65 = arith.maximumf %63, %64 : vector<16x64xf32>
    %c5_47 = arith.constant 5 : index
    %c0_48 = arith.constant 0 : index
    %66 = tpu.strided_load %arg20[%c5_47, %c0_48] {strides = array<i32: 4, 1>} : memref<68x64xf32, #tpu.memory_space<vmem>>, vector<16x64xf32>
    %67 = arith.maximumf %65, %66 : vector<16x64xf32>
    %68 = vector.extract_strided_slice %67 {offsets = [0, 0], sizes = [12, 64], strides = [1, 1]} : vector<16x64xf32> to vector<12x64xf32>
    %c0_49 = arith.constant 0 : index
    %c0_50 = arith.constant 0 : index
    %c0_51 = arith.constant 0 : index
    %69 = vector.load %arg4[%c0_49, %c0_50, %c0_51] : memref<5x64x128xf32, #tpu.memory_space<vmem>>, vector<1x64x128xf32>
    %70 = vector.shape_cast %69 : vector<1x64x128xf32> to vector<64x128xf32>
    %cst_52 = arith.constant dense<0.000000e+00> : vector<12x128xf32>
    %71 = tpu.matmul %68, %70, %cst_52 {dimension_numbers = #tpu.dot_dimension_numbers<[1], [0], [0], [1], [0, 0, 1, 1], [], []>} : vector<12x64xf32>, vector<64x128xf32>, vector<12x128xf32> -> vector<12x128xf32>
    %72 = vector.extract_strided_slice %67 {offsets = [1, 0], sizes = [12, 64], strides = [1, 1]} : vector<16x64xf32> to vector<12x64xf32>
    %c1_53 = arith.constant 1 : index
    %c0_54 = arith.constant 0 : index
    %c0_55 = arith.constant 0 : index
    %73 = vector.load %arg4[%c1_53, %c0_54, %c0_55] : memref<5x64x128xf32, #tpu.memory_space<vmem>>, vector<1x64x128xf32>
    %74 = vector.shape_cast %73 : vector<1x64x128xf32> to vector<64x128xf32>
    %cst_56 = arith.constant dense<0.000000e+00> : vector<12x128xf32>
    %75 = tpu.matmul %72, %74, %cst_56 {dimension_numbers = #tpu.dot_dimension_numbers<[1], [0], [0], [1], [0, 0, 1, 1], [], []>} : vector<12x64xf32>, vector<64x128xf32>, vector<12x128xf32> -> vector<12x128xf32>
    %76 = arith.addf %71, %75 : vector<12x128xf32>
    %77 = vector.extract_strided_slice %67 {offsets = [2, 0], sizes = [12, 64], strides = [1, 1]} : vector<16x64xf32> to vector<12x64xf32>
    %c2_57 = arith.constant 2 : index
    %c0_58 = arith.constant 0 : index
    %c0_59 = arith.constant 0 : index
    %78 = vector.load %arg4[%c2_57, %c0_58, %c0_59] : memref<5x64x128xf32, #tpu.memory_space<vmem>>, vector<1x64x128xf32>
    %79 = vector.shape_cast %78 : vector<1x64x128xf32> to vector<64x128xf32>
    %cst_60 = arith.constant dense<0.000000e+00> : vector<12x128xf32>
    %80 = tpu.matmul %77, %79, %cst_60 {dimension_numbers = #tpu.dot_dimension_numbers<[1], [0], [0], [1], [0, 0, 1, 1], [], []>} : vector<12x64xf32>, vector<64x128xf32>, vector<12x128xf32> -> vector<12x128xf32>
    %81 = arith.addf %76, %80 : vector<12x128xf32>
    %82 = vector.extract_strided_slice %67 {offsets = [3, 0], sizes = [12, 64], strides = [1, 1]} : vector<16x64xf32> to vector<12x64xf32>
    %c3_61 = arith.constant 3 : index
    %c0_62 = arith.constant 0 : index
    %c0_63 = arith.constant 0 : index
    %83 = vector.load %arg4[%c3_61, %c0_62, %c0_63] : memref<5x64x128xf32, #tpu.memory_space<vmem>>, vector<1x64x128xf32>
    %84 = vector.shape_cast %83 : vector<1x64x128xf32> to vector<64x128xf32>
    %cst_64 = arith.constant dense<0.000000e+00> : vector<12x128xf32>
    %85 = tpu.matmul %82, %84, %cst_64 {dimension_numbers = #tpu.dot_dimension_numbers<[1], [0], [0], [1], [0, 0, 1, 1], [], []>} : vector<12x64xf32>, vector<64x128xf32>, vector<12x128xf32> -> vector<12x128xf32>
    %86 = arith.addf %81, %85 : vector<12x128xf32>
    %87 = vector.extract_strided_slice %67 {offsets = [4, 0], sizes = [12, 64], strides = [1, 1]} : vector<16x64xf32> to vector<12x64xf32>
    %c4_65 = arith.constant 4 : index
    %c0_66 = arith.constant 0 : index
    %c0_67 = arith.constant 0 : index
    %88 = vector.load %arg4[%c4_65, %c0_66, %c0_67] : memref<5x64x128xf32, #tpu.memory_space<vmem>>, vector<1x64x128xf32>
    %89 = vector.shape_cast %88 : vector<1x64x128xf32> to vector<64x128xf32>
    %cst_68 = arith.constant dense<0.000000e+00> : vector<12x128xf32>
    %90 = tpu.matmul %87, %89, %cst_68 {dimension_numbers = #tpu.dot_dimension_numbers<[1], [0], [0], [1], [0, 0, 1, 1], [], []>} : vector<12x64xf32>, vector<64x128xf32>, vector<12x128xf32> -> vector<12x128xf32>
    %91 = arith.addf %86, %90 : vector<12x128xf32>
    %c0_69 = arith.constant 0 : index
    %c0_70 = arith.constant 0 : index
    %92 = vector.load %arg5[%c0_69, %c0_70] : memref<1x128xf32, #tpu.memory_space<vmem>>, vector<1x128xf32>
    %93 = vector.broadcast %92 : vector<1x128xf32> to vector<12x128xf32>
    %94 = arith.addf %91, %93 : vector<12x128xf32>
    %cst_71 = arith.constant 0.000000e+00 : f32
    %95 = vector.broadcast %cst_71 : f32 to vector<12x128xf32>
    %96 = arith.maximumf %94, %95 : vector<12x128xf32>
    %c0_72 = arith.constant 0 : index
    %c0_73 = arith.constant 0 : index
    %97 = vector.load %arg21[%c0_72, %c0_73] : memref<12x128xf32, #tpu.memory_space<vmem>>, vector<12x128xf32>
    tpu.vector_store %arg21[%c0_72, %c0_73], %96 {strides = array<i32>} : memref<12x128xf32, #tpu.memory_space<vmem>>, vector<12x128xf32>,
    %c0_74 = arith.constant 0 : index
    %c0_75 = arith.constant 0 : index
    %98 = tpu.strided_load %arg21[%c0_74, %c0_75] {strides = array<i32: 4, 1>} : memref<12x128xf32, #tpu.memory_space<vmem>>, vector<2x128xf32>
    %c1_76 = arith.constant 1 : index
    %c0_77 = arith.constant 0 : index
    %99 = tpu.strided_load %arg21[%c1_76, %c0_77] {strides = array<i32: 4, 1>} : memref<12x128xf32, #tpu.memory_space<vmem>>, vector<2x128xf32>
    %100 = arith.maximumf %98, %99 : vector<2x128xf32>
    %c2_78 = arith.constant 2 : index
    %c0_79 = arith.constant 0 : index
    %101 = tpu.strided_load %arg21[%c2_78, %c0_79] {strides = array<i32: 4, 1>} : memref<12x128xf32, #tpu.memory_space<vmem>>, vector<2x128xf32>
    %102 = arith.maximumf %100, %101 : vector<2x128xf32>
    %c3_80 = arith.constant 3 : index
    %c0_81 = arith.constant 0 : index
    %103 = tpu.strided_load %arg21[%c3_80, %c0_81] {strides = array<i32: 4, 1>} : memref<12x128xf32, #tpu.memory_space<vmem>>, vector<2x128xf32>
    %104 = arith.maximumf %102, %103 : vector<2x128xf32>
    %c4_82 = arith.constant 4 : index
    %c0_83 = arith.constant 0 : index
    %105 = tpu.strided_load %arg21[%c4_82, %c0_83] {strides = array<i32: 4, 1>} : memref<12x128xf32, #tpu.memory_space<vmem>>, vector<2x128xf32>
    %106 = arith.maximumf %104, %105 : vector<2x128xf32>
    %c5_84 = arith.constant 5 : index
    %c0_85 = arith.constant 0 : index
    %107 = tpu.strided_load %arg21[%c5_84, %c0_85] {strides = array<i32: 4, 1>} : memref<12x128xf32, #tpu.memory_space<vmem>>, vector<2x128xf32>
    %108 = arith.maximumf %106, %107 : vector<2x128xf32>
    %c0_86 = arith.constant 0 : index
    %c0_87 = arith.constant 0 : index
    %109 = vector.load %arg22[%c0_86, %c0_87] : memref<4x128xf32, #tpu.memory_space<vmem>>, vector<2x128xf32>
    tpu.vector_store %arg22[%c0_86, %c0_87], %108 {strides = array<i32>} : memref<4x128xf32, #tpu.memory_space<vmem>>, vector<2x128xf32>,
    %c1_88 = arith.constant 1 : index
    %c0_89 = arith.constant 0 : index
    %c0_90 = arith.constant 0 : index
    %110 = vector.load %arg0[%c1_88, %c0_89, %c0_90] : memref<2x77x40xf32, #tpu.memory_space<vmem>>, vector<1x77x40xf32>
    %111 = vector.shape_cast %110 : vector<1x77x40xf32> to vector<77x40xf32>
    %112 = vector.extract_strided_slice %111 {offsets = [0, 0], sizes = [68, 40], strides = [1, 1]} : vector<77x40xf32> to vector<68x40xf32>
    %c0_91 = arith.constant 0 : index
    %c0_92 = arith.constant 0 : index
    %c0_93 = arith.constant 0 : index
    %113 = vector.load %arg2[%c0_91, %c0_92, %c0_93] : memref<10x40x64xf32, #tpu.memory_space<vmem>>, vector<1x40x64xf32>
    %114 = vector.shape_cast %113 : vector<1x40x64xf32> to vector<40x64xf32>
    %cst_94 = arith.constant dense<0.000000e+00> : vector<68x64xf32>
    %115 = tpu.matmul %112, %114, %cst_94 {dimension_numbers = #tpu.dot_dimension_numbers<[1], [0], [0], [1], [0, 0, 1, 1], [], []>} : vector<68x40xf32>, vector<40x64xf32>, vector<68x64xf32> -> vector<68x64xf32>
    %116 = vector.extract_strided_slice %111 {offsets = [1, 0], sizes = [68, 40], strides = [1, 1]} : vector<77x40xf32> to vector<68x40xf32>
    %c1_95 = arith.constant 1 : index
    %c0_96 = arith.constant 0 : index
    %c0_97 = arith.constant 0 : index
    %117 = vector.load %arg2[%c1_95, %c0_96, %c0_97] : memref<10x40x64xf32, #tpu.memory_space<vmem>>, vector<1x40x64xf32>
    %118 = vector.shape_cast %117 : vector<1x40x64xf32> to vector<40x64xf32>
    %cst_98 = arith.constant dense<0.000000e+00> : vector<68x64xf32>
    %119 = tpu.matmul %116, %118, %cst_98 {dimension_numbers = #tpu.dot_dimension_numbers<[1], [0], [0], [1], [0, 0, 1, 1], [], []>} : vector<68x40xf32>, vector<40x64xf32>, vector<68x64xf32> -> vector<68x64xf32>
    %120 = arith.addf %115, %119 : vector<68x64xf32>
    %121 = vector.extract_strided_slice %111 {offsets = [2, 0], sizes = [68, 40], strides = [1, 1]} : vector<77x40xf32> to vector<68x40xf32>
    %c2_99 = arith.constant 2 : index
    %c0_100 = arith.constant 0 : index
    %c0_101 = arith.constant 0 : index
    %122 = vector.load %arg2[%c2_99, %c0_100, %c0_101] : memref<10x40x64xf32, #tpu.memory_space<vmem>>, vector<1x40x64xf32>
    %123 = vector.shape_cast %122 : vector<1x40x64xf32> to vector<40x64xf32>
    %cst_102 = arith.constant dense<0.000000e+00> : vector<68x64xf32>
    %124 = tpu.matmul %121, %123, %cst_102 {dimension_numbers = #tpu.dot_dimension_numbers<[1], [0], [0], [1], [0, 0, 1, 1], [], []>} : vector<68x40xf32>, vector<40x64xf32>, vector<68x64xf32> -> vector<68x64xf32>
    %125 = arith.addf %120, %124 : vector<68x64xf32>
    %126 = vector.extract_strided_slice %111 {offsets = [3, 0], sizes = [68, 40], strides = [1, 1]} : vector<77x40xf32> to vector<68x40xf32>
    %c3_103 = arith.constant 3 : index
    %c0_104 = arith.constant 0 : index
    %c0_105 = arith.constant 0 : index
    %127 = vector.load %arg2[%c3_103, %c0_104, %c0_105] : memref<10x40x64xf32, #tpu.memory_space<vmem>>, vector<1x40x64xf32>
    %128 = vector.shape_cast %127 : vector<1x40x64xf32> to vector<40x64xf32>
    %cst_106 = arith.constant dense<0.000000e+00> : vector<68x64xf32>
    %129 = tpu.matmul %126, %128, %cst_106 {dimension_numbers = #tpu.dot_dimension_numbers<[1], [0], [0], [1], [0, 0, 1, 1], [], []>} : vector<68x40xf32>, vector<40x64xf32>, vector<68x64xf32> -> vector<68x64xf32>
    %130 = arith.addf %125, %129 : vector<68x64xf32>
    %131 = vector.extract_strided_slice %111 {offsets = [4, 0], sizes = [68, 40], strides = [1, 1]} : vector<77x40xf32> to vector<68x40xf32>
    %c4_107 = arith.constant 4 : index
    %c0_108 = arith.constant 0 : index
    %c0_109 = arith.constant 0 : index
    %132 = vector.load %arg2[%c4_107, %c0_108, %c0_109] : memref<10x40x64xf32, #tpu.memory_space<vmem>>, vector<1x40x64xf32>
    %133 = vector.shape_cast %132 : vector<1x40x64xf32> to vector<40x64xf32>
    %cst_110 = arith.constant dense<0.000000e+00> : vector<68x64xf32>
    %134 = tpu.matmul %131, %133, %cst_110 {dimension_numbers = #tpu.dot_dimension_numbers<[1], [0], [0], [1], [0, 0, 1, 1], [], []>} : vector<68x40xf32>, vector<40x64xf32>, vector<68x64xf32> -> vector<68x64xf32>
    %135 = arith.addf %130, %134 : vector<68x64xf32>
    %136 = vector.extract_strided_slice %111 {offsets = [5, 0], sizes = [68, 40], strides = [1, 1]} : vector<77x40xf32> to vector<68x40xf32>
    %c5_111 = arith.constant 5 : index
    %c0_112 = arith.constant 0 : index
    %c0_113 = arith.constant 0 : index
    %137 = vector.load %arg2[%c5_111, %c0_112, %c0_113] : memref<10x40x64xf32, #tpu.memory_space<vmem>>, vector<1x40x64xf32>
    %138 = vector.shape_cast %137 : vector<1x40x64xf32> to vector<40x64xf32>
    %cst_114 = arith.constant dense<0.000000e+00> : vector<68x64xf32>
    %139 = tpu.matmul %136, %138, %cst_114 {dimension_numbers = #tpu.dot_dimension_numbers<[1], [0], [0], [1], [0, 0, 1, 1], [], []>} : vector<68x40xf32>, vector<40x64xf32>, vector<68x64xf32> -> vector<68x64xf32>
    %140 = arith.addf %135, %139 : vector<68x64xf32>
    %141 = vector.extract_strided_slice %111 {offsets = [6, 0], sizes = [68, 40], strides = [1, 1]} : vector<77x40xf32> to vector<68x40xf32>
    %c6_115 = arith.constant 6 : index
    %c0_116 = arith.constant 0 : index
    %c0_117 = arith.constant 0 : index
    %142 = vector.load %arg2[%c6_115, %c0_116, %c0_117] : memref<10x40x64xf32, #tpu.memory_space<vmem>>, vector<1x40x64xf32>
    %143 = vector.shape_cast %142 : vector<1x40x64xf32> to vector<40x64xf32>
    %cst_118 = arith.constant dense<0.000000e+00> : vector<68x64xf32>
    %144 = tpu.matmul %141, %143, %cst_118 {dimension_numbers = #tpu.dot_dimension_numbers<[1], [0], [0], [1], [0, 0, 1, 1], [], []>} : vector<68x40xf32>, vector<40x64xf32>, vector<68x64xf32> -> vector<68x64xf32>
    %145 = arith.addf %140, %144 : vector<68x64xf32>
    %146 = vector.extract_strided_slice %111 {offsets = [7, 0], sizes = [68, 40], strides = [1, 1]} : vector<77x40xf32> to vector<68x40xf32>
    %c7_119 = arith.constant 7 : index
    %c0_120 = arith.constant 0 : index
    %c0_121 = arith.constant 0 : index
    %147 = vector.load %arg2[%c7_119, %c0_120, %c0_121] : memref<10x40x64xf32, #tpu.memory_space<vmem>>, vector<1x40x64xf32>
    %148 = vector.shape_cast %147 : vector<1x40x64xf32> to vector<40x64xf32>
    %cst_122 = arith.constant dense<0.000000e+00> : vector<68x64xf32>
    %149 = tpu.matmul %146, %148, %cst_122 {dimension_numbers = #tpu.dot_dimension_numbers<[1], [0], [0], [1], [0, 0, 1, 1], [], []>} : vector<68x40xf32>, vector<40x64xf32>, vector<68x64xf32> -> vector<68x64xf32>
    %150 = arith.addf %145, %149 : vector<68x64xf32>
    %151 = vector.extract_strided_slice %111 {offsets = [8, 0], sizes = [68, 40], strides = [1, 1]} : vector<77x40xf32> to vector<68x40xf32>
    %c8_123 = arith.constant 8 : index
    %c0_124 = arith.constant 0 : index
    %c0_125 = arith.constant 0 : index
    %152 = vector.load %arg2[%c8_123, %c0_124, %c0_125] : memref<10x40x64xf32, #tpu.memory_space<vmem>>, vector<1x40x64xf32>
    %153 = vector.shape_cast %152 : vector<1x40x64xf32> to vector<40x64xf32>
    %cst_126 = arith.constant dense<0.000000e+00> : vector<68x64xf32>
    %154 = tpu.matmul %151, %153, %cst_126 {dimension_numbers = #tpu.dot_dimension_numbers<[1], [0], [0], [1], [0, 0, 1, 1], [], []>} : vector<68x40xf32>, vector<40x64xf32>, vector<68x64xf32> -> vector<68x64xf32>
    %155 = arith.addf %150, %154 : vector<68x64xf32>
    %156 = vector.extract_strided_slice %111 {offsets = [9, 0], sizes = [68, 40], strides = [1, 1]} : vector<77x40xf32> to vector<68x40xf32>
    %c9_127 = arith.constant 9 : index
    %c0_128 = arith.constant 0 : index
    %c0_129 = arith.constant 0 : index
    %157 = vector.load %arg2[%c9_127, %c0_128, %c0_129] : memref<10x40x64xf32, #tpu.memory_space<vmem>>, vector<1x40x64xf32>
    %158 = vector.shape_cast %157 : vector<1x40x64xf32> to vector<40x64xf32>
    %cst_130 = arith.constant dense<0.000000e+00> : vector<68x64xf32>
    %159 = tpu.matmul %156, %158, %cst_130 {dimension_numbers = #tpu.dot_dimension_numbers<[1], [0], [0], [1], [0, 0, 1, 1], [], []>} : vector<68x40xf32>, vector<40x64xf32>, vector<68x64xf32> -> vector<68x64xf32>
    %160 = arith.addf %155, %159 : vector<68x64xf32>
    %c0_131 = arith.constant 0 : index
    %c0_132 = arith.constant 0 : index
    %161 = vector.load %arg3[%c0_131, %c0_132] : memref<1x64xf32, #tpu.memory_space<vmem>>, vector<1x64xf32>
    %162 = vector.broadcast %161 : vector<1x64xf32> to vector<68x64xf32>
    %163 = arith.addf %160, %162 : vector<68x64xf32>
    %cst_133 = arith.constant 0.000000e+00 : f32
    %164 = vector.broadcast %cst_133 : f32 to vector<68x64xf32>
    %165 = arith.maximumf %163, %164 : vector<68x64xf32>
    %c0_134 = arith.constant 0 : index
    %c0_135 = arith.constant 0 : index
    %166 = vector.load %arg20[%c0_134, %c0_135] : memref<68x64xf32, #tpu.memory_space<vmem>>, vector<68x64xf32>
    tpu.vector_store %arg20[%c0_134, %c0_135], %165 {strides = array<i32>} : memref<68x64xf32, #tpu.memory_space<vmem>>, vector<68x64xf32>,
    %c0_136 = arith.constant 0 : index
    %c0_137 = arith.constant 0 : index
    %167 = tpu.strided_load %arg20[%c0_136, %c0_137] {strides = array<i32: 4, 1>} : memref<68x64xf32, #tpu.memory_space<vmem>>, vector<16x64xf32>
    %c1_138 = arith.constant 1 : index
    %c0_139 = arith.constant 0 : index
    %168 = tpu.strided_load %arg20[%c1_138, %c0_139] {strides = array<i32: 4, 1>} : memref<68x64xf32, #tpu.memory_space<vmem>>, vector<16x64xf32>
    %169 = arith.maximumf %167, %168 : vector<16x64xf32>
    %c2_140 = arith.constant 2 : index
    %c0_141 = arith.constant 0 : index
    %170 = tpu.strided_load %arg20[%c2_140, %c0_141] {strides = array<i32: 4, 1>} : memref<68x64xf32, #tpu.memory_space<vmem>>, vector<16x64xf32>
    %171 = arith.maximumf %169, %170 : vector<16x64xf32>
    %c3_142 = arith.constant 3 : index
    %c0_143 = arith.constant 0 : index
    %172 = tpu.strided_load %arg20[%c3_142, %c0_143] {strides = array<i32: 4, 1>} : memref<68x64xf32, #tpu.memory_space<vmem>>, vector<16x64xf32>
    %173 = arith.maximumf %171, %172 : vector<16x64xf32>
    %c4_144 = arith.constant 4 : index
    %c0_145 = arith.constant 0 : index
    %174 = tpu.strided_load %arg20[%c4_144, %c0_145] {strides = array<i32: 4, 1>} : memref<68x64xf32, #tpu.memory_space<vmem>>, vector<16x64xf32>
    %175 = arith.maximumf %173, %174 : vector<16x64xf32>
    %c5_146 = arith.constant 5 : index
    %c0_147 = arith.constant 0 : index
    %176 = tpu.strided_load %arg20[%c5_146, %c0_147] {strides = array<i32: 4, 1>} : memref<68x64xf32, #tpu.memory_space<vmem>>, vector<16x64xf32>
    %177 = arith.maximumf %175, %176 : vector<16x64xf32>
    %178 = vector.extract_strided_slice %177 {offsets = [0, 0], sizes = [12, 64], strides = [1, 1]} : vector<16x64xf32> to vector<12x64xf32>
    %c0_148 = arith.constant 0 : index
    %c0_149 = arith.constant 0 : index
    %c0_150 = arith.constant 0 : index
    %179 = vector.load %arg4[%c0_148, %c0_149, %c0_150] : memref<5x64x128xf32, #tpu.memory_space<vmem>>, vector<1x64x128xf32>
    %180 = vector.shape_cast %179 : vector<1x64x128xf32> to vector<64x128xf32>
    %cst_151 = arith.constant dense<0.000000e+00> : vector<12x128xf32>
    %181 = tpu.matmul %178, %180, %cst_151 {dimension_numbers = #tpu.dot_dimension_numbers<[1], [0], [0], [1], [0, 0, 1, 1], [], []>} : vector<12x64xf32>, vector<64x128xf32>, vector<12x128xf32> -> vector<12x128xf32>
    %182 = vector.extract_strided_slice %177 {offsets = [1, 0], sizes = [12, 64], strides = [1, 1]} : vector<16x64xf32> to vector<12x64xf32>
    %c1_152 = arith.constant 1 : index
    %c0_153 = arith.constant 0 : index
    %c0_154 = arith.constant 0 : index
    %183 = vector.load %arg4[%c1_152, %c0_153, %c0_154] : memref<5x64x128xf32, #tpu.memory_space<vmem>>, vector<1x64x128xf32>
    %184 = vector.shape_cast %183 : vector<1x64x128xf32> to vector<64x128xf32>
    %cst_155 = arith.constant dense<0.000000e+00> : vector<12x128xf32>
    %185 = tpu.matmul %182, %184, %cst_155 {dimension_numbers = #tpu.dot_dimension_numbers<[1], [0], [0], [1], [0, 0, 1, 1], [], []>} : vector<12x64xf32>, vector<64x128xf32>, vector<12x128xf32> -> vector<12x128xf32>
    %186 = arith.addf %181, %185 : vector<12x128xf32>
    %187 = vector.extract_strided_slice %177 {offsets = [2, 0], sizes = [12, 64], strides = [1, 1]} : vector<16x64xf32> to vector<12x64xf32>
    %c2_156 = arith.constant 2 : index
    %c0_157 = arith.constant 0 : index
    %c0_158 = arith.constant 0 : index
    %188 = vector.load %arg4[%c2_156, %c0_157, %c0_158] : memref<5x64x128xf32, #tpu.memory_space<vmem>>, vector<1x64x128xf32>
    %189 = vector.shape_cast %188 : vector<1x64x128xf32> to vector<64x128xf32>
    %cst_159 = arith.constant dense<0.000000e+00> : vector<12x128xf32>
    %190 = tpu.matmul %187, %189, %cst_159 {dimension_numbers = #tpu.dot_dimension_numbers<[1], [0], [0], [1], [0, 0, 1, 1], [], []>} : vector<12x64xf32>, vector<64x128xf32>, vector<12x128xf32> -> vector<12x128xf32>
    %191 = arith.addf %186, %190 : vector<12x128xf32>
    %192 = vector.extract_strided_slice %177 {offsets = [3, 0], sizes = [12, 64], strides = [1, 1]} : vector<16x64xf32> to vector<12x64xf32>
    %c3_160 = arith.constant 3 : index
    %c0_161 = arith.constant 0 : index
    %c0_162 = arith.constant 0 : index
    %193 = vector.load %arg4[%c3_160, %c0_161, %c0_162] : memref<5x64x128xf32, #tpu.memory_space<vmem>>, vector<1x64x128xf32>
    %194 = vector.shape_cast %193 : vector<1x64x128xf32> to vector<64x128xf32>
    %cst_163 = arith.constant dense<0.000000e+00> : vector<12x128xf32>
    %195 = tpu.matmul %192, %194, %cst_163 {dimension_numbers = #tpu.dot_dimension_numbers<[1], [0], [0], [1], [0, 0, 1, 1], [], []>} : vector<12x64xf32>, vector<64x128xf32>, vector<12x128xf32> -> vector<12x128xf32>
    %196 = arith.addf %191, %195 : vector<12x128xf32>
    %197 = vector.extract_strided_slice %177 {offsets = [4, 0], sizes = [12, 64], strides = [1, 1]} : vector<16x64xf32> to vector<12x64xf32>
    %c4_164 = arith.constant 4 : index
    %c0_165 = arith.constant 0 : index
    %c0_166 = arith.constant 0 : index
    %198 = vector.load %arg4[%c4_164, %c0_165, %c0_166] : memref<5x64x128xf32, #tpu.memory_space<vmem>>, vector<1x64x128xf32>
    %199 = vector.shape_cast %198 : vector<1x64x128xf32> to vector<64x128xf32>
    %cst_167 = arith.constant dense<0.000000e+00> : vector<12x128xf32>
    %200 = tpu.matmul %197, %199, %cst_167 {dimension_numbers = #tpu.dot_dimension_numbers<[1], [0], [0], [1], [0, 0, 1, 1], [], []>} : vector<12x64xf32>, vector<64x128xf32>, vector<12x128xf32> -> vector<12x128xf32>
    %201 = arith.addf %196, %200 : vector<12x128xf32>
    %c0_168 = arith.constant 0 : index
    %c0_169 = arith.constant 0 : index
    %202 = vector.load %arg5[%c0_168, %c0_169] : memref<1x128xf32, #tpu.memory_space<vmem>>, vector<1x128xf32>
    %203 = vector.broadcast %202 : vector<1x128xf32> to vector<12x128xf32>
    %204 = arith.addf %201, %203 : vector<12x128xf32>
    %cst_170 = arith.constant 0.000000e+00 : f32
    %205 = vector.broadcast %cst_170 : f32 to vector<12x128xf32>
    %206 = arith.maximumf %204, %205 : vector<12x128xf32>
    %c0_171 = arith.constant 0 : index
    %c0_172 = arith.constant 0 : index
    %207 = vector.load %arg21[%c0_171, %c0_172] : memref<12x128xf32, #tpu.memory_space<vmem>>, vector<12x128xf32>
    tpu.vector_store %arg21[%c0_171, %c0_172], %206 {strides = array<i32>} : memref<12x128xf32, #tpu.memory_space<vmem>>, vector<12x128xf32>,
    %c0_173 = arith.constant 0 : index
    %c0_174 = arith.constant 0 : index
    %208 = tpu.strided_load %arg21[%c0_173, %c0_174] {strides = array<i32: 4, 1>} : memref<12x128xf32, #tpu.memory_space<vmem>>, vector<2x128xf32>
    %c1_175 = arith.constant 1 : index
    %c0_176 = arith.constant 0 : index
    %209 = tpu.strided_load %arg21[%c1_175, %c0_176] {strides = array<i32: 4, 1>} : memref<12x128xf32, #tpu.memory_space<vmem>>, vector<2x128xf32>
    %210 = arith.maximumf %208, %209 : vector<2x128xf32>
    %c2_177 = arith.constant 2 : index
    %c0_178 = arith.constant 0 : index
    %211 = tpu.strided_load %arg21[%c2_177, %c0_178] {strides = array<i32: 4, 1>} : memref<12x128xf32, #tpu.memory_space<vmem>>, vector<2x128xf32>
    %212 = arith.maximumf %210, %211 : vector<2x128xf32>
    %c3_179 = arith.constant 3 : index
    %c0_180 = arith.constant 0 : index
    %213 = tpu.strided_load %arg21[%c3_179, %c0_180] {strides = array<i32: 4, 1>} : memref<12x128xf32, #tpu.memory_space<vmem>>, vector<2x128xf32>
    %214 = arith.maximumf %212, %213 : vector<2x128xf32>
    %c4_181 = arith.constant 4 : index
    %c0_182 = arith.constant 0 : index
    %215 = tpu.strided_load %arg21[%c4_181, %c0_182] {strides = array<i32: 4, 1>} : memref<12x128xf32, #tpu.memory_space<vmem>>, vector<2x128xf32>
    %216 = arith.maximumf %214, %215 : vector<2x128xf32>
    %c5_183 = arith.constant 5 : index
    %c0_184 = arith.constant 0 : index
    %217 = tpu.strided_load %arg21[%c5_183, %c0_184] {strides = array<i32: 4, 1>} : memref<12x128xf32, #tpu.memory_space<vmem>>, vector<2x128xf32>
    %218 = arith.maximumf %216, %217 : vector<2x128xf32>
    %c2_185 = arith.constant 2 : index
    %c0_186 = arith.constant 0 : index
    %219 = vector.load %arg22[%c2_185, %c0_186] : memref<4x128xf32, #tpu.memory_space<vmem>>, vector<2x128xf32>
    tpu.vector_store %arg22[%c2_185, %c0_186], %218 {strides = array<i32>} : memref<4x128xf32, #tpu.memory_space<vmem>>, vector<2x128xf32>,
    %c0_187 = arith.constant 0 : index
    %c0_188 = arith.constant 0 : index
    %220 = tpu.strided_load %arg22[%c0_187, %c0_188] {strides = array<i32: 2, 1>} : memref<4x128xf32, #tpu.memory_space<vmem>>, vector<2x128xf32>
    %c0_189 = arith.constant 0 : index
    %c0_190 = arith.constant 0 : index
    %c0_191 = arith.constant 0 : index
    %221 = vector.load %arg6[%c0_189, %c0_190, %c0_191] : memref<2x128x512xf32, #tpu.memory_space<vmem>>, vector<1x128x512xf32>
    %222 = vector.shape_cast %221 : vector<1x128x512xf32> to vector<128x512xf32>
    %cst_192 = arith.constant dense<0.000000e+00> : vector<2x512xf32>
    %223 = tpu.matmul %220, %222, %cst_192 {dimension_numbers = #tpu.dot_dimension_numbers<[1], [0], [0], [1], [0, 0, 1, 1], [], []>} : vector<2x128xf32>, vector<128x512xf32>, vector<2x512xf32> -> vector<2x512xf32>
    %c1_193 = arith.constant 1 : index
    %c0_194 = arith.constant 0 : index
    %224 = tpu.strided_load %arg22[%c1_193, %c0_194] {strides = array<i32: 2, 1>} : memref<4x128xf32, #tpu.memory_space<vmem>>, vector<2x128xf32>
    %c1_195 = arith.constant 1 : index
    %c0_196 = arith.constant 0 : index
    %c0_197 = arith.constant 0 : index
    %225 = vector.load %arg6[%c1_195, %c0_196, %c0_197] : memref<2x128x512xf32, #tpu.memory_space<vmem>>, vector<1x128x512xf32>
    %226 = vector.shape_cast %225 : vector<1x128x512xf32> to vector<128x512xf32>
    %cst_198 = arith.constant dense<0.000000e+00> : vector<2x512xf32>
    %227 = tpu.matmul %224, %226, %cst_198 {dimension_numbers = #tpu.dot_dimension_numbers<[1], [0], [0], [1], [0, 0, 1, 1], [], []>} : vector<2x128xf32>, vector<128x512xf32>, vector<2x512xf32> -> vector<2x512xf32>
    %228 = arith.addf %223, %227 : vector<2x512xf32>
    %c0_199 = arith.constant 0 : index
    %c0_200 = arith.constant 0 : index
    %229 = vector.load %arg7[%c0_199, %c0_200] : memref<1x512xf32, #tpu.memory_space<vmem>>, vector<1x512xf32>
    %230 = vector.broadcast %229 : vector<1x512xf32> to vector<2x512xf32>
    %231 = arith.addf %228, %230 : vector<2x512xf32>
    %cst_201 = arith.constant 0.000000e+00 : f32
    %232 = vector.broadcast %cst_201 : f32 to vector<2x512xf32>
    %233 = arith.maximumf %231, %232 : vector<2x512xf32>
    %c0_202 = arith.constant 0 : index
    %c0_203 = arith.constant 0 : index
    %234 = vector.load %arg1[%c0_202, %c0_203] : memref<2x2048xf32, #tpu.memory_space<vmem>>, vector<2x2048xf32>
    %c0_204 = arith.constant 0 : index
    %c0_205 = arith.constant 0 : index
    %235 = vector.load %arg8[%c0_204, %c0_205] : memref<2048x512xf32, #tpu.memory_space<vmem>>, vector<2048x512xf32>
    %cst_206 = arith.constant dense<0.000000e+00> : vector<2x512xf32>
    %236 = tpu.matmul %234, %235, %cst_206 {dimension_numbers = #tpu.dot_dimension_numbers<[1], [0], [0], [1], [0, 0, 1, 1], [], []>} : vector<2x2048xf32>, vector<2048x512xf32>, vector<2x512xf32> -> vector<2x512xf32>
    %c0_207 = arith.constant 0 : index
    %c0_208 = arith.constant 0 : index
    %237 = vector.load %arg9[%c0_207, %c0_208] : memref<1x512xf32, #tpu.memory_space<vmem>>, vector<1x512xf32>
    %238 = vector.broadcast %237 : vector<1x512xf32> to vector<2x512xf32>
    %239 = arith.addf %236, %238 : vector<2x512xf32>
    %cst_209 = arith.constant 0.000000e+00 : f32
    %240 = vector.broadcast %cst_209 : f32 to vector<2x512xf32>
    %241 = arith.maximumf %239, %240 : vector<2x512xf32>
    %c0_210 = arith.constant 0 : index
    %c0_211 = arith.constant 0 : index
    %242 = vector.load %arg10[%c0_210, %c0_211] : memref<512x256xf32, #tpu.memory_space<vmem>>, vector<512x256xf32>
    %cst_212 = arith.constant dense<0.000000e+00> : vector<2x256xf32>
    %243 = tpu.matmul %233, %242, %cst_212 {dimension_numbers = #tpu.dot_dimension_numbers<[1], [0], [0], [1], [0, 0, 1, 1], [], []>} : vector<2x512xf32>, vector<512x256xf32>, vector<2x256xf32> -> vector<2x256xf32>
    %c0_213 = arith.constant 0 : index
    %c0_214 = arith.constant 0 : index
    %244 = vector.load %arg11[%c0_213, %c0_214] : memref<512x256xf32, #tpu.memory_space<vmem>>, vector<512x256xf32>
    %cst_215 = arith.constant dense<0.000000e+00> : vector<2x256xf32>
    %245 = tpu.matmul %241, %244, %cst_215 {dimension_numbers = #tpu.dot_dimension_numbers<[1], [0], [0], [1], [0, 0, 1, 1], [], []>} : vector<2x512xf32>, vector<512x256xf32>, vector<2x256xf32> -> vector<2x256xf32>
    %246 = arith.addf %243, %245 : vector<2x256xf32>
    %c0_216 = arith.constant 0 : index
    %c0_217 = arith.constant 0 : index
    %247 = vector.load %arg12[%c0_216, %c0_217] : memref<1x256xf32, #tpu.memory_space<vmem>>, vector<1x256xf32>
    %248 = vector.broadcast %247 : vector<1x256xf32> to vector<2x256xf32>
    %249 = arith.addf %246, %248 : vector<2x256xf32>
    %cst_218 = arith.constant 0.000000e+00 : f32
    %250 = vector.broadcast %cst_218 : f32 to vector<2x256xf32>
    %251 = arith.maximumf %249, %250 : vector<2x256xf32>
    %c0_219 = arith.constant 0 : index
    %c0_220 = arith.constant 0 : index
    %252 = vector.load %arg13[%c0_219, %c0_220] : memref<256x128xf32, #tpu.memory_space<vmem>>, vector<256x128xf32>
    %cst_221 = arith.constant dense<0.000000e+00> : vector<2x128xf32>
    %253 = tpu.matmul %251, %252, %cst_221 {dimension_numbers = #tpu.dot_dimension_numbers<[1], [0], [0], [1], [0, 0, 1, 1], [], []>} : vector<2x256xf32>, vector<256x128xf32>, vector<2x128xf32> -> vector<2x128xf32>
    %c0_222 = arith.constant 0 : index
    %c0_223 = arith.constant 0 : index
    %254 = vector.load %arg14[%c0_222, %c0_223] : memref<1x128xf32, #tpu.memory_space<vmem>>, vector<1x128xf32>
    %255 = vector.broadcast %254 : vector<1x128xf32> to vector<2x128xf32>
    %256 = arith.addf %253, %255 : vector<2x128xf32>
    %cst_224 = arith.constant 0.000000e+00 : f32
    %257 = vector.broadcast %cst_224 : f32 to vector<2x128xf32>
    %258 = arith.maximumf %256, %257 : vector<2x128xf32>
    %c0_225 = arith.constant 0 : index
    %c0_226 = arith.constant 0 : index
    %259 = vector.load %arg15[%c0_225, %c0_226] : memref<128x64xf32, #tpu.memory_space<vmem>>, vector<128x64xf32>
    %cst_227 = arith.constant dense<0.000000e+00> : vector<2x64xf32>
    %260 = tpu.matmul %258, %259, %cst_227 {dimension_numbers = #tpu.dot_dimension_numbers<[1], [0], [0], [1], [0, 0, 1, 1], [], []>} : vector<2x128xf32>, vector<128x64xf32>, vector<2x64xf32> -> vector<2x64xf32>
    %c0_228 = arith.constant 0 : index
    %c0_229 = arith.constant 0 : index
    %261 = vector.load %arg16[%c0_228, %c0_229] : memref<1x64xf32, #tpu.memory_space<vmem>>, vector<1x64xf32>
    %262 = vector.broadcast %261 : vector<1x64xf32> to vector<2x64xf32>
    %263 = arith.addf %260, %262 : vector<2x64xf32>
    %cst_230 = arith.constant 0.000000e+00 : f32
    %264 = vector.broadcast %cst_230 : f32 to vector<2x64xf32>
    %265 = arith.maximumf %263, %264 : vector<2x64xf32>
    %c0_231 = arith.constant 0 : index
    %c0_232 = arith.constant 0 : index
    %266 = vector.load %arg17[%c0_231, %c0_232] : memref<64x128xf32, #tpu.memory_space<vmem>>, vector<64x128xf32>
    %cst_233 = arith.constant dense<0.000000e+00> : vector<2x128xf32>
    %267 = tpu.matmul %265, %266, %cst_233 {dimension_numbers = #tpu.dot_dimension_numbers<[1], [0], [0], [1], [0, 0, 1, 1], [], []>} : vector<2x64xf32>, vector<64x128xf32>, vector<2x128xf32> -> vector<2x128xf32>
    %c0_234 = arith.constant 0 : index
    %c0_235 = arith.constant 0 : index
    %268 = vector.load %arg18[%c0_234, %c0_235] : memref<1x128xf32, #tpu.memory_space<vmem>>, vector<1x128xf32>
    %269 = vector.broadcast %268 : vector<1x128xf32> to vector<2x128xf32>
    %270 = arith.addf %267, %269 : vector<2x128xf32>
    %c0_236 = arith.constant 0 : index
    %c0_237 = arith.constant 0 : index
    %271 = vector.load %arg19[%c0_236, %c0_237] : memref<2x128xf32, #tpu.memory_space<vmem>>, vector<2x128xf32>
    tpu.vector_store %arg19[%c0_236, %c0_237], %270 {strides = array<i32>} : memref<2x128xf32, #tpu.memory_space<vmem>>, vector<2x128xf32>,
    return
  }
}

</mosaic_0001>

<llo_original>
// kernel: net_forward.1
$region0: #{net_forward.1}
  #allocation0 [shape = 'u32[]', space=smem, size = 0x4, offset = 0x4, fixed_abs, tag = 'smem constant byte address 0x4 - core index']
  #allocation1 [shape = 'u32[144,128]{1,0:T(1,128)}', space=vmem, size = 0x12000, scoped, tag = 'internal scratch']
  #allocation2 [shape = 'f32[68,64]{1,0:T(8,128)}', space=vmem, size = 0x9000, scoped, tag = 'scratch operand']
  #allocation3 [shape = 'f32[12,128]{1,0:T(8,128)}', space=vmem, size = 0x2000, scoped, tag = 'scratch operand']
  #allocation4 [shape = 'f32[4,128]{1,0:T(4,128)}', space=vmem, size = 0x800, scoped, tag = 'scratch operand']
  %s0 = inlined_call_operand.vmem [shape: f32[2,77,40], index: 0, kind: input, shape index: {}]
  %s1 = inlined_call_operand.hbm [shape: f32[2,2048], index: 1, kind: input, shape index: {}]
  %s2 = inlined_call_operand.hbm [shape: f32[10,40,64], index: 2, kind: input, shape index: {}]
  %s3 = inlined_call_operand.hbm [shape: f32[1,64], index: 3, kind: input, shape index: {}]
  %s4 = inlined_call_operand.hbm [shape: f32[5,64,128], index: 4, kind: input, shape index: {}]
  %s5 = inlined_call_operand.hbm [shape: f32[1,128], index: 5, kind: input, shape index: {}]
  %s6 = inlined_call_operand.hbm [shape: f32[2,128,512], index: 6, kind: input, shape index: {}]
  %s7 = inlined_call_operand.hbm [shape: f32[1,512], index: 7, kind: input, shape index: {}]
  %s8 = inlined_call_operand.hbm [shape: f32[2048,512], index: 8, kind: input, shape index: {}]
  %s9 = inlined_call_operand.hbm [shape: f32[1,512], index: 9, kind: input, shape index: {}]
  %s10 = inlined_call_operand.hbm [shape: f32[512,256], index: 10, kind: input, shape index: {}]
  %s11 = inlined_call_operand.hbm [shape: f32[512,256], index: 11, kind: input, shape index: {}]
  %s12 = inlined_call_operand.hbm [shape: f32[1,256], index: 12, kind: input, shape index: {}]
  %s13 = inlined_call_operand.hbm [shape: f32[256,128], index: 13, kind: input, shape index: {}]
  %s14 = inlined_call_operand.hbm [shape: f32[1,128], index: 14, kind: input, shape index: {}]
  %s15 = inlined_call_operand.vmem [shape: f32[128,64], index: 15, kind: input, shape index: {}]
  %s16 = inlined_call_operand.hbm [shape: f32[1,64], index: 16, kind: input, shape index: {}]
  %s17 = inlined_call_operand.hbm [shape: f32[64,128], index: 17, kind: input, shape index: {}]
  %s18 = inlined_call_operand.hbm [shape: f32[1,128], index: 18, kind: input, shape index: {}]
  %s19 = inlined_call_operand.hbm [shape: f32[2,128], index: 19, kind: output, shape index: {}]
  %s20 = sld [smem:[#allocation0]]
  $region154: #{net_forward.1} parent=0
    _
  %s22 = ssub.s32 1, %s20
  %s23 = scalar_select 0, %s22, %s20
  $region1: #{net_forward.1} parent=0
    #allocation5 [shape = 'u8[16384]{0}', space=vmem, size = 0x4000, scoped, tag = 'input window, operand 1, single buffered']
    #allocation6 [shape = 's32[1]{0}', space=sflag, size = 0x4, scoped, tag = 'scoped memory for net_forward.1']
    #allocation7 [shape = 's32[1]{0}', space=sflag, size = 0x4, scoped, tag = 'scoped memory for net_forward.1']
    #allocation8 [shape = 'u8[204800]{0}', space=vmem, size = 0x32000, scoped, tag = 'input window, operand 2, single buffered']
    #allocation9 [shape = 's32[1]{0}', space=sflag, size = 0x4, scoped, tag = 'scoped memory for net_forward.1']
    #allocation10 [shape = 'u8[512]{0}', space=vmem, size = 0x400, scoped, tag = 'input window, operand 3, single buffered']
    #allocation11 [shape = 'u8[163840]{0}', space=vmem, size = 0x28000, scoped, tag = 'input window, operand 4, single buffered']
    #allocation12 [shape = 's32[1]{0}', space=sflag, size = 0x4, scoped, tag = 'scoped memory for net_forward.1']
    #allocation13 [shape = 'u8[512]{0}', space=vmem, size = 0x400, scoped, tag = 'input window, operand 5, single buffered']
    #allocation14 [shape = 'u8[524288]{0}', space=vmem, size = 0x80000, scoped, tag = 'input window, operand 6, single buffered']
    #allocation15 [shape = 's32[1]{0}', space=sflag, size = 0x4, scoped, tag = 'scoped memory for net_forward.1']
    #allocation16 [shape = 'u8[2048]{0}', space=vmem, size = 0x800, scoped, tag = 'input window, operand 7, single buffered']
    #allocation17 [shape = 'u8[4194304]{0}', space=vmem, size = 0x400000, scoped, tag = 'input window, operand 8, single buffered']
    #allocation18 [shape = 's32[1]{0}', space=sflag, size = 0x4, scoped, tag = 'scoped memory for net_forward.1']
    #allocation19 [shape = 'u8[2048]{0}', space=vmem, size = 0x800, scoped, tag = 'input window, operand 9, single buffered']
    #allocation20 [shape = 'u8[524288]{0}', space=vmem, size = 0x80000, scoped, tag = 'input window, operand 10, single buffered']
    #allocation21 [shape = 's32[1]{0}', space=sflag, size = 0x4, scoped, tag = 'scoped memory for net_forward.1']
    #allocation22 [shape = 'u8[524288]{0}', space=vmem, size = 0x80000, scoped, tag = 'input window, operand 11, single buffered']
    #allocation23 [shape = 'u8[1024]{0}', space=vmem, size = 0x400, scoped, tag = 'input window, operand 12, single buffered']
    #allocation24 [shape = 's32[1]{0}', space=sflag, size = 0x4, scoped, tag = 'scoped memory for net_forward.1']
    #allocation25 [shape = 'u8[131072]{0}', space=vmem, size = 0x20000, scoped, tag = 'input window, operand 13, single buffered']
    #allocation26 [shape = 'u8[512]{0}', space=vmem, size = 0x400, scoped, tag = 'input window, operand 14, single buffered']
    #allocation27 [shape = 's32[1]{0}', space=sflag, size = 0x4, scoped, tag = 'scoped memory for net_forward.1']
    #allocation28 [shape = 'u8[512]{0}', space=vmem, size = 0x400, scoped, tag = 'input window, operand 16, single buffered']
    #allocation29 [shape = 'u8[32768]{0}', space=vmem, size = 0x8000, scoped, tag = 'input window, operand 17, single buffered']
    #allocation30 [shape = 's32[1]{0}', space=sflag, size = 0x4, scoped, tag = 'scoped memory for net_forward.1']
    #allocation31 [shape = 'u8[512]{0}', space=vmem, size = 0x400, scoped, tag = 'input window, operand 18, single buffered']
    #allocation32 [shape = 'u8[1024]{0}', space=vmem, size = 0x400, scoped, tag = 'output window, operand 0, single buffered']
    %24 = vsyncpa [#allocation6], 0
    %25 = vsyncpa [#allocation9], 0
    %26 = vsyncpa [#allocation12], 0
    %27 = vsyncpa [#allocation15], 0
    %28 = vsyncpa [#allocation18], 0
    %29 = vsyncpa [#allocation21], 0
    %30 = vsyncpa [#allocation24], 0
    %31 = vsyncpa [#allocation27], 0
    %32 = vsyncpa [#allocation30], 0
    %33 = vsyncpa [#allocation7], 0
    // Predicated region
    $region2: #{net_forward.1} parent=1 // pred_check
      _
    $region3: #{net_forward.1} parent=1 // pred_check_branch
      %35 = sbr.rel (0) target = $region5
    $region4: #{net_forward.1} parent=1 // pred_region
      _
    $region5: #{net_forward.1} parent=1 // pred_fallthru
      _
    // Predicated region
    $region6: #{net_forward.1} parent=1 // pred_check
      _
    $region7: #{net_forward.1} parent=1 // pred_check_branch
      %37 = sbr.rel (0) target = $region9
    $region8: #{net_forward.1} parent=1 // pred_region
      %s39 = ssub.s32 512, 512
      %40 = vsyncadd [#allocation6], %s39
      %s42 = sshll.u32 [#allocation5], 4
      %s43 = int_to_ptr.vmem [resolvable:$true] %s42
      %45 = dma.hbm_to_vmem [thread:$0]  %s1, 512, %s43, [#allocation6]
    $region9: #{net_forward.1} parent=1 // pred_fallthru
      _
    // Predicated region
    $region10: #{net_forward.1} parent=1 // pred_check
      _
    $region11: #{net_forward.1} parent=1 // pred_check_branch
      %47 = sbr.rel (0) target = $region13
    $region12: #{net_forward.1} parent=1 // pred_region
      %s49 = ssub.s32 6400, 6400
      %50 = vsyncadd [#allocation9], %s49
      %s51 = sshll.u32 [#allocation8], 4
      %s52 = int_to_ptr.vmem [resolvable:$true] %s51
      %57 = dma.hbm_to_vmem [thread:$0]  %s2, 6400, %s52, [#allocation9], 128, 128, 8
    $region13: #{net_forward.1} parent=1 // pred_fallthru
      _
    // Predicated region
    $region14: #{net_forward.1} parent=1 // pred_check
      _
    $region15: #{net_forward.1} parent=1 // pred_check_branch
      %59 = sbr.rel (0) target = $region17
    $region16: #{net_forward.1} parent=1 // pred_region
      %s61 = ssub.s32 16, 16
      %62 = vsyncadd [#allocation9], %s61
      %s64 = sshll.u32 [#allocation10], 4
      %s65 = int_to_ptr.vmem [resolvable:$true] %s64
      %67 = dma.hbm_to_vmem [thread:$0]  %s3, 16, %s65, [#allocation9]
    $region17: #{net_forward.1} parent=1 // pred_fallthru
      _
    // Predicated region
    $region18: #{net_forward.1} parent=1 // pred_check
      _
    $region19: #{net_forward.1} parent=1 // pred_check_branch
      %69 = sbr.rel (0) target = $region21
    $region20: #{net_forward.1} parent=1 // pred_region
      %s71 = ssub.s32 5120, 5120
      %72 = vsyncadd [#allocation12], %s71
      %s73 = sshll.u32 [#allocation11], 4
      %s74 = int_to_ptr.vmem [resolvable:$true] %s73
      %79 = dma.hbm_to_vmem [thread:$0]  %s4, 5120, %s74, [#allocation12], 128, 128, 8
    $region21: #{net_forward.1} parent=1 // pred_fallthru
      _
    // Predicated region
    $region22: #{net_forward.1} parent=1 // pred_check
      _
    $region23: #{net_forward.1} parent=1 // pred_check_branch
      %81 = sbr.rel (0) target = $region25
    $region24: #{net_forward.1} parent=1 // pred_region
      %s83 = ssub.s32 16, 16
      %84 = vsyncadd [#allocation12], %s83
      %s86 = sshll.u32 [#allocation13], 4
      %s87 = int_to_ptr.vmem [resolvable:$true] %s86
      %89 = dma.hbm_to_vmem [thread:$0]  %s5, 16, %s87, [#allocation12]
    $region25: #{net_forward.1} parent=1 // pred_fallthru
      _
    // Predicated region
    $region26: #{net_forward.1} parent=1 // pred_check
      _
    $region27: #{net_forward.1} parent=1 // pred_check_branch
      %91 = sbr.rel (0) target = $region29
    $region28: #{net_forward.1} parent=1 // pred_region
      %s93 = ssub.s32 16384, 16384
      %94 = vsyncadd [#allocation15], %s93
      %s95 = sshll.u32 [#allocation14], 4
      %s96 = int_to_ptr.vmem [resolvable:$true] %s95
      %101 = dma.hbm_to_vmem [thread:$0]  %s6, 16384, %s96, [#allocation15], 512, 512, 32
    $region29: #{net_forward.1} parent=1 // pred_fallthru
      _
    // Predicated region
    $region30: #{net_forward.1} parent=1 // pred_check
      _
    $region31: #{net_forward.1} parent=1 // pred_check_branch
      %103 = sbr.rel (0) target = $region33
    $region32: #{net_forward.1} parent=1 // pred_region
      %s105 = ssub.s32 64, 64
      %106 = vsyncadd [#allocation15], %s105
      %s108 = sshll.u32 [#allocation16], 4
      %s109 = int_to_ptr.vmem [resolvable:$true] %s108
      %111 = dma.hbm_to_vmem [thread:$0]  %s7, 64, %s109, [#allocation15]
    $region33: #{net_forward.1} parent=1 // pred_fallthru
      _
    // Predicated region
    $region34: #{net_forward.1} parent=1 // pred_check
      _
    $region35: #{net_forward.1} parent=1 // pred_check_branch
      %113 = sbr.rel (0) target = $region37
    $region36: #{net_forward.1} parent=1 // pred_region
      %s115 = ssub.s32 131072, 131072
      %116 = vsyncadd [#allocation18], %s115
      %s117 = sshll.u32 [#allocation17], 4
      %s118 = int_to_ptr.vmem [resolvable:$true] %s117
      %123 = dma.hbm_to_vmem [thread:$0]  %s8, 131072, %s118, [#allocation18], 512, 512, 32
    $region37: #{net_forward.1} parent=1 // pred_fallthru
      _
    // Predicated region
    $region38: #{net_forward.1} parent=1 // pred_check
      _
    $region39: #{net_forward.1} parent=1 // pred_check_branch
      %125 = sbr.rel (0) target = $region41
    $region40: #{net_forward.1} parent=1 // pred_region
      %s127 = ssub.s32 64, 64
      %128 = vsyncadd [#allocation18], %s127
      %s130 = sshll.u32 [#allocation19], 4
      %s131 = int_to_ptr.vmem [resolvable:$true] %s130
      %133 = dma.hbm_to_vmem [thread:$0]  %s9, 64, %s131, [#allocation18]
    $region41: #{net_forward.1} parent=1 // pred_fallthru
      _
    // Predicated region
    $region42: #{net_forward.1} parent=1 // pred_check
      _
    $region43: #{net_forward.1} parent=1 // pred_check_branch
      %135 = sbr.rel (0) target = $region45
    $region44: #{net_forward.1} parent=1 // pred_region
      %s137 = ssub.s32 16384, 16384
      %138 = vsyncadd [#allocation21], %s137
      %s139 = sshll.u32 [#allocation20], 4
      %s140 = int_to_ptr.vmem [resolvable:$true] %s139
      %145 = dma.hbm_to_vmem [thread:$0]  %s10, 16384, %s140, [#allocation21], 256, 256, 16
    $region45: #{net_forward.1} parent=1 // pred_fallthru
      _
    // Predicated region
    $region46: #{net_forward.1} parent=1 // pred_check
      _
    $region47: #{net_forward.1} parent=1 // pred_check_branch
      %147 = sbr.rel (0) target = $region49
    $region48: #{net_forward.1} parent=1 // pred_region
      %s149 = ssub.s32 16384, 16384
      %150 = vsyncadd [#allocation21], %s149
      %s151 = sshll.u32 [#allocation22], 4
      %s152 = int_to_ptr.vmem [resolvable:$true] %s151
      %157 = dma.hbm_to_vmem [thread:$0]  %s11, 16384, %s152, [#allocation21], 256, 256, 16
    $region49: #{net_forward.1} parent=1 // pred_fallthru
      _
    // Predicated region
    $region50: #{net_forward.1} parent=1 // pred_check
      _
    $region51: #{net_forward.1} parent=1 // pred_check_branch
      %159 = sbr.rel (0) target = $region53
    $region52: #{net_forward.1} parent=1 // pred_region
      %s161 = ssub.s32 32, 32
      %162 = vsyncadd [#allocation24], %s161
      %s164 = sshll.u32 [#allocation23], 4
      %s165 = int_to_ptr.vmem [resolvable:$true] %s164
      %167 = dma.hbm_to_vmem [thread:$0]  %s12, 32, %s165, [#allocation24]
    $region53: #{net_forward.1} parent=1 // pred_fallthru
      _
    // Predicated region
    $region54: #{net_forward.1} parent=1 // pred_check
      _
    $region55: #{net_forward.1} parent=1 // pred_check_branch
      %169 = sbr.rel (0) target = $region57
    $region56: #{net_forward.1} parent=1 // pred_region
      %s171 = ssub.s32 4096, 4096
      %172 = vsyncadd [#allocation24], %s171
      %s173 = sshll.u32 [#allocation25], 4
      %s174 = int_to_ptr.vmem [resolvable:$true] %s173
      %179 = dma.hbm_to_vmem [thread:$0]  %s13, 4096, %s174, [#allocation24], 128, 128, 8
    $region57: #{net_forward.1} parent=1 // pred_fallthru
      _
    // Predicated region
    $region58: #{net_forward.1} parent=1 // pred_check
      _
    $region59: #{net_forward.1} parent=1 // pred_check_branch
      %181 = sbr.rel (0) target = $region61
    $region60: #{net_forward.1} parent=1 // pred_region
      %s183 = ssub.s32 16, 16
      %184 = vsyncadd [#allocation27], %s183
      %s186 = sshll.u32 [#allocation26], 4
      %s187 = int_to_ptr.vmem [resolvable:$true] %s186
      %189 = dma.hbm_to_vmem [thread:$0]  %s14, 16, %s187, [#allocation27]
    $region61: #{net_forward.1} parent=1 // pred_fallthru
      _
    // Predicated region
    $region62: #{net_forward.1} parent=1 // pred_check
      _
    $region63: #{net_forward.1} parent=1 // pred_check_branch
      %191 = sbr.rel (0) target = $region65
    $region64: #{net_forward.1} parent=1 // pred_region
      _
    $region65: #{net_forward.1} parent=1 // pred_fallthru
      _
    // Predicated region
    $region66: #{net_forward.1} parent=1 // pred_check
      _
    $region67: #{net_forward.1} parent=1 // pred_check_branch
      %193 = sbr.rel (0) target = $region69
    $region68: #{net_forward.1} parent=1 // pred_region
      %s195 = ssub.s32 16, 16
      %196 = vsyncadd [#allocation27], %s195
      %s198 = sshll.u32 [#allocation28], 4
      %s199 = int_to_ptr.vmem [resolvable:$true] %s198
      %201 = dma.hbm_to_vmem [thread:$0]  %s16, 16, %s199, [#allocation27]
    $region69: #{net_forward.1} parent=1 // pred_fallthru
      _
    // Predicated region
    $region70: #{net_forward.1} parent=1 // pred_check
      _
    $region71: #{net_forward.1} parent=1 // pred_check_branch
      %203 = sbr.rel (0) target = $region73
    $region72: #{net_forward.1} parent=1 // pred_region
      %s205 = ssub.s32 1024, 1024
      %206 = vsyncadd [#allocation30], %s205
      %s207 = sshll.u32 [#allocation29], 4
      %s208 = int_to_ptr.vmem [resolvable:$true] %s207
      %213 = dma.hbm_to_vmem [thread:$0]  %s17, 1024, %s208, [#allocation30], 128, 128, 8
    $region73: #{net_forward.1} parent=1 // pred_fallthru
      _
    // Predicated region
    $region74: #{net_forward.1} parent=1 // pred_check
      _
    $region75: #{net_forward.1} parent=1 // pred_check_branch
      %215 = sbr.rel (0) target = $region77
    $region76: #{net_forward.1} parent=1 // pred_region
      %s217 = ssub.s32 16, 16
      %218 = vsyncadd [#allocation30], %s217
      %s220 = sshll.u32 [#allocation31], 4
      %s221 = int_to_ptr.vmem [resolvable:$true] %s220
      %223 = dma.hbm_to_vmem [thread:$0]  %s18, 16, %s221, [#allocation30]
    $region77: #{net_forward.1} parent=1 // pred_fallthru
      _
    // Predicated region
    $region78: #{net_forward.1} parent=1 // pred_check
      _
    $region79: #{net_forward.1} parent=1 // pred_check_branch
      %225 = sbr.rel (0) target = $region81
    $region80: #{net_forward.1} parent=1 // pred_region
      %226 = dma.done [#allocation6], 512
    $region81: #{net_forward.1} parent=1 // pred_fallthru
      _
    // Predicated region
    $region82: #{net_forward.1} parent=1 // pred_check
      _
    $region83: #{net_forward.1} parent=1 // pred_check_branch
      %228 = sbr.rel (0) target = $region85
    $region84: #{net_forward.1} parent=1 // pred_region
      %229 = dma.done [#allocation9], 6400
    $region85: #{net_forward.1} parent=1 // pred_fallthru
      _
    // Predicated region
    $region86: #{net_forward.1} parent=1 // pred_check
      _
    $region87: #{net_forward.1} parent=1 // pred_check_branch
      %231 = sbr.rel (0) target = $region89
    $region88: #{net_forward.1} parent=1 // pred_region
      %232 = dma.done [#allocation9], 16
    $region89: #{net_forward.1} parent=1 // pred_fallthru
      _
    // Predicated region
    $region90: #{net_forward.1} parent=1 // pred_check
      _
    $region91: #{net_forward.1} parent=1 // pred_check_branch
      %234 = sbr.rel (0) target = $region93
    $region92: #{net_forward.1} parent=1 // pred_region
      %235 = dma.done [#allocation12], 5120
    $region93: #{net_forward.1} parent=1 // pred_fallthru
      _
    // Predicated region
    $region94: #{net_forward.1} parent=1 // pred_check
      _
    $region95: #{net_forward.1} parent=1 // pred_check_branch
      %237 = sbr.rel (0) target = $region97
    $region96: #{net_forward.1} parent=1 // pred_region
      %238 = dma.done [#allocation12], 16
    $region97: #{net_forward.1} parent=1 // pred_fallthru
      _
    // Predicated region
    $region98: #{net_forward.1} parent=1 // pred_check
      _
    $region99: #{net_forward.1} parent=1 // pred_check_branch
      %240 = sbr.rel (0) target = $region101
    $region100: #{net_forward.1} parent=1 // pred_region
      %241 = dma.done [#allocation15], 16384
    $region101: #{net_forward.1} parent=1 // pred_fallthru
      _
    // Predicated region
    $region102: #{net_forward.1} parent=1 // pred_check
      _
    $region103: #{net_forward.1} parent=1 // pred_check_branch
      %243 = sbr.rel (0) target = $region105
    $region104: #{net_forward.1} parent=1 // pred_region
      %244 = dma.done [#allocation15], 64
    $region105: #{net_forward.1} parent=1 // pred_fallthru
      _
    // Predicated region
    $region106: #{net_forward.1} parent=1 // pred_check
      _
    $region107: #{net_forward.1} parent=1 // pred_check_branch
      %246 = sbr.rel (0) target = $region109
    $region108: #{net_forward.1} parent=1 // pred_region
      %247 = dma.done [#allocation18], 131072
    $region109: #{net_forward.1} parent=1 // pred_fallthru
      _
    // Predicated region
    $region110: #{net_forward.1} parent=1 // pred_check
      _
    $region111: #{net_forward.1} parent=1 // pred_check_branch
      %249 = sbr.rel (0) target = $region113
    $region112: #{net_forward.1} parent=1 // pred_region
      %250 = dma.done [#allocation18], 64
    $region113: #{net_forward.1} parent=1 // pred_fallthru
      _
    // Predicated region
    $region114: #{net_forward.1} parent=1 // pred_check
      _
    $region115: #{net_forward.1} parent=1 // pred_check_branch
      %252 = sbr.rel (0) target = $region117
    $region116: #{net_forward.1} parent=1 // pred_region
      %253 = dma.done [#allocation21], 16384
    $region117: #{net_forward.1} parent=1 // pred_fallthru
      _
    // Predicated region
    $region118: #{net_forward.1} parent=1 // pred_check
      _
    $region119: #{net_forward.1} parent=1 // pred_check_branch
      %255 = sbr.rel (0) target = $region121
    $region120: #{net_forward.1} parent=1 // pred_region
      %256 = dma.done [#allocation21], 16384
    $region121: #{net_forward.1} parent=1 // pred_fallthru
      _
    // Predicated region
    $region122: #{net_forward.1} parent=1 // pred_check
      _
    $region123: #{net_forward.1} parent=1 // pred_check_branch
      %258 = sbr.rel (0) target = $region125
    $region124: #{net_forward.1} parent=1 // pred_region
      %259 = dma.done [#allocation24], 32
    $region125: #{net_forward.1} parent=1 // pred_fallthru
      _
    // Predicated region
    $region126: #{net_forward.1} parent=1 // pred_check
      _
    $region127: #{net_forward.1} parent=1 // pred_check_branch
      %261 = sbr.rel (0) target = $region129
    $region128: #{net_forward.1} parent=1 // pred_region
      %262 = dma.done [#allocation24], 4096
    $region129: #{net_forward.1} parent=1 // pred_fallthru
      _
    // Predicated region
    $region130: #{net_forward.1} parent=1 // pred_check
      _
    $region131: #{net_forward.1} parent=1 // pred_check_branch
      %264 = sbr.rel (0) target = $region133
    $region132: #{net_forward.1} parent=1 // pred_region
      %265 = dma.done [#allocation27], 16
    $region133: #{net_forward.1} parent=1 // pred_fallthru
      _
    // Predicated region
    $region134: #{net_forward.1} parent=1 // pred_check
      _
    $region135: #{net_forward.1} parent=1 // pred_check_branch
      %267 = sbr.rel (0) target = $region137
    $region136: #{net_forward.1} parent=1 // pred_region
      %268 = dma.done [#allocation27], 16
    $region137: #{net_forward.1} parent=1 // pred_fallthru
      _
    // Predicated region
    $region138: #{net_forward.1} parent=1 // pred_check
      _
    $region139: #{net_forward.1} parent=1 // pred_check_branch
      %270 = sbr.rel (0) target = $region141
    $region140: #{net_forward.1} parent=1 // pred_region
      %271 = dma.done [#allocation30], 1024
    $region141: #{net_forward.1} parent=1 // pred_fallthru
      _
    // Predicated region
    $region142: #{net_forward.1} parent=1 // pred_check
      _
    $region143: #{net_forward.1} parent=1 // pred_check_branch
      %273 = sbr.rel (0) target = $region145
    $region144: #{net_forward.1} parent=1 // pred_region
      %274 = dma.done [#allocation30], 16
    $region145: #{net_forward.1} parent=1 // pred_fallthru
      _
    %v275 = vld [vmem:[%s0] sm:$0xff]
    %v276 = vld [vmem:[%s0 + $0x8] sm:$0xff]
    %v277 = vld [vmem:[%s0 + $0x10] sm:$0xff]
    %v278 = vld [vmem:[%s0 + $0x18] sm:$0xff]
    %v279 = vld [vmem:[%s0 + $0x20] sm:$0xff]
    %v280 = vld [vmem:[%s0 + $0x28] sm:$0xff]
    %v281 = vld [vmem:[%s0 + $0x30] sm:$0xff]
    %v282 = vld [vmem:[%s0 + $0x38] sm:$0xff]
    %v283 = vld [vmem:[%s0 + $0x40] sm:$0xff]
    %v284 = vld [vmem:[%s0 + $0x48] sm:$0x1f]
    %v285 = vld [vmem:[#allocation8] sm:$0xff]
    %v286 = vld [vmem:[#allocation8 + $0x8] sm:$0xff]
    %v287 = vld [vmem:[#allocation8 + $0x10] sm:$0xff]
    %v288 = vld [vmem:[#allocation8 + $0x18] sm:$0xff]
    %v289 = vld [vmem:[#allocation8 + $0x20] sm:$0xff]
    %s290 = scalar_lea.vmem [#allocation8], 40
    %v291 = vld [vmem:[%s290] sm:$0xff]
    %v292 = vld [vmem:[%s290 + $0x8] sm:$0xff]
    %v293 = vld [vmem:[%s290 + $0x10] sm:$0xff]
    %v294 = vld [vmem:[%s290 + $0x18] sm:$0xff]
    %v295 = vld [vmem:[%s290 + $0x20] sm:$0xff]
    %vm305 = vcmask 1046528
    %v306 = vrot.slane %v275, 1
    %v307 = vrot.slane %v276, 1
    %v308 = vsel %vm305, %v306, %v307
    %v309 = vrot.slane %v277, 1
    %v310 = vsel %vm305, %v307, %v309
    %v311 = vrot.slane %v278, 1
    %v312 = vsel %vm305, %v309, %v311
    %v313 = vrot.slane %v279, 1
    %v314 = vsel %vm305, %v311, %v313
    %v315 = vrot.slane %v280, 1
    %v316 = vsel %vm305, %v313, %v315
    %v317 = vrot.slane %v281, 1
    %v318 = vsel %vm305, %v315, %v317
    %v319 = vrot.slane %v282, 1
    %v320 = vsel %vm305, %v317, %v319
    %v321 = vrot.slane %v283, 1
    %v322 = vsel %vm305, %v319, %v321
    %vm323 = vcmask 326656
    %v324 = vsel %vm323, %v308, 0
    %v326 = vsel %vm323, %v310, 0
    %v328 = vsel %vm323, %v312, 0
    %v330 = vsel %vm323, %v314, 0
    %v332 = vsel %vm323, %v316, 0
    %v334 = vsel %vm323, %v318, 0
    %v336 = vsel %vm323, %v320, 0
    %v338 = vsel %vm323, %v322, 0
    %v340 = vsel %vm323, %v321, 0
    %342 = vmatprep.subr.mxu0 0.0
    %343 = vmatpush1.msra.mxu0 %v291
    %344 = vmatprep.subr.mxu0 0.0
    %345 = vmatpush1.msra.mxu0 %v292
    %346 = vmatprep.subr.mxu0 0.0
    %347 = vmatpush1.msra.mxu0 %v293
    %348 = vmatprep.subr.mxu0 0.0
    %349 = vmatpush1.msra.mxu0 %v294
    %350 = vmatprep.subr.mxu0 0.0
    %351 = vmatpush1.msra.mxu0 %v295
    %352 = vmatprep.subr.mxu0 0.0
    %353 = vmatpush1.msra.mxu0 0.0
    %354 = vmatprep.subr.mxu0 0.0
    %355 = vmatpush1.msra.mxu0 0.0
    %356 = vmatprep.subr.mxu0 0.0
    %357 = vmatpush1.msra.mxu0 0.0
    %358 = vmatprep.subr.mxu0 0.0
    %359 = vmatpush1.msra.mxu0 0.0
    %360 = vmatprep.subr.mxu0 0.0
    %361 = vmatpush1.msra.mxu0 0.0
    %362 = vmatprep.subr.mxu0 0.0
    %363 = vmatpush1.msra.mxu0 0.0
    %364 = vmatprep.subr.mxu0 0.0
    %365 = vmatpush1.msra.mxu0 0.0
    %366 = vmatprep.subr.mxu0 0.0
    %367 = vmatpush1.msra.mxu0 0.0
    %368 = vmatprep.subr.mxu0 0.0
    %369 = vmatpush1.msra.mxu0 0.0
    %370 = vmatprep.subr.mxu0 0.0
    %371 = vmatpush1.msra.mxu0 0.0
    %372 = vmatprep.subr.mxu0 0.0
    %373 = vmatpush1.msra.mxu0 0.0
    %374 = vmatprep.subr.mxu0 0.0
    %375 = vmatpush1.msra.mxu0 0.0
    %376 = vmatprep.subr.mxu0 0.0
    %377 = vmatpush1.msra.mxu0 0.0
    %378 = vmatprep.subr.mxu0 0.0
    %379 = vmatpush1.msra.mxu0 0.0
    %380 = vmatprep.subr.mxu0 0.0
    %381 = vmatpush1.msra.mxu0 0.0
    %382 = vmatprep.subr.mxu0 0.0
    %383 = vmatpush1.msra.mxu0 0.0
    %384 = vmatprep.subr.mxu0 0.0
    %385 = vmatpush1.msra.mxu0 0.0
    %386 = vmatprep.subr.mxu0 0.0
    %387 = vmatpush1.msra.mxu0 0.0
    %388 = vmatprep.subr.mxu0 0.0
    %389 = vmatpush1.msra.mxu0 0.0
    %390 = vmatprep.subr.mxu0 0.0
    %391 = vmatpush1.msra.mxu0 0.0
    %392 = vmatprep.subr.mxu0 0.0
    %393 = vmatpush1.msra.mxu0 0.0
    %394 = vmatprep.subr.mxu0 0.0
    %395 = vmatpush1.msra.mxu0 0.0
    %396 = vmatprep.subr.mxu0 0.0
    %397 = vmatpush1.msra.mxu0 0.0
    %398 = vmatprep.subr.mxu0 0.0
    %399 = vmatpush1.msra.mxu0 0.0
    %400 = vmatprep.subr.mxu0 0.0
    %401 = vmatpush1.msra.mxu0 0.0
    %402 = vmatprep.subr.mxu0 0.0
    %403 = vmatpush1.msra.mxu0 0.0
    %404 = vmatprep.subr.mxu0 0.0
    %405 = vmatpush1.msra.mxu0 0.0
    %406 = vmatprep.mubr.f32.mxu0 0.0
    %407 = vmatmul.mubr.f32.gmra.mrb[0].mxu0 %v324
    %v408 = vpop.f32.mrb[0].mxu0
    %v409 = vadd.f32 0.0, %v408
    %v410 = vpop.f32.mrb[0].mxu0
    %411 = vmatprep.mubr.f32.mxu0 0.0
    %412 = vmatmul.mubr.f32.gmra.mrb[0].mxu0 %v326
    %v413 = vpop.f32.mrb[0].mxu0
    %v414 = vadd.f32 0.0, %v413
    %v415 = vpop.f32.mrb[0].mxu0
    %416 = vmatprep.mubr.f32.mxu0 0.0
    %417 = vmatmul.mubr.f32.gmra.mrb[0].mxu0 %v328
    %v418 = vpop.f32.mrb[0].mxu0
    %v419 = vadd.f32 0.0, %v418
    %v420 = vpop.f32.mrb[0].mxu0
    %421 = vmatprep.mubr.f32.mxu0 0.0
    %422 = vmatmul.mubr.f32.gmra.mrb[0].mxu0 %v330
    %v423 = vpop.f32.mrb[0].mxu0
    %v424 = vadd.f32 0.0, %v423
    %v425 = vpop.f32.mrb[0].mxu0
    %426 = vmatprep.mubr.f32.mxu0 0.0
    %427 = vmatmul.mubr.f32.gmra.mrb[0].mxu0 %v332
    %v428 = vpop.f32.mrb[0].mxu0
    %v429 = vadd.f32 0.0, %v428
    %v430 = vpop.f32.mrb[0].mxu0
    %431 = vmatprep.mubr.f32.mxu0 0.0
    %432 = vmatmul.mubr.f32.gmra.mrb[0].mxu0 %v334
    %v433 = vpop.f32.mrb[0].mxu0
    %v434 = vadd.f32 0.0, %v433
    %v435 = vpop.f32.mrb[0].mxu0
    %436 = vmatprep.mubr.f32.mxu0 0.0
    %437 = vmatmul.mubr.f32.gmra.mrb[0].mxu0 %v336
    %v438 = vpop.f32.mrb[0].mxu0
    %v439 = vadd.f32 0.0, %v438
    %v440 = vpop.f32.mrb[0].mxu0
    %441 = vmatprep.mubr.f32.mxu0 0.0
    %442 = vmatmul.mubr.f32.gmra.mrb[0].mxu0 %v338
    %v443 = vpop.f32.mrb[0].mxu0
    %v444 = vadd.f32 0.0, %v443
    %v445 = vpop.f32.mrb[0].mxu0
    %446 = vmatprep.mubr.f32.mxu0 0.0
    %447 = vmatmul.mubr.f32.gmra.mrb[0].mxu0 %v340
    %v448 = vpop.f32.mrb[0].mxu0
    %v449 = vadd.f32 0.0, %v448
    %v450 = vpop.f32.mrb[0].mxu0
    %451 = vdwg.mxu0
    %v452 = vsel %vm323, %v275, 0
    %v454 = vsel %vm323, %v276, 0
    %v456 = vsel %vm323, %v277, 0
    %v458 = vsel %vm323, %v278, 0
    %v460 = vsel %vm323, %v279, 0
    %v462 = vsel %vm323, %v280, 0
    %v464 = vsel %vm323, %v281, 0
    %v466 = vsel %vm323, %v282, 0
    %v468 = vsel %vm323, %v283, 0
    %470 = vmatprep.subr.mxu0 0.0
    %471 = vmatpush1.msra.mxu0 %v285
    %472 = vmatprep.subr.mxu0 0.0
    %473 = vmatpush1.msra.mxu0 %v286
    %474 = vmatprep.subr.mxu0 0.0
    %475 = vmatpush1.msra.mxu0 %v287
    %476 = vmatprep.subr.mxu0 0.0
    %477 = vmatpush1.msra.mxu0 %v288
    %478 = vmatprep.subr.mxu0 0.0
    %479 = vmatpush1.msra.mxu0 %v289
    %480 = vmatprep.subr.mxu0 0.0
    %481 = vmatpush1.msra.mxu0 0.0
    %482 = vmatprep.subr.mxu0 0.0
    %483 = vmatpush1.msra.mxu0 0.0
    %484 = vmatprep.subr.mxu0 0.0
    %485 = vmatpush1.msra.mxu0 0.0
    %486 = vmatprep.subr.mxu0 0.0
    %487 = vmatpush1.msra.mxu0 0.0
    %488 = vmatprep.subr.mxu0 0.0
    %489 = vmatpush1.msra.mxu0 0.0
    %490 = vmatprep.subr.mxu0 0.0
    %491 = vmatpush1.msra.mxu0 0.0
    %492 = vmatprep.subr.mxu0 0.0
    %493 = vmatpush1.msra.mxu0 0.0
    %494 = vmatprep.subr.mxu0 0.0
    %495 = vmatpush1.msra.mxu0 0.0
    %496 = vmatprep.subr.mxu0 0.0
    %497 = vmatpush1.msra.mxu0 0.0
    %498 = vmatprep.subr.mxu0 0.0
    %499 = vmatpush1.msra.mxu0 0.0
    %500 = vmatprep.subr.mxu0 0.0
    %501 = vmatpush1.msra.mxu0 0.0
    %502 = vmatprep.subr.mxu0 0.0
    %503 = vmatpush1.msra.mxu0 0.0
    %504 = vmatprep.subr.mxu0 0.0
    %505 = vmatpush1.msra.mxu0 0.0
    %506 = vmatprep.subr.mxu0 0.0
    %507 = vmatpush1.msra.mxu0 0.0
    %508 = vmatprep.subr.mxu0 0.0
    %509 = vmatpush1.msra.mxu0 0.0
    %510 = vmatprep.subr.mxu0 0.0
    %511 = vmatpush1.msra.mxu0 0.0
    %512 = vmatprep.subr.mxu0 0.0
    %513 = vmatpush1.msra.mxu0 0.0
    %514 = vmatprep.subr.mxu0 0.0
    %515 = vmatpush1.msra.mxu0 0.0
    %516 = vmatprep.subr.mxu0 0.0
    %517 = vmatpush1.msra.mxu0 0.0
    %518 = vmatprep.subr.mxu0 0.0
    %519 = vmatpush1.msra.mxu0 0.0
    %520 = vmatprep.subr.mxu0 0.0
    %521 = vmatpush1.msra.mxu0 0.0
    %522 = vmatprep.subr.mxu0 0.0
    %523 = vmatpush1.msra.mxu0 0.0
    %524 = vmatprep.subr.mxu0 0.0
    %525 = vmatpush1.msra.mxu0 0.0
    %526 = vmatprep.subr.mxu0 0.0
    %527 = vmatpush1.msra.mxu0 0.0
    %528 = vmatprep.subr.mxu0 0.0
    %529 = vmatpush1.msra.mxu0 0.0
    %530 = vmatprep.subr.mxu0 0.0
    %531 = vmatpush1.msra.mxu0 0.0
    %532 = vmatprep.subr.mxu0 0.0
    %533 = vmatpush1.msra.mxu0 0.0
    %534 = vmatprep.mubr.f32.mxu0 0.0
    %535 = vmatmul.mubr.f32.gmra.mrb[0].mxu0 %v452
    %v536 = vpop.f32.mrb[0].mxu0
    %v537 = vadd.f32 %v409, %v536
    %v538 = vpop.f32.mrb[0].mxu0
    %539 = vmatprep.mubr.f32.mxu0 0.0
    %540 = vmatmul.mubr.f32.gmra.mrb[0].mxu0 %v454
    %v541 = vpop.f32.mrb[0].mxu0
    %v542 = vadd.f32 %v414, %v541
    %v543 = vpop.f32.mrb[0].mxu0
    %544 = vmatprep.mubr.f32.mxu0 0.0
    %545 = vmatmul.mubr.f32.gmra.mrb[0].mxu0 %v456
    %v546 = vpop.f32.mrb[0].mxu0
    %v547 = vadd.f32 %v419, %v546
    %v548 = vpop.f32.mrb[0].mxu0
    %549 = vmatprep.mubr.f32.mxu0 0.0
    %550 = vmatmul.mubr.f32.gmra.mrb[0].mxu0 %v458
    %v551 = vpop.f32.mrb[0].mxu0
    %v552 = vadd.f32 %v424, %v551
    %v553 = vpop.f32.mrb[0].mxu0
    %554 = vmatprep.mubr.f32.mxu0 0.0
    %555 = vmatmul.mubr.f32.gmra.mrb[0].mxu0 %v460
    %v556 = vpop.f32.mrb[0].mxu0
    %v557 = vadd.f32 %v429, %v556
    %v558 = vpop.f32.mrb[0].mxu0
    %559 = vmatprep.mubr.f32.mxu0 0.0
    %560 = vmatmul.mubr.f32.gmra.mrb[0].mxu0 %v462
    %v561 = vpop.f32.mrb[0].mxu0
    %v562 = vadd.f32 %v434, %v561
    %v563 = vpop.f32.mrb[0].mxu0
    %564 = vmatprep.mubr.f32.mxu0 0.0
    %565 = vmatmul.mubr.f32.gmra.mrb[0].mxu0 %v464
    %v566 = vpop.f32.mrb[0].mxu0
    %v567 = vadd.f32 %v439, %v566
    %v568 = vpop.f32.mrb[0].mxu0
    %569 = vmatprep.mubr.f32.mxu0 0.0
    %570 = vmatmul.mubr.f32.gmra.mrb[0].mxu0 %v466
    %v571 = vpop.f32.mrb[0].mxu0
    %v572 = vadd.f32 %v444, %v571
    %v573 = vpop.f32.mrb[0].mxu0
    %574 = vmatprep.mubr.f32.mxu0 0.0
    %575 = vmatmul.mubr.f32.gmra.mrb[0].mxu0 %v468
    %v576 = vpop.f32.mrb[0].mxu0
    %v577 = vadd.f32 %v449, %v576
    %v578 = vpop.f32.mrb[0].mxu0
    %579 = vdwg.mxu0
    %s580 = scalar_lea.vmem [#allocation8], 80
    %v581 = vld [vmem:[%s580] sm:$0xff]
    %v582 = vld [vmem:[%s580 + $0x8] sm:$0xff]
    %v583 = vld [vmem:[%s580 + $0x10] sm:$0xff]
    %v584 = vld [vmem:[%s580 + $0x18] sm:$0xff]
    %v585 = vld [vmem:[%s580 + $0x20] sm:$0xff]
    %vm586 = vcmask 1045504
    %v587 = vrot.slane %v275, 2
    %v588 = vrot.slane %v276, 2
    %v589 = vsel %vm586, %v587, %v588
    %v590 = vrot.slane %v277, 2
    %v591 = vsel %vm586, %v588, %v590
    %v592 = vrot.slane %v278, 2
    %v593 = vsel %vm586, %v590, %v592
    %v594 = vrot.slane %v279, 2
    %v595 = vsel %vm586, %v592, %v594
    %v596 = vrot.slane %v280, 2
    %v597 = vsel %vm586, %v594, %v596
    %v598 = vrot.slane %v281, 2
    %v599 = vsel %vm586, %v596, %v598
    %v600 = vrot.slane %v282, 2
    %v601 = vsel %vm586, %v598, %v600
    %v602 = vrot.slane %v283, 2
    %v603 = vsel %vm586, %v600, %v602
    %v604 = vsel %vm323, %v589, 0
    %v606 = vsel %vm323, %v591, 0
    %v608 = vsel %vm323, %v593, 0
    %v610 = vsel %vm323, %v595, 0
    %v612 = vsel %vm323, %v597, 0
    %v614 = vsel %vm323, %v599, 0
    %v616 = vsel %vm323, %v601, 0
    %v618 = vsel %vm323, %v603, 0
    %v620 = vsel %vm323, %v602, 0
    %622 = vmatprep.subr.mxu0 0.0
    %623 = vmatpush1.msra.mxu0 %v581
    %624 = vmatprep.subr.mxu0 0.0
    %625 = vmatpush1.msra.mxu0 %v582
    %626 = vmatprep.subr.mxu0 0.0
    %627 = vmatpush1.msra.mxu0 %v583
    %628 = vmatprep.subr.mxu0 0.0
    %629 = vmatpush1.msra.mxu0 %v584
    %630 = vmatprep.subr.mxu0 0.0
    %631 = vmatpush1.msra.mxu0 %v585
    %632 = vmatprep.subr.mxu0 0.0
    %633 = vmatpush1.msra.mxu0 0.0
    %634 = vmatprep.subr.mxu0 0.0
    %635 = vmatpush1.msra.mxu0 0.0
    %636 = vmatprep.subr.mxu0 0.0
    %637 = vmatpush1.msra.mxu0 0.0
    %638 = vmatprep.subr.mxu0 0.0
    %639 = vmatpush1.msra.mxu0 0.0
    %640 = vmatprep.subr.mxu0 0.0
    %641 = vmatpush1.msra.mxu0 0.0
    %642 = vmatprep.subr.mxu0 0.0
    %643 = vmatpush1.msra.mxu0 0.0
    %644 = vmatprep.subr.mxu0 0.0
    %645 = vmatpush1.msra.mxu0 0.0
    %646 = vmatprep.subr.mxu0 0.0
    %647 = vmatpush1.msra.mxu0 0.0
    %648 = vmatprep.subr.mxu0 0.0
    %649 = vmatpush1.msra.mxu0 0.0
    %650 = vmatprep.subr.mxu0 0.0
    %651 = vmatpush1.msra.mxu0 0.0
    %652 = vmatprep.subr.mxu0 0.0
    %653 = vmatpush1.msra.mxu0 0.0
    %654 = vmatprep.subr.mxu0 0.0
    %655 = vmatpush1.msra.mxu0 0.0
    %656 = vmatprep.subr.mxu0 0.0
    %657 = vmatpush1.msra.mxu0 0.0
    %658 = vmatprep.subr.mxu0 0.0
    %659 = vmatpush1.msra.mxu0 0.0
    %660 = vmatprep.subr.mxu0 0.0
    %661 = vmatpush1.msra.mxu0 0.0
    %662 = vmatprep.subr.mxu0 0.0
    %663 = vmatpush1.msra.mxu0 0.0
    %664 = vmatprep.subr.mxu0 0.0
    %665 = vmatpush1.msra.mxu0 0.0
    %666 = vmatprep.subr.mxu0 0.0
    %667 = vmatpush1.msra.mxu0 0.0
    %668 = vmatprep.subr.mxu0 0.0
    %669 = vmatpush1.msra.mxu0 0.0
    %670 = vmatprep.subr.mxu0 0.0
    %671 = vmatpush1.msra.mxu0 0.0
    %672 = vmatprep.subr.mxu0 0.0
    %673 = vmatpush1.msra.mxu0 0.0
    %674 = vmatprep.subr.mxu0 0.0
    %675 = vmatpush1.msra.mxu0 0.0
    %676 = vmatprep.subr.mxu0 0.0
    %677 = vmatpush1.msra.mxu0 0.0
    %678 = vmatprep.subr.mxu0 0.0
    %679 = vmatpush1.msra.mxu0 0.0
    %680 = vmatprep.subr.mxu0 0.0
    %681 = vmatpush1.msra.mxu0 0.0
    %682 = vmatprep.subr.mxu0 0.0
    %683 = vmatpush1.msra.mxu0 0.0
    %684 = vmatprep.subr.mxu0 0.0
    %685 = vmatpush1.msra.mxu0 0.0
    %686 = vmatprep.mubr.f32.mxu0 0.0
    %687 = vmatmul.mubr.f32.gmra.mrb[0].mxu0 %v604
    %v688 = vpop.f32.mrb[0].mxu0
    %v689 = vadd.f32 0.0, %v688
    %v690 = vpop.f32.mrb[0].mxu0
    %691 = vmatprep.mubr.f32.mxu0 0.0
    %692 = vmatmul.mubr.f32.gmra.mrb[0].mxu0 %v606
    %v693 = vpop.f32.mrb[0].mxu0
    %v694 = vadd.f32 0.0, %v693
    %v695 = vpop.f32.mrb[0].mxu0
    %696 = vmatprep.mubr.f32.mxu0 0.0
    %697 = vmatmul.mubr.f32.gmra.mrb[0].mxu0 %v608
    %v698 = vpop.f32.mrb[0].mxu0
    %v699 = vadd.f32 0.0, %v698
    %v700 = vpop.f32.mrb[0].mxu0
    %701 = vmatprep.mubr.f32.mxu0 0.0
    %702 = vmatmul.mubr.f32.gmra.mrb[0].mxu0 %v610
    %v703 = vpop.f32.mrb[0].mxu0
    %v704 = vadd.f32 0.0, %v703
    %v705 = vpop.f32.mrb[0].mxu0
    %706 = vmatprep.mubr.f32.mxu0 0.0
    %707 = vmatmul.mubr.f32.gmra.mrb[0].mxu0 %v612
    %v708 = vpop.f32.mrb[0].mxu0
    %v709 = vadd.f32 0.0, %v708
    %v710 = vpop.f32.mrb[0].mxu0
    %711 = vmatprep.mubr.f32.mxu0 0.0
    %712 = vmatmul.mubr.f32.gmra.mrb[0].mxu0 %v614
    %v713 = vpop.f32.mrb[0].mxu0
    %v714 = vadd.f32 0.0, %v713
    %v715 = vpop.f32.mrb[0].mxu0
    %716 = vmatprep.mubr.f32.mxu0 0.0
    %717 = vmatmul.mubr.f32.gmra.mrb[0].mxu0 %v616
    %v718 = vpop.f32.mrb[0].mxu0
    %v719 = vadd.f32 0.0, %v718
    %v720 = vpop.f32.mrb[0].mxu0
    %721 = vmatprep.mubr.f32.mxu0 0.0
    %722 = vmatmul.mubr.f32.gmra.mrb[0].mxu0 %v618
    %v723 = vpop.f32.mrb[0].mxu0
    %v724 = vadd.f32 0.0, %v723
    %v725 = vpop.f32.mrb[0].mxu0
    %726 = vmatprep.mubr.f32.mxu0 0.0
    %727 = vmatmul.mubr.f32.gmra.mrb[0].mxu0 %v620
    %v728 = vpop.f32.mrb[0].mxu0
    %v729 = vadd.f32 0.0, %v728
    %v730 = vpop.f32.mrb[0].mxu0
    %731 = vdwg.mxu0
    %v732 = vadd.f32 %v537, %v689
    %v733 = vadd.f32 %v542, %v694
    %v734 = vadd.f32 %v547, %v699
    %v735 = vadd.f32 %v552, %v704
    %v736 = vadd.f32 %v557, %v709
    %v737 = vadd.f32 %v562, %v714
    %v738 = vadd.f32 %v567, %v719
    %v739 = vadd.f32 %v572, %v724
    %v740 = vadd.f32 %v577, %v729
    %s741 = scalar_lea.vmem [#allocation8], 120
    %v742 = vld [vmem:[%s741] sm:$0xff]
    %v743 = vld [vmem:[%s741 + $0x8] sm:$0xff]
    %v744 = vld [vmem:[%s741 + $0x10] sm:$0xff]
    %v745 = vld [vmem:[%s741 + $0x18] sm:$0xff]
    %v746 = vld [vmem:[%s741 + $0x20] sm:$0xff]
    %vm747 = vcmask 1044480
    %v748 = vrot.slane %v275, 3
    %v749 = vrot.slane %v276, 3
    %v750 = vsel %vm747, %v748, %v749
    %v751 = vrot.slane %v277, 3
    %v752 = vsel %vm747, %v749, %v751
    %v753 = vrot.slane %v278, 3
    %v754 = vsel %vm747, %v751, %v753
    %v755 = vrot.slane %v279, 3
    %v756 = vsel %vm747, %v753, %v755
    %v757 = vrot.slane %v280, 3
    %v758 = vsel %vm747, %v755, %v757
    %v759 = vrot.slane %v281, 3
    %v760 = vsel %vm747, %v757, %v759
    %v761 = vrot.slane %v282, 3
    %v762 = vsel %vm747, %v759, %v761
    %v763 = vrot.slane %v283, 3
    %v764 = vsel %vm747, %v761, %v763
    %v765 = vsel %vm323, %v750, 0
    %v767 = vsel %vm323, %v752, 0
    %v769 = vsel %vm323, %v754, 0
    %v771 = vsel %vm323, %v756, 0
    %v773 = vsel %vm323, %v758, 0
    %v775 = vsel %vm323, %v760, 0
    %v777 = vsel %vm323, %v762, 0
    %v779 = vsel %vm323, %v764, 0
    %v781 = vsel %vm323, %v763, 0
    %783 = vmatprep.subr.mxu0 0.0
    %784 = vmatpush1.msra.mxu0 %v742
    %785 = vmatprep.subr.mxu0 0.0
    %786 = vmatpush1.msra.mxu0 %v743
    %787 = vmatprep.subr.mxu0 0.0
    %788 = vmatpush1.msra.mxu0 %v744
    %789 = vmatprep.subr.mxu0 0.0
    %790 = vmatpush1.msra.mxu0 %v745
    %791 = vmatprep.subr.mxu0 0.0
    %792 = vmatpush1.msra.mxu0 %v746
    %793 = vmatprep.subr.mxu0 0.0
    %794 = vmatpush1.msra.mxu0 0.0
    %795 = vmatprep.subr.mxu0 0.0
    %796 = vmatpush1.msra.mxu0 0.0
    %797 = vmatprep.subr.mxu0 0.0
    %798 = vmatpush1.msra.mxu0 0.0
    %799 = vmatprep.subr.mxu0 0.0
    %800 = vmatpush1.msra.mxu0 0.0
    %801 = vmatprep.subr.mxu0 0.0
    %802 = vmatpush1.msra.mxu0 0.0
    %803 = vmatprep.subr.mxu0 0.0
    %804 = vmatpush1.msra.mxu0 0.0
    %805 = vmatprep.subr.mxu0 0.0
    %806 = vmatpush1.msra.mxu0 0.0
    %807 = vmatprep.subr.mxu0 0.0
    %808 = vmatpush1.msra.mxu0 0.0
    %809 = vmatprep.subr.mxu0 0.0
    %810 = vmatpush1.msra.mxu0 0.0
    %811 = vmatprep.subr.mxu0 0.0
    %812 = vmatpush1.msra.mxu0 0.0
    %813 = vmatprep.subr.mxu0 0.0
    %814 = vmatpush1.msra.mxu0 0.0
    %815 = vmatprep.subr.mxu0 0.0
    %816 = vmatpush1.msra.mxu0 0.0
    %817 = vmatprep.subr.mxu0 0.0
    %818 = vmatpush1.msra.mxu0 0.0
    %819 = vmatprep.subr.mxu0 0.0
    %820 = vmatpush1.msra.mxu0 0.0
    %821 = vmatprep.subr.mxu0 0.0
    %822 = vmatpush1.msra.mxu0 0.0
    %823 = vmatprep.subr.mxu0 0.0
    %824 = vmatpush1.msra.mxu0 0.0
    %825 = vmatprep.subr.mxu0 0.0
    %826 = vmatpush1.msra.mxu0 0.0
    %827 = vmatprep.subr.mxu0 0.0
    %828 = vmatpush1.msra.mxu0 0.0
    %829 = vmatprep.subr.mxu0 0.0
    %830 = vmatpush1.msra.mxu0 0.0
    %831 = vmatprep.subr.mxu0 0.0
    %832 = vmatpush1.msra.mxu0 0.0
    %833 = vmatprep.subr.mxu0 0.0
    %834 = vmatpush1.msra.mxu0 0.0
    %835 = vmatprep.subr.mxu0 0.0
    %836 = vmatpush1.msra.mxu0 0.0
    %837 = vmatprep.subr.mxu0 0.0
    %838 = vmatpush1.msra.mxu0 0.0
    %839 = vmatprep.subr.mxu0 0.0
    %840 = vmatpush1.msra.mxu0 0.0
    %841 = vmatprep.subr.mxu0 0.0
    %842 = vmatpush1.msra.mxu0 0.0
    %843 = vmatprep.subr.mxu0 0.0
    %844 = vmatpush1.msra.mxu0 0.0
    %845 = vmatprep.subr.mxu0 0.0
    %846 = vmatpush1.msra.mxu0 0.0
    %847 = vmatprep.mubr.f32.mxu0 0.0
    %848 = vmatmul.mubr.f32.gmra.mrb[0].mxu0 %v765
    %v849 = vpop.f32.mrb[0].mxu0
    %v850 = vadd.f32 0.0, %v849
    %v851 = vpop.f32.mrb[0].mxu0
    %852 = vmatprep.mubr.f32.mxu0 0.0
    %853 = vmatmul.mubr.f32.gmra.mrb[0].mxu0 %v767
    %v854 = vpop.f32.mrb[0].mxu0
    %v855 = vadd.f32 0.0, %v854
    %v856 = vpop.f32.mrb[0].mxu0
    %857 = vmatprep.mubr.f32.mxu0 0.0
    %858 = vmatmul.mubr.f32.gmra.mrb[0].mxu0 %v769
    %v859 = vpop.f32.mrb[0].mxu0
    %v860 = vadd.f32 0.0, %v859
    %v861 = vpop.f32.mrb[0].mxu0
    %862 = vmatprep.mubr.f32.mxu0 0.0
    %863 = vmatmul.mubr.f32.gmra.mrb[0].mxu0 %v771
    %v864 = vpop.f32.mrb[0].mxu0
    %v865 = vadd.f32 0.0, %v864
    %v866 = vpop.f32.mrb[0].mxu0
    %867 = vmatprep.mubr.f32.mxu0 0.0
    %868 = vmatmul.mubr.f32.gmra.mrb[0].mxu0 %v773
    %v869 = vpop.f32.mrb[0].mxu0
    %v870 = vadd.f32 0.0, %v869
    %v871 = vpop.f32.mrb[0].mxu0
    %872 = vmatprep.mubr.f32.mxu0 0.0
    %873 = vmatmul.mubr.f32.gmra.mrb[0].mxu0 %v775
    %v874 = vpop.f32.mrb[0].mxu0
    %v875 = vadd.f32 0.0, %v874
    %v876 = vpop.f32.mrb[0].mxu0
    %877 = vmatprep.mubr.f32.mxu0 0.0
    %878 = vmatmul.mubr.f32.gmra.mrb[0].mxu0 %v777
    %v879 = vpop.f32.mrb[0].mxu0
    %v880 = vadd.f32 0.0, %v879
    %v881 = vpop.f32.mrb[0].mxu0
    %882 = vmatprep.mubr.f32.mxu0 0.0
    %883 = vmatmul.mubr.f32.gmra.mrb[0].mxu0 %v779
    %v884 = vpop.f32.mrb[0].mxu0
    %v885 = vadd.f32 0.0, %v884
    %v886 = vpop.f32.mrb[0].mxu0
    %887 = vmatprep.mubr.f32.mxu0 0.0
    %888 = vmatmul.mubr.f32.gmra.mrb[0].mxu0 %v781
    %v889 = vpop.f32.mrb[0].mxu0
    %v890 = vadd.f32 0.0, %v889
    %v891 = vpop.f32.mrb[0].mxu0
    %892 = vdwg.mxu0
    %v893 = vadd.f32 %v732, %v850
    %v894 = vadd.f32 %v733, %v855
    %v895 = vadd.f32 %v734, %v860
    %v896 = vadd.f32 %v735, %v865
    %v897 = vadd.f32 %v736, %v870
    %v898 = vadd.f32 %v737, %v875
    %v899 = vadd.f32 %v738, %v880
    %v900 = vadd.f32 %v739, %v885
    %v901 = vadd.f32 %v740, %v890
    %s902 = scalar_lea.vmem [#allocation8], 160
    %v903 = vld [vmem:[%s902] sm:$0xff]
    %v904 = vld [vmem:[%s902 + $0x8] sm:$0xff]
    %v905 = vld [vmem:[%s902 + $0x10] sm:$0xff]
    %v906 = vld [vmem:[%s902 + $0x18] sm:$0xff]
    %v907 = vld [vmem:[%s902 + $0x20] sm:$0xff]
    %vm908 = vcmask 1043456
    %v909 = vrot.slane %v275, 4
    %v910 = vrot.slane %v276, 4
    %v911 = vsel %vm908, %v909, %v910
    %v912 = vrot.slane %v277, 4
    %v913 = vsel %vm908, %v910, %v912
    %v914 = vrot.slane %v278, 4
    %v915 = vsel %vm908, %v912, %v914
    %v916 = vrot.slane %v279, 4
    %v917 = vsel %vm908, %v914, %v916
    %v918 = vrot.slane %v280, 4
    %v919 = vsel %vm908, %v916, %v918
    %v920 = vrot.slane %v281, 4
    %v921 = vsel %vm908, %v918, %v920
    %v922 = vrot.slane %v282, 4
    %v923 = vsel %vm908, %v920, %v922
    %v924 = vrot.slane %v283, 4
    %v925 = vsel %vm908, %v922, %v924
    %v926 = vsel %vm323, %v911, 0
    %v928 = vsel %vm323, %v913, 0
    %v930 = vsel %vm323, %v915, 0
    %v932 = vsel %vm323, %v917, 0
    %v934 = vsel %vm323, %v919, 0
    %v936 = vsel %vm323, %v921, 0
    %v938 = vsel %vm323, %v923, 0
    %v940 = vsel %vm323, %v925, 0
    %v942 = vsel %vm323, %v924, 0
    %944 = vmatprep.subr.mxu0 0.0
    %945 = vmatpush1.msra.mxu0 %v903
    %946 = vmatprep.subr.mxu0 0.0
    %947 = vmatpush1.msra.mxu0 %v904
    %948 = vmatprep.subr.mxu0 0.0
    %949 = vmatpush1.msra.mxu0 %v905
    %950 = vmatprep.subr.mxu0 0.0
    %951 = vmatpush1.msra.mxu0 %v906
    %952 = vmatprep.subr.mxu0 0.0
    %953 = vmatpush1.msra.mxu0 %v907
    %954 = vmatprep.subr.mxu0 0.0
    %955 = vmatpush1.msra.mxu0 0.0
    %956 = vmatprep.subr.mxu0 0.0
    %957 = vmatpush1.msra.mxu0 0.0
    %958 = vmatprep.subr.mxu0 0.0
    %959 = vmatpush1.msra.mxu0 0.0
    %960 = vmatprep.subr.mxu0 0.0
    %961 = vmatpush1.msra.mxu0 0.0
    %962 = vmatprep.subr.mxu0 0.0
    %963 = vmatpush1.msra.mxu0 0.0
    %964 = vmatprep.subr.mxu0 0.0
    %965 = vmatpush1.msra.mxu0 0.0
    %966 = vmatprep.subr.mxu0 0.0
    %967 = vmatpush1.msra.mxu0 0.0
    %968 = vmatprep.subr.mxu0 0.0
    %969 = vmatpush1.msra.mxu0 0.0
    %970 = vmatprep.subr.mxu0 0.0
    %971 = vmatpush1.msra.mxu0 0.0
    %972 = vmatprep.subr.mxu0 0.0
    %973 = vmatpush1.msra.mxu0 0.0
    %974 = vmatprep.subr.mxu0 0.0
    %975 = vmatpush1.msra.mxu0 0.0
    %976 = vmatprep.subr.mxu0 0.0
    %977 = vmatpush1.msra.mxu0 0.0
    %978 = vmatprep.subr.mxu0 0.0
    %979 = vmatpush1.msra.mxu0 0.0
    %980 = vmatprep.subr.mxu0 0.0
    %981 = vmatpush1.msra.mxu0 0.0
    %982 = vmatprep.subr.mxu0 0.0
    %983 = vmatpush1.msra.mxu0 0.0
    %984 = vmatprep.subr.mxu0 0.0
    %985 = vmatpush1.msra.mxu0 0.0
    %986 = vmatprep.subr.mxu0 0.0
    %987 = vmatpush1.msra.mxu0 0.0
    %988 = vmatprep.subr.mxu0 0.0
    %989 = vmatpush1.msra.mxu0 0.0
    %990 = vmatprep.subr.mxu0 0.0
    %991 = vmatpush1.msra.mxu0 0.0
    %992 = vmatprep.subr.mxu0 0.0
    %993 = vmatpush1.msra.mxu0 0.0
    %994 = vmatprep.subr.mxu0 0.0
    %995 = vmatpush1.msra.mxu0 0.0
    %996 = vmatprep.subr.mxu0 0.0
    %997 = vmatpush1.msra.mxu0 0.0
    %998 = vmatprep.subr.mxu0 0.0
    %999 = vmatpush1.msra.mxu0 0.0
    %1000 = vmatprep.subr.mxu0 0.0
    %1001 = vmatpush1.msra.mxu0 0.0
    %1002 = vmatprep.subr.mxu0 0.0
    %1003 = vmatpush1.msra.mxu0 0.0
    %1004 = vmatprep.subr.mxu0 0.0
    %1005 = vmatpush1.msra.mxu0 0.0
    %1006 = vmatprep.subr.mxu0 0.0
    %1007 = vmatpush1.msra.mxu0 0.0
    %1008 = vmatprep.mubr.f32.mxu0 0.0
    %1009 = vmatmul.mubr.f32.gmra.mrb[0].mxu0 %v926
    %v1010 = vpop.f32.mrb[0].mxu0
    %v1011 = vadd.f32 0.0, %v1010
    %v1012 = vpop.f32.mrb[0].mxu0
    %1013 = vmatprep.mubr.f32.mxu0 0.0
    %1014 = vmatmul.mubr.f32.gmra.mrb[0].mxu0 %v928
    %v1015 = vpop.f32.mrb[0].mxu0
    %v1016 = vadd.f32 0.0, %v1015
    %v1017 = vpop.f32.mrb[0].mxu0
    %1018 = vmatprep.mubr.f32.mxu0 0.0
    %1019 = vmatmul.mubr.f32.gmra.mrb[0].mxu0 %v930
    %v1020 = vpop.f32.mrb[0].mxu0
    %v1021 = vadd.f32 0.0, %v1020
    %v1022 = vpop.f32.mrb[0].mxu0
    %1023 = vmatprep.mubr.f32.mxu0 0.0
    %1024 = vmatmul.mubr.f32.gmra.mrb[0].mxu0 %v932
    %v1025 = vpop.f32.mrb[0].mxu0
    %v1026 = vadd.f32 0.0, %v1025
    %v1027 = vpop.f32.mrb[0].mxu0
    %1028 = vmatprep.mubr.f32.mxu0 0.0
    %1029 = vmatmul.mubr.f32.gmra.mrb[0].mxu0 %v934
    %v1030 = vpop.f32.mrb[0].mxu0
    %v1031 = vadd.f32 0.0, %v1030
    %v1032 = vpop.f32.mrb[0].mxu0
    %1033 = vmatprep.mubr.f32.mxu0 0.0
    %1034 = vmatmul.mubr.f32.gmra.mrb[0].mxu0 %v936
    %v1035 = vpop.f32.mrb[0].mxu0
    %v1036 = vadd.f32 0.0, %v1035
    %v1037 = vpop.f32.mrb[0].mxu0
    %1038 = vmatprep.mubr.f32.mxu0 0.0
    %1039 = vmatmul.mubr.f32.gmra.mrb[0].mxu0 %v938
    %v1040 = vpop.f32.mrb[0].mxu0
    %v1041 = vadd.f32 0.0, %v1040
    %v1042 = vpop.f32.mrb[0].mxu0
    %1043 = vmatprep.mubr.f32.mxu0 0.0
    %1044 = vmatmul.mubr.f32.gmra.mrb[0].mxu0 %v940
    %v1045 = vpop.f32.mrb[0].mxu0
    %v1046 = vadd.f32 0.0, %v1045
    %v1047 = vpop.f32.mrb[0].mxu0
    %1048 = vmatprep.mubr.f32.mxu0 0.0
    %1049 = vmatmul.mubr.f32.gmra.mrb[0].mxu0 %v942
    %v1050 = vpop.f32.mrb[0].mxu0
    %v1051 = vadd.f32 0.0, %v1050
    %v1052 = vpop.f32.mrb[0].mxu0
    %1053 = vdwg.mxu0
    %v1054 = vadd.f32 %v893, %v1011
    %v1055 = vadd.f32 %v894, %v1016
    %v1056 = vadd.f32 %v895, %v1021
    %v1057 = vadd.f32 %v896, %v1026
    %v1058 = vadd.f32 %v897, %v1031
    %v1059 = vadd.f32 %v898, %v1036
    %v1060 = vadd.f32 %v899, %v1041
    %v1061 = vadd.f32 %v900, %v1046
    %v1062 = vadd.f32 %v901, %v1051
    %s1063 = scalar_lea.vmem [#allocation8], 200
    %v1064 = vld [vmem:[%s1063] sm:$0xff]
    %v1065 = vld [vmem:[%s1063 + $0x8] sm:$0xff]
    %v1066 = vld [vmem:[%s1063 + $0x10] sm:$0xff]
    %v1067 = vld [vmem:[%s1063 + $0x18] sm:$0xff]
    %v1068 = vld [vmem:[%s1063 + $0x20] sm:$0xff]
    %vm1070 = vcmask 1042432
    %v1071 = vrot.slane %v275, 5
    %v1072 = vrot.slane %v276, 5
    %v1073 = vsel %vm1070, %v1071, %v1072
    %v1074 = vrot.slane %v277, 5
    %v1075 = vsel %vm1070, %v1072, %v1074
    %v1076 = vrot.slane %v278, 5
    %v1077 = vsel %vm1070, %v1074, %v1076
    %v1078 = vrot.slane %v279, 5
    %v1079 = vsel %vm1070, %v1076, %v1078
    %v1080 = vrot.slane %v280, 5
    %v1081 = vsel %vm1070, %v1078, %v1080
    %v1082 = vrot.slane %v281, 5
    %v1083 = vsel %vm1070, %v1080, %v1082
    %v1084 = vrot.slane %v282, 5
    %v1085 = vsel %vm1070, %v1082, %v1084
    %v1086 = vrot.slane %v283, 5
    %v1087 = vsel %vm1070, %v1084, %v1086
    %v1088 = vrot.slane %v284, 5
    %v1089 = vsel %vm1070, %v1086, %v1088
    %v1090 = vsel %vm323, %v1073, 0
    %v1092 = vsel %vm323, %v1075, 0
    %v1094 = vsel %vm323, %v1077, 0
    %v1096 = vsel %vm323, %v1079, 0
    %v1098 = vsel %vm323, %v1081, 0
    %v1100 = vsel %vm323, %v1083, 0
    %v1102 = vsel %vm323, %v1085, 0
    %v1104 = vsel %vm323, %v1087, 0
    %v1106 = vsel %vm323, %v1089, 0
    %1108 = vmatprep.subr.mxu0 0.0
    %1109 = vmatpush1.msra.mxu0 %v1064
    %1110 = vmatprep.subr.mxu0 0.0
    %1111 = vmatpush1.msra.mxu0 %v1065
    %1112 = vmatprep.subr.mxu0 0.0
    %1113 = vmatpush1.msra.mxu0 %v1066
    %1114 = vmatprep.subr.mxu0 0.0
    %1115 = vmatpush1.msra.mxu0 %v1067
    %1116 = vmatprep.subr.mxu0 0.0
    %1117 = vmatpush1.msra.mxu0 %v1068
    %1118 = vmatprep.subr.mxu0 0.0
    %1119 = vmatpush1.msra.mxu0 0.0
    %1120 = vmatprep.subr.mxu0 0.0
    %1121 = vmatpush1.msra.mxu0 0.0
    %1122 = vmatprep.subr.mxu0 0.0
    %1123 = vmatpush1.msra.mxu0 0.0
    %1124 = vmatprep.subr.mxu0 0.0
    %1125 = vmatpush1.msra.mxu0 0.0
    %1126 = vmatprep.subr.mxu0 0.0
    %1127 = vmatpush1.msra.mxu0 0.0
    %1128 = vmatprep.subr.mxu0 0.0
    %1129 = vmatpush1.msra.mxu0 0.0
    %1130 = vmatprep.subr.mxu0 0.0
    %1131 = vmatpush1.msra.mxu0 0.0
    %1132 = vmatprep.subr.mxu0 0.0
    %1133 = vmatpush1.msra.mxu0 0.0
    %1134 = vmatprep.subr.mxu0 0.0
    %1135 = vmatpush1.msra.mxu0 0.0
    %1136 = vmatprep.subr.mxu0 0.0
    %1137 = vmatpush1.msra.mxu0 0.0
    %1138 = vmatprep.subr.mxu0 0.0
    %1139 = vmatpush1.msra.mxu0 0.0
    %1140 = vmatprep.subr.mxu0 0.0
    %1141 = vmatpush1.msra.mxu0 0.0
    %1142 = vmatprep.subr.mxu0 0.0
    %1143 = vmatpush1.msra.mxu0 0.0
    %1144 = vmatprep.subr.mxu0 0.0
    %1145 = vmatpush1.msra.mxu0 0.0
    %1146 = vmatprep.subr.mxu0 0.0
    %1147 = vmatpush1.msra.mxu0 0.0
    %1148 = vmatprep.subr.mxu0 0.0
    %1149 = vmatpush1.msra.mxu0 0.0
    %1150 = vmatprep.subr.mxu0 0.0
    %1151 = vmatpush1.msra.mxu0 0.0
    %1152 = vmatprep.subr.mxu0 0.0
    %1153 = vmatpush1.msra.mxu0 0.0
    %1154 = vmatprep.subr.mxu0 0.0
    %1155 = vmatpush1.msra.mxu0 0.0
    %1156 = vmatprep.subr.mxu0 0.0
    %1157 = vmatpush1.msra.mxu0 0.0
    %1158 = vmatprep.subr.mxu0 0.0
    %1159 = vmatpush1.msra.mxu0 0.0
    %1160 = vmatprep.subr.mxu0 0.0
    %1161 = vmatpush1.msra.mxu0 0.0
    %1162 = vmatprep.subr.mxu0 0.0
    %1163 = vmatpush1.msra.mxu0 0.0
    %1164 = vmatprep.subr.mxu0 0.0
    %1165 = vmatpush1.msra.mxu0 0.0
    %1166 = vmatprep.subr.mxu0 0.0
    %1167 = vmatpush1.msra.mxu0 0.0
    %1168 = vmatprep.subr.mxu0 0.0
    %1169 = vmatpush1.msra.mxu0 0.0
    %1170 = vmatprep.subr.mxu0 0.0
    %1171 = vmatpush1.msra.mxu0 0.0
    %1172 = vmatprep.mubr.f32.mxu0 0.0
    %1173 = vmatmul.mubr.f32.gmra.mrb[0].mxu0 %v1090
    %v1174 = vpop.f32.mrb[0].mxu0
    %v1175 = vadd.f32 0.0, %v1174
    %v1176 = vpop.f32.mrb[0].mxu0
    %1177 = vmatprep.mubr.f32.mxu0 0.0
    %1178 = vmatmul.mubr.f32.gmra.mrb[0].mxu0 %v1092
    %v1179 = vpop.f32.mrb[0].mxu0
    %v1180 = vadd.f32 0.0, %v1179
    %v1181 = vpop.f32.mrb[0].mxu0
    %1182 = vmatprep.mubr.f32.mxu0 0.0
    %1183 = vmatmul.mubr.f32.gmra.mrb[0].mxu0 %v1094
    %v1184 = vpop.f32.mrb[0].mxu0
    %v1185 = vadd.f32 0.0, %v1184
    %v1186 = vpop.f32.mrb[0].mxu0
    %1187 = vmatprep.mubr.f32.mxu0 0.0
    %1188 = vmatmul.mubr.f32.gmra.mrb[0].mxu0 %v1096
    %v1189 = vpop.f32.mrb[0].mxu0
    %v1190 = vadd.f32 0.0, %v1189
    %v1191 = vpop.f32.mrb[0].mxu0
    %1192 = vmatprep.mubr.f32.mxu0 0.0
    %1193 = vmatmul.mubr.f32.gmra.mrb[0].mxu0 %v1098
    %v1194 = vpop.f32.mrb[0].mxu0
    %v1195 = vadd.f32 0.0, %v1194
    %v1196 = vpop.f32.mrb[0].mxu0
    %1197 = vmatprep.mubr.f32.mxu0 0.0
    %1198 = vmatmul.mubr.f32.gmra.mrb[0].mxu0 %v1100
    %v1199 = vpop.f32.mrb[0].mxu0
    %v1200 = vadd.f32 0.0, %v1199
    %v1201 = vpop.f32.mrb[0].mxu0
    %1202 = vmatprep.mubr.f32.mxu0 0.0
    %1203 = vmatmul.mubr.f32.gmra.mrb[0].mxu0 %v1102
    %v1204 = vpop.f32.mrb[0].mxu0
    %v1205 = vadd.f32 0.0, %v1204
    %v1206 = vpop.f32.mrb[0].mxu0
    %1207 = vmatprep.mubr.f32.mxu0 0.0
    %1208 = vmatmul.mubr.f32.gmra.mrb[0].mxu0 %v1104
    %v1209 = vpop.f32.mrb[0].mxu0
    %v1210 = vadd.f32 0.0, %v1209
    %v1211 = vpop.f32.mrb[0].mxu0
    %1212 = vmatprep.mubr.f32.mxu0 0.0
    %1213 = vmatmul.mubr.f32.gmra.mrb[0].mxu0 %v1106
    %v1214 = vpop.f32.mrb[0].mxu0
    %v1215 = vadd.f32 0.0, %v1214
    %v1216 = vpop.f32.mrb[0].mxu0
    %1217 = vdwg.mxu0
    %v1218 = vadd.f32 %v1054, %v1175
    %v1219 = vadd.f32 %v1055, %v1180
    %v1220 = vadd.f32 %v1056, %v1185
    %v1221 = vadd.f32 %v1057, %v1190
    %v1222 = vadd.f32 %v1058, %v1195
    %v1223 = vadd.f32 %v1059, %v1200
    %v1224 = vadd.f32 %v1060, %v1205
    %v1225 = vadd.f32 %v1061, %v1210
    %v1226 = vadd.f32 %v1062, %v1215
    %s1227 = scalar_lea.vmem [#allocation8], 240
    %v1228 = vld [vmem:[%s1227] sm:$0xff]
    %v1229 = vld [vmem:[%s1227 + $0x8] sm:$0xff]
    %v1230 = vld [vmem:[%s1227 + $0x10] sm:$0xff]
    %v1231 = vld [vmem:[%s1227 + $0x18] sm:$0xff]
    %v1232 = vld [vmem:[%s1227 + $0x20] sm:$0xff]
    %vm1233 = vcmask 1041408
    %v1234 = vrot.slane %v275, 6
    %v1235 = vrot.slane %v276, 6
    %v1236 = vsel %vm1233, %v1234, %v1235
    %v1237 = vrot.slane %v277, 6
    %v1238 = vsel %vm1233, %v1235, %v1237
    %v1239 = vrot.slane %v278, 6
    %v1240 = vsel %vm1233, %v1237, %v1239
    %v1241 = vrot.slane %v279, 6
    %v1242 = vsel %vm1233, %v1239, %v1241
    %v1243 = vrot.slane %v280, 6
    %v1244 = vsel %vm1233, %v1241, %v1243
    %v1245 = vrot.slane %v281, 6
    %v1246 = vsel %vm1233, %v1243, %v1245
    %v1247 = vrot.slane %v282, 6
    %v1248 = vsel %vm1233, %v1245, %v1247
    %v1249 = vrot.slane %v283, 6
    %v1250 = vsel %vm1233, %v1247, %v1249
    %v1251 = vrot.slane %v284, 6
    %v1252 = vsel %vm1233, %v1249, %v1251
    %v1253 = vsel %vm323, %v1236, 0
    %v1255 = vsel %vm323, %v1238, 0
    %v1257 = vsel %vm323, %v1240, 0
    %v1259 = vsel %vm323, %v1242, 0
    %v1261 = vsel %vm323, %v1244, 0
    %v1263 = vsel %vm323, %v1246, 0
    %v1265 = vsel %vm323, %v1248, 0
    %v1267 = vsel %vm323, %v1250, 0
    %v1269 = vsel %vm323, %v1252, 0
    %1271 = vmatprep.subr.mxu0 0.0
    %1272 = vmatpush1.msra.mxu0 %v1228
    %1273 = vmatprep.subr.mxu0 0.0
    %1274 = vmatpush1.msra.mxu0 %v1229
    %1275 = vmatprep.subr.mxu0 0.0
    %1276 = vmatpush1.msra.mxu0 %v1230
    %1277 = vmatprep.subr.mxu0 0.0
    %1278 = vmatpush1.msra.mxu0 %v1231
    %1279 = vmatprep.subr.mxu0 0.0
    %1280 = vmatpush1.msra.mxu0 %v1232
    %1281 = vmatprep.subr.mxu0 0.0
    %1282 = vmatpush1.msra.mxu0 0.0
    %1283 = vmatprep.subr.mxu0 0.0
    %1284 = vmatpush1.msra.mxu0 0.0
    %1285 = vmatprep.subr.mxu0 0.0
    %1286 = vmatpush1.msra.mxu0 0.0
    %1287 = vmatprep.subr.mxu0 0.0
    %1288 = vmatpush1.msra.mxu0 0.0
    %1289 = vmatprep.subr.mxu0 0.0
    %1290 = vmatpush1.msra.mxu0 0.0
    %1291 = vmatprep.subr.mxu0 0.0
    %1292 = vmatpush1.msra.mxu0 0.0
    %1293 = vmatprep.subr.mxu0 0.0
    %1294 = vmatpush1.msra.mxu0 0.0
    %1295 = vmatprep.subr.mxu0 0.0
    %1296 = vmatpush1.msra.mxu0 0.0
    %1297 = vmatprep.subr.mxu0 0.0
    %1298 = vmatpush1.msra.mxu0 0.0
    %1299 = vmatprep.subr.mxu0 0.0
    %1300 = vmatpush1.msra.mxu0 0.0
    %1301 = vmatprep.subr.mxu0 0.0
    %1302 = vmatpush1.msra.mxu0 0.0
    %1303 = vmatprep.subr.mxu0 0.0
    %1304 = vmatpush1.msra.mxu0 0.0
    %1305 = vmatprep.subr.mxu0 0.0
    %1306 = vmatpush1.msra.mxu0 0.0
    %1307 = vmatprep.subr.mxu0 0.0
    %1308 = vmatpush1.msra.mxu0 0.0
    %1309 = vmatprep.subr.mxu0 0.0
    %1310 = vmatpush1.msra.mxu0 0.0
    %1311 = vmatprep.subr.mxu0 0.0
    %1312 = vmatpush1.msra.mxu0 0.0
    %1313 = vmatprep.subr.mxu0 0.0
    %1314 = vmatpush1.msra.mxu0 0.0
    %1315 = vmatprep.subr.mxu0 0.0
    %1316 = vmatpush1.msra.mxu0 0.0
    %1317 = vmatprep.subr.mxu0 0.0
    %1318 = vmatpush1.msra.mxu0 0.0
    %1319 = vmatprep.subr.mxu0 0.0
    %1320 = vmatpush1.msra.mxu0 0.0
    %1321 = vmatprep.subr.mxu0 0.0
    %1322 = vmatpush1.msra.mxu0 0.0
    %1323 = vmatprep.subr.mxu0 0.0
    %1324 = vmatpush1.msra.mxu0 0.0
    %1325 = vmatprep.subr.mxu0 0.0
    %1326 = vmatpush1.msra.mxu0 0.0
    %1327 = vmatprep.subr.mxu0 0.0
    %1328 = vmatpush1.msra.mxu0 0.0
    %1329 = vmatprep.subr.mxu0 0.0
    %1330 = vmatpush1.msra.mxu0 0.0
    %1331 = vmatprep.subr.mxu0 0.0
    %1332 = vmatpush1.msra.mxu0 0.0
    %1333 = vmatprep.subr.mxu0 0.0
    %1334 = vmatpush1.msra.mxu0 0.0
    %1335 = vmatprep.mubr.f32.mxu0 0.0
    %1336 = vmatmul.mubr.f32.gmra.mrb[0].mxu0 %v1253
    %v1337 = vpop.f32.mrb[0].mxu0
    %v1338 = vadd.f32 0.0, %v1337
    %v1339 = vpop.f32.mrb[0].mxu0
    %1340 = vmatprep.mubr.f32.mxu0 0.0
    %1341 = vmatmul.mubr.f32.gmra.mrb[0].mxu0 %v1255
    %v1342 = vpop.f32.mrb[0].mxu0
    %v1343 = vadd.f32 0.0, %v1342
    %v1344 = vpop.f32.mrb[0].mxu0
    %1345 = vmatprep.mubr.f32.mxu0 0.0
    %1346 = vmatmul.mubr.f32.gmra.mrb[0].mxu0 %v1257
    %v1347 = vpop.f32.mrb[0].mxu0
    %v1348 = vadd.f32 0.0, %v1347
    %v1349 = vpop.f32.mrb[0].mxu0
    %1350 = vmatprep.mubr.f32.mxu0 0.0
    %1351 = vmatmul.mubr.f32.gmra.mrb[0].mxu0 %v1259
    %v1352 = vpop.f32.mrb[0].mxu0
    %v1353 = vadd.f32 0.0, %v1352
    %v1354 = vpop.f32.mrb[0].mxu0
    %1355 = vmatprep.mubr.f32.mxu0 0.0
    %1356 = vmatmul.mubr.f32.gmra.mrb[0].mxu0 %v1261
    %v1357 = vpop.f32.mrb[0].mxu0
    %v1358 = vadd.f32 0.0, %v1357
    %v1359 = vpop.f32.mrb[0].mxu0
    %1360 = vmatprep.mubr.f32.mxu0 0.0
    %1361 = vmatmul.mubr.f32.gmra.mrb[0].mxu0 %v1263
    %v1362 = vpop.f32.mrb[0].mxu0
    %v1363 = vadd.f32 0.0, %v1362
    %v1364 = vpop.f32.mrb[0].mxu0
    %1365 = vmatprep.mubr.f32.mxu0 0.0
    %1366 = vmatmul.mubr.f32.gmra.mrb[0].mxu0 %v1265
    %v1367 = vpop.f32.mrb[0].mxu0
    %v1368 = vadd.f32 0.0, %v1367
    %v1369 = vpop.f32.mrb[0].mxu0
    %1370 = vmatprep.mubr.f32.mxu0 0.0
    %1371 = vmatmul.mubr.f32.gmra.mrb[0].mxu0 %v1267
    %v1372 = vpop.f32.mrb[0].mxu0
    %v1373 = vadd.f32 0.0, %v1372
    %v1374 = vpop.f32.mrb[0].mxu0
    %1375 = vmatprep.mubr.f32.mxu0 0.0
    %1376 = vmatmul.mubr.f32.gmra.mrb[0].mxu0 %v1269
    %v1377 = vpop.f32.mrb[0].mxu0
    %v1378 = vadd.f32 0.0, %v1377
    %v1379 = vpop.f32.mrb[0].mxu0
    %1380 = vdwg.mxu0
    %v1381 = vadd.f32 %v1218, %v1338
    %v1382 = vadd.f32 %v1219, %v1343
    %v1383 = vadd.f32 %v1220, %v1348
    %v1384 = vadd.f32 %v1221, %v1353
    %v1385 = vadd.f32 %v1222, %v1358
    %v1386 = vadd.f32 %v1223, %v1363
    %v1387 = vadd.f32 %v1224, %v1368
    %v1388 = vadd.f32 %v1225, %v1373
    %v1389 = vadd.f32 %v1226, %v1378
    %s1390 = scalar_lea.vmem [#allocation8], 280
    %v1391 = vld [vmem:[%s1390] sm:$0xff]
    %v1392 = vld [vmem:[%s1390 + $0x8] sm:$0xff]
    %v1393 = vld [vmem:[%s1390 + $0x10] sm:$0xff]
    %v1394 = vld [vmem:[%s1390 + $0x18] sm:$0xff]
    %v1395 = vld [vmem:[%s1390 + $0x20] sm:$0xff]
    %vm1396 = vcmask 1040384
    %v1397 = vrot.slane %v275, 7
    %v1398 = vrot.slane %v276, 7
    %v1399 = vsel %vm1396, %v1397, %v1398
    %v1400 = vrot.slane %v277, 7
    %v1401 = vsel %vm1396, %v1398, %v1400
    %v1402 = vrot.slane %v278, 7
    %v1403 = vsel %vm1396, %v1400, %v1402
    %v1404 = vrot.slane %v279, 7
    %v1405 = vsel %vm1396, %v1402, %v1404
    %v1406 = vrot.slane %v280, 7
    %v1407 = vsel %vm1396, %v1404, %v1406
    %v1408 = vrot.slane %v281, 7
    %v1409 = vsel %vm1396, %v1406, %v1408
    %v1410 = vrot.slane %v282, 7
    %v1411 = vsel %vm1396, %v1408, %v1410
    %v1412 = vrot.slane %v283, 7
    %v1413 = vsel %vm1396, %v1410, %v1412
    %v1414 = vrot.slane %v284, 7
    %v1415 = vsel %vm1396, %v1412, %v1414
    %v1416 = vsel %vm323, %v1399, 0
    %v1418 = vsel %vm323, %v1401, 0
    %v1420 = vsel %vm323, %v1403, 0
    %v1422 = vsel %vm323, %v1405, 0
    %v1424 = vsel %vm323, %v1407, 0
    %v1426 = vsel %vm323, %v1409, 0
    %v1428 = vsel %vm323, %v1411, 0
    %v1430 = vsel %vm323, %v1413, 0
    %v1432 = vsel %vm323, %v1415, 0
    %1434 = vmatprep.subr.mxu0 0.0
    %1435 = vmatpush1.msra.mxu0 %v1391
    %1436 = vmatprep.subr.mxu0 0.0
    %1437 = vmatpush1.msra.mxu0 %v1392
    %1438 = vmatprep.subr.mxu0 0.0
    %1439 = vmatpush1.msra.mxu0 %v1393
    %1440 = vmatprep.subr.mxu0 0.0
    %1441 = vmatpush1.msra.mxu0 %v1394
    %1442 = vmatprep.subr.mxu0 0.0
    %1443 = vmatpush1.msra.mxu0 %v1395
    %1444 = vmatprep.subr.mxu0 0.0
    %1445 = vmatpush1.msra.mxu0 0.0
    %1446 = vmatprep.subr.mxu0 0.0
    %1447 = vmatpush1.msra.mxu0 0.0
    %1448 = vmatprep.subr.mxu0 0.0
    %1449 = vmatpush1.msra.mxu0 0.0
    %1450 = vmatprep.subr.mxu0 0.0
    %1451 = vmatpush1.msra.mxu0 0.0
    %1452 = vmatprep.subr.mxu0 0.0
    %1453 = vmatpush1.msra.mxu0 0.0
    %1454 = vmatprep.subr.mxu0 0.0
    %1455 = vmatpush1.msra.mxu0 0.0
    %1456 = vmatprep.subr.mxu0 0.0
    %1457 = vmatpush1.msra.mxu0 0.0
    %1458 = vmatprep.subr.mxu0 0.0
    %1459 = vmatpush1.msra.mxu0 0.0
    %1460 = vmatprep.subr.mxu0 0.0
    %1461 = vmatpush1.msra.mxu0 0.0
    %1462 = vmatprep.subr.mxu0 0.0
    %1463 = vmatpush1.msra.mxu0 0.0
    %1464 = vmatprep.subr.mxu0 0.0
    %1465 = vmatpush1.msra.mxu0 0.0
    %1466 = vmatprep.subr.mxu0 0.0
    %1467 = vmatpush1.msra.mxu0 0.0
    %1468 = vmatprep.subr.mxu0 0.0
    %1469 = vmatpush1.msra.mxu0 0.0
    %1470 = vmatprep.subr.mxu0 0.0
    %1471 = vmatpush1.msra.mxu0 0.0
    %1472 = vmatprep.subr.mxu0 0.0
    %1473 = vmatpush1.msra.mxu0 0.0
    %1474 = vmatprep.subr.mxu0 0.0
    %1475 = vmatpush1.msra.mxu0 0.0
    %1476 = vmatprep.subr.mxu0 0.0
    %1477 = vmatpush1.msra.mxu0 0.0
    %1478 = vmatprep.subr.mxu0 0.0
    %1479 = vmatpush1.msra.mxu0 0.0
    %1480 = vmatprep.subr.mxu0 0.0
    %1481 = vmatpush1.msra.mxu0 0.0
    %1482 = vmatprep.subr.mxu0 0.0
    %1483 = vmatpush1.msra.mxu0 0.0
    %1484 = vmatprep.subr.mxu0 0.0
    %1485 = vmatpush1.msra.mxu0 0.0
    %1486 = vmatprep.subr.mxu0 0.0
    %1487 = vmatpush1.msra.mxu0 0.0
    %1488 = vmatprep.subr.mxu0 0.0
    %1489 = vmatpush1.msra.mxu0 0.0
    %1490 = vmatprep.subr.mxu0 0.0
    %1491 = vmatpush1.msra.mxu0 0.0
    %1492 = vmatprep.subr.mxu0 0.0
    %1493 = vmatpush1.msra.mxu0 0.0
    %1494 = vmatprep.subr.mxu0 0.0
    %1495 = vmatpush1.msra.mxu0 0.0
    %1496 = vmatprep.subr.mxu0 0.0
    %1497 = vmatpush1.msra.mxu0 0.0
    %1498 = vmatprep.mubr.f32.mxu0 0.0
    %1499 = vmatmul.mubr.f32.gmra.mrb[0].mxu0 %v1416
    %v1500 = vpop.f32.mrb[0].mxu0
    %v1501 = vadd.f32 0.0, %v1500
    %v1502 = vpop.f32.mrb[0].mxu0
    %1503 = vmatprep.mubr.f32.mxu0 0.0
    %1504 = vmatmul.mubr.f32.gmra.mrb[0].mxu0 %v1418
    %v1505 = vpop.f32.mrb[0].mxu0
    %v1506 = vadd.f32 0.0, %v1505
    %v1507 = vpop.f32.mrb[0].mxu0
    %1508 = vmatprep.mubr.f32.mxu0 0.0
    %1509 = vmatmul.mubr.f32.gmra.mrb[0].mxu0 %v1420
    %v1510 = vpop.f32.mrb[0].mxu0
    %v1511 = vadd.f32 0.0, %v1510
    %v1512 = vpop.f32.mrb[0].mxu0
    %1513 = vmatprep.mubr.f32.mxu0 0.0
    %1514 = vmatmul.mubr.f32.gmra.mrb[0].mxu0 %v1422
    %v1515 = vpop.f32.mrb[0].mxu0
    %v1516 = vadd.f32 0.0, %v1515
    %v1517 = vpop.f32.mrb[0].mxu0
    %1518 = vmatprep.mubr.f32.mxu0 0.0
    %1519 = vmatmul.mubr.f32.gmra.mrb[0].mxu0 %v1424
    %v1520 = vpop.f32.mrb[0].mxu0
    %v1521 = vadd.f32 0.0, %v1520
    %v1522 = vpop.f32.mrb[0].mxu0
    %1523 = vmatprep.mubr.f32.mxu0 0.0
    %1524 = vmatmul.mubr.f32.gmra.mrb[0].mxu0 %v1426
    %v1525 = vpop.f32.mrb[0].mxu0
    %v1526 = vadd.f32 0.0, %v1525
    %v1527 = vpop.f32.mrb[0].mxu0
    %1528 = vmatprep.mubr.f32.mxu0 0.0
    %1529 = vmatmul.mubr.f32.gmra.mrb[0].mxu0 %v1428
    %v1530 = vpop.f32.mrb[0].mxu0
    %v1531 = vadd.f32 0.0, %v1530
    %v1532 = vpop.f32.mrb[0].mxu0
    %1533 = vmatprep.mubr.f32.mxu0 0.0
    %1534 = vmatmul.mubr.f32.gmra.mrb[0].mxu0 %v1430
    %v1535 = vpop.f32.mrb[0].mxu0
    %v1536 = vadd.f32 0.0, %v1535
    %v1537 = vpop.f32.mrb[0].mxu0
    %1538 = vmatprep.mubr.f32.mxu0 0.0
    %1539 = vmatmul.mubr.f32.gmra.mrb[0].mxu0 %v1432
    %v1540 = vpop.f32.mrb[0].mxu0
    %v1541 = vadd.f32 0.0, %v1540
    %v1542 = vpop.f32.mrb[0].mxu0
    %1543 = vdwg.mxu0
    %v1544 = vadd.f32 %v1381, %v1501
    %v1545 = vadd.f32 %v1382, %v1506
    %v1546 = vadd.f32 %v1383, %v1511
    %v1547 = vadd.f32 %v1384, %v1516
    %v1548 = vadd.f32 %v1385, %v1521
    %v1549 = vadd.f32 %v1386, %v1526
    %v1550 = vadd.f32 %v1387, %v1531
    %v1551 = vadd.f32 %v1388, %v1536
    %v1552 = vadd.f32 %v1389, %v1541
    %s1553 = scalar_lea.vmem [#allocation8], 320
    %v1554 = vld [vmem:[%s1553] sm:$0xff]
    %v1555 = vld [vmem:[%s1553 + $0x8] sm:$0xff]
    %v1556 = vld [vmem:[%s1553 + $0x10] sm:$0xff]
    %v1557 = vld [vmem:[%s1553 + $0x18] sm:$0xff]
    %v1558 = vld [vmem:[%s1553 + $0x20] sm:$0xff]
    %v1559 = vsel %vm323, %v284, 0
    %1561 = vmatprep.subr.mxu0 0.0
    %1562 = vmatpush1.msra.mxu0 %v1554
    %1563 = vmatprep.subr.mxu0 0.0
    %1564 = vmatpush1.msra.mxu0 %v1555
    %1565 = vmatprep.subr.mxu0 0.0
    %1566 = vmatpush1.msra.mxu0 %v1556
    %1567 = vmatprep.subr.mxu0 0.0
    %1568 = vmatpush1.msra.mxu0 %v1557
    %1569 = vmatprep.subr.mxu0 0.0
    %1570 = vmatpush1.msra.mxu0 %v1558
    %1571 = vmatprep.subr.mxu0 0.0
    %1572 = vmatpush1.msra.mxu0 0.0
    %1573 = vmatprep.subr.mxu0 0.0
    %1574 = vmatpush1.msra.mxu0 0.0
    %1575 = vmatprep.subr.mxu0 0.0
    %1576 = vmatpush1.msra.mxu0 0.0
    %1577 = vmatprep.subr.mxu0 0.0
    %1578 = vmatpush1.msra.mxu0 0.0
    %1579 = vmatprep.subr.mxu0 0.0
    %1580 = vmatpush1.msra.mxu0 0.0
    %1581 = vmatprep.subr.mxu0 0.0
    %1582 = vmatpush1.msra.mxu0 0.0
    %1583 = vmatprep.subr.mxu0 0.0
    %1584 = vmatpush1.msra.mxu0 0.0
    %1585 = vmatprep.subr.mxu0 0.0
    %1586 = vmatpush1.msra.mxu0 0.0
    %1587 = vmatprep.subr.mxu0 0.0
    %1588 = vmatpush1.msra.mxu0 0.0
    %1589 = vmatprep.subr.mxu0 0.0
    %1590 = vmatpush1.msra.mxu0 0.0
    %1591 = vmatprep.subr.mxu0 0.0
    %1592 = vmatpush1.msra.mxu0 0.0
    %1593 = vmatprep.subr.mxu0 0.0
    %1594 = vmatpush1.msra.mxu0 0.0
    %1595 = vmatprep.subr.mxu0 0.0
    %1596 = vmatpush1.msra.mxu0 0.0
    %1597 = vmatprep.subr.mxu0 0.0
    %1598 = vmatpush1.msra.mxu0 0.0
    %1599 = vmatprep.subr.mxu0 0.0
    %1600 = vmatpush1.msra.mxu0 0.0
    %1601 = vmatprep.subr.mxu0 0.0
    %1602 = vmatpush1.msra.mxu0 0.0
    %1603 = vmatprep.subr.mxu0 0.0
    %1604 = vmatpush1.msra.mxu0 0.0
    %1605 = vmatprep.subr.mxu0 0.0
    %1606 = vmatpush1.msra.mxu0 0.0
    %1607 = vmatprep.subr.mxu0 0.0
    %1608 = vmatpush1.msra.mxu0 0.0
    %1609 = vmatprep.subr.mxu0 0.0
    %1610 = vmatpush1.msra.mxu0 0.0
    %1611 = vmatprep.subr.mxu0 0.0
    %1612 = vmatpush1.msra.mxu0 0.0
    %1613 = vmatprep.subr.mxu0 0.0
    %1614 = vmatpush1.msra.mxu0 0.0
    %1615 = vmatprep.subr.mxu0 0.0
    %1616 = vmatpush1.msra.mxu0 0.0
    %1617 = vmatprep.subr.mxu0 0.0
    %1618 = vmatpush1.msra.mxu0 0.0
    %1619 = vmatprep.subr.mxu0 0.0
    %1620 = vmatpush1.msra.mxu0 0.0
    %1621 = vmatprep.subr.mxu0 0.0
    %1622 = vmatpush1.msra.mxu0 0.0
    %1623 = vmatprep.subr.mxu0 0.0
    %1624 = vmatpush1.msra.mxu0 0.0
    %1625 = vmatprep.mubr.f32.mxu0 0.0
    %1626 = vmatmul.mubr.f32.gmra.mrb[0].mxu0 %v454
    %v1627 = vpop.f32.mrb[0].mxu0
    %v1628 = vadd.f32 0.0, %v1627
    %v1629 = vpop.f32.mrb[0].mxu0
    %1630 = vmatprep.mubr.f32.mxu0 0.0
    %1631 = vmatmul.mubr.f32.gmra.mrb[0].mxu0 %v456
    %v1632 = vpop.f32.mrb[0].mxu0
    %v1633 = vadd.f32 0.0, %v1632
    %v1634 = vpop.f32.mrb[0].mxu0
    %1635 = vmatprep.mubr.f32.mxu0 0.0
    %1636 = vmatmul.mubr.f32.gmra.mrb[0].mxu0 %v458
    %v1637 = vpop.f32.mrb[0].mxu0
    %v1638 = vadd.f32 0.0, %v1637
    %v1639 = vpop.f32.mrb[0].mxu0
    %1640 = vmatprep.mubr.f32.mxu0 0.0
    %1641 = vmatmul.mubr.f32.gmra.mrb[0].mxu0 %v460
    %v1642 = vpop.f32.mrb[0].mxu0
    %v1643 = vadd.f32 0.0, %v1642
    %v1644 = vpop.f32.mrb[0].mxu0
    %1645 = vmatprep.mubr.f32.mxu0 0.0
    %1646 = vmatmul.mubr.f32.gmra.mrb[0].mxu0 %v462
    %v1647 = vpop.f32.mrb[0].mxu0
    %v1648 = vadd.f32 0.0, %v1647
    %v1649 = vpop.f32.mrb[0].mxu0
    %1650 = vmatprep.mubr.f32.mxu0 0.0
    %1651 = vmatmul.mubr.f32.gmra.mrb[0].mxu0 %v464
    %v1652 = vpop.f32.mrb[0].mxu0
    %v1653 = vadd.f32 0.0, %v1652
    %v1654 = vpop.f32.mrb[0].mxu0
    %1655 = vmatprep.mubr.f32.mxu0 0.0
    %1656 = vmatmul.mubr.f32.gmra.mrb[0].mxu0 %v466
    %v1657 = vpop.f32.mrb[0].mxu0
    %v1658 = vadd.f32 0.0, %v1657
    %v1659 = vpop.f32.mrb[0].mxu0
    %1660 = vmatprep.mubr.f32.mxu0 0.0
    %1661 = vmatmul.mubr.f32.gmra.mrb[0].mxu0 %v468
    %v1662 = vpop.f32.mrb[0].mxu0
    %v1663 = vadd.f32 0.0, %v1662
    %v1664 = vpop.f32.mrb[0].mxu0
    %1665 = vmatprep.mubr.f32.mxu0 0.0
    %1666 = vmatmul.mubr.f32.gmra.mrb[0].mxu0 %v1559
    %v1667 = vpop.f32.mrb[0].mxu0
    %v1668 = vadd.f32 0.0, %v1667
    %v1669 = vpop.f32.mrb[0].mxu0
    %1670 = vdwg.mxu0
    %v1671 = vadd.f32 %v1544, %v1628
    %v1672 = vadd.f32 %v1545, %v1633
    %v1673 = vadd.f32 %v1546, %v1638
    %v1674 = vadd.f32 %v1547, %v1643
    %v1675 = vadd.f32 %v1548, %v1648
    %v1676 = vadd.f32 %v1549, %v1653
    %v1677 = vadd.f32 %v1550, %v1658
    %v1678 = vadd.f32 %v1551, %v1663
    %v1679 = vadd.f32 %v1552, %v1668
    %s1680 = scalar_lea.vmem [#allocation8], 360
    %v1681 = vld [vmem:[%s1680] sm:$0xff]
    %v1682 = vld [vmem:[%s1680 + $0x8] sm:$0xff]
    %v1683 = vld [vmem:[%s1680 + $0x10] sm:$0xff]
    %v1684 = vld [vmem:[%s1680 + $0x18] sm:$0xff]
    %v1685 = vld [vmem:[%s1680 + $0x20] sm:$0xff]
    %v1686 = vrot.slane %v284, 1
    %v1687 = vsel %vm305, %v321, %v1686
    %v1688 = vsel %vm323, %v1687, 0
    %v1690 = vsel %vm323, %v1686, 0
    %1692 = vmatprep.subr.mxu0 0.0
    %1693 = vmatpush1.msra.mxu0 %v1681
    %1694 = vmatprep.subr.mxu0 0.0
    %1695 = vmatpush1.msra.mxu0 %v1682
    %1696 = vmatprep.subr.mxu0 0.0
    %1697 = vmatpush1.msra.mxu0 %v1683
    %1698 = vmatprep.subr.mxu0 0.0
    %1699 = vmatpush1.msra.mxu0 %v1684
    %1700 = vmatprep.subr.mxu0 0.0
    %1701 = vmatpush1.msra.mxu0 %v1685
    %1702 = vmatprep.subr.mxu0 0.0
    %1703 = vmatpush1.msra.mxu0 0.0
    %1704 = vmatprep.subr.mxu0 0.0
    %1705 = vmatpush1.msra.mxu0 0.0
    %1706 = vmatprep.subr.mxu0 0.0
    %1707 = vmatpush1.msra.mxu0 0.0
    %1708 = vmatprep.subr.mxu0 0.0
    %1709 = vmatpush1.msra.mxu0 0.0
    %1710 = vmatprep.subr.mxu0 0.0
    %1711 = vmatpush1.msra.mxu0 0.0
    %1712 = vmatprep.subr.mxu0 0.0
    %1713 = vmatpush1.msra.mxu0 0.0
    %1714 = vmatprep.subr.mxu0 0.0
    %1715 = vmatpush1.msra.mxu0 0.0
    %1716 = vmatprep.subr.mxu0 0.0
    %1717 = vmatpush1.msra.mxu0 0.0
    %1718 = vmatprep.subr.mxu0 0.0
    %1719 = vmatpush1.msra.mxu0 0.0
    %1720 = vmatprep.subr.mxu0 0.0
    %1721 = vmatpush1.msra.mxu0 0.0
    %1722 = vmatprep.subr.mxu0 0.0
    %1723 = vmatpush1.msra.mxu0 0.0
    %1724 = vmatprep.subr.mxu0 0.0
    %1725 = vmatpush1.msra.mxu0 0.0
    %1726 = vmatprep.subr.mxu0 0.0
    %1727 = vmatpush1.msra.mxu0 0.0
    %1728 = vmatprep.subr.mxu0 0.0
    %1729 = vmatpush1.msra.mxu0 0.0
    %1730 = vmatprep.subr.mxu0 0.0
    %1731 = vmatpush1.msra.mxu0 0.0
    %1732 = vmatprep.subr.mxu0 0.0
    %1733 = vmatpush1.msra.mxu0 0.0
    %1734 = vmatprep.subr.mxu0 0.0
    %1735 = vmatpush1.msra.mxu0 0.0
    %1736 = vmatprep.subr.mxu0 0.0
    %1737 = vmatpush1.msra.mxu0 0.0
    %1738 = vmatprep.subr.mxu0 0.0
    %1739 = vmatpush1.msra.mxu0 0.0
    %1740 = vmatprep.subr.mxu0 0.0
    %1741 = vmatpush1.msra.mxu0 0.0
    %1742 = vmatprep.subr.mxu0 0.0
    %1743 = vmatpush1.msra.mxu0 0.0
    %1744 = vmatprep.subr.mxu0 0.0
    %1745 = vmatpush1.msra.mxu0 0.0
    %1746 = vmatprep.subr.mxu0 0.0
    %1747 = vmatpush1.msra.mxu0 0.0
    %1748 = vmatprep.subr.mxu0 0.0
    %1749 = vmatpush1.msra.mxu0 0.0
    %1750 = vmatprep.subr.mxu0 0.0
    %1751 = vmatpush1.msra.mxu0 0.0
    %1752 = vmatprep.subr.mxu0 0.0
    %1753 = vmatpush1.msra.mxu0 0.0
    %1754 = vmatprep.subr.mxu0 0.0
    %1755 = vmatpush1.msra.mxu0 0.0
    %1756 = vmatprep.mubr.f32.mxu0 0.0
    %1757 = vmatmul.mubr.f32.gmra.mrb[0].mxu0 %v326
    %v1758 = vpop.f32.mrb[0].mxu0
    %v1759 = vadd.f32 0.0, %v1758
    %v1760 = vpop.f32.mrb[0].mxu0
    %1761 = vmatprep.mubr.f32.mxu0 0.0
    %1762 = vmatmul.mubr.f32.gmra.mrb[0].mxu0 %v328
    %v1763 = vpop.f32.mrb[0].mxu0
    %v1764 = vadd.f32 0.0, %v1763
    %v1765 = vpop.f32.mrb[0].mxu0
    %1766 = vmatprep.mubr.f32.mxu0 0.0
    %1767 = vmatmul.mubr.f32.gmra.mrb[0].mxu0 %v330
    %v1768 = vpop.f32.mrb[0].mxu0
    %v1769 = vadd.f32 0.0, %v1768
    %v1770 = vpop.f32.mrb[0].mxu0
    %1771 = vmatprep.mubr.f32.mxu0 0.0
    %1772 = vmatmul.mubr.f32.gmra.mrb[0].mxu0 %v332
    %v1773 = vpop.f32.mrb[0].mxu0
    %v1774 = vadd.f32 0.0, %v1773
    %v1775 = vpop.f32.mrb[0].mxu0
    %1776 = vmatprep.mubr.f32.mxu0 0.0
    %1777 = vmatmul.mubr.f32.gmra.mrb[0].mxu0 %v334
    %v1778 = vpop.f32.mrb[0].mxu0
    %v1779 = vadd.f32 0.0, %v1778
    %v1780 = vpop.f32.mrb[0].mxu0
    %1781 = vmatprep.mubr.f32.mxu0 0.0
    %1782 = vmatmul.mubr.f32.gmra.mrb[0].mxu0 %v336
    %v1783 = vpop.f32.mrb[0].mxu0
    %v1784 = vadd.f32 0.0, %v1783
    %v1785 = vpop.f32.mrb[0].mxu0
    %1786 = vmatprep.mubr.f32.mxu0 0.0
    %1787 = vmatmul.mubr.f32.gmra.mrb[0].mxu0 %v338
    %v1788 = vpop.f32.mrb[0].mxu0
    %v1789 = vadd.f32 0.0, %v1788
    %v1790 = vpop.f32.mrb[0].mxu0
    %1791 = vmatprep.mubr.f32.mxu0 0.0
    %1792 = vmatmul.mubr.f32.gmra.mrb[0].mxu0 %v1688
    %v1793 = vpop.f32.mrb[0].mxu0
    %v1794 = vadd.f32 0.0, %v1793
    %v1795 = vpop.f32.mrb[0].mxu0
    %1796 = vmatprep.mubr.f32.mxu0 0.0
    %1797 = vmatmul.mubr.f32.gmra.mrb[0].mxu0 %v1690
    %v1798 = vpop.f32.mrb[0].mxu0
    %v1799 = vadd.f32 0.0, %v1798
    %v1800 = vpop.f32.mrb[0].mxu0
    %1801 = vdwg.mxu0
    %v1802 = vadd.f32 %v1671, %v1759
    %v1803 = vadd.f32 %v1672, %v1764
    %v1804 = vadd.f32 %v1673, %v1769
    %v1805 = vadd.f32 %v1674, %v1774
    %v1806 = vadd.f32 %v1675, %v1779
    %v1807 = vadd.f32 %v1676, %v1784
    %v1808 = vadd.f32 %v1677, %v1789
    %v1809 = vadd.f32 %v1678, %v1794
    %v1810 = vadd.f32 %v1679, %v1799
    %v1811 = vld [vmem:[#allocation10] sm:$0x1]
    %v1813 = vlaneseq
    %v1814 = vshrl.u32 %v1813, 7
    %v1815 = vsub.s32 0, %v1814
    %v1816 = vrot.slane %v1811, %v1815
    %v1818 = vadd.f32 %v1802, %v1816
    %v1819 = vadd.f32 %v1803, %v1816
    %v1820 = vadd.f32 %v1804, %v1816
    %v1821 = vadd.f32 %v1805, %v1816
    %v1822 = vadd.f32 %v1806, %v1816
    %v1823 = vadd.f32 %v1807, %v1816
    %v1824 = vadd.f32 %v1808, %v1816
    %v1825 = vadd.f32 %v1809, %v1816
    %v1826 = vadd.f32 %v1810, %v1816
    %v1827 = vmax.f32 %v1818, 0.0
    %v1828 = vmax.f32 %v1819, 0.0
    %v1829 = vmax.f32 %v1820, 0.0
    %v1830 = vmax.f32 %v1821, 0.0
    %v1831 = vmax.f32 %v1822, 0.0
    %v1832 = vmax.f32 %v1823, 0.0
    %v1833 = vmax.f32 %v1824, 0.0
    %v1834 = vmax.f32 %v1825, 0.0
    %v1835 = vmax.f32 %v1826, 0.0
    %vm1836 = vcmask 523264
    %1837 = vst.msk [vmem:[#allocation2] sm:$0xff] %vm1836, %v1827
    %1838 = vst.msk [vmem:[#allocation2 + $0x8] sm:$0xff] %vm1836, %v1828
    %1839 = vst.msk [vmem:[#allocation2 + $0x10] sm:$0xff] %vm1836, %v1829
    %1840 = vst.msk [vmem:[#allocation2 + $0x18] sm:$0xff] %vm1836, %v1830
    %1841 = vst.msk [vmem:[#allocation2 + $0x20] sm:$0xff] %vm1836, %v1831
    %1842 = vst.msk [vmem:[#allocation2 + $0x28] sm:$0xff] %vm1836, %v1832
    %1843 = vst.msk [vmem:[#allocation2 + $0x30] sm:$0xff] %vm1836, %v1833
    %1844 = vst.msk [vmem:[#allocation2 + $0x38] sm:$0xff] %vm1836, %v1834
    %vm1845 = vcmask 519168
    %1846 = vst.msk [vmem:[#allocation2 + $0x40] sm:$0xf] %vm1845, %v1835
    %v1847 = vld [vmem:[#allocation2] ss:$4 sm:$0xff]
    %s1848 = scalar_lea.vmem [#allocation2], 32
    %v1849 = vld [vmem:[%s1848] ss:$4 sm:$0xff]
    %s1850 = scalar_lea.vmem [#allocation2], 1
    %v1851 = vld [vmem:[%s1850] ss:$4 sm:$0xff]
    %s1852 = scalar_lea.vmem [#allocation2], 33
    %v1853 = vld [vmem:[%s1852] ss:$4 sm:$0xff]
    %v1854 = vmax.f32 %v1847, %v1851
    %v1855 = vmax.f32 %v1849, %v1853
    %s1856 = scalar_lea.vmem [#allocation2], 2
    %v1857 = vld [vmem:[%s1856] ss:$4 sm:$0xff]
    %s1858 = scalar_lea.vmem [#allocation2], 34
    %v1859 = vld [vmem:[%s1858] ss:$4 sm:$0xff]
    %v1860 = vmax.f32 %v1854, %v1857
    %v1861 = vmax.f32 %v1855, %v1859
    %s1862 = scalar_lea.vmem [#allocation2], 3
    %v1863 = vld [vmem:[%s1862] ss:$4 sm:$0xff]
    %s1864 = scalar_lea.vmem [#allocation2], 35
    %v1865 = vld [vmem:[%s1864] ss:$4 sm:$0xff]
    %v1866 = vmax.f32 %v1860, %v1863
    %v1867 = vmax.f32 %v1861, %v1865
    %s1868 = scalar_lea.vmem [#allocation2], 4
    %v1869 = vld [vmem:[%s1868] ss:$4 sm:$0xff]
    %s1870 = scalar_lea.vmem [#allocation2], 36
    %v1871 = vld [vmem:[%s1870] ss:$4 sm:$0xff]
    %v1872 = vmax.f32 %v1866, %v1869
    %v1873 = vmax.f32 %v1867, %v1871
    %s1874 = scalar_lea.vmem [#allocation2], 5
    %v1875 = vld [vmem:[%s1874] ss:$4 sm:$0xff]
    %s1876 = scalar_lea.vmem [#allocation2], 37
    %v1877 = vld [vmem:[%s1876] ss:$4 sm:$0xff]
    %v1878 = vmax.f32 %v1872, %v1875
    %v1879 = vmax.f32 %v1873, %v1877
    %v1880 = vld [vmem:[#allocation11] sm:$0xff]
    %v1881 = vld [vmem:[#allocation11 + $0x8] sm:$0xff]
    %v1882 = vld [vmem:[#allocation11 + $0x10] sm:$0xff]
    %v1883 = vld [vmem:[#allocation11 + $0x18] sm:$0xff]
    %v1884 = vld [vmem:[#allocation11 + $0x20] sm:$0xff]
    %v1885 = vld [vmem:[#allocation11 + $0x28] sm:$0xff]
    %v1886 = vld [vmem:[#allocation11 + $0x30] sm:$0xff]
    %v1887 = vld [vmem:[#allocation11 + $0x38] sm:$0xff]
    %s1888 = scalar_lea.vmem [#allocation11], 64
    %v1889 = vld [vmem:[%s1888] sm:$0xff]
    %v1890 = vld [vmem:[%s1888 + $0x8] sm:$0xff]
    %v1891 = vld [vmem:[%s1888 + $0x10] sm:$0xff]
    %v1892 = vld [vmem:[%s1888 + $0x18] sm:$0xff]
    %v1893 = vld [vmem:[%s1888 + $0x20] sm:$0xff]
    %v1894 = vld [vmem:[%s1888 + $0x28] sm:$0xff]
    %v1895 = vld [vmem:[%s1888 + $0x30] sm:$0xff]
    %v1896 = vld [vmem:[%s1888 + $0x38] sm:$0xff]
    %v1899 = vrot.slane %v1878, 1
    %v1900 = vrot.slane %v1879, 1
    %v1901 = vsel %vm305, %v1899, %v1900
    %v1902 = vsel %vm1836, %v1901, 0
    %v1904 = vsel %vm1836, %v1900, 0
    %1906 = vmatprep.subr.mxu0 0.0
    %1907 = vmatpush1.msra.mxu0 %v1889
    %1908 = vmatprep.subr.mxu0 0.0
    %1909 = vmatpush1.msra.mxu0 %v1890
    %1910 = vmatprep.subr.mxu0 0.0
    %1911 = vmatpush1.msra.mxu0 %v1891
    %1912 = vmatprep.subr.mxu0 0.0
    %1913 = vmatpush1.msra.mxu0 %v1892
    %1914 = vmatprep.subr.mxu0 0.0
    %1915 = vmatpush1.msra.mxu0 %v1893
    %1916 = vmatprep.subr.mxu0 0.0
    %1917 = vmatpush1.msra.mxu0 %v1894
    %1918 = vmatprep.subr.mxu0 0.0
    %1919 = vmatpush1.msra.mxu0 %v1895
    %1920 = vmatprep.subr.mxu0 0.0
    %1921 = vmatpush1.msra.mxu0 %v1896
    %1922 = vmatprep.subr.mxu0 0.0
    %1923 = vmatpush1.msra.mxu0 0.0
    %1924 = vmatprep.subr.mxu0 0.0
    %1925 = vmatpush1.msra.mxu0 0.0
    %1926 = vmatprep.subr.mxu0 0.0
    %1927 = vmatpush1.msra.mxu0 0.0
    %1928 = vmatprep.subr.mxu0 0.0
    %1929 = vmatpush1.msra.mxu0 0.0
    %1930 = vmatprep.subr.mxu0 0.0
    %1931 = vmatpush1.msra.mxu0 0.0
    %1932 = vmatprep.subr.mxu0 0.0
    %1933 = vmatpush1.msra.mxu0 0.0
    %1934 = vmatprep.subr.mxu0 0.0
    %1935 = vmatpush1.msra.mxu0 0.0
    %1936 = vmatprep.subr.mxu0 0.0
    %1937 = vmatpush1.msra.mxu0 0.0
    %1938 = vmatprep.subr.mxu0 0.0
    %1939 = vmatpush1.msra.mxu0 0.0
    %1940 = vmatprep.subr.mxu0 0.0
    %1941 = vmatpush1.msra.mxu0 0.0
    %1942 = vmatprep.subr.mxu0 0.0
    %1943 = vmatpush1.msra.mxu0 0.0
    %1944 = vmatprep.subr.mxu0 0.0
    %1945 = vmatpush1.msra.mxu0 0.0
    %1946 = vmatprep.subr.mxu0 0.0
    %1947 = vmatpush1.msra.mxu0 0.0
    %1948 = vmatprep.subr.mxu0 0.0
    %1949 = vmatpush1.msra.mxu0 0.0
    %1950 = vmatprep.subr.mxu0 0.0
    %1951 = vmatpush1.msra.mxu0 0.0
    %1952 = vmatprep.subr.mxu0 0.0
    %1953 = vmatpush1.msra.mxu0 0.0
    %1954 = vmatprep.subr.mxu0 0.0
    %1955 = vmatpush1.msra.mxu0 0.0
    %1956 = vmatprep.subr.mxu0 0.0
    %1957 = vmatpush1.msra.mxu0 0.0
    %1958 = vmatprep.subr.mxu0 0.0
    %1959 = vmatpush1.msra.mxu0 0.0
    %1960 = vmatprep.subr.mxu0 0.0
    %1961 = vmatpush1.msra.mxu0 0.0
    %1962 = vmatprep.subr.mxu0 0.0
    %1963 = vmatpush1.msra.mxu0 0.0
    %1964 = vmatprep.subr.mxu0 0.0
    %1965 = vmatpush1.msra.mxu0 0.0
    %1966 = vmatprep.subr.mxu0 0.0
    %1967 = vmatpush1.msra.mxu0 0.0
    %1968 = vmatprep.subr.mxu0 0.0
    %1969 = vmatpush1.msra.mxu0 0.0
    %1970 = vmatprep.mubr.f32.mxu0 0.0
    %1971 = vmatmul.mubr.f32.gmra.mrb[0].mxu0 %v1902
    %v1972 = vpop.f32.mrb[0].mxu0
    %v1973 = vadd.f32 0.0, %v1972
    %v1974 = vpop.f32.mrb[0].mxu0
    %1975 = vmatprep.mubr.f32.mxu0 0.0
    %1976 = vmatmul.mubr.f32.gmra.mrb[0].mxu0 %v1904
    %v1977 = vpop.f32.mrb[0].mxu0
    %v1978 = vadd.f32 0.0, %v1977
    %v1979 = vpop.f32.mrb[0].mxu0
    %1980 = vdwg.mxu0
    %v1981 = vsel %vm1836, %v1878, 0
    %v1983 = vsel %vm1836, %v1879, 0
    %1985 = vmatprep.subr.mxu0 0.0
    %1986 = vmatpush1.msra.mxu0 %v1880
    %1987 = vmatprep.subr.mxu0 0.0
    %1988 = vmatpush1.msra.mxu0 %v1881
    %1989 = vmatprep.subr.mxu0 0.0
    %1990 = vmatpush1.msra.mxu0 %v1882
    %1991 = vmatprep.subr.mxu0 0.0
    %1992 = vmatpush1.msra.mxu0 %v1883
    %1993 = vmatprep.subr.mxu0 0.0
    %1994 = vmatpush1.msra.mxu0 %v1884
    %1995 = vmatprep.subr.mxu0 0.0
    %1996 = vmatpush1.msra.mxu0 %v1885
    %1997 = vmatprep.subr.mxu0 0.0
    %1998 = vmatpush1.msra.mxu0 %v1886
    %1999 = vmatprep.subr.mxu0 0.0
    %2000 = vmatpush1.msra.mxu0 %v1887
    %2001 = vmatprep.subr.mxu0 0.0
    %2002 = vmatpush1.msra.mxu0 0.0
    %2003 = vmatprep.subr.mxu0 0.0
    %2004 = vmatpush1.msra.mxu0 0.0
    %2005 = vmatprep.subr.mxu0 0.0
    %2006 = vmatpush1.msra.mxu0 0.0
    %2007 = vmatprep.subr.mxu0 0.0
    %2008 = vmatpush1.msra.mxu0 0.0
    %2009 = vmatprep.subr.mxu0 0.0
    %2010 = vmatpush1.msra.mxu0 0.0
    %2011 = vmatprep.subr.mxu0 0.0
    %2012 = vmatpush1.msra.mxu0 0.0
    %2013 = vmatprep.subr.mxu0 0.0
    %2014 = vmatpush1.msra.mxu0 0.0
    %2015 = vmatprep.subr.mxu0 0.0
    %2016 = vmatpush1.msra.mxu0 0.0
    %2017 = vmatprep.subr.mxu0 0.0
    %2018 = vmatpush1.msra.mxu0 0.0
    %2019 = vmatprep.subr.mxu0 0.0
    %2020 = vmatpush1.msra.mxu0 0.0
    %2021 = vmatprep.subr.mxu0 0.0
    %2022 = vmatpush1.msra.mxu0 0.0
    %2023 = vmatprep.subr.mxu0 0.0
    %2024 = vmatpush1.msra.mxu0 0.0
    %2025 = vmatprep.subr.mxu0 0.0
    %2026 = vmatpush1.msra.mxu0 0.0
    %2027 = vmatprep.subr.mxu0 0.0
    %2028 = vmatpush1.msra.mxu0 0.0
    %2029 = vmatprep.subr.mxu0 0.0
    %2030 = vmatpush1.msra.mxu0 0.0
    %2031 = vmatprep.subr.mxu0 0.0
    %2032 = vmatpush1.msra.mxu0 0.0
    %2033 = vmatprep.subr.mxu0 0.0
    %2034 = vmatpush1.msra.mxu0 0.0
    %2035 = vmatprep.subr.mxu0 0.0
    %2036 = vmatpush1.msra.mxu0 0.0
    %2037 = vmatprep.subr.mxu0 0.0
    %2038 = vmatpush1.msra.mxu0 0.0
    %2039 = vmatprep.subr.mxu0 0.0
    %2040 = vmatpush1.msra.mxu0 0.0
    %2041 = vmatprep.subr.mxu0 0.0
    %2042 = vmatpush1.msra.mxu0 0.0
    %2043 = vmatprep.subr.mxu0 0.0
    %2044 = vmatpush1.msra.mxu0 0.0
    %2045 = vmatprep.subr.mxu0 0.0
    %2046 = vmatpush1.msra.mxu0 0.0
    %2047 = vmatprep.subr.mxu0 0.0
    %2048 = vmatpush1.msra.mxu0 0.0
    %2049 = vmatprep.mubr.f32.mxu0 0.0
    %2050 = vmatmul.mubr.f32.gmra.mrb[0].mxu0 %v1981
    %v2051 = vpop.f32.mrb[0].mxu0
    %v2052 = vadd.f32 %v1973, %v2051
    %v2053 = vpop.f32.mrb[0].mxu0
    %2054 = vmatprep.mubr.f32.mxu0 0.0
    %2055 = vmatmul.mubr.f32.gmra.mrb[0].mxu0 %v1983
    %v2056 = vpop.f32.mrb[0].mxu0
    %v2057 = vadd.f32 %v1978, %v2056
    %v2058 = vpop.f32.mrb[0].mxu0
    %2059 = vdwg.mxu0
    %s2060 = scalar_lea.vmem [#allocation11], 128
    %v2061 = vld [vmem:[%s2060] sm:$0xff]
    %v2062 = vld [vmem:[%s2060 + $0x8] sm:$0xff]
    %v2063 = vld [vmem:[%s2060 + $0x10] sm:$0xff]
    %v2064 = vld [vmem:[%s2060 + $0x18] sm:$0xff]
    %v2065 = vld [vmem:[%s2060 + $0x20] sm:$0xff]
    %v2066 = vld [vmem:[%s2060 + $0x28] sm:$0xff]
    %v2067 = vld [vmem:[%s2060 + $0x30] sm:$0xff]
    %v2068 = vld [vmem:[%s2060 + $0x38] sm:$0xff]
    %v2069 = vrot.slane %v1878, 2
    %v2070 = vrot.slane %v1879, 2
    %v2071 = vsel %vm586, %v2069, %v2070
    %v2072 = vsel %vm1836, %v2071, 0
    %v2074 = vsel %vm1836, %v2070, 0
    %2076 = vmatprep.subr.mxu0 0.0
    %2077 = vmatpush1.msra.mxu0 %v2061
    %2078 = vmatprep.subr.mxu0 0.0
    %2079 = vmatpush1.msra.mxu0 %v2062
    %2080 = vmatprep.subr.mxu0 0.0
    %2081 = vmatpush1.msra.mxu0 %v2063
    %2082 = vmatprep.subr.mxu0 0.0
    %2083 = vmatpush1.msra.mxu0 %v2064
    %2084 = vmatprep.subr.mxu0 0.0
    %2085 = vmatpush1.msra.mxu0 %v2065
    %2086 = vmatprep.subr.mxu0 0.0
    %2087 = vmatpush1.msra.mxu0 %v2066
    %2088 = vmatprep.subr.mxu0 0.0
    %2089 = vmatpush1.msra.mxu0 %v2067
    %2090 = vmatprep.subr.mxu0 0.0
    %2091 = vmatpush1.msra.mxu0 %v2068
    %2092 = vmatprep.subr.mxu0 0.0
    %2093 = vmatpush1.msra.mxu0 0.0
    %2094 = vmatprep.subr.mxu0 0.0
    %2095 = vmatpush1.msra.mxu0 0.0
    %2096 = vmatprep.subr.mxu0 0.0
    %2097 = vmatpush1.msra.mxu0 0.0
    %2098 = vmatprep.subr.mxu0 0.0
    %2099 = vmatpush1.msra.mxu0 0.0
    %2100 = vmatprep.subr.mxu0 0.0
    %2101 = vmatpush1.msra.mxu0 0.0
    %2102 = vmatprep.subr.mxu0 0.0
    %2103 = vmatpush1.msra.mxu0 0.0
    %2104 = vmatprep.subr.mxu0 0.0
    %2105 = vmatpush1.msra.mxu0 0.0
    %2106 = vmatprep.subr.mxu0 0.0
    %2107 = vmatpush1.msra.mxu0 0.0
    %2108 = vmatprep.subr.mxu0 0.0
    %2109 = vmatpush1.msra.mxu0 0.0
    %2110 = vmatprep.subr.mxu0 0.0
    %2111 = vmatpush1.msra.mxu0 0.0
    %2112 = vmatprep.subr.mxu0 0.0
    %2113 = vmatpush1.msra.mxu0 0.0
    %2114 = vmatprep.subr.mxu0 0.0
    %2115 = vmatpush1.msra.mxu0 0.0
    %2116 = vmatprep.subr.mxu0 0.0
    %2117 = vmatpush1.msra.mxu0 0.0
    %2118 = vmatprep.subr.mxu0 0.0
    %2119 = vmatpush1.msra.mxu0 0.0
    %2120 = vmatprep.subr.mxu0 0.0
    %2121 = vmatpush1.msra.mxu0 0.0
    %2122 = vmatprep.subr.mxu0 0.0
    %2123 = vmatpush1.msra.mxu0 0.0
    %2124 = vmatprep.subr.mxu0 0.0
    %2125 = vmatpush1.msra.mxu0 0.0
    %2126 = vmatprep.subr.mxu0 0.0
    %2127 = vmatpush1.msra.mxu0 0.0
    %2128 = vmatprep.subr.mxu0 0.0
    %2129 = vmatpush1.msra.mxu0 0.0
    %2130 = vmatprep.subr.mxu0 0.0
    %2131 = vmatpush1.msra.mxu0 0.0
    %2132 = vmatprep.subr.mxu0 0.0
    %2133 = vmatpush1.msra.mxu0 0.0
    %2134 = vmatprep.subr.mxu0 0.0
    %2135 = vmatpush1.msra.mxu0 0.0
    %2136 = vmatprep.subr.mxu0 0.0
    %2137 = vmatpush1.msra.mxu0 0.0
    %2138 = vmatprep.subr.mxu0 0.0
    %2139 = vmatpush1.msra.mxu0 0.0
    %2140 = vmatprep.mubr.f32.mxu0 0.0
    %2141 = vmatmul.mubr.f32.gmra.mrb[0].mxu0 %v2072
    %v2142 = vpop.f32.mrb[0].mxu0
    %v2143 = vadd.f32 0.0, %v2142
    %v2144 = vpop.f32.mrb[0].mxu0
    %2145 = vmatprep.mubr.f32.mxu0 0.0
    %2146 = vmatmul.mubr.f32.gmra.mrb[0].mxu0 %v2074
    %v2147 = vpop.f32.mrb[0].mxu0
    %v2148 = vadd.f32 0.0, %v2147
    %v2149 = vpop.f32.mrb[0].mxu0
    %2150 = vdwg.mxu0
    %v2151 = vadd.f32 %v2052, %v2143
    %v2152 = vadd.f32 %v2057, %v2148
    %s2153 = scalar_lea.vmem [#allocation11], 192
    %v2154 = vld [vmem:[%s2153] sm:$0xff]
    %v2155 = vld [vmem:[%s2153 + $0x8] sm:$0xff]
    %v2156 = vld [vmem:[%s2153 + $0x10] sm:$0xff]
    %v2157 = vld [vmem:[%s2153 + $0x18] sm:$0xff]
    %v2158 = vld [vmem:[%s2153 + $0x20] sm:$0xff]
    %v2159 = vld [vmem:[%s2153 + $0x28] sm:$0xff]
    %v2160 = vld [vmem:[%s2153 + $0x30] sm:$0xff]
    %v2161 = vld [vmem:[%s2153 + $0x38] sm:$0xff]
    %v2162 = vrot.slane %v1878, 3
    %v2163 = vrot.slane %v1879, 3
    %v2164 = vsel %vm747, %v2162, %v2163
    %v2165 = vsel %vm1836, %v2164, 0
    %v2167 = vsel %vm1836, %v2163, 0
    %2169 = vmatprep.subr.mxu0 0.0
    %2170 = vmatpush1.msra.mxu0 %v2154
    %2171 = vmatprep.subr.mxu0 0.0
    %2172 = vmatpush1.msra.mxu0 %v2155
    %2173 = vmatprep.subr.mxu0 0.0
    %2174 = vmatpush1.msra.mxu0 %v2156
    %2175 = vmatprep.subr.mxu0 0.0
    %2176 = vmatpush1.msra.mxu0 %v2157
    %2177 = vmatprep.subr.mxu0 0.0
    %2178 = vmatpush1.msra.mxu0 %v2158
    %2179 = vmatprep.subr.mxu0 0.0
    %2180 = vmatpush1.msra.mxu0 %v2159
    %2181 = vmatprep.subr.mxu0 0.0
    %2182 = vmatpush1.msra.mxu0 %v2160
    %2183 = vmatprep.subr.mxu0 0.0
    %2184 = vmatpush1.msra.mxu0 %v2161
    %2185 = vmatprep.subr.mxu0 0.0
    %2186 = vmatpush1.msra.mxu0 0.0
    %2187 = vmatprep.subr.mxu0 0.0
    %2188 = vmatpush1.msra.mxu0 0.0
    %2189 = vmatprep.subr.mxu0 0.0
    %2190 = vmatpush1.msra.mxu0 0.0
    %2191 = vmatprep.subr.mxu0 0.0
    %2192 = vmatpush1.msra.mxu0 0.0
    %2193 = vmatprep.subr.mxu0 0.0
    %2194 = vmatpush1.msra.mxu0 0.0
    %2195 = vmatprep.subr.mxu0 0.0
    %2196 = vmatpush1.msra.mxu0 0.0
    %2197 = vmatprep.subr.mxu0 0.0
    %2198 = vmatpush1.msra.mxu0 0.0
    %2199 = vmatprep.subr.mxu0 0.0
    %2200 = vmatpush1.msra.mxu0 0.0
    %2201 = vmatprep.subr.mxu0 0.0
    %2202 = vmatpush1.msra.mxu0 0.0
    %2203 = vmatprep.subr.mxu0 0.0
    %2204 = vmatpush1.msra.mxu0 0.0
    %2205 = vmatprep.subr.mxu0 0.0
    %2206 = vmatpush1.msra.mxu0 0.0
    %2207 = vmatprep.subr.mxu0 0.0
    %2208 = vmatpush1.msra.mxu0 0.0
    %2209 = vmatprep.subr.mxu0 0.0
    %2210 = vmatpush1.msra.mxu0 0.0
    %2211 = vmatprep.subr.mxu0 0.0
    %2212 = vmatpush1.msra.mxu0 0.0
    %2213 = vmatprep.subr.mxu0 0.0
    %2214 = vmatpush1.msra.mxu0 0.0
    %2215 = vmatprep.subr.mxu0 0.0
    %2216 = vmatpush1.msra.mxu0 0.0
    %2217 = vmatprep.subr.mxu0 0.0
    %2218 = vmatpush1.msra.mxu0 0.0
    %2219 = vmatprep.subr.mxu0 0.0
    %2220 = vmatpush1.msra.mxu0 0.0
    %2221 = vmatprep.subr.mxu0 0.0
    %2222 = vmatpush1.msra.mxu0 0.0
    %2223 = vmatprep.subr.mxu0 0.0
    %2224 = vmatpush1.msra.mxu0 0.0
    %2225 = vmatprep.subr.mxu0 0.0
    %2226 = vmatpush1.msra.mxu0 0.0
    %2227 = vmatprep.subr.mxu0 0.0
    %2228 = vmatpush1.msra.mxu0 0.0
    %2229 = vmatprep.subr.mxu0 0.0
    %2230 = vmatpush1.msra.mxu0 0.0
    %2231 = vmatprep.subr.mxu0 0.0
    %2232 = vmatpush1.msra.mxu0 0.0
    %2233 = vmatprep.mubr.f32.mxu0 0.0
    %2234 = vmatmul.mubr.f32.gmra.mrb[0].mxu0 %v2165
    %v2235 = vpop.f32.mrb[0].mxu0
    %v2236 = vadd.f32 0.0, %v2235
    %v2237 = vpop.f32.mrb[0].mxu0
    %2238 = vmatprep.mubr.f32.mxu0 0.0
    %2239 = vmatmul.mubr.f32.gmra.mrb[0].mxu0 %v2167
    %v2240 = vpop.f32.mrb[0].mxu0
    %v2241 = vadd.f32 0.0, %v2240
    %v2242 = vpop.f32.mrb[0].mxu0
    %2243 = vdwg.mxu0
    %v2244 = vadd.f32 %v2151, %v2236
    %v2245 = vadd.f32 %v2152, %v2241
    %s2246 = scalar_lea.vmem [#allocation11], 256
    %v2247 = vld [vmem:[%s2246] sm:$0xff]
    %v2248 = vld [vmem:[%s2246 + $0x8] sm:$0xff]
    %v2249 = vld [vmem:[%s2246 + $0x10] sm:$0xff]
    %v2250 = vld [vmem:[%s2246 + $0x18] sm:$0xff]
    %v2251 = vld [vmem:[%s2246 + $0x20] sm:$0xff]
    %v2252 = vld [vmem:[%s2246 + $0x28] sm:$0xff]
    %v2253 = vld [vmem:[%s2246 + $0x30] sm:$0xff]
    %v2254 = vld [vmem:[%s2246 + $0x38] sm:$0xff]
    %v2255 = vrot.slane %v1878, 4
    %v2256 = vrot.slane %v1879, 4
    %v2257 = vsel %vm908, %v2255, %v2256
    %v2258 = vsel %vm1836, %v2257, 0
    %v2260 = vsel %vm1836, %v2256, 0
    %2262 = vmatprep.subr.mxu0 0.0
    %2263 = vmatpush1.msra.mxu0 %v2247
    %2264 = vmatprep.subr.mxu0 0.0
    %2265 = vmatpush1.msra.mxu0 %v2248
    %2266 = vmatprep.subr.mxu0 0.0
    %2267 = vmatpush1.msra.mxu0 %v2249
    %2268 = vmatprep.subr.mxu0 0.0
    %2269 = vmatpush1.msra.mxu0 %v2250
    %2270 = vmatprep.subr.mxu0 0.0
    %2271 = vmatpush1.msra.mxu0 %v2251
    %2272 = vmatprep.subr.mxu0 0.0
    %2273 = vmatpush1.msra.mxu0 %v2252
    %2274 = vmatprep.subr.mxu0 0.0
    %2275 = vmatpush1.msra.mxu0 %v2253
    %2276 = vmatprep.subr.mxu0 0.0
    %2277 = vmatpush1.msra.mxu0 %v2254
    %2278 = vmatprep.subr.mxu0 0.0
    %2279 = vmatpush1.msra.mxu0 0.0
    %2280 = vmatprep.subr.mxu0 0.0
    %2281 = vmatpush1.msra.mxu0 0.0
    %2282 = vmatprep.subr.mxu0 0.0
    %2283 = vmatpush1.msra.mxu0 0.0
    %2284 = vmatprep.subr.mxu0 0.0
    %2285 = vmatpush1.msra.mxu0 0.0
    %2286 = vmatprep.subr.mxu0 0.0
    %2287 = vmatpush1.msra.mxu0 0.0
    %2288 = vmatprep.subr.mxu0 0.0
    %2289 = vmatpush1.msra.mxu0 0.0
    %2290 = vmatprep.subr.mxu0 0.0
    %2291 = vmatpush1.msra.mxu0 0.0
    %2292 = vmatprep.subr.mxu0 0.0
    %2293 = vmatpush1.msra.mxu0 0.0
    %2294 = vmatprep.subr.mxu0 0.0
    %2295 = vmatpush1.msra.mxu0 0.0
    %2296 = vmatprep.subr.mxu0 0.0
    %2297 = vmatpush1.msra.mxu0 0.0
    %2298 = vmatprep.subr.mxu0 0.0
    %2299 = vmatpush1.msra.mxu0 0.0
    %2300 = vmatprep.subr.mxu0 0.0
    %2301 = vmatpush1.msra.mxu0 0.0
    %2302 = vmatprep.subr.mxu0 0.0
    %2303 = vmatpush1.msra.mxu0 0.0
    %2304 = vmatprep.subr.mxu0 0.0
    %2305 = vmatpush1.msra.mxu0 0.0
    %2306 = vmatprep.subr.mxu0 0.0
    %2307 = vmatpush1.msra.mxu0 0.0
    %2308 = vmatprep.subr.mxu0 0.0
    %2309 = vmatpush1.msra.mxu0 0.0
    %2310 = vmatprep.subr.mxu0 0.0
    %2311 = vmatpush1.msra.mxu0 0.0
    %2312 = vmatprep.subr.mxu0 0.0
    %2313 = vmatpush1.msra.mxu0 0.0
    %2314 = vmatprep.subr.mxu0 0.0
    %2315 = vmatpush1.msra.mxu0 0.0
    %2316 = vmatprep.subr.mxu0 0.0
    %2317 = vmatpush1.msra.mxu0 0.0
    %2318 = vmatprep.subr.mxu0 0.0
    %2319 = vmatpush1.msra.mxu0 0.0
    %2320 = vmatprep.subr.mxu0 0.0
    %2321 = vmatpush1.msra.mxu0 0.0
    %2322 = vmatprep.subr.mxu0 0.0
    %2323 = vmatpush1.msra.mxu0 0.0
    %2324 = vmatprep.subr.mxu0 0.0
    %2325 = vmatpush1.msra.mxu0 0.0
    %2326 = vmatprep.mubr.f32.mxu0 0.0
    %2327 = vmatmul.mubr.f32.gmra.mrb[0].mxu0 %v2258
    %v2328 = vpop.f32.mrb[0].mxu0
    %v2329 = vadd.f32 0.0, %v2328
    %v2330 = vpop.f32.mrb[0].mxu0
    %2331 = vmatprep.mubr.f32.mxu0 0.0
    %2332 = vmatmul.mubr.f32.gmra.mrb[0].mxu0 %v2260
    %v2333 = vpop.f32.mrb[0].mxu0
    %v2334 = vadd.f32 0.0, %v2333
    %v2335 = vpop.f32.mrb[0].mxu0
    %2336 = vdwg.mxu0
    %v2337 = vadd.f32 %v2244, %v2329
    %v2338 = vadd.f32 %v2245, %v2334
    %v2339 = vld [vmem:[#allocation13] sm:$0x1]
    %v2341 = vlaneseq
    %v2342 = vshrl.u32 %v2341, 7
    %v2343 = vsub.s32 0, %v2342
    %v2344 = vrot.slane %v2339, %v2343
    %v2346 = vadd.f32 %v2337, %v2344
    %v2347 = vadd.f32 %v2338, %v2344
    %v2348 = vmax.f32 %v2346, 0.0
    %v2349 = vmax.f32 %v2347, 0.0
    %2350 = vst [vmem:[#allocation3] sm:$0xff] %v2348
    %2351 = vst [vmem:[#allocation3 + $0x8] sm:$0xf] %v2349
    %v2352 = vld [vmem:[#allocation3] ss:$4 sm:$0x3]
    %s2353 = scalar_lea.vmem [#allocation3], 1
    %v2354 = vld [vmem:[%s2353] ss:$4 sm:$0x3]
    %v2355 = vmax.f32 %v2352, %v2354
    %s2356 = scalar_lea.vmem [#allocation3], 2
    %v2357 = vld [vmem:[%s2356] ss:$4 sm:$0x3]
    %v2358 = vmax.f32 %v2355, %v2357
    %s2359 = scalar_lea.vmem [#allocation3], 3
    %v2360 = vld [vmem:[%s2359] ss:$4 sm:$0x3]
    %v2361 = vmax.f32 %v2358, %v2360
    %s2362 = scalar_lea.vmem [#allocation3], 4
    %v2363 = vld [vmem:[%s2362] ss:$4 sm:$0x3]
    %v2364 = vmax.f32 %v2361, %v2363
    %s2365 = scalar_lea.vmem [#allocation3], 5
    %v2366 = vld [vmem:[%s2365] ss:$4 sm:$0x3]
    %v2367 = vmax.f32 %v2364, %v2366
    %2368 = vst [vmem:[#allocation4] sm:$0x3] %v2367
    %s2369 = scalar_lea.vmem %s0, 80
    %v2370 = vld [vmem:[%s2369] sm:$0xff]
    %v2371 = vld [vmem:[%s2369 + $0x8] sm:$0xff]
    %v2372 = vld [vmem:[%s2369 + $0x10] sm:$0xff]
    %v2373 = vld [vmem:[%s2369 + $0x18] sm:$0xff]
    %v2374 = vld [vmem:[%s2369 + $0x20] sm:$0xff]
    %v2375 = vld [vmem:[%s2369 + $0x28] sm:$0xff]
    %v2376 = vld [vmem:[%s2369 + $0x30] sm:$0xff]
    %v2377 = vld [vmem:[%s2369 + $0x38] sm:$0xff]
    %v2378 = vld [vmem:[%s2369 + $0x40] sm:$0xff]
    %v2379 = vld [vmem:[%s2369 + $0x48] sm:$0x1f]
    %v2380 = vld [vmem:[#allocation8] sm:$0xff]
    %v2381 = vld [vmem:[#allocation8 + $0x8] sm:$0xff]
    %v2382 = vld [vmem:[#allocation8 + $0x10] sm:$0xff]
    %v2383 = vld [vmem:[#allocation8 + $0x18] sm:$0xff]
    %v2384 = vld [vmem:[#allocation8 + $0x20] sm:$0xff]
    %v2385 = vld [vmem:[%s290] sm:$0xff]
    %v2386 = vld [vmem:[%s290 + $0x8] sm:$0xff]
    %v2387 = vld [vmem:[%s290 + $0x10] sm:$0xff]
    %v2388 = vld [vmem:[%s290 + $0x18] sm:$0xff]
    %v2389 = vld [vmem:[%s290 + $0x20] sm:$0xff]
    %v2399 = vrot.slane %v2370, 1
    %v2400 = vrot.slane %v2371, 1
    %v2401 = vsel %vm305, %v2399, %v2400
    %v2402 = vrot.slane %v2372, 1
    %v2403 = vsel %vm305, %v2400, %v2402
    %v2404 = vrot.slane %v2373, 1
    %v2405 = vsel %vm305, %v2402, %v2404
    %v2406 = vrot.slane %v2374, 1
    %v2407 = vsel %vm305, %v2404, %v2406
    %v2408 = vrot.slane %v2375, 1
    %v2409 = vsel %vm305, %v2406, %v2408
    %v2410 = vrot.slane %v2376, 1
    %v2411 = vsel %vm305, %v2408, %v2410
    %v2412 = vrot.slane %v2377, 1
    %v2413 = vsel %vm305, %v2410, %v2412
    %v2414 = vrot.slane %v2378, 1
    %v2415 = vsel %vm305, %v2412, %v2414
    %v2416 = vsel %vm323, %v2401, 0
    %v2418 = vsel %vm323, %v2403, 0
    %v2420 = vsel %vm323, %v2405, 0
    %v2422 = vsel %vm323, %v2407, 0
    %v2424 = vsel %vm323, %v2409, 0
    %v2426 = vsel %vm323, %v2411, 0
    %v2428 = vsel %vm323, %v2413, 0
    %v2430 = vsel %vm323, %v2415, 0
    %v2432 = vsel %vm323, %v2414, 0
    %2434 = vmatprep.subr.mxu0 0.0
    %2435 = vmatpush1.msra.mxu0 %v2385
    %2436 = vmatprep.subr.mxu0 0.0
    %2437 = vmatpush1.msra.mxu0 %v2386
    %2438 = vmatprep.subr.mxu0 0.0
    %2439 = vmatpush1.msra.mxu0 %v2387
    %2440 = vmatprep.subr.mxu0 0.0
    %2441 = vmatpush1.msra.mxu0 %v2388
    %2442 = vmatprep.subr.mxu0 0.0
    %2443 = vmatpush1.msra.mxu0 %v2389
    %2444 = vmatprep.subr.mxu0 0.0
    %2445 = vmatpush1.msra.mxu0 0.0
    %2446 = vmatprep.subr.mxu0 0.0
    %2447 = vmatpush1.msra.mxu0 0.0
    %2448 = vmatprep.subr.mxu0 0.0
    %2449 = vmatpush1.msra.mxu0 0.0
    %2450 = vmatprep.subr.mxu0 0.0
    %2451 = vmatpush1.msra.mxu0 0.0
    %2452 = vmatprep.subr.mxu0 0.0
    %2453 = vmatpush1.msra.mxu0 0.0
    %2454 = vmatprep.subr.mxu0 0.0
    %2455 = vmatpush1.msra.mxu0 0.0
    %2456 = vmatprep.subr.mxu0 0.0
    %2457 = vmatpush1.msra.mxu0 0.0
    %2458 = vmatprep.subr.mxu0 0.0
    %2459 = vmatpush1.msra.mxu0 0.0
    %2460 = vmatprep.subr.mxu0 0.0
    %2461 = vmatpush1.msra.mxu0 0.0
    %2462 = vmatprep.subr.mxu0 0.0
    %2463 = vmatpush1.msra.mxu0 0.0
    %2464 = vmatprep.subr.mxu0 0.0
    %2465 = vmatpush1.msra.mxu0 0.0
    %2466 = vmatprep.subr.mxu0 0.0
    %2467 = vmatpush1.msra.mxu0 0.0
    %2468 = vmatprep.subr.mxu0 0.0
    %2469 = vmatpush1.msra.mxu0 0.0
    %2470 = vmatprep.subr.mxu0 0.0
    %2471 = vmatpush1.msra.mxu0 0.0
    %2472 = vmatprep.subr.mxu0 0.0
    %2473 = vmatpush1.msra.mxu0 0.0
    %2474 = vmatprep.subr.mxu0 0.0
    %2475 = vmatpush1.msra.mxu0 0.0
    %2476 = vmatprep.subr.mxu0 0.0
    %2477 = vmatpush1.msra.mxu0 0.0
    %2478 = vmatprep.subr.mxu0 0.0
    %2479 = vmatpush1.msra.mxu0 0.0
    %2480 = vmatprep.subr.mxu0 0.0
    %2481 = vmatpush1.msra.mxu0 0.0
    %2482 = vmatprep.subr.mxu0 0.0
    %2483 = vmatpush1.msra.mxu0 0.0
    %2484 = vmatprep.subr.mxu0 0.0
    %2485 = vmatpush1.msra.mxu0 0.0
    %2486 = vmatprep.subr.mxu0 0.0
    %2487 = vmatpush1.msra.mxu0 0.0
    %2488 = vmatprep.subr.mxu0 0.0
    %2489 = vmatpush1.msra.mxu0 0.0
    %2490 = vmatprep.subr.mxu0 0.0
    %2491 = vmatpush1.msra.mxu0 0.0
    %2492 = vmatprep.subr.mxu0 0.0
    %2493 = vmatpush1.msra.mxu0 0.0
    %2494 = vmatprep.subr.mxu0 0.0
    %2495 = vmatpush1.msra.mxu0 0.0
    %2496 = vmatprep.subr.mxu0 0.0
    %2497 = vmatpush1.msra.mxu0 0.0
    %2498 = vmatprep.mubr.f32.mxu0 0.0
    %2499 = vmatmul.mubr.f32.gmra.mrb[0].mxu0 %v2416
    %v2500 = vpop.f32.mrb[0].mxu0
    %v2501 = vadd.f32 0.0, %v2500
    %v2502 = vpop.f32.mrb[0].mxu0
    %2503 = vmatprep.mubr.f32.mxu0 0.0
    %2504 = vmatmul.mubr.f32.gmra.mrb[0].mxu0 %v2418
    %v2505 = vpop.f32.mrb[0].mxu0
    %v2506 = vadd.f32 0.0, %v2505
    %v2507 = vpop.f32.mrb[0].mxu0
    %2508 = vmatprep.mubr.f32.mxu0 0.0
    %2509 = vmatmul.mubr.f32.gmra.mrb[0].mxu0 %v2420
    %v2510 = vpop.f32.mrb[0].mxu0
    %v2511 = vadd.f32 0.0, %v2510
    %v2512 = vpop.f32.mrb[0].mxu0
    %2513 = vmatprep.mubr.f32.mxu0 0.0
    %2514 = vmatmul.mubr.f32.gmra.mrb[0].mxu0 %v2422
    %v2515 = vpop.f32.mrb[0].mxu0
    %v2516 = vadd.f32 0.0, %v2515
    %v2517 = vpop.f32.mrb[0].mxu0
    %2518 = vmatprep.mubr.f32.mxu0 0.0
    %2519 = vmatmul.mubr.f32.gmra.mrb[0].mxu0 %v2424
    %v2520 = vpop.f32.mrb[0].mxu0
    %v2521 = vadd.f32 0.0, %v2520
    %v2522 = vpop.f32.mrb[0].mxu0
    %2523 = vmatprep.mubr.f32.mxu0 0.0
    %2524 = vmatmul.mubr.f32.gmra.mrb[0].mxu0 %v2426
    %v2525 = vpop.f32.mrb[0].mxu0
    %v2526 = vadd.f32 0.0, %v2525
    %v2527 = vpop.f32.mrb[0].mxu0
    %2528 = vmatprep.mubr.f32.mxu0 0.0
    %2529 = vmatmul.mubr.f32.gmra.mrb[0].mxu0 %v2428
    %v2530 = vpop.f32.mrb[0].mxu0
    %v2531 = vadd.f32 0.0, %v2530
    %v2532 = vpop.f32.mrb[0].mxu0
    %2533 = vmatprep.mubr.f32.mxu0 0.0
    %2534 = vmatmul.mubr.f32.gmra.mrb[0].mxu0 %v2430
    %v2535 = vpop.f32.mrb[0].mxu0
    %v2536 = vadd.f32 0.0, %v2535
    %v2537 = vpop.f32.mrb[0].mxu0
    %2538 = vmatprep.mubr.f32.mxu0 0.0
    %2539 = vmatmul.mubr.f32.gmra.mrb[0].mxu0 %v2432
    %v2540 = vpop.f32.mrb[0].mxu0
    %v2541 = vadd.f32 0.0, %v2540
    %v2542 = vpop.f32.mrb[0].mxu0
    %2543 = vdwg.mxu0
    %v2544 = vsel %vm323, %v2370, 0
    %v2546 = vsel %vm323, %v2371, 0
    %v2548 = vsel %vm323, %v2372, 0
    %v2550 = vsel %vm323, %v2373, 0
    %v2552 = vsel %vm323, %v2374, 0
    %v2554 = vsel %vm323, %v2375, 0
    %v2556 = vsel %vm323, %v2376, 0
    %v2558 = vsel %vm323, %v2377, 0
    %v2560 = vsel %vm323, %v2378, 0
    %2562 = vmatprep.subr.mxu0 0.0
    %2563 = vmatpush1.msra.mxu0 %v2380
    %2564 = vmatprep.subr.mxu0 0.0
    %2565 = vmatpush1.msra.mxu0 %v2381
    %2566 = vmatprep.subr.mxu0 0.0
    %2567 = vmatpush1.msra.mxu0 %v2382
    %2568 = vmatprep.subr.mxu0 0.0
    %2569 = vmatpush1.msra.mxu0 %v2383
    %2570 = vmatprep.subr.mxu0 0.0
    %2571 = vmatpush1.msra.mxu0 %v2384
    %2572 = vmatprep.subr.mxu0 0.0
    %2573 = vmatpush1.msra.mxu0 0.0
    %2574 = vmatprep.subr.mxu0 0.0
    %2575 = vmatpush1.msra.mxu0 0.0
    %2576 = vmatprep.subr.mxu0 0.0
    %2577 = vmatpush1.msra.mxu0 0.0
    %2578 = vmatprep.subr.mxu0 0.0
    %2579 = vmatpush1.msra.mxu0 0.0
    %2580 = vmatprep.subr.mxu0 0.0
    %2581 = vmatpush1.msra.mxu0 0.0
    %2582 = vmatprep.subr.mxu0 0.0
    %2583 = vmatpush1.msra.mxu0 0.0
    %2584 = vmatprep.subr.mxu0 0.0
    %2585 = vmatpush1.msra.mxu0 0.0
    %2586 = vmatprep.subr.mxu0 0.0
    %2587 = vmatpush1.msra.mxu0 0.0
    %2588 = vmatprep.subr.mxu0 0.0
    %2589 = vmatpush1.msra.mxu0 0.0
    %2590 = vmatprep.subr.mxu0 0.0
    %2591 = vmatpush1.msra.mxu0 0.0
    %2592 = vmatprep.subr.mxu0 0.0
    %2593 = vmatpush1.msra.mxu0 0.0
    %2594 = vmatprep.subr.mxu0 0.0
    %2595 = vmatpush1.msra.mxu0 0.0
    %2596 = vmatprep.subr.mxu0 0.0
    %2597 = vmatpush1.msra.mxu0 0.0
    %2598 = vmatprep.subr.mxu0 0.0
    %2599 = vmatpush1.msra.mxu0 0.0
    %2600 = vmatprep.subr.mxu0 0.0
    %2601 = vmatpush1.msra.mxu0 0.0
    %2602 = vmatprep.subr.mxu0 0.0
    %2603 = vmatpush1.msra.mxu0 0.0
    %2604 = vmatprep.subr.mxu0 0.0
    %2605 = vmatpush1.msra.mxu0 0.0
    %2606 = vmatprep.subr.mxu0 0.0
    %2607 = vmatpush1.msra.mxu0 0.0
    %2608 = vmatprep.subr.mxu0 0.0
    %2609 = vmatpush1.msra.mxu0 0.0
    %2610 = vmatprep.subr.mxu0 0.0
    %2611 = vmatpush1.msra.mxu0 0.0
    %2612 = vmatprep.subr.mxu0 0.0
    %2613 = vmatpush1.msra.mxu0 0.0
    %2614 = vmatprep.subr.mxu0 0.0
    %2615 = vmatpush1.msra.mxu0 0.0
    %2616 = vmatprep.subr.mxu0 0.0
    %2617 = vmatpush1.msra.mxu0 0.0
    %2618 = vmatprep.subr.mxu0 0.0
    %2619 = vmatpush1.msra.mxu0 0.0
    %2620 = vmatprep.subr.mxu0 0.0
    %2621 = vmatpush1.msra.mxu0 0.0
    %2622 = vmatprep.subr.mxu0 0.0
    %2623 = vmatpush1.msra.mxu0 0.0
    %2624 = vmatprep.subr.mxu0 0.0
    %2625 = vmatpush1.msra.mxu0 0.0
    %2626 = vmatprep.mubr.f32.mxu0 0.0
    %2627 = vmatmul.mubr.f32.gmra.mrb[0].mxu0 %v2544
    %v2628 = vpop.f32.mrb[0].mxu0
    %v2629 = vadd.f32 %v2501, %v2628
    %v2630 = vpop.f32.mrb[0].mxu0
    %2631 = vmatprep.mubr.f32.mxu0 0.0
    %2632 = vmatmul.mubr.f32.gmra.mrb[0].mxu0 %v2546
    %v2633 = vpop.f32.mrb[0].mxu0
    %v2634 = vadd.f32 %v2506, %v2633
    %v2635 = vpop.f32.mrb[0].mxu0
    %2636 = vmatprep.mubr.f32.mxu0 0.0
    %2637 = vmatmul.mubr.f32.gmra.mrb[0].mxu0 %v2548
    %v2638 = vpop.f32.mrb[0].mxu0
    %v2639 = vadd.f32 %v2511, %v2638
    %v2640 = vpop.f32.mrb[0].mxu0
    %2641 = vmatprep.mubr.f32.mxu0 0.0
    %2642 = vmatmul.mubr.f32.gmra.mrb[0].mxu0 %v2550
    %v2643 = vpop.f32.mrb[0].mxu0
    %v2644 = vadd.f32 %v2516, %v2643
    %v2645 = vpop.f32.mrb[0].mxu0
    %2646 = vmatprep.mubr.f32.mxu0 0.0
    %2647 = vmatmul.mubr.f32.gmra.mrb[0].mxu0 %v2552
    %v2648 = vpop.f32.mrb[0].mxu0
    %v2649 = vadd.f32 %v2521, %v2648
    %v2650 = vpop.f32.mrb[0].mxu0
    %2651 = vmatprep.mubr.f32.mxu0 0.0
    %2652 = vmatmul.mubr.f32.gmra.mrb[0].mxu0 %v2554
    %v2653 = vpop.f32.mrb[0].mxu0
    %v2654 = vadd.f32 %v2526, %v2653
    %v2655 = vpop.f32.mrb[0].mxu0
    %2656 = vmatprep.mubr.f32.mxu0 0.0
    %2657 = vmatmul.mubr.f32.gmra.mrb[0].mxu0 %v2556
    %v2658 = vpop.f32.mrb[0].mxu0
    %v2659 = vadd.f32 %v2531, %v2658
    %v2660 = vpop.f32.mrb[0].mxu0
    %2661 = vmatprep.mubr.f32.mxu0 0.0
    %2662 = vmatmul.mubr.f32.gmra.mrb[0].mxu0 %v2558
    %v2663 = vpop.f32.mrb[0].mxu0
    %v2664 = vadd.f32 %v2536, %v2663
    %v2665 = vpop.f32.mrb[0].mxu0
    %2666 = vmatprep.mubr.f32.mxu0 0.0
    %2667 = vmatmul.mubr.f32.gmra.mrb[0].mxu0 %v2560
    %v2668 = vpop.f32.mrb[0].mxu0
    %v2669 = vadd.f32 %v2541, %v2668
    %v2670 = vpop.f32.mrb[0].mxu0
    %2671 = vdwg.mxu0
    %v2672 = vld [vmem:[%s580] sm:$0xff]
    %v2673 = vld [vmem:[%s580 + $0x8] sm:$0xff]
    %v2674 = vld [vmem:[%s580 + $0x10] sm:$0xff]
    %v2675 = vld [vmem:[%s580 + $0x18] sm:$0xff]
    %v2676 = vld [vmem:[%s580 + $0x20] sm:$0xff]
    %v2677 = vrot.slane %v2370, 2
    %v2678 = vrot.slane %v2371, 2
    %v2679 = vsel %vm586, %v2677, %v2678
    %v2680 = vrot.slane %v2372, 2
    %v2681 = vsel %vm586, %v2678, %v2680
    %v2682 = vrot.slane %v2373, 2
    %v2683 = vsel %vm586, %v2680, %v2682
    %v2684 = vrot.slane %v2374, 2
    %v2685 = vsel %vm586, %v2682, %v2684
    %v2686 = vrot.slane %v2375, 2
    %v2687 = vsel %vm586, %v2684, %v2686
    %v2688 = vrot.slane %v2376, 2
    %v2689 = vsel %vm586, %v2686, %v2688
    %v2690 = vrot.slane %v2377, 2
    %v2691 = vsel %vm586, %v2688, %v2690
    %v2692 = vrot.slane %v2378, 2
    %v2693 = vsel %vm586, %v2690, %v2692
    %v2694 = vsel %vm323, %v2679, 0
    %v2696 = vsel %vm323, %v2681, 0
    %v2698 = vsel %vm323, %v2683, 0
    %v2700 = vsel %vm323, %v2685, 0
    %v2702 = vsel %vm323, %v2687, 0
    %v2704 = vsel %vm323, %v2689, 0
    %v2706 = vsel %vm323, %v2691, 0
    %v2708 = vsel %vm323, %v2693, 0
    %v2710 = vsel %vm323, %v2692, 0
    %2712 = vmatprep.subr.mxu0 0.0
    %2713 = vmatpush1.msra.mxu0 %v2672
    %2714 = vmatprep.subr.mxu0 0.0
    %2715 = vmatpush1.msra.mxu0 %v2673
    %2716 = vmatprep.subr.mxu0 0.0
    %2717 = vmatpush1.msra.mxu0 %v2674
    %2718 = vmatprep.subr.mxu0 0.0
    %2719 = vmatpush1.msra.mxu0 %v2675
    %2720 = vmatprep.subr.mxu0 0.0
    %2721 = vmatpush1.msra.mxu0 %v2676
    %2722 = vmatprep.subr.mxu0 0.0
    %2723 = vmatpush1.msra.mxu0 0.0
    %2724 = vmatprep.subr.mxu0 0.0
    %2725 = vmatpush1.msra.mxu0 0.0
    %2726 = vmatprep.subr.mxu0 0.0
    %2727 = vmatpush1.msra.mxu0 0.0
    %2728 = vmatprep.subr.mxu0 0.0
    %2729 = vmatpush1.msra.mxu0 0.0
    %2730 = vmatprep.subr.mxu0 0.0
    %2731 = vmatpush1.msra.mxu0 0.0
    %2732 = vmatprep.subr.mxu0 0.0
    %2733 = vmatpush1.msra.mxu0 0.0
    %2734 = vmatprep.subr.mxu0 0.0
    %2735 = vmatpush1.msra.mxu0 0.0
    %2736 = vmatprep.subr.mxu0 0.0
    %2737 = vmatpush1.msra.mxu0 0.0
    %2738 = vmatprep.subr.mxu0 0.0
    %2739 = vmatpush1.msra.mxu0 0.0
    %2740 = vmatprep.subr.mxu0 0.0
    %2741 = vmatpush1.msra.mxu0 0.0
    %2742 = vmatprep.subr.mxu0 0.0
    %2743 = vmatpush1.msra.mxu0 0.0
    %2744 = vmatprep.subr.mxu0 0.0
    %2745 = vmatpush1.msra.mxu0 0.0
    %2746 = vmatprep.subr.mxu0 0.0
    %2747 = vmatpush1.msra.mxu0 0.0
    %2748 = vmatprep.subr.mxu0 0.0
    %2749 = vmatpush1.msra.mxu0 0.0
    %2750 = vmatprep.subr.mxu0 0.0
    %2751 = vmatpush1.msra.mxu0 0.0
    %2752 = vmatprep.subr.mxu0 0.0
    %2753 = vmatpush1.msra.mxu0 0.0
    %2754 = vmatprep.subr.mxu0 0.0
    %2755 = vmatpush1.msra.mxu0 0.0
    %2756 = vmatprep.subr.mxu0 0.0
    %2757 = vmatpush1.msra.mxu0 0.0
    %2758 = vmatprep.subr.mxu0 0.0
    %2759 = vmatpush1.msra.mxu0 0.0
    %2760 = vmatprep.subr.mxu0 0.0
    %2761 = vmatpush1.msra.mxu0 0.0
    %2762 = vmatprep.subr.mxu0 0.0
    %2763 = vmatpush1.msra.mxu0 0.0
    %2764 = vmatprep.subr.mxu0 0.0
    %2765 = vmatpush1.msra.mxu0 0.0
    %2766 = vmatprep.subr.mxu0 0.0
    %2767 = vmatpush1.msra.mxu0 0.0
    %2768 = vmatprep.subr.mxu0 0.0
    %2769 = vmatpush1.msra.mxu0 0.0
    %2770 = vmatprep.subr.mxu0 0.0
    %2771 = vmatpush1.msra.mxu0 0.0
    %2772 = vmatprep.subr.mxu0 0.0
    %2773 = vmatpush1.msra.mxu0 0.0
    %2774 = vmatprep.subr.mxu0 0.0
    %2775 = vmatpush1.msra.mxu0 0.0
    %2776 = vmatprep.mubr.f32.mxu0 0.0
    %2777 = vmatmul.mubr.f32.gmra.mrb[0].mxu0 %v2694
    %v2778 = vpop.f32.mrb[0].mxu0
    %v2779 = vadd.f32 0.0, %v2778
    %v2780 = vpop.f32.mrb[0].mxu0
    %2781 = vmatprep.mubr.f32.mxu0 0.0
    %2782 = vmatmul.mubr.f32.gmra.mrb[0].mxu0 %v2696
    %v2783 = vpop.f32.mrb[0].mxu0
    %v2784 = vadd.f32 0.0, %v2783
    %v2785 = vpop.f32.mrb[0].mxu0
    %2786 = vmatprep.mubr.f32.mxu0 0.0
    %2787 = vmatmul.mubr.f32.gmra.mrb[0].mxu0 %v2698
    %v2788 = vpop.f32.mrb[0].mxu0
    %v2789 = vadd.f32 0.0, %v2788
    %v2790 = vpop.f32.mrb[0].mxu0
    %2791 = vmatprep.mubr.f32.mxu0 0.0
    %2792 = vmatmul.mubr.f32.gmra.mrb[0].mxu0 %v2700
    %v2793 = vpop.f32.mrb[0].mxu0
    %v2794 = vadd.f32 0.0, %v2793
    %v2795 = vpop.f32.mrb[0].mxu0
    %2796 = vmatprep.mubr.f32.mxu0 0.0
    %2797 = vmatmul.mubr.f32.gmra.mrb[0].mxu0 %v2702
    %v2798 = vpop.f32.mrb[0].mxu0
    %v2799 = vadd.f32 0.0, %v2798
    %v2800 = vpop.f32.mrb[0].mxu0
    %2801 = vmatprep.mubr.f32.mxu0 0.0
    %2802 = vmatmul.mubr.f32.gmra.mrb[0].mxu0 %v2704
    %v2803 = vpop.f32.mrb[0].mxu0
    %v2804 = vadd.f32 0.0, %v2803
    %v2805 = vpop.f32.mrb[0].mxu0
    %2806 = vmatprep.mubr.f32.mxu0 0.0
    %2807 = vmatmul.mubr.f32.gmra.mrb[0].mxu0 %v2706
    %v2808 = vpop.f32.mrb[0].mxu0
    %v2809 = vadd.f32 0.0, %v2808
    %v2810 = vpop.f32.mrb[0].mxu0
    %2811 = vmatprep.mubr.f32.mxu0 0.0
    %2812 = vmatmul.mubr.f32.gmra.mrb[0].mxu0 %v2708
    %v2813 = vpop.f32.mrb[0].mxu0
    %v2814 = vadd.f32 0.0, %v2813
    %v2815 = vpop.f32.mrb[0].mxu0
    %2816 = vmatprep.mubr.f32.mxu0 0.0
    %2817 = vmatmul.mubr.f32.gmra.mrb[0].mxu0 %v2710
    %v2818 = vpop.f32.mrb[0].mxu0
    %v2819 = vadd.f32 0.0, %v2818
    %v2820 = vpop.f32.mrb[0].mxu0
    %2821 = vdwg.mxu0
    %v2822 = vadd.f32 %v2629, %v2779
    %v2823 = vadd.f32 %v2634, %v2784
    %v2824 = vadd.f32 %v2639, %v2789
    %v2825 = vadd.f32 %v2644, %v2794
    %v2826 = vadd.f32 %v2649, %v2799
    %v2827 = vadd.f32 %v2654, %v2804
    %v2828 = vadd.f32 %v2659, %v2809
    %v2829 = vadd.f32 %v2664, %v2814
    %v2830 = vadd.f32 %v2669, %v2819
    %v2831 = vld [vmem:[%s741] sm:$0xff]
    %v2832 = vld [vmem:[%s741 + $0x8] sm:$0xff]
    %v2833 = vld [vmem:[%s741 + $0x10] sm:$0xff]
    %v2834 = vld [vmem:[%s741 + $0x18] sm:$0xff]
    %v2835 = vld [vmem:[%s741 + $0x20] sm:$0xff]
    %v2836 = vrot.slane %v2370, 3
    %v2837 = vrot.slane %v2371, 3
    %v2838 = vsel %vm747, %v2836, %v2837
    %v2839 = vrot.slane %v2372, 3
    %v2840 = vsel %vm747, %v2837, %v2839
    %v2841 = vrot.slane %v2373, 3
    %v2842 = vsel %vm747, %v2839, %v2841
    %v2843 = vrot.slane %v2374, 3
    %v2844 = vsel %vm747, %v2841, %v2843
    %v2845 = vrot.slane %v2375, 3
    %v2846 = vsel %vm747, %v2843, %v2845
    %v2847 = vrot.slane %v2376, 3
    %v2848 = vsel %vm747, %v2845, %v2847
    %v2849 = vrot.slane %v2377, 3
    %v2850 = vsel %vm747, %v2847, %v2849
    %v2851 = vrot.slane %v2378, 3
    %v2852 = vsel %vm747, %v2849, %v2851
    %v2853 = vsel %vm323, %v2838, 0
    %v2855 = vsel %vm323, %v2840, 0
    %v2857 = vsel %vm323, %v2842, 0
    %v2859 = vsel %vm323, %v2844, 0
    %v2861 = vsel %vm323, %v2846, 0
    %v2863 = vsel %vm323, %v2848, 0
    %v2865 = vsel %vm323, %v2850, 0
    %v2867 = vsel %vm323, %v2852, 0
    %v2869 = vsel %vm323, %v2851, 0
    %2871 = vmatprep.subr.mxu0 0.0
    %2872 = vmatpush1.msra.mxu0 %v2831
    %2873 = vmatprep.subr.mxu0 0.0
    %2874 = vmatpush1.msra.mxu0 %v2832
    %2875 = vmatprep.subr.mxu0 0.0
    %2876 = vmatpush1.msra.mxu0 %v2833
    %2877 = vmatprep.subr.mxu0 0.0
    %2878 = vmatpush1.msra.mxu0 %v2834
    %2879 = vmatprep.subr.mxu0 0.0
    %2880 = vmatpush1.msra.mxu0 %v2835
    %2881 = vmatprep.subr.mxu0 0.0
    %2882 = vmatpush1.msra.mxu0 0.0
    %2883 = vmatprep.subr.mxu0 0.0
    %2884 = vmatpush1.msra.mxu0 0.0
    %2885 = vmatprep.subr.mxu0 0.0
    %2886 = vmatpush1.msra.mxu0 0.0
    %2887 = vmatprep.subr.mxu0 0.0
    %2888 = vmatpush1.msra.mxu0 0.0
    %2889 = vmatprep.subr.mxu0 0.0
    %2890 = vmatpush1.msra.mxu0 0.0
    %2891 = vmatprep.subr.mxu0 0.0
    %2892 = vmatpush1.msra.mxu0 0.0
    %2893 = vmatprep.subr.mxu0 0.0
    %2894 = vmatpush1.msra.mxu0 0.0
    %2895 = vmatprep.subr.mxu0 0.0
    %2896 = vmatpush1.msra.mxu0 0.0
    %2897 = vmatprep.subr.mxu0 0.0
    %2898 = vmatpush1.msra.mxu0 0.0
    %2899 = vmatprep.subr.mxu0 0.0
    %2900 = vmatpush1.msra.mxu0 0.0
    %2901 = vmatprep.subr.mxu0 0.0
    %2902 = vmatpush1.msra.mxu0 0.0
    %2903 = vmatprep.subr.mxu0 0.0
    %2904 = vmatpush1.msra.mxu0 0.0
    %2905 = vmatprep.subr.mxu0 0.0
    %2906 = vmatpush1.msra.mxu0 0.0
    %2907 = vmatprep.subr.mxu0 0.0
    %2908 = vmatpush1.msra.mxu0 0.0
    %2909 = vmatprep.subr.mxu0 0.0
    %2910 = vmatpush1.msra.mxu0 0.0
    %2911 = vmatprep.subr.mxu0 0.0
    %2912 = vmatpush1.msra.mxu0 0.0
    %2913 = vmatprep.subr.mxu0 0.0
    %2914 = vmatpush1.msra.mxu0 0.0
    %2915 = vmatprep.subr.mxu0 0.0
    %2916 = vmatpush1.msra.mxu0 0.0
    %2917 = vmatprep.subr.mxu0 0.0
    %2918 = vmatpush1.msra.mxu0 0.0
    %2919 = vmatprep.subr.mxu0 0.0
    %2920 = vmatpush1.msra.mxu0 0.0
    %2921 = vmatprep.subr.mxu0 0.0
    %2922 = vmatpush1.msra.mxu0 0.0
    %2923 = vmatprep.subr.mxu0 0.0
    %2924 = vmatpush1.msra.mxu0 0.0
    %2925 = vmatprep.subr.mxu0 0.0
    %2926 = vmatpush1.msra.mxu0 0.0
    %2927 = vmatprep.subr.mxu0 0.0
    %2928 = vmatpush1.msra.mxu0 0.0
    %2929 = vmatprep.subr.mxu0 0.0
    %2930 = vmatpush1.msra.mxu0 0.0
    %2931 = vmatprep.subr.mxu0 0.0
    %2932 = vmatpush1.msra.mxu0 0.0
    %2933 = vmatprep.subr.mxu0 0.0
    %2934 = vmatpush1.msra.mxu0 0.0
    %2935 = vmatprep.mubr.f32.mxu0 0.0
    %2936 = vmatmul.mubr.f32.gmra.mrb[0].mxu0 %v2853
    %v2937 = vpop.f32.mrb[0].mxu0
    %v2938 = vadd.f32 0.0, %v2937
    %v2939 = vpop.f32.mrb[0].mxu0
    %2940 = vmatprep.mubr.f32.mxu0 0.0
    %2941 = vmatmul.mubr.f32.gmra.mrb[0].mxu0 %v2855
    %v2942 = vpop.f32.mrb[0].mxu0
    %v2943 = vadd.f32 0.0, %v2942
    %v2944 = vpop.f32.mrb[0].mxu0
    %2945 = vmatprep.mubr.f32.mxu0 0.0
    %2946 = vmatmul.mubr.f32.gmra.mrb[0].mxu0 %v2857
    %v2947 = vpop.f32.mrb[0].mxu0
    %v2948 = vadd.f32 0.0, %v2947
    %v2949 = vpop.f32.mrb[0].mxu0
    %2950 = vmatprep.mubr.f32.mxu0 0.0
    %2951 = vmatmul.mubr.f32.gmra.mrb[0].mxu0 %v2859
    %v2952 = vpop.f32.mrb[0].mxu0
    %v2953 = vadd.f32 0.0, %v2952
    %v2954 = vpop.f32.mrb[0].mxu0
    %2955 = vmatprep.mubr.f32.mxu0 0.0
    %2956 = vmatmul.mubr.f32.gmra.mrb[0].mxu0 %v2861
    %v2957 = vpop.f32.mrb[0].mxu0
    %v2958 = vadd.f32 0.0, %v2957
    %v2959 = vpop.f32.mrb[0].mxu0
    %2960 = vmatprep.mubr.f32.mxu0 0.0
    %2961 = vmatmul.mubr.f32.gmra.mrb[0].mxu0 %v2863
    %v2962 = vpop.f32.mrb[0].mxu0
    %v2963 = vadd.f32 0.0, %v2962
    %v2964 = vpop.f32.mrb[0].mxu0
    %2965 = vmatprep.mubr.f32.mxu0 0.0
    %2966 = vmatmul.mubr.f32.gmra.mrb[0].mxu0 %v2865
    %v2967 = vpop.f32.mrb[0].mxu0
    %v2968 = vadd.f32 0.0, %v2967
    %v2969 = vpop.f32.mrb[0].mxu0
    %2970 = vmatprep.mubr.f32.mxu0 0.0
    %2971 = vmatmul.mubr.f32.gmra.mrb[0].mxu0 %v2867
    %v2972 = vpop.f32.mrb[0].mxu0
    %v2973 = vadd.f32 0.0, %v2972
    %v2974 = vpop.f32.mrb[0].mxu0
    %2975 = vmatprep.mubr.f32.mxu0 0.0
    %2976 = vmatmul.mubr.f32.gmra.mrb[0].mxu0 %v2869
    %v2977 = vpop.f32.mrb[0].mxu0
    %v2978 = vadd.f32 0.0, %v2977
    %v2979 = vpop.f32.mrb[0].mxu0
    %2980 = vdwg.mxu0
    %v2981 = vadd.f32 %v2822, %v2938
    %v2982 = vadd.f32 %v2823, %v2943
    %v2983 = vadd.f32 %v2824, %v2948
    %v2984 = vadd.f32 %v2825, %v2953
    %v2985 = vadd.f32 %v2826, %v2958
    %v2986 = vadd.f32 %v2827, %v2963
    %v2987 = vadd.f32 %v2828, %v2968
    %v2988 = vadd.f32 %v2829, %v2973
    %v2989 = vadd.f32 %v2830, %v2978
    %v2990 = vld [vmem:[%s902] sm:$0xff]
    %v2991 = vld [vmem:[%s902 + $0x8] sm:$0xff]
    %v2992 = vld [vmem:[%s902 + $0x10] sm:$0xff]
    %v2993 = vld [vmem:[%s902 + $0x18] sm:$0xff]
    %v2994 = vld [vmem:[%s902 + $0x20] sm:$0xff]
    %v2995 = vrot.slane %v2370, 4
    %v2996 = vrot.slane %v2371, 4
    %v2997 = vsel %vm908, %v2995, %v2996
    %v2998 = vrot.slane %v2372, 4
    %v2999 = vsel %vm908, %v2996, %v2998
    %v3000 = vrot.slane %v2373, 4
    %v3001 = vsel %vm908, %v2998, %v3000
    %v3002 = vrot.slane %v2374, 4
    %v3003 = vsel %vm908, %v3000, %v3002
    %v3004 = vrot.slane %v2375, 4
    %v3005 = vsel %vm908, %v3002, %v3004
    %v3006 = vrot.slane %v2376, 4
    %v3007 = vsel %vm908, %v3004, %v3006
    %v3008 = vrot.slane %v2377, 4
    %v3009 = vsel %vm908, %v3006, %v3008
    %v3010 = vrot.slane %v2378, 4
    %v3011 = vsel %vm908, %v3008, %v3010
    %v3012 = vsel %vm323, %v2997, 0
    %v3014 = vsel %vm323, %v2999, 0
    %v3016 = vsel %vm323, %v3001, 0
    %v3018 = vsel %vm323, %v3003, 0
    %v3020 = vsel %vm323, %v3005, 0
    %v3022 = vsel %vm323, %v3007, 0
    %v3024 = vsel %vm323, %v3009, 0
    %v3026 = vsel %vm323, %v3011, 0
    %v3028 = vsel %vm323, %v3010, 0
    %3030 = vmatprep.subr.mxu0 0.0
    %3031 = vmatpush1.msra.mxu0 %v2990
    %3032 = vmatprep.subr.mxu0 0.0
    %3033 = vmatpush1.msra.mxu0 %v2991
    %3034 = vmatprep.subr.mxu0 0.0
    %3035 = vmatpush1.msra.mxu0 %v2992
    %3036 = vmatprep.subr.mxu0 0.0
    %3037 = vmatpush1.msra.mxu0 %v2993
    %3038 = vmatprep.subr.mxu0 0.0
    %3039 = vmatpush1.msra.mxu0 %v2994
    %3040 = vmatprep.subr.mxu0 0.0
    %3041 = vmatpush1.msra.mxu0 0.0
    %3042 = vmatprep.subr.mxu0 0.0
    %3043 = vmatpush1.msra.mxu0 0.0
    %3044 = vmatprep.subr.mxu0 0.0
    %3045 = vmatpush1.msra.mxu0 0.0
    %3046 = vmatprep.subr.mxu0 0.0
    %3047 = vmatpush1.msra.mxu0 0.0
    %3048 = vmatprep.subr.mxu0 0.0
    %3049 = vmatpush1.msra.mxu0 0.0
    %3050 = vmatprep.subr.mxu0 0.0
    %3051 = vmatpush1.msra.mxu0 0.0
    %3052 = vmatprep.subr.mxu0 0.0
    %3053 = vmatpush1.msra.mxu0 0.0
    %3054 = vmatprep.subr.mxu0 0.0
    %3055 = vmatpush1.msra.mxu0 0.0
    %3056 = vmatprep.subr.mxu0 0.0
    %3057 = vmatpush1.msra.mxu0 0.0
    %3058 = vmatprep.subr.mxu0 0.0
    %3059 = vmatpush1.msra.mxu0 0.0
    %3060 = vmatprep.subr.mxu0 0.0
    %3061 = vmatpush1.msra.mxu0 0.0
    %3062 = vmatprep.subr.mxu0 0.0
    %3063 = vmatpush1.msra.mxu0 0.0
    %3064 = vmatprep.subr.mxu0 0.0
    %3065 = vmatpush1.msra.mxu0 0.0
    %3066 = vmatprep.subr.mxu0 0.0
    %3067 = vmatpush1.msra.mxu0 0.0
    %3068 = vmatprep.subr.mxu0 0.0
    %3069 = vmatpush1.msra.mxu0 0.0
    %3070 = vmatprep.subr.mxu0 0.0
    %3071 = vmatpush1.msra.mxu0 0.0
    %3072 = vmatprep.subr.mxu0 0.0
    %3073 = vmatpush1.msra.mxu0 0.0
    %3074 = vmatprep.subr.mxu0 0.0
    %3075 = vmatpush1.msra.mxu0 0.0
    %3076 = vmatprep.subr.mxu0 0.0
    %3077 = vmatpush1.msra.mxu0 0.0
    %3078 = vmatprep.subr.mxu0 0.0
    %3079 = vmatpush1.msra.mxu0 0.0
    %3080 = vmatprep.subr.mxu0 0.0
    %3081 = vmatpush1.msra.mxu0 0.0
    %3082 = vmatprep.subr.mxu0 0.0
    %3083 = vmatpush1.msra.mxu0 0.0
    %3084 = vmatprep.subr.mxu0 0.0
    %3085 = vmatpush1.msra.mxu0 0.0
    %3086 = vmatprep.subr.mxu0 0.0
    %3087 = vmatpush1.msra.mxu0 0.0
    %3088 = vmatprep.subr.mxu0 0.0
    %3089 = vmatpush1.msra.mxu0 0.0
    %3090 = vmatprep.subr.mxu0 0.0
    %3091 = vmatpush1.msra.mxu0 0.0
    %3092 = vmatprep.subr.mxu0 0.0
    %3093 = vmatpush1.msra.mxu0 0.0
    %3094 = vmatprep.mubr.f32.mxu0 0.0
    %3095 = vmatmul.mubr.f32.gmra.mrb[0].mxu0 %v3012
    %v3096 = vpop.f32.mrb[0].mxu0
    %v3097 = vadd.f32 0.0, %v3096
    %v3098 = vpop.f32.mrb[0].mxu0
    %3099 = vmatprep.mubr.f32.mxu0 0.0
    %3100 = vmatmul.mubr.f32.gmra.mrb[0].mxu0 %v3014
    %v3101 = vpop.f32.mrb[0].mxu0
    %v3102 = vadd.f32 0.0, %v3101
    %v3103 = vpop.f32.mrb[0].mxu0
    %3104 = vmatprep.mubr.f32.mxu0 0.0
    %3105 = vmatmul.mubr.f32.gmra.mrb[0].mxu0 %v3016
    %v3106 = vpop.f32.mrb[0].mxu0
    %v3107 = vadd.f32 0.0, %v3106
    %v3108 = vpop.f32.mrb[0].mxu0
    %3109 = vmatprep.mubr.f32.mxu0 0.0
    %3110 = vmatmul.mubr.f32.gmra.mrb[0].mxu0 %v3018
    %v3111 = vpop.f32.mrb[0].mxu0
    %v3112 = vadd.f32 0.0, %v3111
    %v3113 = vpop.f32.mrb[0].mxu0
    %3114 = vmatprep.mubr.f32.mxu0 0.0
    %3115 = vmatmul.mubr.f32.gmra.mrb[0].mxu0 %v3020
    %v3116 = vpop.f32.mrb[0].mxu0
    %v3117 = vadd.f32 0.0, %v3116
    %v3118 = vpop.f32.mrb[0].mxu0
    %3119 = vmatprep.mubr.f32.mxu0 0.0
    %3120 = vmatmul.mubr.f32.gmra.mrb[0].mxu0 %v3022
    %v3121 = vpop.f32.mrb[0].mxu0
    %v3122 = vadd.f32 0.0, %v3121
    %v3123 = vpop.f32.mrb[0].mxu0
    %3124 = vmatprep.mubr.f32.mxu0 0.0
    %3125 = vmatmul.mubr.f32.gmra.mrb[0].mxu0 %v3024
    %v3126 = vpop.f32.mrb[0].mxu0
    %v3127 = vadd.f32 0.0, %v3126
    %v3128 = vpop.f32.mrb[0].mxu0
    %3129 = vmatprep.mubr.f32.mxu0 0.0
    %3130 = vmatmul.mubr.f32.gmra.mrb[0].mxu0 %v3026
    %v3131 = vpop.f32.mrb[0].mxu0
    %v3132 = vadd.f32 0.0, %v3131
    %v3133 = vpop.f32.mrb[0].mxu0
    %3134 = vmatprep.mubr.f32.mxu0 0.0
    %3135 = vmatmul.mubr.f32.gmra.mrb[0].mxu0 %v3028
    %v3136 = vpop.f32.mrb[0].mxu0
    %v3137 = vadd.f32 0.0, %v3136
    %v3138 = vpop.f32.mrb[0].mxu0
    %3139 = vdwg.mxu0
    %v3140 = vadd.f32 %v2981, %v3097
    %v3141 = vadd.f32 %v2982, %v3102
    %v3142 = vadd.f32 %v2983, %v3107
    %v3143 = vadd.f32 %v2984, %v3112
    %v3144 = vadd.f32 %v2985, %v3117
    %v3145 = vadd.f32 %v2986, %v3122
    %v3146 = vadd.f32 %v2987, %v3127
    %v3147 = vadd.f32 %v2988, %v3132
    %v3148 = vadd.f32 %v2989, %v3137
    %v3149 = vld [vmem:[%s1063] sm:$0xff]
    %v3150 = vld [vmem:[%s1063 + $0x8] sm:$0xff]
    %v3151 = vld [vmem:[%s1063 + $0x10] sm:$0xff]
    %v3152 = vld [vmem:[%s1063 + $0x18] sm:$0xff]
    %v3153 = vld [vmem:[%s1063 + $0x20] sm:$0xff]
    %v3155 = vrot.slane %v2370, 5
    %v3156 = vrot.slane %v2371, 5
    %v3157 = vsel %vm1070, %v3155, %v3156
    %v3158 = vrot.slane %v2372, 5
    %v3159 = vsel %vm1070, %v3156, %v3158
    %v3160 = vrot.slane %v2373, 5
    %v3161 = vsel %vm1070, %v3158, %v3160
    %v3162 = vrot.slane %v2374, 5
    %v3163 = vsel %vm1070, %v3160, %v3162
    %v3164 = vrot.slane %v2375, 5
    %v3165 = vsel %vm1070, %v3162, %v3164
    %v3166 = vrot.slane %v2376, 5
    %v3167 = vsel %vm1070, %v3164, %v3166
    %v3168 = vrot.slane %v2377, 5
    %v3169 = vsel %vm1070, %v3166, %v3168
    %v3170 = vrot.slane %v2378, 5
    %v3171 = vsel %vm1070, %v3168, %v3170
    %v3172 = vrot.slane %v2379, 5
    %v3173 = vsel %vm1070, %v3170, %v3172
    %v3174 = vsel %vm323, %v3157, 0
    %v3176 = vsel %vm323, %v3159, 0
    %v3178 = vsel %vm323, %v3161, 0
    %v3180 = vsel %vm323, %v3163, 0
    %v3182 = vsel %vm323, %v3165, 0
    %v3184 = vsel %vm323, %v3167, 0
    %v3186 = vsel %vm323, %v3169, 0
    %v3188 = vsel %vm323, %v3171, 0
    %v3190 = vsel %vm323, %v3173, 0
    %3192 = vmatprep.subr.mxu0 0.0
    %3193 = vmatpush1.msra.mxu0 %v3149
    %3194 = vmatprep.subr.mxu0 0.0
    %3195 = vmatpush1.msra.mxu0 %v3150
    %3196 = vmatprep.subr.mxu0 0.0
    %3197 = vmatpush1.msra.mxu0 %v3151
    %3198 = vmatprep.subr.mxu0 0.0
    %3199 = vmatpush1.msra.mxu0 %v3152
    %3200 = vmatprep.subr.mxu0 0.0
    %3201 = vmatpush1.msra.mxu0 %v3153
    %3202 = vmatprep.subr.mxu0 0.0
    %3203 = vmatpush1.msra.mxu0 0.0
    %3204 = vmatprep.subr.mxu0 0.0
    %3205 = vmatpush1.msra.mxu0 0.0
    %3206 = vmatprep.subr.mxu0 0.0
    %3207 = vmatpush1.msra.mxu0 0.0
    %3208 = vmatprep.subr.mxu0 0.0
    %3209 = vmatpush1.msra.mxu0 0.0
    %3210 = vmatprep.subr.mxu0 0.0
    %3211 = vmatpush1.msra.mxu0 0.0
    %3212 = vmatprep.subr.mxu0 0.0
    %3213 = vmatpush1.msra.mxu0 0.0
    %3214 = vmatprep.subr.mxu0 0.0
    %3215 = vmatpush1.msra.mxu0 0.0
    %3216 = vmatprep.subr.mxu0 0.0
    %3217 = vmatpush1.msra.mxu0 0.0
    %3218 = vmatprep.subr.mxu0 0.0
    %3219 = vmatpush1.msra.mxu0 0.0
    %3220 = vmatprep.subr.mxu0 0.0
    %3221 = vmatpush1.msra.mxu0 0.0
    %3222 = vmatprep.subr.mxu0 0.0
    %3223 = vmatpush1.msra.mxu0 0.0
    %3224 = vmatprep.subr.mxu0 0.0
    %3225 = vmatpush1.msra.mxu0 0.0
    %3226 = vmatprep.subr.mxu0 0.0
    %3227 = vmatpush1.msra.mxu0 0.0
    %3228 = vmatprep.subr.mxu0 0.0
    %3229 = vmatpush1.msra.mxu0 0.0
    %3230 = vmatprep.subr.mxu0 0.0
    %3231 = vmatpush1.msra.mxu0 0.0
    %3232 = vmatprep.subr.mxu0 0.0
    %3233 = vmatpush1.msra.mxu0 0.0
    %3234 = vmatprep.subr.mxu0 0.0
    %3235 = vmatpush1.msra.mxu0 0.0
    %3236 = vmatprep.subr.mxu0 0.0
    %3237 = vmatpush1.msra.mxu0 0.0
    %3238 = vmatprep.subr.mxu0 0.0
    %3239 = vmatpush1.msra.mxu0 0.0
    %3240 = vmatprep.subr.mxu0 0.0
    %3241 = vmatpush1.msra.mxu0 0.0
    %3242 = vmatprep.subr.mxu0 0.0
    %3243 = vmatpush1.msra.mxu0 0.0
    %3244 = vmatprep.subr.mxu0 0.0
    %3245 = vmatpush1.msra.mxu0 0.0
    %3246 = vmatprep.subr.mxu0 0.0
    %3247 = vmatpush1.msra.mxu0 0.0
    %3248 = vmatprep.subr.mxu0 0.0
    %3249 = vmatpush1.msra.mxu0 0.0
    %3250 = vmatprep.subr.mxu0 0.0
    %3251 = vmatpush1.msra.mxu0 0.0
    %3252 = vmatprep.subr.mxu0 0.0
    %3253 = vmatpush1.msra.mxu0 0.0
    %3254 = vmatprep.subr.mxu0 0.0
    %3255 = vmatpush1.msra.mxu0 0.0
    %3256 = vmatprep.mubr.f32.mxu0 0.0
    %3257 = vmatmul.mubr.f32.gmra.mrb[0].mxu0 %v3174
    %v3258 = vpop.f32.mrb[0].mxu0
    %v3259 = vadd.f32 0.0, %v3258
    %v3260 = vpop.f32.mrb[0].mxu0
    %3261 = vmatprep.mubr.f32.mxu0 0.0
    %3262 = vmatmul.mubr.f32.gmra.mrb[0].mxu0 %v3176
    %v3263 = vpop.f32.mrb[0].mxu0
    %v3264 = vadd.f32 0.0, %v3263
    %v3265 = vpop.f32.mrb[0].mxu0
    %3266 = vmatprep.mubr.f32.mxu0 0.0
    %3267 = vmatmul.mubr.f32.gmra.mrb[0].mxu0 %v3178
    %v3268 = vpop.f32.mrb[0].mxu0
    %v3269 = vadd.f32 0.0, %v3268
    %v3270 = vpop.f32.mrb[0].mxu0
    %3271 = vmatprep.mubr.f32.mxu0 0.0
    %3272 = vmatmul.mubr.f32.gmra.mrb[0].mxu0 %v3180
    %v3273 = vpop.f32.mrb[0].mxu0
    %v3274 = vadd.f32 0.0, %v3273
    %v3275 = vpop.f32.mrb[0].mxu0
    %3276 = vmatprep.mubr.f32.mxu0 0.0
    %3277 = vmatmul.mubr.f32.gmra.mrb[0].mxu0 %v3182
    %v3278 = vpop.f32.mrb[0].mxu0
    %v3279 = vadd.f32 0.0, %v3278
    %v3280 = vpop.f32.mrb[0].mxu0
    %3281 = vmatprep.mubr.f32.mxu0 0.0
    %3282 = vmatmul.mubr.f32.gmra.mrb[0].mxu0 %v3184
    %v3283 = vpop.f32.mrb[0].mxu0
    %v3284 = vadd.f32 0.0, %v3283
    %v3285 = vpop.f32.mrb[0].mxu0
    %3286 = vmatprep.mubr.f32.mxu0 0.0
    %3287 = vmatmul.mubr.f32.gmra.mrb[0].mxu0 %v3186
    %v3288 = vpop.f32.mrb[0].mxu0
    %v3289 = vadd.f32 0.0, %v3288
    %v3290 = vpop.f32.mrb[0].mxu0
    %3291 = vmatprep.mubr.f32.mxu0 0.0
    %3292 = vmatmul.mubr.f32.gmra.mrb[0].mxu0 %v3188
    %v3293 = vpop.f32.mrb[0].mxu0
    %v3294 = vadd.f32 0.0, %v3293
    %v3295 = vpop.f32.mrb[0].mxu0
    %3296 = vmatprep.mubr.f32.mxu0 0.0
    %3297 = vmatmul.mubr.f32.gmra.mrb[0].mxu0 %v3190
    %v3298 = vpop.f32.mrb[0].mxu0
    %v3299 = vadd.f32 0.0, %v3298
    %v3300 = vpop.f32.mrb[0].mxu0
    %3301 = vdwg.mxu0
    %v3302 = vadd.f32 %v3140, %v3259
    %v3303 = vadd.f32 %v3141, %v3264
    %v3304 = vadd.f32 %v3142, %v3269
    %v3305 = vadd.f32 %v3143, %v3274
    %v3306 = vadd.f32 %v3144, %v3279
    %v3307 = vadd.f32 %v3145, %v3284
    %v3308 = vadd.f32 %v3146, %v3289
    %v3309 = vadd.f32 %v3147, %v3294
    %v3310 = vadd.f32 %v3148, %v3299
    %v3311 = vld [vmem:[%s1227] sm:$0xff]
    %v3312 = vld [vmem:[%s1227 + $0x8] sm:$0xff]
    %v3313 = vld [vmem:[%s1227 + $0x10] sm:$0xff]
    %v3314 = vld [vmem:[%s1227 + $0x18] sm:$0xff]
    %v3315 = vld [vmem:[%s1227 + $0x20] sm:$0xff]
    %v3316 = vrot.slane %v2370, 6
    %v3317 = vrot.slane %v2371, 6
    %v3318 = vsel %vm1233, %v3316, %v3317
    %v3319 = vrot.slane %v2372, 6
    %v3320 = vsel %vm1233, %v3317, %v3319
    %v3321 = vrot.slane %v2373, 6
    %v3322 = vsel %vm1233, %v3319, %v3321
    %v3323 = vrot.slane %v2374, 6
    %v3324 = vsel %vm1233, %v3321, %v3323
    %v3325 = vrot.slane %v2375, 6
    %v3326 = vsel %vm1233, %v3323, %v3325
    %v3327 = vrot.slane %v2376, 6
    %v3328 = vsel %vm1233, %v3325, %v3327
    %v3329 = vrot.slane %v2377, 6
    %v3330 = vsel %vm1233, %v3327, %v3329
    %v3331 = vrot.slane %v2378, 6
    %v3332 = vsel %vm1233, %v3329, %v3331
    %v3333 = vrot.slane %v2379, 6
    %v3334 = vsel %vm1233, %v3331, %v3333
    %v3335 = vsel %vm323, %v3318, 0
    %v3337 = vsel %vm323, %v3320, 0
    %v3339 = vsel %vm323, %v3322, 0
    %v3341 = vsel %vm323, %v3324, 0
    %v3343 = vsel %vm323, %v3326, 0
    %v3345 = vsel %vm323, %v3328, 0
    %v3347 = vsel %vm323, %v3330, 0
    %v3349 = vsel %vm323, %v3332, 0
    %v3351 = vsel %vm323, %v3334, 0
    %3353 = vmatprep.subr.mxu0 0.0
    %3354 = vmatpush1.msra.mxu0 %v3311
    %3355 = vmatprep.subr.mxu0 0.0
    %3356 = vmatpush1.msra.mxu0 %v3312
    %3357 = vmatprep.subr.mxu0 0.0
    %3358 = vmatpush1.msra.mxu0 %v3313
    %3359 = vmatprep.subr.mxu0 0.0
    %3360 = vmatpush1.msra.mxu0 %v3314
    %3361 = vmatprep.subr.mxu0 0.0
    %3362 = vmatpush1.msra.mxu0 %v3315
    %3363 = vmatprep.subr.mxu0 0.0
    %3364 = vmatpush1.msra.mxu0 0.0
    %3365 = vmatprep.subr.mxu0 0.0
    %3366 = vmatpush1.msra.mxu0 0.0
    %3367 = vmatprep.subr.mxu0 0.0
    %3368 = vmatpush1.msra.mxu0 0.0
    %3369 = vmatprep.subr.mxu0 0.0
    %3370 = vmatpush1.msra.mxu0 0.0
    %3371 = vmatprep.subr.mxu0 0.0
    %3372 = vmatpush1.msra.mxu0 0.0
    %3373 = vmatprep.subr.mxu0 0.0
    %3374 = vmatpush1.msra.mxu0 0.0
    %3375 = vmatprep.subr.mxu0 0.0
    %3376 = vmatpush1.msra.mxu0 0.0
    %3377 = vmatprep.subr.mxu0 0.0
    %3378 = vmatpush1.msra.mxu0 0.0
    %3379 = vmatprep.subr.mxu0 0.0
    %3380 = vmatpush1.msra.mxu0 0.0
    %3381 = vmatprep.subr.mxu0 0.0
    %3382 = vmatpush1.msra.mxu0 0.0
    %3383 = vmatprep.subr.mxu0 0.0
    %3384 = vmatpush1.msra.mxu0 0.0
    %3385 = vmatprep.subr.mxu0 0.0
    %3386 = vmatpush1.msra.mxu0 0.0
    %3387 = vmatprep.subr.mxu0 0.0
    %3388 = vmatpush1.msra.mxu0 0.0
    %3389 = vmatprep.subr.mxu0 0.0
    %3390 = vmatpush1.msra.mxu0 0.0
    %3391 = vmatprep.subr.mxu0 0.0
    %3392 = vmatpush1.msra.mxu0 0.0
    %3393 = vmatprep.subr.mxu0 0.0
    %3394 = vmatpush1.msra.mxu0 0.0
    %3395 = vmatprep.subr.mxu0 0.0
    %3396 = vmatpush1.msra.mxu0 0.0
    %3397 = vmatprep.subr.mxu0 0.0
    %3398 = vmatpush1.msra.mxu0 0.0
    %3399 = vmatprep.subr.mxu0 0.0
    %3400 = vmatpush1.msra.mxu0 0.0
    %3401 = vmatprep.subr.mxu0 0.0
    %3402 = vmatpush1.msra.mxu0 0.0
    %3403 = vmatprep.subr.mxu0 0.0
    %3404 = vmatpush1.msra.mxu0 0.0
    %3405 = vmatprep.subr.mxu0 0.0
    %3406 = vmatpush1.msra.mxu0 0.0
    %3407 = vmatprep.subr.mxu0 0.0
    %3408 = vmatpush1.msra.mxu0 0.0
    %3409 = vmatprep.subr.mxu0 0.0
    %3410 = vmatpush1.msra.mxu0 0.0
    %3411 = vmatprep.subr.mxu0 0.0
    %3412 = vmatpush1.msra.mxu0 0.0
    %3413 = vmatprep.subr.mxu0 0.0
    %3414 = vmatpush1.msra.mxu0 0.0
    %3415 = vmatprep.subr.mxu0 0.0
    %3416 = vmatpush1.msra.mxu0 0.0
    %3417 = vmatprep.mubr.f32.mxu0 0.0
    %3418 = vmatmul.mubr.f32.gmra.mrb[0].mxu0 %v3335
    %v3419 = vpop.f32.mrb[0].mxu0
    %v3420 = vadd.f32 0.0, %v3419
    %v3421 = vpop.f32.mrb[0].mxu0
    %3422 = vmatprep.mubr.f32.mxu0 0.0
    %3423 = vmatmul.mubr.f32.gmra.mrb[0].mxu0 %v3337
    %v3424 = vpop.f32.mrb[0].mxu0
    %v3425 = vadd.f32 0.0, %v3424
    %v3426 = vpop.f32.mrb[0].mxu0
    %3427 = vmatprep.mubr.f32.mxu0 0.0
    %3428 = vmatmul.mubr.f32.gmra.mrb[0].mxu0 %v3339
    %v3429 = vpop.f32.mrb[0].mxu0
    %v3430 = vadd.f32 0.0, %v3429
    %v3431 = vpop.f32.mrb[0].mxu0
    %3432 = vmatprep.mubr.f32.mxu0 0.0
    %3433 = vmatmul.mubr.f32.gmra.mrb[0].mxu0 %v3341
    %v3434 = vpop.f32.mrb[0].mxu0
    %v3435 = vadd.f32 0.0, %v3434
    %v3436 = vpop.f32.mrb[0].mxu0
    %3437 = vmatprep.mubr.f32.mxu0 0.0
    %3438 = vmatmul.mubr.f32.gmra.mrb[0].mxu0 %v3343
    %v3439 = vpop.f32.mrb[0].mxu0
    %v3440 = vadd.f32 0.0, %v3439
    %v3441 = vpop.f32.mrb[0].mxu0
    %3442 = vmatprep.mubr.f32.mxu0 0.0
    %3443 = vmatmul.mubr.f32.gmra.mrb[0].mxu0 %v3345
    %v3444 = vpop.f32.mrb[0].mxu0
    %v3445 = vadd.f32 0.0, %v3444
    %v3446 = vpop.f32.mrb[0].mxu0
    %3447 = vmatprep.mubr.f32.mxu0 0.0
    %3448 = vmatmul.mubr.f32.gmra.mrb[0].mxu0 %v3347
    %v3449 = vpop.f32.mrb[0].mxu0
    %v3450 = vadd.f32 0.0, %v3449
    %v3451 = vpop.f32.mrb[0].mxu0
    %3452 = vmatprep.mubr.f32.mxu0 0.0
    %3453 = vmatmul.mubr.f32.gmra.mrb[0].mxu0 %v3349
    %v3454 = vpop.f32.mrb[0].mxu0
    %v3455 = vadd.f32 0.0, %v3454
    %v3456 = vpop.f32.mrb[0].mxu0
    %3457 = vmatprep.mubr.f32.mxu0 0.0
    %3458 = vmatmul.mubr.f32.gmra.mrb[0].mxu0 %v3351
    %v3459 = vpop.f32.mrb[0].mxu0
    %v3460 = vadd.f32 0.0, %v3459
    %v3461 = vpop.f32.mrb[0].mxu0
    %3462 = vdwg.mxu0
    %v3463 = vadd.f32 %v3302, %v3420
    %v3464 = vadd.f32 %v3303, %v3425
    %v3465 = vadd.f32 %v3304, %v3430
    %v3466 = vadd.f32 %v3305, %v3435
    %v3467 = vadd.f32 %v3306, %v3440
    %v3468 = vadd.f32 %v3307, %v3445
    %v3469 = vadd.f32 %v3308, %v3450
    %v3470 = vadd.f32 %v3309, %v3455
    %v3471 = vadd.f32 %v3310, %v3460
    %v3472 = vld [vmem:[%s1390] sm:$0xff]
    %v3473 = vld [vmem:[%s1390 + $0x8] sm:$0xff]
    %v3474 = vld [vmem:[%s1390 + $0x10] sm:$0xff]
    %v3475 = vld [vmem:[%s1390 + $0x18] sm:$0xff]
    %v3476 = vld [vmem:[%s1390 + $0x20] sm:$0xff]
    %v3477 = vrot.slane %v2370, 7
    %v3478 = vrot.slane %v2371, 7
    %v3479 = vsel %vm1396, %v3477, %v3478
    %v3480 = vrot.slane %v2372, 7
    %v3481 = vsel %vm1396, %v3478, %v3480
    %v3482 = vrot.slane %v2373, 7
    %v3483 = vsel %vm1396, %v3480, %v3482
    %v3484 = vrot.slane %v2374, 7
    %v3485 = vsel %vm1396, %v3482, %v3484
    %v3486 = vrot.slane %v2375, 7
    %v3487 = vsel %vm1396, %v3484, %v3486
    %v3488 = vrot.slane %v2376, 7
    %v3489 = vsel %vm1396, %v3486, %v3488
    %v3490 = vrot.slane %v2377, 7
    %v3491 = vsel %vm1396, %v3488, %v3490
    %v3492 = vrot.slane %v2378, 7
    %v3493 = vsel %vm1396, %v3490, %v3492
    %v3494 = vrot.slane %v2379, 7
    %v3495 = vsel %vm1396, %v3492, %v3494
    %v3496 = vsel %vm323, %v3479, 0
    %v3498 = vsel %vm323, %v3481, 0
    %v3500 = vsel %vm323, %v3483, 0
    %v3502 = vsel %vm323, %v3485, 0
    %v3504 = vsel %vm323, %v3487, 0
    %v3506 = vsel %vm323, %v3489, 0
    %v3508 = vsel %vm323, %v3491, 0
    %v3510 = vsel %vm323, %v3493, 0
    %v3512 = vsel %vm323, %v3495, 0
    %3514 = vmatprep.subr.mxu0 0.0
    %3515 = vmatpush1.msra.mxu0 %v3472
    %3516 = vmatprep.subr.mxu0 0.0
    %3517 = vmatpush1.msra.mxu0 %v3473
    %3518 = vmatprep.subr.mxu0 0.0
    %3519 = vmatpush1.msra.mxu0 %v3474
    %3520 = vmatprep.subr.mxu0 0.0
    %3521 = vmatpush1.msra.mxu0 %v3475
    %3522 = vmatprep.subr.mxu0 0.0
    %3523 = vmatpush1.msra.mxu0 %v3476
    %3524 = vmatprep.subr.mxu0 0.0
    %3525 = vmatpush1.msra.mxu0 0.0
    %3526 = vmatprep.subr.mxu0 0.0
    %3527 = vmatpush1.msra.mxu0 0.0
    %3528 = vmatprep.subr.mxu0 0.0
    %3529 = vmatpush1.msra.mxu0 0.0
    %3530 = vmatprep.subr.mxu0 0.0
    %3531 = vmatpush1.msra.mxu0 0.0
    %3532 = vmatprep.subr.mxu0 0.0
    %3533 = vmatpush1.msra.mxu0 0.0
    %3534 = vmatprep.subr.mxu0 0.0
    %3535 = vmatpush1.msra.mxu0 0.0
    %3536 = vmatprep.subr.mxu0 0.0
    %3537 = vmatpush1.msra.mxu0 0.0
    %3538 = vmatprep.subr.mxu0 0.0
    %3539 = vmatpush1.msra.mxu0 0.0
    %3540 = vmatprep.subr.mxu0 0.0
    %3541 = vmatpush1.msra.mxu0 0.0
    %3542 = vmatprep.subr.mxu0 0.0
    %3543 = vmatpush1.msra.mxu0 0.0
    %3544 = vmatprep.subr.mxu0 0.0
    %3545 = vmatpush1.msra.mxu0 0.0
    %3546 = vmatprep.subr.mxu0 0.0
    %3547 = vmatpush1.msra.mxu0 0.0
    %3548 = vmatprep.subr.mxu0 0.0
    %3549 = vmatpush1.msra.mxu0 0.0
    %3550 = vmatprep.subr.mxu0 0.0
    %3551 = vmatpush1.msra.mxu0 0.0
    %3552 = vmatprep.subr.mxu0 0.0
    %3553 = vmatpush1.msra.mxu0 0.0
    %3554 = vmatprep.subr.mxu0 0.0
    %3555 = vmatpush1.msra.mxu0 0.0
    %3556 = vmatprep.subr.mxu0 0.0
    %3557 = vmatpush1.msra.mxu0 0.0
    %3558 = vmatprep.subr.mxu0 0.0
    %3559 = vmatpush1.msra.mxu0 0.0
    %3560 = vmatprep.subr.mxu0 0.0
    %3561 = vmatpush1.msra.mxu0 0.0
    %3562 = vmatprep.subr.mxu0 0.0
    %3563 = vmatpush1.msra.mxu0 0.0
    %3564 = vmatprep.subr.mxu0 0.0
    %3565 = vmatpush1.msra.mxu0 0.0
    %3566 = vmatprep.subr.mxu0 0.0
    %3567 = vmatpush1.msra.mxu0 0.0
    %3568 = vmatprep.subr.mxu0 0.0
    %3569 = vmatpush1.msra.mxu0 0.0
    %3570 = vmatprep.subr.mxu0 0.0
    %3571 = vmatpush1.msra.mxu0 0.0
    %3572 = vmatprep.subr.mxu0 0.0
    %3573 = vmatpush1.msra.mxu0 0.0
    %3574 = vmatprep.subr.mxu0 0.0
    %3575 = vmatpush1.msra.mxu0 0.0
    %3576 = vmatprep.subr.mxu0 0.0
    %3577 = vmatpush1.msra.mxu0 0.0
    %3578 = vmatprep.mubr.f32.mxu0 0.0
    %3579 = vmatmul.mubr.f32.gmra.mrb[0].mxu0 %v3496
    %v3580 = vpop.f32.mrb[0].mxu0
    %v3581 = vadd.f32 0.0, %v3580
    %v3582 = vpop.f32.mrb[0].mxu0
    %3583 = vmatprep.mubr.f32.mxu0 0.0
    %3584 = vmatmul.mubr.f32.gmra.mrb[0].mxu0 %v3498
    %v3585 = vpop.f32.mrb[0].mxu0
    %v3586 = vadd.f32 0.0, %v3585
    %v3587 = vpop.f32.mrb[0].mxu0
    %3588 = vmatprep.mubr.f32.mxu0 0.0
    %3589 = vmatmul.mubr.f32.gmra.mrb[0].mxu0 %v3500
    %v3590 = vpop.f32.mrb[0].mxu0
    %v3591 = vadd.f32 0.0, %v3590
    %v3592 = vpop.f32.mrb[0].mxu0
    %3593 = vmatprep.mubr.f32.mxu0 0.0
    %3594 = vmatmul.mubr.f32.gmra.mrb[0].mxu0 %v3502
    %v3595 = vpop.f32.mrb[0].mxu0
    %v3596 = vadd.f32 0.0, %v3595
    %v3597 = vpop.f32.mrb[0].mxu0
    %3598 = vmatprep.mubr.f32.mxu0 0.0
    %3599 = vmatmul.mubr.f32.gmra.mrb[0].mxu0 %v3504
    %v3600 = vpop.f32.mrb[0].mxu0
    %v3601 = vadd.f32 0.0, %v3600
    %v3602 = vpop.f32.mrb[0].mxu0
    %3603 = vmatprep.mubr.f32.mxu0 0.0
    %3604 = vmatmul.mubr.f32.gmra.mrb[0].mxu0 %v3506
    %v3605 = vpop.f32.mrb[0].mxu0
    %v3606 = vadd.f32 0.0, %v3605
    %v3607 = vpop.f32.mrb[0].mxu0
    %3608 = vmatprep.mubr.f32.mxu0 0.0
    %3609 = vmatmul.mubr.f32.gmra.mrb[0].mxu0 %v3508
    %v3610 = vpop.f32.mrb[0].mxu0
    %v3611 = vadd.f32 0.0, %v3610
    %v3612 = vpop.f32.mrb[0].mxu0
    %3613 = vmatprep.mubr.f32.mxu0 0.0
    %3614 = vmatmul.mubr.f32.gmra.mrb[0].mxu0 %v3510
    %v3615 = vpop.f32.mrb[0].mxu0
    %v3616 = vadd.f32 0.0, %v3615
    %v3617 = vpop.f32.mrb[0].mxu0
    %3618 = vmatprep.mubr.f32.mxu0 0.0
    %3619 = vmatmul.mubr.f32.gmra.mrb[0].mxu0 %v3512
    %v3620 = vpop.f32.mrb[0].mxu0
    %v3621 = vadd.f32 0.0, %v3620
    %v3622 = vpop.f32.mrb[0].mxu0
    %3623 = vdwg.mxu0
    %v3624 = vadd.f32 %v3463, %v3581
    %v3625 = vadd.f32 %v3464, %v3586
    %v3626 = vadd.f32 %v3465, %v3591
    %v3627 = vadd.f32 %v3466, %v3596
    %v3628 = vadd.f32 %v3467, %v3601
    %v3629 = vadd.f32 %v3468, %v3606
    %v3630 = vadd.f32 %v3469, %v3611
    %v3631 = vadd.f32 %v3470, %v3616
    %v3632 = vadd.f32 %v3471, %v3621
    %v3633 = vld [vmem:[%s1553] sm:$0xff]
    %v3634 = vld [vmem:[%s1553 + $0x8] sm:$0xff]
    %v3635 = vld [vmem:[%s1553 + $0x10] sm:$0xff]
    %v3636 = vld [vmem:[%s1553 + $0x18] sm:$0xff]
    %v3637 = vld [vmem:[%s1553 + $0x20] sm:$0xff]
    %v3638 = vsel %vm323, %v2379, 0
    %3640 = vmatprep.subr.mxu0 0.0
    %3641 = vmatpush1.msra.mxu0 %v3633
    %3642 = vmatprep.subr.mxu0 0.0
    %3643 = vmatpush1.msra.mxu0 %v3634
    %3644 = vmatprep.subr.mxu0 0.0
    %3645 = vmatpush1.msra.mxu0 %v3635
    %3646 = vmatprep.subr.mxu0 0.0
    %3647 = vmatpush1.msra.mxu0 %v3636
    %3648 = vmatprep.subr.mxu0 0.0
    %3649 = vmatpush1.msra.mxu0 %v3637
    %3650 = vmatprep.subr.mxu0 0.0
    %3651 = vmatpush1.msra.mxu0 0.0
    %3652 = vmatprep.subr.mxu0 0.0
    %3653 = vmatpush1.msra.mxu0 0.0
    %3654 = vmatprep.subr.mxu0 0.0
    %3655 = vmatpush1.msra.mxu0 0.0
    %3656 = vmatprep.subr.mxu0 0.0
    %3657 = vmatpush1.msra.mxu0 0.0
    %3658 = vmatprep.subr.mxu0 0.0
    %3659 = vmatpush1.msra.mxu0 0.0
    %3660 = vmatprep.subr.mxu0 0.0
    %3661 = vmatpush1.msra.mxu0 0.0
    %3662 = vmatprep.subr.mxu0 0.0
    %3663 = vmatpush1.msra.mxu0 0.0
    %3664 = vmatprep.subr.mxu0 0.0
    %3665 = vmatpush1.msra.mxu0 0.0
    %3666 = vmatprep.subr.mxu0 0.0
    %3667 = vmatpush1.msra.mxu0 0.0
    %3668 = vmatprep.subr.mxu0 0.0
    %3669 = vmatpush1.msra.mxu0 0.0
    %3670 = vmatprep.subr.mxu0 0.0
    %3671 = vmatpush1.msra.mxu0 0.0
    %3672 = vmatprep.subr.mxu0 0.0
    %3673 = vmatpush1.msra.mxu0 0.0
    %3674 = vmatprep.subr.mxu0 0.0
    %3675 = vmatpush1.msra.mxu0 0.0
    %3676 = vmatprep.subr.mxu0 0.0
    %3677 = vmatpush1.msra.mxu0 0.0
    %3678 = vmatprep.subr.mxu0 0.0
    %3679 = vmatpush1.msra.mxu0 0.0
    %3680 = vmatprep.subr.mxu0 0.0
    %3681 = vmatpush1.msra.mxu0 0.0
    %3682 = vmatprep.subr.mxu0 0.0
    %3683 = vmatpush1.msra.mxu0 0.0
    %3684 = vmatprep.subr.mxu0 0.0
    %3685 = vmatpush1.msra.mxu0 0.0
    %3686 = vmatprep.subr.mxu0 0.0
    %3687 = vmatpush1.msra.mxu0 0.0
    %3688 = vmatprep.subr.mxu0 0.0
    %3689 = vmatpush1.msra.mxu0 0.0
    %3690 = vmatprep.subr.mxu0 0.0
    %3691 = vmatpush1.msra.mxu0 0.0
    %3692 = vmatprep.subr.mxu0 0.0
    %3693 = vmatpush1.msra.mxu0 0.0
    %3694 = vmatprep.subr.mxu0 0.0
    %3695 = vmatpush1.msra.mxu0 0.0
    %3696 = vmatprep.subr.mxu0 0.0
    %3697 = vmatpush1.msra.mxu0 0.0
    %3698 = vmatprep.subr.mxu0 0.0
    %3699 = vmatpush1.msra.mxu0 0.0
    %3700 = vmatprep.subr.mxu0 0.0
    %3701 = vmatpush1.msra.mxu0 0.0
    %3702 = vmatprep.subr.mxu0 0.0
    %3703 = vmatpush1.msra.mxu0 0.0
    %3704 = vmatprep.mubr.f32.mxu0 0.0
    %3705 = vmatmul.mubr.f32.gmra.mrb[0].mxu0 %v2546
    %v3706 = vpop.f32.mrb[0].mxu0
    %v3707 = vadd.f32 0.0, %v3706
    %v3708 = vpop.f32.mrb[0].mxu0
    %3709 = vmatprep.mubr.f32.mxu0 0.0
    %3710 = vmatmul.mubr.f32.gmra.mrb[0].mxu0 %v2548
    %v3711 = vpop.f32.mrb[0].mxu0
    %v3712 = vadd.f32 0.0, %v3711
    %v3713 = vpop.f32.mrb[0].mxu0
    %3714 = vmatprep.mubr.f32.mxu0 0.0
    %3715 = vmatmul.mubr.f32.gmra.mrb[0].mxu0 %v2550
    %v3716 = vpop.f32.mrb[0].mxu0
    %v3717 = vadd.f32 0.0, %v3716
    %v3718 = vpop.f32.mrb[0].mxu0
    %3719 = vmatprep.mubr.f32.mxu0 0.0
    %3720 = vmatmul.mubr.f32.gmra.mrb[0].mxu0 %v2552
    %v3721 = vpop.f32.mrb[0].mxu0
    %v3722 = vadd.f32 0.0, %v3721
    %v3723 = vpop.f32.mrb[0].mxu0
    %3724 = vmatprep.mubr.f32.mxu0 0.0
    %3725 = vmatmul.mubr.f32.gmra.mrb[0].mxu0 %v2554
    %v3726 = vpop.f32.mrb[0].mxu0
    %v3727 = vadd.f32 0.0, %v3726
    %v3728 = vpop.f32.mrb[0].mxu0
    %3729 = vmatprep.mubr.f32.mxu0 0.0
    %3730 = vmatmul.mubr.f32.gmra.mrb[0].mxu0 %v2556
    %v3731 = vpop.f32.mrb[0].mxu0
    %v3732 = vadd.f32 0.0, %v3731
    %v3733 = vpop.f32.mrb[0].mxu0
    %3734 = vmatprep.mubr.f32.mxu0 0.0
    %3735 = vmatmul.mubr.f32.gmra.mrb[0].mxu0 %v2558
    %v3736 = vpop.f32.mrb[0].mxu0
    %v3737 = vadd.f32 0.0, %v3736
    %v3738 = vpop.f32.mrb[0].mxu0
    %3739 = vmatprep.mubr.f32.mxu0 0.0
    %3740 = vmatmul.mubr.f32.gmra.mrb[0].mxu0 %v2560
    %v3741 = vpop.f32.mrb[0].mxu0
    %v3742 = vadd.f32 0.0, %v3741
    %v3743 = vpop.f32.mrb[0].mxu0
    %3744 = vmatprep.mubr.f32.mxu0 0.0
    %3745 = vmatmul.mubr.f32.gmra.mrb[0].mxu0 %v3638
    %v3746 = vpop.f32.mrb[0].mxu0
    %v3747 = vadd.f32 0.0, %v3746
    %v3748 = vpop.f32.mrb[0].mxu0
    %3749 = vdwg.mxu0
    %v3750 = vadd.f32 %v3624, %v3707
    %v3751 = vadd.f32 %v3625, %v3712
    %v3752 = vadd.f32 %v3626, %v3717
    %v3753 = vadd.f32 %v3627, %v3722
    %v3754 = vadd.f32 %v3628, %v3727
    %v3755 = vadd.f32 %v3629, %v3732
    %v3756 = vadd.f32 %v3630, %v3737
    %v3757 = vadd.f32 %v3631, %v3742
    %v3758 = vadd.f32 %v3632, %v3747
    %v3759 = vld [vmem:[%s1680] sm:$0xff]
    %v3760 = vld [vmem:[%s1680 + $0x8] sm:$0xff]
    %v3761 = vld [vmem:[%s1680 + $0x10] sm:$0xff]
    %v3762 = vld [vmem:[%s1680 + $0x18] sm:$0xff]
    %v3763 = vld [vmem:[%s1680 + $0x20] sm:$0xff]
    %v3764 = vrot.slane %v2379, 1
    %v3765 = vsel %vm305, %v2414, %v3764
    %v3766 = vsel %vm323, %v3765, 0
    %v3768 = vsel %vm323, %v3764, 0
    %3770 = vmatprep.subr.mxu0 0.0
    %3771 = vmatpush1.msra.mxu0 %v3759
    %3772 = vmatprep.subr.mxu0 0.0
    %3773 = vmatpush1.msra.mxu0 %v3760
    %3774 = vmatprep.subr.mxu0 0.0
    %3775 = vmatpush1.msra.mxu0 %v3761
    %3776 = vmatprep.subr.mxu0 0.0
    %3777 = vmatpush1.msra.mxu0 %v3762
    %3778 = vmatprep.subr.mxu0 0.0
    %3779 = vmatpush1.msra.mxu0 %v3763
    %3780 = vmatprep.subr.mxu0 0.0
    %3781 = vmatpush1.msra.mxu0 0.0
    %3782 = vmatprep.subr.mxu0 0.0
    %3783 = vmatpush1.msra.mxu0 0.0
    %3784 = vmatprep.subr.mxu0 0.0
    %3785 = vmatpush1.msra.mxu0 0.0
    %3786 = vmatprep.subr.mxu0 0.0
    %3787 = vmatpush1.msra.mxu0 0.0
    %3788 = vmatprep.subr.mxu0 0.0
    %3789 = vmatpush1.msra.mxu0 0.0
    %3790 = vmatprep.subr.mxu0 0.0
    %3791 = vmatpush1.msra.mxu0 0.0
    %3792 = vmatprep.subr.mxu0 0.0
    %3793 = vmatpush1.msra.mxu0 0.0
    %3794 = vmatprep.subr.mxu0 0.0
    %3795 = vmatpush1.msra.mxu0 0.0
    %3796 = vmatprep.subr.mxu0 0.0
    %3797 = vmatpush1.msra.mxu0 0.0
    %3798 = vmatprep.subr.mxu0 0.0
    %3799 = vmatpush1.msra.mxu0 0.0
    %3800 = vmatprep.subr.mxu0 0.0
    %3801 = vmatpush1.msra.mxu0 0.0
    %3802 = vmatprep.subr.mxu0 0.0
    %3803 = vmatpush1.msra.mxu0 0.0
    %3804 = vmatprep.subr.mxu0 0.0
    %3805 = vmatpush1.msra.mxu0 0.0
    %3806 = vmatprep.subr.mxu0 0.0
    %3807 = vmatpush1.msra.mxu0 0.0
    %3808 = vmatprep.subr.mxu0 0.0
    %3809 = vmatpush1.msra.mxu0 0.0
    %3810 = vmatprep.subr.mxu0 0.0
    %3811 = vmatpush1.msra.mxu0 0.0
    %3812 = vmatprep.subr.mxu0 0.0
    %3813 = vmatpush1.msra.mxu0 0.0
    %3814 = vmatprep.subr.mxu0 0.0
    %3815 = vmatpush1.msra.mxu0 0.0
    %3816 = vmatprep.subr.mxu0 0.0
    %3817 = vmatpush1.msra.mxu0 0.0
    %3818 = vmatprep.subr.mxu0 0.0
    %3819 = vmatpush1.msra.mxu0 0.0
    %3820 = vmatprep.subr.mxu0 0.0
    %3821 = vmatpush1.msra.mxu0 0.0
    %3822 = vmatprep.subr.mxu0 0.0
    %3823 = vmatpush1.msra.mxu0 0.0
    %3824 = vmatprep.subr.mxu0 0.0
    %3825 = vmatpush1.msra.mxu0 0.0
    %3826 = vmatprep.subr.mxu0 0.0
    %3827 = vmatpush1.msra.mxu0 0.0
    %3828 = vmatprep.subr.mxu0 0.0
    %3829 = vmatpush1.msra.mxu0 0.0
    %3830 = vmatprep.subr.mxu0 0.0
    %3831 = vmatpush1.msra.mxu0 0.0
    %3832 = vmatprep.subr.mxu0 0.0
    %3833 = vmatpush1.msra.mxu0 0.0
    %3834 = vmatprep.mubr.f32.mxu0 0.0
    %3835 = vmatmul.mubr.f32.gmra.mrb[0].mxu0 %v2418
    %v3836 = vpop.f32.mrb[0].mxu0
    %v3837 = vadd.f32 0.0, %v3836
    %v3838 = vpop.f32.mrb[0].mxu0
    %3839 = vmatprep.mubr.f32.mxu0 0.0
    %3840 = vmatmul.mubr.f32.gmra.mrb[0].mxu0 %v2420
    %v3841 = vpop.f32.mrb[0].mxu0
    %v3842 = vadd.f32 0.0, %v3841
    %v3843 = vpop.f32.mrb[0].mxu0
    %3844 = vmatprep.mubr.f32.mxu0 0.0
    %3845 = vmatmul.mubr.f32.gmra.mrb[0].mxu0 %v2422
    %v3846 = vpop.f32.mrb[0].mxu0
    %v3847 = vadd.f32 0.0, %v3846
    %v3848 = vpop.f32.mrb[0].mxu0
    %3849 = vmatprep.mubr.f32.mxu0 0.0
    %3850 = vmatmul.mubr.f32.gmra.mrb[0].mxu0 %v2424
    %v3851 = vpop.f32.mrb[0].mxu0
    %v3852 = vadd.f32 0.0, %v3851
    %v3853 = vpop.f32.mrb[0].mxu0
    %3854 = vmatprep.mubr.f32.mxu0 0.0
    %3855 = vmatmul.mubr.f32.gmra.mrb[0].mxu0 %v2426
    %v3856 = vpop.f32.mrb[0].mxu0
    %v3857 = vadd.f32 0.0, %v3856
    %v3858 = vpop.f32.mrb[0].mxu0
    %3859 = vmatprep.mubr.f32.mxu0 0.0
    %3860 = vmatmul.mubr.f32.gmra.mrb[0].mxu0 %v2428
    %v3861 = vpop.f32.mrb[0].mxu0
    %v3862 = vadd.f32 0.0, %v3861
    %v3863 = vpop.f32.mrb[0].mxu0
    %3864 = vmatprep.mubr.f32.mxu0 0.0
    %3865 = vmatmul.mubr.f32.gmra.mrb[0].mxu0 %v2430
    %v3866 = vpop.f32.mrb[0].mxu0
    %v3867 = vadd.f32 0.0, %v3866
    %v3868 = vpop.f32.mrb[0].mxu0
    %3869 = vmatprep.mubr.f32.mxu0 0.0
    %3870 = vmatmul.mubr.f32.gmra.mrb[0].mxu0 %v3766
    %v3871 = vpop.f32.mrb[0].mxu0
    %v3872 = vadd.f32 0.0, %v3871
    %v3873 = vpop.f32.mrb[0].mxu0
    %3874 = vmatprep.mubr.f32.mxu0 0.0
    %3875 = vmatmul.mubr.f32.gmra.mrb[0].mxu0 %v3768
    %v3876 = vpop.f32.mrb[0].mxu0
    %v3877 = vadd.f32 0.0, %v3876
    %v3878 = vpop.f32.mrb[0].mxu0
    %3879 = vdwg.mxu0
    %v3880 = vadd.f32 %v3750, %v3837
    %v3881 = vadd.f32 %v3751, %v3842
    %v3882 = vadd.f32 %v3752, %v3847
    %v3883 = vadd.f32 %v3753, %v3852
    %v3884 = vadd.f32 %v3754, %v3857
    %v3885 = vadd.f32 %v3755, %v3862
    %v3886 = vadd.f32 %v3756, %v3867
    %v3887 = vadd.f32 %v3757, %v3872
    %v3888 = vadd.f32 %v3758, %v3877
    %v3889 = vld [vmem:[#allocation10] sm:$0x1]
    %v3891 = vlaneseq
    %v3892 = vshrl.u32 %v3891, 7
    %v3893 = vsub.s32 0, %v3892
    %v3894 = vrot.slane %v3889, %v3893
    %v3896 = vadd.f32 %v3880, %v3894
    %v3897 = vadd.f32 %v3881, %v3894
    %v3898 = vadd.f32 %v3882, %v3894
    %v3899 = vadd.f32 %v3883, %v3894
    %v3900 = vadd.f32 %v3884, %v3894
    %v3901 = vadd.f32 %v3885, %v3894
    %v3902 = vadd.f32 %v3886, %v3894
    %v3903 = vadd.f32 %v3887, %v3894
    %v3904 = vadd.f32 %v3888, %v3894
    %v3905 = vmax.f32 %v3896, 0.0
    %v3906 = vmax.f32 %v3897, 0.0
    %v3907 = vmax.f32 %v3898, 0.0
    %v3908 = vmax.f32 %v3899, 0.0
    %v3909 = vmax.f32 %v3900, 0.0
    %v3910 = vmax.f32 %v3901, 0.0
    %v3911 = vmax.f32 %v3902, 0.0
    %v3912 = vmax.f32 %v3903, 0.0
    %v3913 = vmax.f32 %v3904, 0.0
    %3914 = vst.msk [vmem:[#allocation2] sm:$0xff] %vm1836, %v3905
    %3915 = vst.msk [vmem:[#allocation2 + $0x8] sm:$0xff] %vm1836, %v3906
    %3916 = vst.msk [vmem:[#allocation2 + $0x10] sm:$0xff] %vm1836, %v3907
    %3917 = vst.msk [vmem:[#allocation2 + $0x18] sm:$0xff] %vm1836, %v3908
    %3918 = vst.msk [vmem:[#allocation2 + $0x20] sm:$0xff] %vm1836, %v3909
    %3919 = vst.msk [vmem:[#allocation2 + $0x28] sm:$0xff] %vm1836, %v3910
    %3920 = vst.msk [vmem:[#allocation2 + $0x30] sm:$0xff] %vm1836, %v3911
    %3921 = vst.msk [vmem:[#allocation2 + $0x38] sm:$0xff] %vm1836, %v3912
    %3922 = vst.msk [vmem:[#allocation2 + $0x40] sm:$0xf] %vm1845, %v3913
    %v3923 = vld [vmem:[#allocation2] ss:$4 sm:$0xff]
    %v3924 = vld [vmem:[%s1848] ss:$4 sm:$0xff]
    %v3925 = vld [vmem:[%s1850] ss:$4 sm:$0xff]
    %v3926 = vld [vmem:[%s1852] ss:$4 sm:$0xff]
    %v3927 = vmax.f32 %v3923, %v3925
    %v3928 = vmax.f32 %v3924, %v3926
    %v3929 = vld [vmem:[%s1856] ss:$4 sm:$0xff]
    %v3930 = vld [vmem:[%s1858] ss:$4 sm:$0xff]
    %v3931 = vmax.f32 %v3927, %v3929
    %v3932 = vmax.f32 %v3928, %v3930
    %v3933 = vld [vmem:[%s1862] ss:$4 sm:$0xff]
    %v3934 = vld [vmem:[%s1864] ss:$4 sm:$0xff]
    %v3935 = vmax.f32 %v3931, %v3933
    %v3936 = vmax.f32 %v3932, %v3934
    %v3937 = vld [vmem:[%s1868] ss:$4 sm:$0xff]
    %v3938 = vld [vmem:[%s1870] ss:$4 sm:$0xff]
    %v3939 = vmax.f32 %v3935, %v3937
    %v3940 = vmax.f32 %v3936, %v3938
    %v3941 = vld [vmem:[%s1874] ss:$4 sm:$0xff]
    %v3942 = vld [vmem:[%s1876] ss:$4 sm:$0xff]
    %v3943 = vmax.f32 %v3939, %v3941
    %v3944 = vmax.f32 %v3940, %v3942
    %v3945 = vld [vmem:[#allocation11] sm:$0xff]
    %v3946 = vld [vmem:[#allocation11 + $0x8] sm:$0xff]
    %v3947 = vld [vmem:[#allocation11 + $0x10] sm:$0xff]
    %v3948 = vld [vmem:[#allocation11 + $0x18] sm:$0xff]
    %v3949 = vld [vmem:[#allocation11 + $0x20] sm:$0xff]
    %v3950 = vld [vmem:[#allocation11 + $0x28] sm:$0xff]
    %v3951 = vld [vmem:[#allocation11 + $0x30] sm:$0xff]
    %v3952 = vld [vmem:[#allocation11 + $0x38] sm:$0xff]
    %v3953 = vld [vmem:[%s1888] sm:$0xff]
    %v3954 = vld [vmem:[%s1888 + $0x8] sm:$0xff]
    %v3955 = vld [vmem:[%s1888 + $0x10] sm:$0xff]
    %v3956 = vld [vmem:[%s1888 + $0x18] sm:$0xff]
    %v3957 = vld [vmem:[%s1888 + $0x20] sm:$0xff]
    %v3958 = vld [vmem:[%s1888 + $0x28] sm:$0xff]
    %v3959 = vld [vmem:[%s1888 + $0x30] sm:$0xff]
    %v3960 = vld [vmem:[%s1888 + $0x38] sm:$0xff]
    %v3963 = vrot.slane %v3943, 1
    %v3964 = vrot.slane %v3944, 1
    %v3965 = vsel %vm305, %v3963, %v3964
    %v3966 = vsel %vm1836, %v3965, 0
    %v3968 = vsel %vm1836, %v3964, 0
    %3970 = vmatprep.subr.mxu0 0.0
    %3971 = vmatpush1.msra.mxu0 %v3953
    %3972 = vmatprep.subr.mxu0 0.0
    %3973 = vmatpush1.msra.mxu0 %v3954
    %3974 = vmatprep.subr.mxu0 0.0
    %3975 = vmatpush1.msra.mxu0 %v3955
    %3976 = vmatprep.subr.mxu0 0.0
    %3977 = vmatpush1.msra.mxu0 %v3956
    %3978 = vmatprep.subr.mxu0 0.0
    %3979 = vmatpush1.msra.mxu0 %v3957
    %3980 = vmatprep.subr.mxu0 0.0
    %3981 = vmatpush1.msra.mxu0 %v3958
    %3982 = vmatprep.subr.mxu0 0.0
    %3983 = vmatpush1.msra.mxu0 %v3959
    %3984 = vmatprep.subr.mxu0 0.0
    %3985 = vmatpush1.msra.mxu0 %v3960
    %3986 = vmatprep.subr.mxu0 0.0
    %3987 = vmatpush1.msra.mxu0 0.0
    %3988 = vmatprep.subr.mxu0 0.0
    %3989 = vmatpush1.msra.mxu0 0.0
    %3990 = vmatprep.subr.mxu0 0.0
    %3991 = vmatpush1.msra.mxu0 0.0
    %3992 = vmatprep.subr.mxu0 0.0
    %3993 = vmatpush1.msra.mxu0 0.0
    %3994 = vmatprep.subr.mxu0 0.0
    %3995 = vmatpush1.msra.mxu0 0.0
    %3996 = vmatprep.subr.mxu0 0.0
    %3997 = vmatpush1.msra.mxu0 0.0
    %3998 = vmatprep.subr.mxu0 0.0
    %3999 = vmatpush1.msra.mxu0 0.0
    %4000 = vmatprep.subr.mxu0 0.0
    %4001 = vmatpush1.msra.mxu0 0.0
    %4002 = vmatprep.subr.mxu0 0.0
    %4003 = vmatpush1.msra.mxu0 0.0
    %4004 = vmatprep.subr.mxu0 0.0
    %4005 = vmatpush1.msra.mxu0 0.0
    %4006 = vmatprep.subr.mxu0 0.0
    %4007 = vmatpush1.msra.mxu0 0.0
    %4008 = vmatprep.subr.mxu0 0.0
    %4009 = vmatpush1.msra.mxu0 0.0
    %4010 = vmatprep.subr.mxu0 0.0
    %4011 = vmatpush1.msra.mxu0 0.0
    %4012 = vmatprep.subr.mxu0 0.0
    %4013 = vmatpush1.msra.mxu0 0.0
    %4014 = vmatprep.subr.mxu0 0.0
    %4015 = vmatpush1.msra.mxu0 0.0
    %4016 = vmatprep.subr.mxu0 0.0
    %4017 = vmatpush1.msra.mxu0 0.0
    %4018 = vmatprep.subr.mxu0 0.0
    %4019 = vmatpush1.msra.mxu0 0.0
    %4020 = vmatprep.subr.mxu0 0.0
    %4021 = vmatpush1.msra.mxu0 0.0
    %4022 = vmatprep.subr.mxu0 0.0
    %4023 = vmatpush1.msra.mxu0 0.0
    %4024 = vmatprep.subr.mxu0 0.0
    %4025 = vmatpush1.msra.mxu0 0.0
    %4026 = vmatprep.subr.mxu0 0.0
    %4027 = vmatpush1.msra.mxu0 0.0
    %4028 = vmatprep.subr.mxu0 0.0
    %4029 = vmatpush1.msra.mxu0 0.0
    %4030 = vmatprep.subr.mxu0 0.0
    %4031 = vmatpush1.msra.mxu0 0.0
    %4032 = vmatprep.subr.mxu0 0.0
    %4033 = vmatpush1.msra.mxu0 0.0
    %4034 = vmatprep.mubr.f32.mxu0 0.0
    %4035 = vmatmul.mubr.f32.gmra.mrb[0].mxu0 %v3966
    %v4036 = vpop.f32.mrb[0].mxu0
    %v4037 = vadd.f32 0.0, %v4036
    %v4038 = vpop.f32.mrb[0].mxu0
    %4039 = vmatprep.mubr.f32.mxu0 0.0
    %4040 = vmatmul.mubr.f32.gmra.mrb[0].mxu0 %v3968
    %v4041 = vpop.f32.mrb[0].mxu0
    %v4042 = vadd.f32 0.0, %v4041
    %v4043 = vpop.f32.mrb[0].mxu0
    %4044 = vdwg.mxu0
    %v4045 = vsel %vm1836, %v3943, 0
    %v4047 = vsel %vm1836, %v3944, 0
    %4049 = vmatprep.subr.mxu0 0.0
    %4050 = vmatpush1.msra.mxu0 %v3945
    %4051 = vmatprep.subr.mxu0 0.0
    %4052 = vmatpush1.msra.mxu0 %v3946
    %4053 = vmatprep.subr.mxu0 0.0
    %4054 = vmatpush1.msra.mxu0 %v3947
    %4055 = vmatprep.subr.mxu0 0.0
    %4056 = vmatpush1.msra.mxu0 %v3948
    %4057 = vmatprep.subr.mxu0 0.0
    %4058 = vmatpush1.msra.mxu0 %v3949
    %4059 = vmatprep.subr.mxu0 0.0
    %4060 = vmatpush1.msra.mxu0 %v3950
    %4061 = vmatprep.subr.mxu0 0.0
    %4062 = vmatpush1.msra.mxu0 %v3951
    %4063 = vmatprep.subr.mxu0 0.0
    %4064 = vmatpush1.msra.mxu0 %v3952
    %4065 = vmatprep.subr.mxu0 0.0
    %4066 = vmatpush1.msra.mxu0 0.0
    %4067 = vmatprep.subr.mxu0 0.0
    %4068 = vmatpush1.msra.mxu0 0.0
    %4069 = vmatprep.subr.mxu0 0.0
    %4070 = vmatpush1.msra.mxu0 0.0
    %4071 = vmatprep.subr.mxu0 0.0
    %4072 = vmatpush1.msra.mxu0 0.0
    %4073 = vmatprep.subr.mxu0 0.0
    %4074 = vmatpush1.msra.mxu0 0.0
    %4075 = vmatprep.subr.mxu0 0.0
    %4076 = vmatpush1.msra.mxu0 0.0
    %4077 = vmatprep.subr.mxu0 0.0
    %4078 = vmatpush1.msra.mxu0 0.0
    %4079 = vmatprep.subr.mxu0 0.0
    %4080 = vmatpush1.msra.mxu0 0.0
    %4081 = vmatprep.subr.mxu0 0.0
    %4082 = vmatpush1.msra.mxu0 0.0
    %4083 = vmatprep.subr.mxu0 0.0
    %4084 = vmatpush1.msra.mxu0 0.0
    %4085 = vmatprep.subr.mxu0 0.0
    %4086 = vmatpush1.msra.mxu0 0.0
    %4087 = vmatprep.subr.mxu0 0.0
    %4088 = vmatpush1.msra.mxu0 0.0
    %4089 = vmatprep.subr.mxu0 0.0
    %4090 = vmatpush1.msra.mxu0 0.0
    %4091 = vmatprep.subr.mxu0 0.0
    %4092 = vmatpush1.msra.mxu0 0.0
    %4093 = vmatprep.subr.mxu0 0.0
    %4094 = vmatpush1.msra.mxu0 0.0
    %4095 = vmatprep.subr.mxu0 0.0
    %4096 = vmatpush1.msra.mxu0 0.0
    %4097 = vmatprep.subr.mxu0 0.0
    %4098 = vmatpush1.msra.mxu0 0.0
    %4099 = vmatprep.subr.mxu0 0.0
    %4100 = vmatpush1.msra.mxu0 0.0
    %4101 = vmatprep.subr.mxu0 0.0
    %4102 = vmatpush1.msra.mxu0 0.0
    %4103 = vmatprep.subr.mxu0 0.0
    %4104 = vmatpush1.msra.mxu0 0.0
    %4105 = vmatprep.subr.mxu0 0.0
    %4106 = vmatpush1.msra.mxu0 0.0
    %4107 = vmatprep.subr.mxu0 0.0
    %4108 = vmatpush1.msra.mxu0 0.0
    %4109 = vmatprep.subr.mxu0 0.0
    %4110 = vmatpush1.msra.mxu0 0.0
    %4111 = vmatprep.subr.mxu0 0.0
    %4112 = vmatpush1.msra.mxu0 0.0
    %4113 = vmatprep.mubr.f32.mxu0 0.0
    %4114 = vmatmul.mubr.f32.gmra.mrb[0].mxu0 %v4045
    %v4115 = vpop.f32.mrb[0].mxu0
    %v4116 = vadd.f32 %v4037, %v4115
    %v4117 = vpop.f32.mrb[0].mxu0
    %4118 = vmatprep.mubr.f32.mxu0 0.0
    %4119 = vmatmul.mubr.f32.gmra.mrb[0].mxu0 %v4047
    %v4120 = vpop.f32.mrb[0].mxu0
    %v4121 = vadd.f32 %v4042, %v4120
    %v4122 = vpop.f32.mrb[0].mxu0
    %4123 = vdwg.mxu0
    %v4124 = vld [vmem:[%s2060] sm:$0xff]
    %v4125 = vld [vmem:[%s2060 + $0x8] sm:$0xff]
    %v4126 = vld [vmem:[%s2060 + $0x10] sm:$0xff]
    %v4127 = vld [vmem:[%s2060 + $0x18] sm:$0xff]
    %v4128 = vld [vmem:[%s2060 + $0x20] sm:$0xff]
    %v4129 = vld [vmem:[%s2060 + $0x28] sm:$0xff]
    %v4130 = vld [vmem:[%s2060 + $0x30] sm:$0xff]
    %v4131 = vld [vmem:[%s2060 + $0x38] sm:$0xff]
    %v4132 = vrot.slane %v3943, 2
    %v4133 = vrot.slane %v3944, 2
    %v4134 = vsel %vm586, %v4132, %v4133
    %v4135 = vsel %vm1836, %v4134, 0
    %v4137 = vsel %vm1836, %v4133, 0
    %4139 = vmatprep.subr.mxu0 0.0
    %4140 = vmatpush1.msra.mxu0 %v4124
    %4141 = vmatprep.subr.mxu0 0.0
    %4142 = vmatpush1.msra.mxu0 %v4125
    %4143 = vmatprep.subr.mxu0 0.0
    %4144 = vmatpush1.msra.mxu0 %v4126
    %4145 = vmatprep.subr.mxu0 0.0
    %4146 = vmatpush1.msra.mxu0 %v4127
    %4147 = vmatprep.subr.mxu0 0.0
    %4148 = vmatpush1.msra.mxu0 %v4128
    %4149 = vmatprep.subr.mxu0 0.0
    %4150 = vmatpush1.msra.mxu0 %v4129
    %4151 = vmatprep.subr.mxu0 0.0
    %4152 = vmatpush1.msra.mxu0 %v4130
    %4153 = vmatprep.subr.mxu0 0.0
    %4154 = vmatpush1.msra.mxu0 %v4131
    %4155 = vmatprep.subr.mxu0 0.0
    %4156 = vmatpush1.msra.mxu0 0.0
    %4157 = vmatprep.subr.mxu0 0.0
    %4158 = vmatpush1.msra.mxu0 0.0
    %4159 = vmatprep.subr.mxu0 0.0
    %4160 = vmatpush1.msra.mxu0 0.0
    %4161 = vmatprep.subr.mxu0 0.0
    %4162 = vmatpush1.msra.mxu0 0.0
    %4163 = vmatprep.subr.mxu0 0.0
    %4164 = vmatpush1.msra.mxu0 0.0
    %4165 = vmatprep.subr.mxu0 0.0
    %4166 = vmatpush1.msra.mxu0 0.0
    %4167 = vmatprep.subr.mxu0 0.0
    %4168 = vmatpush1.msra.mxu0 0.0
    %4169 = vmatprep.subr.mxu0 0.0
    %4170 = vmatpush1.msra.mxu0 0.0
    %4171 = vmatprep.subr.mxu0 0.0
    %4172 = vmatpush1.msra.mxu0 0.0
    %4173 = vmatprep.subr.mxu0 0.0
    %4174 = vmatpush1.msra.mxu0 0.0
    %4175 = vmatprep.subr.mxu0 0.0
    %4176 = vmatpush1.msra.mxu0 0.0
    %4177 = vmatprep.subr.mxu0 0.0
    %4178 = vmatpush1.msra.mxu0 0.0
    %4179 = vmatprep.subr.mxu0 0.0
    %4180 = vmatpush1.msra.mxu0 0.0
    %4181 = vmatprep.subr.mxu0 0.0
    %4182 = vmatpush1.msra.mxu0 0.0
    %4183 = vmatprep.subr.mxu0 0.0
    %4184 = vmatpush1.msra.mxu0 0.0
    %4185 = vmatprep.subr.mxu0 0.0
    %4186 = vmatpush1.msra.mxu0 0.0
    %4187 = vmatprep.subr.mxu0 0.0
    %4188 = vmatpush1.msra.mxu0 0.0
    %4189 = vmatprep.subr.mxu0 0.0
    %4190 = vmatpush1.msra.mxu0 0.0
    %4191 = vmatprep.subr.mxu0 0.0
    %4192 = vmatpush1.msra.mxu0 0.0
    %4193 = vmatprep.subr.mxu0 0.0
    %4194 = vmatpush1.msra.mxu0 0.0
    %4195 = vmatprep.subr.mxu0 0.0
    %4196 = vmatpush1.msra.mxu0 0.0
    %4197 = vmatprep.subr.mxu0 0.0
    %4198 = vmatpush1.msra.mxu0 0.0
    %4199 = vmatprep.subr.mxu0 0.0
    %4200 = vmatpush1.msra.mxu0 0.0
    %4201 = vmatprep.subr.mxu0 0.0
    %4202 = vmatpush1.msra.mxu0 0.0
    %4203 = vmatprep.mubr.f32.mxu0 0.0
    %4204 = vmatmul.mubr.f32.gmra.mrb[0].mxu0 %v4135
    %v4205 = vpop.f32.mrb[0].mxu0
    %v4206 = vadd.f32 0.0, %v4205
    %v4207 = vpop.f32.mrb[0].mxu0
    %4208 = vmatprep.mubr.f32.mxu0 0.0
    %4209 = vmatmul.mubr.f32.gmra.mrb[0].mxu0 %v4137
    %v4210 = vpop.f32.mrb[0].mxu0
    %v4211 = vadd.f32 0.0, %v4210
    %v4212 = vpop.f32.mrb[0].mxu0
    %4213 = vdwg.mxu0
    %v4214 = vadd.f32 %v4116, %v4206
    %v4215 = vadd.f32 %v4121, %v4211
    %v4216 = vld [vmem:[%s2153] sm:$0xff]
    %v4217 = vld [vmem:[%s2153 + $0x8] sm:$0xff]
    %v4218 = vld [vmem:[%s2153 + $0x10] sm:$0xff]
    %v4219 = vld [vmem:[%s2153 + $0x18] sm:$0xff]
    %v4220 = vld [vmem:[%s2153 + $0x20] sm:$0xff]
    %v4221 = vld [vmem:[%s2153 + $0x28] sm:$0xff]
    %v4222 = vld [vmem:[%s2153 + $0x30] sm:$0xff]
    %v4223 = vld [vmem:[%s2153 + $0x38] sm:$0xff]
    %v4224 = vrot.slane %v3943, 3
    %v4225 = vrot.slane %v3944, 3
    %v4226 = vsel %vm747, %v4224, %v4225
    %v4227 = vsel %vm1836, %v4226, 0
    %v4229 = vsel %vm1836, %v4225, 0
    %4231 = vmatprep.subr.mxu0 0.0
    %4232 = vmatpush1.msra.mxu0 %v4216
    %4233 = vmatprep.subr.mxu0 0.0
    %4234 = vmatpush1.msra.mxu0 %v4217
    %4235 = vmatprep.subr.mxu0 0.0
    %4236 = vmatpush1.msra.mxu0 %v4218
    %4237 = vmatprep.subr.mxu0 0.0
    %4238 = vmatpush1.msra.mxu0 %v4219
    %4239 = vmatprep.subr.mxu0 0.0
    %4240 = vmatpush1.msra.mxu0 %v4220
    %4241 = vmatprep.subr.mxu0 0.0
    %4242 = vmatpush1.msra.mxu0 %v4221
    %4243 = vmatprep.subr.mxu0 0.0
    %4244 = vmatpush1.msra.mxu0 %v4222
    %4245 = vmatprep.subr.mxu0 0.0
    %4246 = vmatpush1.msra.mxu0 %v4223
    %4247 = vmatprep.subr.mxu0 0.0
    %4248 = vmatpush1.msra.mxu0 0.0
    %4249 = vmatprep.subr.mxu0 0.0
    %4250 = vmatpush1.msra.mxu0 0.0
    %4251 = vmatprep.subr.mxu0 0.0
    %4252 = vmatpush1.msra.mxu0 0.0
    %4253 = vmatprep.subr.mxu0 0.0
    %4254 = vmatpush1.msra.mxu0 0.0
    %4255 = vmatprep.subr.mxu0 0.0
    %4256 = vmatpush1.msra.mxu0 0.0
    %4257 = vmatprep.subr.mxu0 0.0
    %4258 = vmatpush1.msra.mxu0 0.0
    %4259 = vmatprep.subr.mxu0 0.0
    %4260 = vmatpush1.msra.mxu0 0.0
    %4261 = vmatprep.subr.mxu0 0.0
    %4262 = vmatpush1.msra.mxu0 0.0
    %4263 = vmatprep.subr.mxu0 0.0
    %4264 = vmatpush1.msra.mxu0 0.0
    %4265 = vmatprep.subr.mxu0 0.0
    %4266 = vmatpush1.msra.mxu0 0.0
    %4267 = vmatprep.subr.mxu0 0.0
    %4268 = vmatpush1.msra.mxu0 0.0
    %4269 = vmatprep.subr.mxu0 0.0
    %4270 = vmatpush1.msra.mxu0 0.0
    %4271 = vmatprep.subr.mxu0 0.0
    %4272 = vmatpush1.msra.mxu0 0.0
    %4273 = vmatprep.subr.mxu0 0.0
    %4274 = vmatpush1.msra.mxu0 0.0
    %4275 = vmatprep.subr.mxu0 0.0
    %4276 = vmatpush1.msra.mxu0 0.0
    %4277 = vmatprep.subr.mxu0 0.0
    %4278 = vmatpush1.msra.mxu0 0.0
    %4279 = vmatprep.subr.mxu0 0.0
    %4280 = vmatpush1.msra.mxu0 0.0
    %4281 = vmatprep.subr.mxu0 0.0
    %4282 = vmatpush1.msra.mxu0 0.0
    %4283 = vmatprep.subr.mxu0 0.0
    %4284 = vmatpush1.msra.mxu0 0.0
    %4285 = vmatprep.subr.mxu0 0.0
    %4286 = vmatpush1.msra.mxu0 0.0
    %4287 = vmatprep.subr.mxu0 0.0
    %4288 = vmatpush1.msra.mxu0 0.0
    %4289 = vmatprep.subr.mxu0 0.0
    %4290 = vmatpush1.msra.mxu0 0.0
    %4291 = vmatprep.subr.mxu0 0.0
    %4292 = vmatpush1.msra.mxu0 0.0
    %4293 = vmatprep.subr.mxu0 0.0
    %4294 = vmatpush1.msra.mxu0 0.0
    %4295 = vmatprep.mubr.f32.mxu0 0.0
    %4296 = vmatmul.mubr.f32.gmra.mrb[0].mxu0 %v4227
    %v4297 = vpop.f32.mrb[0].mxu0
    %v4298 = vadd.f32 0.0, %v4297
    %v4299 = vpop.f32.mrb[0].mxu0
    %4300 = vmatprep.mubr.f32.mxu0 0.0
    %4301 = vmatmul.mubr.f32.gmra.mrb[0].mxu0 %v4229
    %v4302 = vpop.f32.mrb[0].mxu0
    %v4303 = vadd.f32 0.0, %v4302
    %v4304 = vpop.f32.mrb[0].mxu0
    %4305 = vdwg.mxu0
    %v4306 = vadd.f32 %v4214, %v4298
    %v4307 = vadd.f32 %v4215, %v4303
    %v4308 = vld [vmem:[%s2246] sm:$0xff]
    %v4309 = vld [vmem:[%s2246 + $0x8] sm:$0xff]
    %v4310 = vld [vmem:[%s2246 + $0x10] sm:$0xff]
    %v4311 = vld [vmem:[%s2246 + $0x18] sm:$0xff]
    %v4312 = vld [vmem:[%s2246 + $0x20] sm:$0xff]
    %v4313 = vld [vmem:[%s2246 + $0x28] sm:$0xff]
    %v4314 = vld [vmem:[%s2246 + $0x30] sm:$0xff]
    %v4315 = vld [vmem:[%s2246 + $0x38] sm:$0xff]
    %v4316 = vrot.slane %v3943, 4
    %v4317 = vrot.slane %v3944, 4
    %v4318 = vsel %vm908, %v4316, %v4317
    %v4319 = vsel %vm1836, %v4318, 0
    %v4321 = vsel %vm1836, %v4317, 0
    %4323 = vmatprep.subr.mxu0 0.0
    %4324 = vmatpush1.msra.mxu0 %v4308
    %4325 = vmatprep.subr.mxu0 0.0
    %4326 = vmatpush1.msra.mxu0 %v4309
    %4327 = vmatprep.subr.mxu0 0.0
    %4328 = vmatpush1.msra.mxu0 %v4310
    %4329 = vmatprep.subr.mxu0 0.0
    %4330 = vmatpush1.msra.mxu0 %v4311
    %4331 = vmatprep.subr.mxu0 0.0
    %4332 = vmatpush1.msra.mxu0 %v4312
    %4333 = vmatprep.subr.mxu0 0.0
    %4334 = vmatpush1.msra.mxu0 %v4313
    %4335 = vmatprep.subr.mxu0 0.0
    %4336 = vmatpush1.msra.mxu0 %v4314
    %4337 = vmatprep.subr.mxu0 0.0
    %4338 = vmatpush1.msra.mxu0 %v4315
    %4339 = vmatprep.subr.mxu0 0.0
    %4340 = vmatpush1.msra.mxu0 0.0
    %4341 = vmatprep.subr.mxu0 0.0
    %4342 = vmatpush1.msra.mxu0 0.0
    %4343 = vmatprep.subr.mxu0 0.0
    %4344 = vmatpush1.msra.mxu0 0.0
    %4345 = vmatprep.subr.mxu0 0.0
    %4346 = vmatpush1.msra.mxu0 0.0
    %4347 = vmatprep.subr.mxu0 0.0
    %4348 = vmatpush1.msra.mxu0 0.0
    %4349 = vmatprep.subr.mxu0 0.0
    %4350 = vmatpush1.msra.mxu0 0.0
    %4351 = vmatprep.subr.mxu0 0.0
    %4352 = vmatpush1.msra.mxu0 0.0
    %4353 = vmatprep.subr.mxu0 0.0
    %4354 = vmatpush1.msra.mxu0 0.0
    %4355 = vmatprep.subr.mxu0 0.0
    %4356 = vmatpush1.msra.mxu0 0.0
    %4357 = vmatprep.subr.mxu0 0.0
    %4358 = vmatpush1.msra.mxu0 0.0
    %4359 = vmatprep.subr.mxu0 0.0
    %4360 = vmatpush1.msra.mxu0 0.0
    %4361 = vmatprep.subr.mxu0 0.0
    %4362 = vmatpush1.msra.mxu0 0.0
    %4363 = vmatprep.subr.mxu0 0.0
    %4364 = vmatpush1.msra.mxu0 0.0
    %4365 = vmatprep.subr.mxu0 0.0
    %4366 = vmatpush1.msra.mxu0 0.0
    %4367 = vmatprep.subr.mxu0 0.0
    %4368 = vmatpush1.msra.mxu0 0.0
    %4369 = vmatprep.subr.mxu0 0.0
    %4370 = vmatpush1.msra.mxu0 0.0
    %4371 = vmatprep.subr.mxu0 0.0
    %4372 = vmatpush1.msra.mxu0 0.0
    %4373 = vmatprep.subr.mxu0 0.0
    %4374 = vmatpush1.msra.mxu0 0.0
    %4375 = vmatprep.subr.mxu0 0.0
    %4376 = vmatpush1.msra.mxu0 0.0
    %4377 = vmatprep.subr.mxu0 0.0
    %4378 = vmatpush1.msra.mxu0 0.0
    %4379 = vmatprep.subr.mxu0 0.0
    %4380 = vmatpush1.msra.mxu0 0.0
    %4381 = vmatprep.subr.mxu0 0.0
    %4382 = vmatpush1.msra.mxu0 0.0
    %4383 = vmatprep.subr.mxu0 0.0
    %4384 = vmatpush1.msra.mxu0 0.0
    %4385 = vmatprep.subr.mxu0 0.0
    %4386 = vmatpush1.msra.mxu0 0.0
    %4387 = vmatprep.mubr.f32.mxu0 0.0
    %4388 = vmatmul.mubr.f32.gmra.mrb[0].mxu0 %v4319
    %v4389 = vpop.f32.mrb[0].mxu0
    %v4390 = vadd.f32 0.0, %v4389
    %v4391 = vpop.f32.mrb[0].mxu0
    %4392 = vmatprep.mubr.f32.mxu0 0.0
    %4393 = vmatmul.mubr.f32.gmra.mrb[0].mxu0 %v4321
    %v4394 = vpop.f32.mrb[0].mxu0
    %v4395 = vadd.f32 0.0, %v4394
    %v4396 = vpop.f32.mrb[0].mxu0
    %4397 = vdwg.mxu0
    %v4398 = vadd.f32 %v4306, %v4390
    %v4399 = vadd.f32 %v4307, %v4395
    %v4400 = vld [vmem:[#allocation13] sm:$0x1]
    %v4402 = vlaneseq
    %v4403 = vshrl.u32 %v4402, 7
    %v4404 = vsub.s32 0, %v4403
    %v4405 = vrot.slane %v4400, %v4404
    %v4407 = vadd.f32 %v4398, %v4405
    %v4408 = vadd.f32 %v4399, %v4405
    %v4409 = vmax.f32 %v4407, 0.0
    %v4410 = vmax.f32 %v4408, 0.0
    %4411 = vst [vmem:[#allocation3] sm:$0xff] %v4409
    %4412 = vst [vmem:[#allocation3 + $0x8] sm:$0xf] %v4410
    %v4413 = vld [vmem:[#allocation3] ss:$4 sm:$0x3]
    %v4414 = vld [vmem:[%s2353] ss:$4 sm:$0x3]
    %v4415 = vmax.f32 %v4413, %v4414
    %v4416 = vld [vmem:[%s2356] ss:$4 sm:$0x3]
    %v4417 = vmax.f32 %v4415, %v4416
    %v4418 = vld [vmem:[%s2359] ss:$4 sm:$0x3]
    %v4419 = vmax.f32 %v4417, %v4418
    %v4420 = vld [vmem:[%s2362] ss:$4 sm:$0x3]
    %v4421 = vmax.f32 %v4419, %v4420
    %v4422 = vld [vmem:[%s2365] ss:$4 sm:$0x3]
    %v4423 = vmax.f32 %v4421, %v4422
    %4424 = vst [vmem:[#allocation4 + $0x2] sm:$0x3] %v4423
    %v4425 = vld [vmem:[#allocation4] ss:$2 sm:$0x3]
    %v4426 = vld [vmem:[#allocation14] sm:$0xff]
    %v4427 = vld [vmem:[#allocation14 + $0x8] sm:$0xff]
    %v4428 = vld [vmem:[#allocation14 + $0x10] sm:$0xff]
    %v4429 = vld [vmem:[#allocation14 + $0x18] sm:$0xff]
    %v4430 = vld [vmem:[#allocation14 + $0x20] sm:$0xff]
    %v4431 = vld [vmem:[#allocation14 + $0x28] sm:$0xff]
    %v4432 = vld [vmem:[#allocation14 + $0x30] sm:$0xff]
    %v4433 = vld [vmem:[#allocation14 + $0x38] sm:$0xff]
    %v4434 = vld [vmem:[#allocation14 + $0x40] sm:$0xff]
    %v4435 = vld [vmem:[#allocation14 + $0x48] sm:$0xff]
    %v4436 = vld [vmem:[#allocation14 + $0x50] sm:$0xff]
    %v4437 = vld [vmem:[#allocation14 + $0x58] sm:$0xff]
    %v4438 = vld [vmem:[#allocation14 + $0x60] sm:$0xff]
    %v4439 = vld [vmem:[#allocation14 + $0x68] sm:$0xff]
    %v4440 = vld [vmem:[#allocation14 + $0x70] sm:$0xff]
    %v4441 = vld [vmem:[#allocation14 + $0x78] sm:$0xff]
    %v4442 = vld [vmem:[#allocation14 + $0x80] sm:$0xff]
    %v4443 = vld [vmem:[#allocation14 + $0x88] sm:$0xff]
    %v4444 = vld [vmem:[#allocation14 + $0x90] sm:$0xff]
    %v4445 = vld [vmem:[#allocation14 + $0x98] sm:$0xff]
    %v4446 = vld [vmem:[#allocation14 + $0xa0] sm:$0xff]
    %v4447 = vld [vmem:[#allocation14 + $0xa8] sm:$0xff]
    %v4448 = vld [vmem:[#allocation14 + $0xb0] sm:$0xff]
    %v4449 = vld [vmem:[#allocation14 + $0xb8] sm:$0xff]
    %v4450 = vld [vmem:[#allocation14 + $0xc0] sm:$0xff]
    %v4451 = vld [vmem:[#allocation14 + $0xc8] sm:$0xff]
    %v4452 = vld [vmem:[#allocation14 + $0xd0] sm:$0xff]
    %v4453 = vld [vmem:[#allocation14 + $0xd8] sm:$0xff]
    %v4454 = vld [vmem:[#allocation14 + $0xe0] sm:$0xff]
    %v4455 = vld [vmem:[#allocation14 + $0xe8] sm:$0xff]
    %v4456 = vld [vmem:[#allocation14 + $0xf0] sm:$0xff]
    %v4457 = vld [vmem:[#allocation14 + $0xf8] sm:$0xff]
    %v4458 = vld [vmem:[#allocation14 + $0x100] sm:$0xff]
    %v4459 = vld [vmem:[#allocation14 + $0x108] sm:$0xff]
    %v4460 = vld [vmem:[#allocation14 + $0x110] sm:$0xff]
    %v4461 = vld [vmem:[#allocation14 + $0x118] sm:$0xff]
    %v4462 = vld [vmem:[#allocation14 + $0x120] sm:$0xff]
    %v4463 = vld [vmem:[#allocation14 + $0x128] sm:$0xff]
    %v4464 = vld [vmem:[#allocation14 + $0x130] sm:$0xff]
    %v4465 = vld [vmem:[#allocation14 + $0x138] sm:$0xff]
    %v4466 = vld [vmem:[#allocation14 + $0x140] sm:$0xff]
    %v4467 = vld [vmem:[#allocation14 + $0x148] sm:$0xff]
    %v4468 = vld [vmem:[#allocation14 + $0x150] sm:$0xff]
    %v4469 = vld [vmem:[#allocation14 + $0x158] sm:$0xff]
    %v4470 = vld [vmem:[#allocation14 + $0x160] sm:$0xff]
    %v4471 = vld [vmem:[#allocation14 + $0x168] sm:$0xff]
    %v4472 = vld [vmem:[#allocation14 + $0x170] sm:$0xff]
    %v4473 = vld [vmem:[#allocation14 + $0x178] sm:$0xff]
    %v4474 = vld [vmem:[#allocation14 + $0x180] sm:$0xff]
    %v4475 = vld [vmem:[#allocation14 + $0x188] sm:$0xff]
    %v4476 = vld [vmem:[#allocation14 + $0x190] sm:$0xff]
    %v4477 = vld [vmem:[#allocation14 + $0x198] sm:$0xff]
    %v4478 = vld [vmem:[#allocation14 + $0x1a0] sm:$0xff]
    %v4479 = vld [vmem:[#allocation14 + $0x1a8] sm:$0xff]
    %v4480 = vld [vmem:[#allocation14 + $0x1b0] sm:$0xff]
    %v4481 = vld [vmem:[#allocation14 + $0x1b8] sm:$0xff]
    %v4482 = vld [vmem:[#allocation14 + $0x1c0] sm:$0xff]
    %v4483 = vld [vmem:[#allocation14 + $0x1c8] sm:$0xff]
    %v4484 = vld [vmem:[#allocation14 + $0x1d0] sm:$0xff]
    %v4485 = vld [vmem:[#allocation14 + $0x1d8] sm:$0xff]
    %v4486 = vld [vmem:[#allocation14 + $0x1e0] sm:$0xff]
    %v4487 = vld [vmem:[#allocation14 + $0x1e8] sm:$0xff]
    %v4488 = vld [vmem:[#allocation14 + $0x1f0] sm:$0xff]
    %v4489 = vld [vmem:[#allocation14 + $0x1f8] sm:$0xff]
    %s4490 = scalar_lea.vmem [#allocation4], 1
    %v4491 = vld [vmem:[%s4490] ss:$2 sm:$0x3]
    %s4492 = scalar_lea.vmem [#allocation14], 512
    %v4493 = vld [vmem:[%s4492] sm:$0xff]
    %v4494 = vld [vmem:[%s4492 + $0x8] sm:$0xff]
    %v4495 = vld [vmem:[%s4492 + $0x10] sm:$0xff]
    %v4496 = vld [vmem:[%s4492 + $0x18] sm:$0xff]
    %v4497 = vld [vmem:[%s4492 + $0x20] sm:$0xff]
    %v4498 = vld [vmem:[%s4492 + $0x28] sm:$0xff]
    %v4499 = vld [vmem:[%s4492 + $0x30] sm:$0xff]
    %v4500 = vld [vmem:[%s4492 + $0x38] sm:$0xff]
    %v4501 = vld [vmem:[%s4492 + $0x40] sm:$0xff]
    %v4502 = vld [vmem:[%s4492 + $0x48] sm:$0xff]
    %v4503 = vld [vmem:[%s4492 + $0x50] sm:$0xff]
    %v4504 = vld [vmem:[%s4492 + $0x58] sm:$0xff]
    %v4505 = vld [vmem:[%s4492 + $0x60] sm:$0xff]
    %v4506 = vld [vmem:[%s4492 + $0x68] sm:$0xff]
    %v4507 = vld [vmem:[%s4492 + $0x70] sm:$0xff]
    %v4508 = vld [vmem:[%s4492 + $0x78] sm:$0xff]
    %v4509 = vld [vmem:[%s4492 + $0x80] sm:$0xff]
    %v4510 = vld [vmem:[%s4492 + $0x88] sm:$0xff]
    %v4511 = vld [vmem:[%s4492 + $0x90] sm:$0xff]
    %v4512 = vld [vmem:[%s4492 + $0x98] sm:$0xff]
    %v4513 = vld [vmem:[%s4492 + $0xa0] sm:$0xff]
    %v4514 = vld [vmem:[%s4492 + $0xa8] sm:$0xff]
    %v4515 = vld [vmem:[%s4492 + $0xb0] sm:$0xff]
    %v4516 = vld [vmem:[%s4492 + $0xb8] sm:$0xff]
    %v4517 = vld [vmem:[%s4492 + $0xc0] sm:$0xff]
    %v4518 = vld [vmem:[%s4492 + $0xc8] sm:$0xff]
    %v4519 = vld [vmem:[%s4492 + $0xd0] sm:$0xff]
    %v4520 = vld [vmem:[%s4492 + $0xd8] sm:$0xff]
    %v4521 = vld [vmem:[%s4492 + $0xe0] sm:$0xff]
    %v4522 = vld [vmem:[%s4492 + $0xe8] sm:$0xff]
    %v4523 = vld [vmem:[%s4492 + $0xf0] sm:$0xff]
    %v4524 = vld [vmem:[%s4492 + $0xf8] sm:$0xff]
    %v4525 = vld [vmem:[%s4492 + $0x100] sm:$0xff]
    %v4526 = vld [vmem:[%s4492 + $0x108] sm:$0xff]
    %v4527 = vld [vmem:[%s4492 + $0x110] sm:$0xff]
    %v4528 = vld [vmem:[%s4492 + $0x118] sm:$0xff]
    %v4529 = vld [vmem:[%s4492 + $0x120] sm:$0xff]
    %v4530 = vld [vmem:[%s4492 + $0x128] sm:$0xff]
    %v4531 = vld [vmem:[%s4492 + $0x130] sm:$0xff]
    %v4532 = vld [vmem:[%s4492 + $0x138] sm:$0xff]
    %v4533 = vld [vmem:[%s4492 + $0x140] sm:$0xff]
    %v4534 = vld [vmem:[%s4492 + $0x148] sm:$0xff]
    %v4535 = vld [vmem:[%s4492 + $0x150] sm:$0xff]
    %v4536 = vld [vmem:[%s4492 + $0x158] sm:$0xff]
    %v4537 = vld [vmem:[%s4492 + $0x160] sm:$0xff]
    %v4538 = vld [vmem:[%s4492 + $0x168] sm:$0xff]
    %v4539 = vld [vmem:[%s4492 + $0x170] sm:$0xff]
    %v4540 = vld [vmem:[%s4492 + $0x178] sm:$0xff]
    %v4541 = vld [vmem:[%s4492 + $0x180] sm:$0xff]
    %v4542 = vld [vmem:[%s4492 + $0x188] sm:$0xff]
    %v4543 = vld [vmem:[%s4492 + $0x190] sm:$0xff]
    %v4544 = vld [vmem:[%s4492 + $0x198] sm:$0xff]
    %v4545 = vld [vmem:[%s4492 + $0x1a0] sm:$0xff]
    %v4546 = vld [vmem:[%s4492 + $0x1a8] sm:$0xff]
    %v4547 = vld [vmem:[%s4492 + $0x1b0] sm:$0xff]
    %v4548 = vld [vmem:[%s4492 + $0x1b8] sm:$0xff]
    %v4549 = vld [vmem:[%s4492 + $0x1c0] sm:$0xff]
    %v4550 = vld [vmem:[%s4492 + $0x1c8] sm:$0xff]
    %v4551 = vld [vmem:[%s4492 + $0x1d0] sm:$0xff]
    %v4552 = vld [vmem:[%s4492 + $0x1d8] sm:$0xff]
    %v4553 = vld [vmem:[%s4492 + $0x1e0] sm:$0xff]
    %v4554 = vld [vmem:[%s4492 + $0x1e8] sm:$0xff]
    %v4555 = vld [vmem:[%s4492 + $0x1f0] sm:$0xff]
    %v4556 = vld [vmem:[%s4492 + $0x1f8] sm:$0xff]
    %4557 = vmatprep.subr.mxu0 %v4494
    %4558 = vmatpush1.msra.mxu0 %v4493
    %4559 = vmatprep.subr.mxu0 %v4498
    %4560 = vmatpush1.msra.mxu0 %v4497
    %4561 = vmatprep.subr.mxu0 %v4502
    %4562 = vmatpush1.msra.mxu0 %v4501
    %4563 = vmatprep.subr.mxu0 %v4506
    %4564 = vmatpush1.msra.mxu0 %v4505
    %4565 = vmatprep.subr.mxu0 %v4510
    %4566 = vmatpush1.msra.mxu0 %v4509
    %4567 = vmatprep.subr.mxu0 %v4514
    %4568 = vmatpush1.msra.mxu0 %v4513
    %4569 = vmatprep.subr.mxu0 %v4518
    %4570 = vmatpush1.msra.mxu0 %v4517
    %4571 = vmatprep.subr.mxu0 %v4522
    %4572 = vmatpush1.msra.mxu0 %v4521
    %4573 = vmatprep.subr.mxu0 %v4526
    %4574 = vmatpush1.msra.mxu0 %v4525
    %4575 = vmatprep.subr.mxu0 %v4530
    %4576 = vmatpush1.msra.mxu0 %v4529
    %4577 = vmatprep.subr.mxu0 %v4534
    %4578 = vmatpush1.msra.mxu0 %v4533
    %4579 = vmatprep.subr.mxu0 %v4538
    %4580 = vmatpush1.msra.mxu0 %v4537
    %4581 = vmatprep.subr.mxu0 %v4542
    %4582 = vmatpush1.msra.mxu0 %v4541
    %4583 = vmatprep.subr.mxu0 %v4546
    %4584 = vmatpush1.msra.mxu0 %v4545
    %4585 = vmatprep.subr.mxu0 %v4550
    %4586 = vmatpush1.msra.mxu0 %v4549
    %4587 = vmatprep.subr.mxu0 %v4554
    %4588 = vmatpush1.msra.mxu0 %v4553
    %4589 = vmatprep.subr.mxu0 0.0
    %4590 = vmatpush1.msra.mxu0 0.0
    %4591 = vmatprep.subr.mxu0 0.0
    %4592 = vmatpush1.msra.mxu0 0.0
    %4593 = vmatprep.subr.mxu0 0.0
    %4594 = vmatpush1.msra.mxu0 0.0
    %4595 = vmatprep.subr.mxu0 0.0
    %4596 = vmatpush1.msra.mxu0 0.0
    %4597 = vmatprep.subr.mxu0 0.0
    %4598 = vmatpush1.msra.mxu0 0.0
    %4599 = vmatprep.subr.mxu0 0.0
    %4600 = vmatpush1.msra.mxu0 0.0
    %4601 = vmatprep.subr.mxu0 0.0
    %4602 = vmatpush1.msra.mxu0 0.0
    %4603 = vmatprep.subr.mxu0 0.0
    %4604 = vmatpush1.msra.mxu0 0.0
    %4605 = vmatprep.subr.mxu0 0.0
    %4606 = vmatpush1.msra.mxu0 0.0
    %4607 = vmatprep.subr.mxu0 0.0
    %4608 = vmatpush1.msra.mxu0 0.0
    %4609 = vmatprep.subr.mxu0 0.0
    %4610 = vmatpush1.msra.mxu0 0.0
    %4611 = vmatprep.subr.mxu0 0.0
    %4612 = vmatpush1.msra.mxu0 0.0
    %4613 = vmatprep.subr.mxu0 0.0
    %4614 = vmatpush1.msra.mxu0 0.0
    %4615 = vmatprep.subr.mxu0 0.0
    %4616 = vmatpush1.msra.mxu0 0.0
    %4617 = vmatprep.subr.mxu0 0.0
    %4618 = vmatpush1.msra.mxu0 0.0
    %4619 = vmatprep.subr.mxu0 0.0
    %4620 = vmatpush1.msra.mxu0 0.0
    %4621 = vmatprep.mubr.f32.mxu0 0.0
    %4622 = vmatmul.mubr.f32.gmra.mrb[0].mxu0 %v4491
    %v4623 = vpop.f32.mrb[0].mxu0
    %v4624 = vadd.f32 0.0, %v4623
    %v4625 = vpop.f32.mrb[0].mxu0
    %v4626 = vadd.f32 0.0, %v4625
    %4627 = vdwg.mxu0
    %4628 = vmatprep.subr.mxu0 %v4496
    %4629 = vmatpush1.msra.mxu0 %v4495
    %4630 = vmatprep.subr.mxu0 %v4500
    %4631 = vmatpush1.msra.mxu0 %v4499
    %4632 = vmatprep.subr.mxu0 %v4504
    %4633 = vmatpush1.msra.mxu0 %v4503
    %4634 = vmatprep.subr.mxu0 %v4508
    %4635 = vmatpush1.msra.mxu0 %v4507
    %4636 = vmatprep.subr.mxu0 %v4512
    %4637 = vmatpush1.msra.mxu0 %v4511
    %4638 = vmatprep.subr.mxu0 %v4516
    %4639 = vmatpush1.msra.mxu0 %v4515
    %4640 = vmatprep.subr.mxu0 %v4520
    %4641 = vmatpush1.msra.mxu0 %v4519
    %4642 = vmatprep.subr.mxu0 %v4524
    %4643 = vmatpush1.msra.mxu0 %v4523
    %4644 = vmatprep.subr.mxu0 %v4528
    %4645 = vmatpush1.msra.mxu0 %v4527
    %4646 = vmatprep.subr.mxu0 %v4532
    %4647 = vmatpush1.msra.mxu0 %v4531
    %4648 = vmatprep.subr.mxu0 %v4536
    %4649 = vmatpush1.msra.mxu0 %v4535
    %4650 = vmatprep.subr.mxu0 %v4540
    %4651 = vmatpush1.msra.mxu0 %v4539
    %4652 = vmatprep.subr.mxu0 %v4544
    %4653 = vmatpush1.msra.mxu0 %v4543
    %4654 = vmatprep.subr.mxu0 %v4548
    %4655 = vmatpush1.msra.mxu0 %v4547
    %4656 = vmatprep.subr.mxu0 %v4552
    %4657 = vmatpush1.msra.mxu0 %v4551
    %4658 = vmatprep.subr.mxu0 %v4556
    %4659 = vmatpush1.msra.mxu0 %v4555
    %4660 = vmatprep.subr.mxu0 0.0
    %4661 = vmatpush1.msra.mxu0 0.0
    %4662 = vmatprep.subr.mxu0 0.0
    %4663 = vmatpush1.msra.mxu0 0.0
    %4664 = vmatprep.subr.mxu0 0.0
    %4665 = vmatpush1.msra.mxu0 0.0
    %4666 = vmatprep.subr.mxu0 0.0
    %4667 = vmatpush1.msra.mxu0 0.0
    %4668 = vmatprep.subr.mxu0 0.0
    %4669 = vmatpush1.msra.mxu0 0.0
    %4670 = vmatprep.subr.mxu0 0.0
    %4671 = vmatpush1.msra.mxu0 0.0
    %4672 = vmatprep.subr.mxu0 0.0
    %4673 = vmatpush1.msra.mxu0 0.0
    %4674 = vmatprep.subr.mxu0 0.0
    %4675 = vmatpush1.msra.mxu0 0.0
    %4676 = vmatprep.subr.mxu0 0.0
    %4677 = vmatpush1.msra.mxu0 0.0
    %4678 = vmatprep.subr.mxu0 0.0
    %4679 = vmatpush1.msra.mxu0 0.0
    %4680 = vmatprep.subr.mxu0 0.0
    %4681 = vmatpush1.msra.mxu0 0.0
    %4682 = vmatprep.subr.mxu0 0.0
    %4683 = vmatpush1.msra.mxu0 0.0
    %4684 = vmatprep.subr.mxu0 0.0
    %4685 = vmatpush1.msra.mxu0 0.0
    %4686 = vmatprep.subr.mxu0 0.0
    %4687 = vmatpush1.msra.mxu0 0.0
    %4688 = vmatprep.subr.mxu0 0.0
    %4689 = vmatpush1.msra.mxu0 0.0
    %4690 = vmatprep.subr.mxu0 0.0
    %4691 = vmatpush1.msra.mxu0 0.0
    %4692 = vmatprep.mubr.f32.mxu0 0.0
    %4693 = vmatmul.mubr.f32.gmra.mrb[0].mxu0 %v4491
    %v4694 = vpop.f32.mrb[0].mxu0
    %v4695 = vadd.f32 0.0, %v4694
    %v4696 = vpop.f32.mrb[0].mxu0
    %v4697 = vadd.f32 0.0, %v4696
    %4698 = vdwg.mxu0
    %4699 = vmatprep.subr.mxu0 %v4427
    %4700 = vmatpush1.msra.mxu0 %v4426
    %4701 = vmatprep.subr.mxu0 %v4431
    %4702 = vmatpush1.msra.mxu0 %v4430
    %4703 = vmatprep.subr.mxu0 %v4435
    %4704 = vmatpush1.msra.mxu0 %v4434
    %4705 = vmatprep.subr.mxu0 %v4439
    %4706 = vmatpush1.msra.mxu0 %v4438
    %4707 = vmatprep.subr.mxu0 %v4443
    %4708 = vmatpush1.msra.mxu0 %v4442
    %4709 = vmatprep.subr.mxu0 %v4447
    %4710 = vmatpush1.msra.mxu0 %v4446
    %4711 = vmatprep.subr.mxu0 %v4451
    %4712 = vmatpush1.msra.mxu0 %v4450
    %4713 = vmatprep.subr.mxu0 %v4455
    %4714 = vmatpush1.msra.mxu0 %v4454
    %4715 = vmatprep.subr.mxu0 %v4459
    %4716 = vmatpush1.msra.mxu0 %v4458
    %4717 = vmatprep.subr.mxu0 %v4463
    %4718 = vmatpush1.msra.mxu0 %v4462
    %4719 = vmatprep.subr.mxu0 %v4467
    %4720 = vmatpush1.msra.mxu0 %v4466
    %4721 = vmatprep.subr.mxu0 %v4471
    %4722 = vmatpush1.msra.mxu0 %v4470
    %4723 = vmatprep.subr.mxu0 %v4475
    %4724 = vmatpush1.msra.mxu0 %v4474
    %4725 = vmatprep.subr.mxu0 %v4479
    %4726 = vmatpush1.msra.mxu0 %v4478
    %4727 = vmatprep.subr.mxu0 %v4483
    %4728 = vmatpush1.msra.mxu0 %v4482
    %4729 = vmatprep.subr.mxu0 %v4487
    %4730 = vmatpush1.msra.mxu0 %v4486
    %4731 = vmatprep.subr.mxu0 0.0
    %4732 = vmatpush1.msra.mxu0 0.0
    %4733 = vmatprep.subr.mxu0 0.0
    %4734 = vmatpush1.msra.mxu0 0.0
    %4735 = vmatprep.subr.mxu0 0.0
    %4736 = vmatpush1.msra.mxu0 0.0
    %4737 = vmatprep.subr.mxu0 0.0
    %4738 = vmatpush1.msra.mxu0 0.0
    %4739 = vmatprep.subr.mxu0 0.0
    %4740 = vmatpush1.msra.mxu0 0.0
    %4741 = vmatprep.subr.mxu0 0.0
    %4742 = vmatpush1.msra.mxu0 0.0
    %4743 = vmatprep.subr.mxu0 0.0
    %4744 = vmatpush1.msra.mxu0 0.0
    %4745 = vmatprep.subr.mxu0 0.0
    %4746 = vmatpush1.msra.mxu0 0.0
    %4747 = vmatprep.subr.mxu0 0.0
    %4748 = vmatpush1.msra.mxu0 0.0
    %4749 = vmatprep.subr.mxu0 0.0
    %4750 = vmatpush1.msra.mxu0 0.0
    %4751 = vmatprep.subr.mxu0 0.0
    %4752 = vmatpush1.msra.mxu0 0.0
    %4753 = vmatprep.subr.mxu0 0.0
    %4754 = vmatpush1.msra.mxu0 0.0
    %4755 = vmatprep.subr.mxu0 0.0
    %4756 = vmatpush1.msra.mxu0 0.0
    %4757 = vmatprep.subr.mxu0 0.0
    %4758 = vmatpush1.msra.mxu0 0.0
    %4759 = vmatprep.subr.mxu0 0.0
    %4760 = vmatpush1.msra.mxu0 0.0
    %4761 = vmatprep.subr.mxu0 0.0
    %4762 = vmatpush1.msra.mxu0 0.0
    %4763 = vmatprep.mubr.f32.mxu0 0.0
    %4764 = vmatmul.mubr.f32.gmra.mrb[0].mxu0 %v4425
    %v4765 = vpop.f32.mrb[0].mxu0
    %v4766 = vadd.f32 %v4624, %v4765
    %v4767 = vpop.f32.mrb[0].mxu0
    %v4768 = vadd.f32 %v4626, %v4767
    %4769 = vdwg.mxu0
    %4770 = vmatprep.subr.mxu0 %v4429
    %4771 = vmatpush1.msra.mxu0 %v4428
    %4772 = vmatprep.subr.mxu0 %v4433
    %4773 = vmatpush1.msra.mxu0 %v4432
    %4774 = vmatprep.subr.mxu0 %v4437
    %4775 = vmatpush1.msra.mxu0 %v4436
    %4776 = vmatprep.subr.mxu0 %v4441
    %4777 = vmatpush1.msra.mxu0 %v4440
    %4778 = vmatprep.subr.mxu0 %v4445
    %4779 = vmatpush1.msra.mxu0 %v4444
    %4780 = vmatprep.subr.mxu0 %v4449
    %4781 = vmatpush1.msra.mxu0 %v4448
    %4782 = vmatprep.subr.mxu0 %v4453
    %4783 = vmatpush1.msra.mxu0 %v4452
    %4784 = vmatprep.subr.mxu0 %v4457
    %4785 = vmatpush1.msra.mxu0 %v4456
    %4786 = vmatprep.subr.mxu0 %v4461
    %4787 = vmatpush1.msra.mxu0 %v4460
    %4788 = vmatprep.subr.mxu0 %v4465
    %4789 = vmatpush1.msra.mxu0 %v4464
    %4790 = vmatprep.subr.mxu0 %v4469
    %4791 = vmatpush1.msra.mxu0 %v4468
    %4792 = vmatprep.subr.mxu0 %v4473
    %4793 = vmatpush1.msra.mxu0 %v4472
    %4794 = vmatprep.subr.mxu0 %v4477
    %4795 = vmatpush1.msra.mxu0 %v4476
    %4796 = vmatprep.subr.mxu0 %v4481
    %4797 = vmatpush1.msra.mxu0 %v4480
    %4798 = vmatprep.subr.mxu0 %v4485
    %4799 = vmatpush1.msra.mxu0 %v4484
    %4800 = vmatprep.subr.mxu0 %v4489
    %4801 = vmatpush1.msra.mxu0 %v4488
    %4802 = vmatprep.subr.mxu0 0.0
    %4803 = vmatpush1.msra.mxu0 0.0
    %4804 = vmatprep.subr.mxu0 0.0
    %4805 = vmatpush1.msra.mxu0 0.0
    %4806 = vmatprep.subr.mxu0 0.0
    %4807 = vmatpush1.msra.mxu0 0.0
    %4808 = vmatprep.subr.mxu0 0.0
    %4809 = vmatpush1.msra.mxu0 0.0
    %4810 = vmatprep.subr.mxu0 0.0
    %4811 = vmatpush1.msra.mxu0 0.0
    %4812 = vmatprep.subr.mxu0 0.0
    %4813 = vmatpush1.msra.mxu0 0.0
    %4814 = vmatprep.subr.mxu0 0.0
    %4815 = vmatpush1.msra.mxu0 0.0
    %4816 = vmatprep.subr.mxu0 0.0
    %4817 = vmatpush1.msra.mxu0 0.0
    %4818 = vmatprep.subr.mxu0 0.0
    %4819 = vmatpush1.msra.mxu0 0.0
    %4820 = vmatprep.subr.mxu0 0.0
    %4821 = vmatpush1.msra.mxu0 0.0
    %4822 = vmatprep.subr.mxu0 0.0
    %4823 = vmatpush1.msra.mxu0 0.0
    %4824 = vmatprep.subr.mxu0 0.0
    %4825 = vmatpush1.msra.mxu0 0.0
    %4826 = vmatprep.subr.mxu0 0.0
    %4827 = vmatpush1.msra.mxu0 0.0
    %4828 = vmatprep.subr.mxu0 0.0
    %4829 = vmatpush1.msra.mxu0 0.0
    %4830 = vmatprep.subr.mxu0 0.0
    %4831 = vmatpush1.msra.mxu0 0.0
    %4832 = vmatprep.subr.mxu0 0.0
    %4833 = vmatpush1.msra.mxu0 0.0
    %4834 = vmatprep.mubr.f32.mxu0 0.0
    %4835 = vmatmul.mubr.f32.gmra.mrb[0].mxu0 %v4425
    %v4836 = vpop.f32.mrb[0].mxu0
    %v4837 = vadd.f32 %v4695, %v4836
    %v4838 = vpop.f32.mrb[0].mxu0
    %v4839 = vadd.f32 %v4697, %v4838
    %4840 = vdwg.mxu0
    %v4841 = vld [vmem:[#allocation16] sm:$0xf]
    %v4843 = vlaneseq
    %v4844 = vshrl.u32 %v4843, 7
    %v4845 = vsub.s32 0, %v4844
    %v4846 = vrot.slane %v4841, %v4845
    %v4847 = vlaneseq
    %v4848 = vshrl.u32 %v4847, 7
    %v4849 = vsub.s32 1, %v4848
    %v4850 = vrot.slane %v4841, %v4849
    %v4851 = vlaneseq
    %v4852 = vshrl.u32 %v4851, 7
    %v4853 = vsub.s32 2, %v4852
    %v4854 = vrot.slane %v4841, %v4853
    %v4855 = vlaneseq
    %v4856 = vshrl.u32 %v4855, 7
    %v4857 = vsub.s32 3, %v4856
    %v4858 = vrot.slane %v4841, %v4857
    %v4863 = vadd.f32 %v4766, %v4846
    %v4864 = vadd.f32 %v4768, %v4850
    %v4865 = vadd.f32 %v4837, %v4854
    %v4866 = vadd.f32 %v4839, %v4858
    %v4867 = vmax.f32 %v4863, 0.0
    %v4868 = vmax.f32 %v4864, 0.0
    %v4869 = vmax.f32 %v4865, 0.0
    %v4870 = vmax.f32 %v4866, 0.0
    %v4871 = vld [vmem:[#allocation5] sm:$0xff]
    %v4872 = vld [vmem:[#allocation5 + $0x8] sm:$0xff]
    %v4873 = vld [vmem:[#allocation5 + $0x10] sm:$0xff]
    %v4874 = vld [vmem:[#allocation5 + $0x18] sm:$0xff]
    %v4875 = vld [vmem:[#allocation17] sm:$0xff]
    %v4876 = vld [vmem:[#allocation17 + $0x8] sm:$0xff]
    %v4877 = vld [vmem:[#allocation17 + $0x10] sm:$0xff]
    %v4878 = vld [vmem:[#allocation17 + $0x18] sm:$0xff]
    %v4879 = vld [vmem:[#allocation17 + $0x20] sm:$0xff]
    %v4880 = vld [vmem:[#allocation17 + $0x28] sm:$0xff]
    %v4881 = vld [vmem:[#allocation17 + $0x30] sm:$0xff]
    %v4882 = vld [vmem:[#allocation17 + $0x38] sm:$0xff]
    %v4883 = vld [vmem:[#allocation17 + $0x40] sm:$0xff]
    %v4884 = vld [vmem:[#allocation17 + $0x48] sm:$0xff]
    %v4885 = vld [vmem:[#allocation17 + $0x50] sm:$0xff]
    %v4886 = vld [vmem:[#allocation17 + $0x58] sm:$0xff]
    %v4887 = vld [vmem:[#allocation17 + $0x60] sm:$0xff]
    %v4888 = vld [vmem:[#allocation17 + $0x68] sm:$0xff]
    %v4889 = vld [vmem:[#allocation17 + $0x70] sm:$0xff]
    %v4890 = vld [vmem:[#allocation17 + $0x78] sm:$0xff]
    %v4891 = vld [vmem:[#allocation17 + $0x80] sm:$0xff]
    %v4892 = vld [vmem:[#allocation17 + $0x88] sm:$0xff]
    %v4893 = vld [vmem:[#allocation17 + $0x90] sm:$0xff]
    %v4894 = vld [vmem:[#allocation17 + $0x98] sm:$0xff]
    %v4895 = vld [vmem:[#allocation17 + $0xa0] sm:$0xff]
    %v4896 = vld [vmem:[#allocation17 + $0xa8] sm:$0xff]
    %v4897 = vld [vmem:[#allocation17 + $0xb0] sm:$0xff]
    %v4898 = vld [vmem:[#allocation17 + $0xb8] sm:$0xff]
    %v4899 = vld [vmem:[#allocation17 + $0xc0] sm:$0xff]
    %v4900 = vld [vmem:[#allocation17 + $0xc8] sm:$0xff]
    %v4901 = vld [vmem:[#allocation17 + $0xd0] sm:$0xff]
    %v4902 = vld [vmem:[#allocation17 + $0xd8] sm:$0xff]
    %v4903 = vld [vmem:[#allocation17 + $0xe0] sm:$0xff]
    %v4904 = vld [vmem:[#allocation17 + $0xe8] sm:$0xff]
    %v4905 = vld [vmem:[#allocation17 + $0xf0] sm:$0xff]
    %v4906 = vld [vmem:[#allocation17 + $0xf8] sm:$0xff]
    %v4907 = vld [vmem:[#allocation17 + $0x100] sm:$0xff]
    %v4908 = vld [vmem:[#allocation17 + $0x108] sm:$0xff]
    %v4909 = vld [vmem:[#allocation17 + $0x110] sm:$0xff]
    %v4910 = vld [vmem:[#allocation17 + $0x118] sm:$0xff]
    %v4911 = vld [vmem:[#allocation17 + $0x120] sm:$0xff]
    %v4912 = vld [vmem:[#allocation17 + $0x128] sm:$0xff]
    %v4913 = vld [vmem:[#allocation17 + $0x130] sm:$0xff]
    %v4914 = vld [vmem:[#allocation17 + $0x138] sm:$0xff]
    %v4915 = vld [vmem:[#allocation17 + $0x140] sm:$0xff]
    %v4916 = vld [vmem:[#allocation17 + $0x148] sm:$0xff]
    %v4917 = vld [vmem:[#allocation17 + $0x150] sm:$0xff]
    %v4918 = vld [vmem:[#allocation17 + $0x158] sm:$0xff]
    %v4919 = vld [vmem:[#allocation17 + $0x160] sm:$0xff]
    %v4920 = vld [vmem:[#allocation17 + $0x168] sm:$0xff]
    %v4921 = vld [vmem:[#allocation17 + $0x170] sm:$0xff]
    %v4922 = vld [vmem:[#allocation17 + $0x178] sm:$0xff]
    %v4923 = vld [vmem:[#allocation17 + $0x180] sm:$0xff]
    %v4924 = vld [vmem:[#allocation17 + $0x188] sm:$0xff]
    %v4925 = vld [vmem:[#allocation17 + $0x190] sm:$0xff]
    %v4926 = vld [vmem:[#allocation17 + $0x198] sm:$0xff]
    %v4927 = vld [vmem:[#allocation17 + $0x1a0] sm:$0xff]
    %v4928 = vld [vmem:[#allocation17 + $0x1a8] sm:$0xff]
    %v4929 = vld [vmem:[#allocation17 + $0x1b0] sm:$0xff]
    %v4930 = vld [vmem:[#allocation17 + $0x1b8] sm:$0xff]
    %v4931 = vld [vmem:[#allocation17 + $0x1c0] sm:$0xff]
    %v4932 = vld [vmem:[#allocation17 + $0x1c8] sm:$0xff]
    %v4933 = vld [vmem:[#allocation17 + $0x1d0] sm:$0xff]
    %v4934 = vld [vmem:[#allocation17 + $0x1d8] sm:$0xff]
    %v4935 = vld [vmem:[#allocation17 + $0x1e0] sm:$0xff]
    %v4936 = vld [vmem:[#allocation17 + $0x1e8] sm:$0xff]
    %v4937 = vld [vmem:[#allocation17 + $0x1f0] sm:$0xff]
    %v4938 = vld [vmem:[#allocation17 + $0x1f8] sm:$0xff]
    %v4939 = vld [vmem:[#allocation17 + $0x200] sm:$0xff]
    %v4940 = vld [vmem:[#allocation17 + $0x208] sm:$0xff]
    %v4941 = vld [vmem:[#allocation17 + $0x210] sm:$0xff]
    %v4942 = vld [vmem:[#allocation17 + $0x218] sm:$0xff]
    %v4943 = vld [vmem:[#allocation17 + $0x220] sm:$0xff]
    %v4944 = vld [vmem:[#allocation17 + $0x228] sm:$0xff]
    %v4945 = vld [vmem:[#allocation17 + $0x230] sm:$0xff]
    %v4946 = vld [vmem:[#allocation17 + $0x238] sm:$0xff]
    %v4947 = vld [vmem:[#allocation17 + $0x240] sm:$0xff]
    %v4948 = vld [vmem:[#allocation17 + $0x248] sm:$0xff]
    %v4949 = vld [vmem:[#allocation17 + $0x250] sm:$0xff]
    %v4950 = vld [vmem:[#allocation17 + $0x258] sm:$0xff]
    %v4951 = vld [vmem:[#allocation17 + $0x260] sm:$0xff]
    %v4952 = vld [vmem:[#allocation17 + $0x268] sm:$0xff]
    %v4953 = vld [vmem:[#allocation17 + $0x270] sm:$0xff]
    %v4954 = vld [vmem:[#allocation17 + $0x278] sm:$0xff]
    %v4955 = vld [vmem:[#allocation17 + $0x280] sm:$0xff]
    %v4956 = vld [vmem:[#allocation17 + $0x288] sm:$0xff]
    %v4957 = vld [vmem:[#allocation17 + $0x290] sm:$0xff]
    %v4958 = vld [vmem:[#allocation17 + $0x298] sm:$0xff]
    %v4959 = vld [vmem:[#allocation17 + $0x2a0] sm:$0xff]
    %v4960 = vld [vmem:[#allocation17 + $0x2a8] sm:$0xff]
    %v4961 = vld [vmem:[#allocation17 + $0x2b0] sm:$0xff]
    %v4962 = vld [vmem:[#allocation17 + $0x2b8] sm:$0xff]
    %v4963 = vld [vmem:[#allocation17 + $0x2c0] sm:$0xff]
    %v4964 = vld [vmem:[#allocation17 + $0x2c8] sm:$0xff]
    %v4965 = vld [vmem:[#allocation17 + $0x2d0] sm:$0xff]
    %v4966 = vld [vmem:[#allocation17 + $0x2d8] sm:$0xff]
    %v4967 = vld [vmem:[#allocation17 + $0x2e0] sm:$0xff]
    %v4968 = vld [vmem:[#allocation17 + $0x2e8] sm:$0xff]
    %v4969 = vld [vmem:[#allocation17 + $0x2f0] sm:$0xff]
    %v4970 = vld [vmem:[#allocation17 + $0x2f8] sm:$0xff]
    %v4971 = vld [vmem:[#allocation17 + $0x300] sm:$0xff]
    %v4972 = vld [vmem:[#allocation17 + $0x308] sm:$0xff]
    %v4973 = vld [vmem:[#allocation17 + $0x310] sm:$0xff]
    %v4974 = vld [vmem:[#allocation17 + $0x318] sm:$0xff]
    %v4975 = vld [vmem:[#allocation17 + $0x320] sm:$0xff]
    %v4976 = vld [vmem:[#allocation17 + $0x328] sm:$0xff]
    %v4977 = vld [vmem:[#allocation17 + $0x330] sm:$0xff]
    %v4978 = vld [vmem:[#allocation17 + $0x338] sm:$0xff]
    %v4979 = vld [vmem:[#allocation17 + $0x340] sm:$0xff]
    %v4980 = vld [vmem:[#allocation17 + $0x348] sm:$0xff]
    %v4981 = vld [vmem:[#allocation17 + $0x350] sm:$0xff]
    %v4982 = vld [vmem:[#allocation17 + $0x358] sm:$0xff]
    %v4983 = vld [vmem:[#allocation17 + $0x360] sm:$0xff]
    %v4984 = vld [vmem:[#allocation17 + $0x368] sm:$0xff]
    %v4985 = vld [vmem:[#allocation17 + $0x370] sm:$0xff]
    %v4986 = vld [vmem:[#allocation17 + $0x378] sm:$0xff]
    %v4987 = vld [vmem:[#allocation17 + $0x380] sm:$0xff]
    %v4988 = vld [vmem:[#allocation17 + $0x388] sm:$0xff]
    %v4989 = vld [vmem:[#allocation17 + $0x390] sm:$0xff]
    %v4990 = vld [vmem:[#allocation17 + $0x398] sm:$0xff]
    %v4991 = vld [vmem:[#allocation17 + $0x3a0] sm:$0xff]
    %v4992 = vld [vmem:[#allocation17 + $0x3a8] sm:$0xff]
    %v4993 = vld [vmem:[#allocation17 + $0x3b0] sm:$0xff]
    %v4994 = vld [vmem:[#allocation17 + $0x3b8] sm:$0xff]
    %v4995 = vld [vmem:[#allocation17 + $0x3c0] sm:$0xff]
    %v4996 = vld [vmem:[#allocation17 + $0x3c8] sm:$0xff]
    %v4997 = vld [vmem:[#allocation17 + $0x3d0] sm:$0xff]
    %v4998 = vld [vmem:[#allocation17 + $0x3d8] sm:$0xff]
    %v4999 = vld [vmem:[#allocation17 + $0x3e0] sm:$0xff]
    %v5000 = vld [vmem:[#allocation17 + $0x3e8] sm:$0xff]
    %v5001 = vld [vmem:[#allocation17 + $0x3f0] sm:$0xff]
    %v5002 = vld [vmem:[#allocation17 + $0x3f8] sm:$0xff]
    %v5003 = vld [vmem:[#allocation17 + $0x400] sm:$0xff]
    %v5004 = vld [vmem:[#allocation17 + $0x408] sm:$0xff]
    %v5005 = vld [vmem:[#allocation17 + $0x410] sm:$0xff]
    %v5006 = vld [vmem:[#allocation17 + $0x418] sm:$0xff]
    %v5007 = vld [vmem:[#allocation17 + $0x420] sm:$0xff]
    %v5008 = vld [vmem:[#allocation17 + $0x428] sm:$0xff]
    %v5009 = vld [vmem:[#allocation17 + $0x430] sm:$0xff]
    %v5010 = vld [vmem:[#allocation17 + $0x438] sm:$0xff]
    %v5011 = vld [vmem:[#allocation17 + $0x440] sm:$0xff]
    %v5012 = vld [vmem:[#allocation17 + $0x448] sm:$0xff]
    %v5013 = vld [vmem:[#allocation17 + $0x450] sm:$0xff]
    %v5014 = vld [vmem:[#allocation17 + $0x458] sm:$0xff]
    %v5015 = vld [vmem:[#allocation17 + $0x460] sm:$0xff]
    %v5016 = vld [vmem:[#allocation17 + $0x468] sm:$0xff]
    %v5017 = vld [vmem:[#allocation17 + $0x470] sm:$0xff]
    %v5018 = vld [vmem:[#allocation17 + $0x478] sm:$0xff]
    %v5019 = vld [vmem:[#allocation17 + $0x480] sm:$0xff]
    %v5020 = vld [vmem:[#allocation17 + $0x488] sm:$0xff]
    %v5021 = vld [vmem:[#allocation17 + $0x490] sm:$0xff]
    %v5022 = vld [vmem:[#allocation17 + $0x498] sm:$0xff]
    %v5023 = vld [vmem:[#allocation17 + $0x4a0] sm:$0xff]
    %v5024 = vld [vmem:[#allocation17 + $0x4a8] sm:$0xff]
    %v5025 = vld [vmem:[#allocation17 + $0x4b0] sm:$0xff]
    %v5026 = vld [vmem:[#allocation17 + $0x4b8] sm:$0xff]
    %v5027 = vld [vmem:[#allocation17 + $0x4c0] sm:$0xff]
    %v5028 = vld [vmem:[#allocation17 + $0x4c8] sm:$0xff]
    %v5029 = vld [vmem:[#allocation17 + $0x4d0] sm:$0xff]
    %v5030 = vld [vmem:[#allocation17 + $0x4d8] sm:$0xff]
    %v5031 = vld [vmem:[#allocation17 + $0x4e0] sm:$0xff]
    %v5032 = vld [vmem:[#allocation17 + $0x4e8] sm:$0xff]
    %v5033 = vld [vmem:[#allocation17 + $0x4f0] sm:$0xff]
    %v5034 = vld [vmem:[#allocation17 + $0x4f8] sm:$0xff]
    %v5035 = vld [vmem:[#allocation17 + $0x500] sm:$0xff]
    %v5036 = vld [vmem:[#allocation17 + $0x508] sm:$0xff]
    %v5037 = vld [vmem:[#allocation17 + $0x510] sm:$0xff]
    %v5038 = vld [vmem:[#allocation17 + $0x518] sm:$0xff]
    %v5039 = vld [vmem:[#allocation17 + $0x520] sm:$0xff]
    %v5040 = vld [vmem:[#allocation17 + $0x528] sm:$0xff]
    %v5041 = vld [vmem:[#allocation17 + $0x530] sm:$0xff]
    %v5042 = vld [vmem:[#allocation17 + $0x538] sm:$0xff]
    %v5043 = vld [vmem:[#allocation17 + $0x540] sm:$0xff]
    %v5044 = vld [vmem:[#allocation17 + $0x548] sm:$0xff]
    %v5045 = vld [vmem:[#allocation17 + $0x550] sm:$0xff]
    %v5046 = vld [vmem:[#allocation17 + $0x558] sm:$0xff]
    %v5047 = vld [vmem:[#allocation17 + $0x560] sm:$0xff]
    %v5048 = vld [vmem:[#allocation17 + $0x568] sm:$0xff]
    %v5049 = vld [vmem:[#allocation17 + $0x570] sm:$0xff]
    %v5050 = vld [vmem:[#allocation17 + $0x578] sm:$0xff]
    %v5051 = vld [vmem:[#allocation17 + $0x580] sm:$0xff]
    %v5052 = vld [vmem:[#allocation17 + $0x588] sm:$0xff]
    %v5053 = vld [vmem:[#allocation17 + $0x590] sm:$0xff]
    %v5054 = vld [vmem:[#allocation17 + $0x598] sm:$0xff]
    %v5055 = vld [vmem:[#allocation17 + $0x5a0] sm:$0xff]
    %v5056 = vld [vmem:[#allocation17 + $0x5a8] sm:$0xff]
    %v5057 = vld [vmem:[#allocation17 + $0x5b0] sm:$0xff]
    %v5058 = vld [vmem:[#allocation17 + $0x5b8] sm:$0xff]
    %v5059 = vld [vmem:[#allocation17 + $0x5c0] sm:$0xff]
    %v5060 = vld [vmem:[#allocation17 + $0x5c8] sm:$0xff]
    %v5061 = vld [vmem:[#allocation17 + $0x5d0] sm:$0xff]
    %v5062 = vld [vmem:[#allocation17 + $0x5d8] sm:$0xff]
    %v5063 = vld [vmem:[#allocation17 + $0x5e0] sm:$0xff]
    %v5064 = vld [vmem:[#allocation17 + $0x5e8] sm:$0xff]
    %v5065 = vld [vmem:[#allocation17 + $0x5f0] sm:$0xff]
    %v5066 = vld [vmem:[#allocation17 + $0x5f8] sm:$0xff]
    %v5067 = vld [vmem:[#allocation17 + $0x600] sm:$0xff]
    %v5068 = vld [vmem:[#allocation17 + $0x608] sm:$0xff]
    %v5069 = vld [vmem:[#allocation17 + $0x610] sm:$0xff]
    %v5070 = vld [vmem:[#allocation17 + $0x618] sm:$0xff]
    %v5071 = vld [vmem:[#allocation17 + $0x620] sm:$0xff]
    %v5072 = vld [vmem:[#allocation17 + $0x628] sm:$0xff]
    %v5073 = vld [vmem:[#allocation17 + $0x630] sm:$0xff]
    %v5074 = vld [vmem:[#allocation17 + $0x638] sm:$0xff]
    %v5075 = vld [vmem:[#allocation17 + $0x640] sm:$0xff]
    %v5076 = vld [vmem:[#allocation17 + $0x648] sm:$0xff]
    %v5077 = vld [vmem:[#allocation17 + $0x650] sm:$0xff]
    %v5078 = vld [vmem:[#allocation17 + $0x658] sm:$0xff]
    %v5079 = vld [vmem:[#allocation17 + $0x660] sm:$0xff]
    %v5080 = vld [vmem:[#allocation17 + $0x668] sm:$0xff]
    %v5081 = vld [vmem:[#allocation17 + $0x670] sm:$0xff]
    %v5082 = vld [vmem:[#allocation17 + $0x678] sm:$0xff]
    %v5083 = vld [vmem:[#allocation17 + $0x680] sm:$0xff]
    %v5084 = vld [vmem:[#allocation17 + $0x688] sm:$0xff]
    %v5085 = vld [vmem:[#allocation17 + $0x690] sm:$0xff]
    %v5086 = vld [vmem:[#allocation17 + $0x698] sm:$0xff]
    %v5087 = vld [vmem:[#allocation17 + $0x6a0] sm:$0xff]
    %v5088 = vld [vmem:[#allocation17 + $0x6a8] sm:$0xff]
    %v5089 = vld [vmem:[#allocation17 + $0x6b0] sm:$0xff]
    %v5090 = vld [vmem:[#allocation17 + $0x6b8] sm:$0xff]
    %v5091 = vld [vmem:[#allocation17 + $0x6c0] sm:$0xff]
    %v5092 = vld [vmem:[#allocation17 + $0x6c8] sm:$0xff]
    %v5093 = vld [vmem:[#allocation17 + $0x6d0] sm:$0xff]
    %v5094 = vld [vmem:[#allocation17 + $0x6d8] sm:$0xff]
    %v5095 = vld [vmem:[#allocation17 + $0x6e0] sm:$0xff]
    %v5096 = vld [vmem:[#allocation17 + $0x6e8] sm:$0xff]
    %v5097 = vld [vmem:[#allocation17 + $0x6f0] sm:$0xff]
    %v5098 = vld [vmem:[#allocation17 + $0x6f8] sm:$0xff]
    %v5099 = vld [vmem:[#allocation17 + $0x700] sm:$0xff]
    %v5100 = vld [vmem:[#allocation17 + $0x708] sm:$0xff]
    %v5101 = vld [vmem:[#allocation17 + $0x710] sm:$0xff]
    %v5102 = vld [vmem:[#allocation17 + $0x718] sm:$0xff]
    %v5103 = vld [vmem:[#allocation17 + $0x720] sm:$0xff]
    %v5104 = vld [vmem:[#allocation17 + $0x728] sm:$0xff]
    %v5105 = vld [vmem:[#allocation17 + $0x730] sm:$0xff]
    %v5106 = vld [vmem:[#allocation17 + $0x738] sm:$0xff]
    %v5107 = vld [vmem:[#allocation17 + $0x740] sm:$0xff]
    %v5108 = vld [vmem:[#allocation17 + $0x748] sm:$0xff]
    %v5109 = vld [vmem:[#allocation17 + $0x750] sm:$0xff]
    %v5110 = vld [vmem:[#allocation17 + $0x758] sm:$0xff]
    %v5111 = vld [vmem:[#allocation17 + $0x760] sm:$0xff]
    %v5112 = vld [vmem:[#allocation17 + $0x768] sm:$0xff]
    %v5113 = vld [vmem:[#allocation17 + $0x770] sm:$0xff]
    %v5114 = vld [vmem:[#allocation17 + $0x778] sm:$0xff]
    %v5115 = vld [vmem:[#allocation17 + $0x780] sm:$0xff]
    %v5116 = vld [vmem:[#allocation17 + $0x788] sm:$0xff]
    %v5117 = vld [vmem:[#allocation17 + $0x790] sm:$0xff]
    %v5118 = vld [vmem:[#allocation17 + $0x798] sm:$0xff]
    %v5119 = vld [vmem:[#allocation17 + $0x7a0] sm:$0xff]
    %v5120 = vld [vmem:[#allocation17 + $0x7a8] sm:$0xff]
    %v5121 = vld [vmem:[#allocation17 + $0x7b0] sm:$0xff]
    %v5122 = vld [vmem:[#allocation17 + $0x7b8] sm:$0xff]
    %v5123 = vld [vmem:[#allocation17 + $0x7c0] sm:$0xff]
    %v5124 = vld [vmem:[#allocation17 + $0x7c8] sm:$0xff]
    %v5125 = vld [vmem:[#allocation17 + $0x7d0] sm:$0xff]
    %v5126 = vld [vmem:[#allocation17 + $0x7d8] sm:$0xff]
    %v5127 = vld [vmem:[#allocation17 + $0x7e0] sm:$0xff]
    %v5128 = vld [vmem:[#allocation17 + $0x7e8] sm:$0xff]
    %v5129 = vld [vmem:[#allocation17 + $0x7f0] sm:$0xff]
    %v5130 = vld [vmem:[#allocation17 + $0x7f8] sm:$0xff]
    %v5131 = vld [vmem:[#allocation17 + $0x800] sm:$0xff]
    %v5132 = vld [vmem:[#allocation17 + $0x808] sm:$0xff]
    %v5133 = vld [vmem:[#allocation17 + $0x810] sm:$0xff]
    %v5134 = vld [vmem:[#allocation17 + $0x818] sm:$0xff]
    %v5135 = vld [vmem:[#allocation17 + $0x820] sm:$0xff]
    %v5136 = vld [vmem:[#allocation17 + $0x828] sm:$0xff]
    %v5137 = vld [vmem:[#allocation17 + $0x830] sm:$0xff]
    %v5138 = vld [vmem:[#allocation17 + $0x838] sm:$0xff]
    %v5139 = vld [vmem:[#allocation17 + $0x840] sm:$0xff]
    %v5140 = vld [vmem:[#allocation17 + $0x848] sm:$0xff]
    %v5141 = vld [vmem:[#allocation17 + $0x850] sm:$0xff]
    %v5142 = vld [vmem:[#allocation17 + $0x858] sm:$0xff]
    %v5143 = vld [vmem:[#allocation17 + $0x860] sm:$0xff]
    %v5144 = vld [vmem:[#allocation17 + $0x868] sm:$0xff]
    %v5145 = vld [vmem:[#allocation17 + $0x870] sm:$0xff]
    %v5146 = vld [vmem:[#allocation17 + $0x878] sm:$0xff]
    %v5147 = vld [vmem:[#allocation17 + $0x880] sm:$0xff]
    %v5148 = vld [vmem:[#allocation17 + $0x888] sm:$0xff]
    %v5149 = vld [vmem:[#allocation17 + $0x890] sm:$0xff]
    %v5150 = vld [vmem:[#allocation17 + $0x898] sm:$0xff]
    %v5151 = vld [vmem:[#allocation17 + $0x8a0] sm:$0xff]
    %v5152 = vld [vmem:[#allocation17 + $0x8a8] sm:$0xff]
    %v5153 = vld [vmem:[#allocation17 + $0x8b0] sm:$0xff]
    %v5154 = vld [vmem:[#allocation17 + $0x8b8] sm:$0xff]
    %v5155 = vld [vmem:[#allocation17 + $0x8c0] sm:$0xff]
    %v5156 = vld [vmem:[#allocation17 + $0x8c8] sm:$0xff]
    %v5157 = vld [vmem:[#allocation17 + $0x8d0] sm:$0xff]
    %v5158 = vld [vmem:[#allocation17 + $0x8d8] sm:$0xff]
    %v5159 = vld [vmem:[#allocation17 + $0x8e0] sm:$0xff]
    %v5160 = vld [vmem:[#allocation17 + $0x8e8] sm:$0xff]
    %v5161 = vld [vmem:[#allocation17 + $0x8f0] sm:$0xff]
    %v5162 = vld [vmem:[#allocation17 + $0x8f8] sm:$0xff]
    %v5163 = vld [vmem:[#allocation17 + $0x900] sm:$0xff]
    %v5164 = vld [vmem:[#allocation17 + $0x908] sm:$0xff]
    %v5165 = vld [vmem:[#allocation17 + $0x910] sm:$0xff]
    %v5166 = vld [vmem:[#allocation17 + $0x918] sm:$0xff]
    %v5167 = vld [vmem:[#allocation17 + $0x920] sm:$0xff]
    %v5168 = vld [vmem:[#allocation17 + $0x928] sm:$0xff]
    %v5169 = vld [vmem:[#allocation17 + $0x930] sm:$0xff]
    %v5170 = vld [vmem:[#allocation17 + $0x938] sm:$0xff]
    %v5171 = vld [vmem:[#allocation17 + $0x940] sm:$0xff]
    %v5172 = vld [vmem:[#allocation17 + $0x948] sm:$0xff]
    %v5173 = vld [vmem:[#allocation17 + $0x950] sm:$0xff]
    %v5174 = vld [vmem:[#allocation17 + $0x958] sm:$0xff]
    %v5175 = vld [vmem:[#allocation17 + $0x960] sm:$0xff]
    %v5176 = vld [vmem:[#allocation17 + $0x968] sm:$0xff]
    %v5177 = vld [vmem:[#allocation17 + $0x970] sm:$0xff]
    %v5178 = vld [vmem:[#allocation17 + $0x978] sm:$0xff]
    %v5179 = vld [vmem:[#allocation17 + $0x980] sm:$0xff]
    %v5180 = vld [vmem:[#allocation17 + $0x988] sm:$0xff]
    %v5181 = vld [vmem:[#allocation17 + $0x990] sm:$0xff]
    %v5182 = vld [vmem:[#allocation17 + $0x998] sm:$0xff]
    %v5183 = vld [vmem:[#allocation17 + $0x9a0] sm:$0xff]
    %v5184 = vld [vmem:[#allocation17 + $0x9a8] sm:$0xff]
    %v5185 = vld [vmem:[#allocation17 + $0x9b0] sm:$0xff]
    %v5186 = vld [vmem:[#allocation17 + $0x9b8] sm:$0xff]
    %v5187 = vld [vmem:[#allocation17 + $0x9c0] sm:$0xff]
    %v5188 = vld [vmem:[#allocation17 + $0x9c8] sm:$0xff]
    %v5189 = vld [vmem:[#allocation17 + $0x9d0] sm:$0xff]
    %v5190 = vld [vmem:[#allocation17 + $0x9d8] sm:$0xff]
    %v5191 = vld [vmem:[#allocation17 + $0x9e0] sm:$0xff]
    %v5192 = vld [vmem:[#allocation17 + $0x9e8] sm:$0xff]
    %v5193 = vld [vmem:[#allocation17 + $0x9f0] sm:$0xff]
    %v5194 = vld [vmem:[#allocation17 + $0x9f8] sm:$0xff]
    %v5195 = vld [vmem:[#allocation17 + $0xa00] sm:$0xff]
    %v5196 = vld [vmem:[#allocation17 + $0xa08] sm:$0xff]
    %v5197 = vld [vmem:[#allocation17 + $0xa10] sm:$0xff]
    %v5198 = vld [vmem:[#allocation17 + $0xa18] sm:$0xff]
    %v5199 = vld [vmem:[#allocation17 + $0xa20] sm:$0xff]
    %v5200 = vld [vmem:[#allocation17 + $0xa28] sm:$0xff]
    %v5201 = vld [vmem:[#allocation17 + $0xa30] sm:$0xff]
    %v5202 = vld [vmem:[#allocation17 + $0xa38] sm:$0xff]
    %v5203 = vld [vmem:[#allocation17 + $0xa40] sm:$0xff]
    %v5204 = vld [vmem:[#allocation17 + $0xa48] sm:$0xff]
    %v5205 = vld [vmem:[#allocation17 + $0xa50] sm:$0xff]
    %v5206 = vld [vmem:[#allocation17 + $0xa58] sm:$0xff]
    %v5207 = vld [vmem:[#allocation17 + $0xa60] sm:$0xff]
    %v5208 = vld [vmem:[#allocation17 + $0xa68] sm:$0xff]
    %v5209 = vld [vmem:[#allocation17 + $0xa70] sm:$0xff]
    %v5210 = vld [vmem:[#allocation17 + $0xa78] sm:$0xff]
    %v5211 = vld [vmem:[#allocation17 + $0xa80] sm:$0xff]
    %v5212 = vld [vmem:[#allocation17 + $0xa88] sm:$0xff]
    %v5213 = vld [vmem:[#allocation17 + $0xa90] sm:$0xff]
    %v5214 = vld [vmem:[#allocation17 + $0xa98] sm:$0xff]
    %v5215 = vld [vmem:[#allocation17 + $0xaa0] sm:$0xff]
    %v5216 = vld [vmem:[#allocation17 + $0xaa8] sm:$0xff]
    %v5217 = vld [vmem:[#allocation17 + $0xab0] sm:$0xff]
    %v5218 = vld [vmem:[#allocation17 + $0xab8] sm:$0xff]
    %v5219 = vld [vmem:[#allocation17 + $0xac0] sm:$0xff]
    %v5220 = vld [vmem:[#allocation17 + $0xac8] sm:$0xff]
    %v5221 = vld [vmem:[#allocation17 + $0xad0] sm:$0xff]
    %v5222 = vld [vmem:[#allocation17 + $0xad8] sm:$0xff]
    %v5223 = vld [vmem:[#allocation17 + $0xae0] sm:$0xff]
    %v5224 = vld [vmem:[#allocation17 + $0xae8] sm:$0xff]
    %v5225 = vld [vmem:[#allocation17 + $0xaf0] sm:$0xff]
    %v5226 = vld [vmem:[#allocation17 + $0xaf8] sm:$0xff]
    %v5227 = vld [vmem:[#allocation17 + $0xb00] sm:$0xff]
    %v5228 = vld [vmem:[#allocation17 + $0xb08] sm:$0xff]
    %v5229 = vld [vmem:[#allocation17 + $0xb10] sm:$0xff]
    %v5230 = vld [vmem:[#allocation17 + $0xb18] sm:$0xff]
    %v5231 = vld [vmem:[#allocation17 + $0xb20] sm:$0xff]
    %v5232 = vld [vmem:[#allocation17 + $0xb28] sm:$0xff]
    %v5233 = vld [vmem:[#allocation17 + $0xb30] sm:$0xff]
    %v5234 = vld [vmem:[#allocation17 + $0xb38] sm:$0xff]
    %v5235 = vld [vmem:[#allocation17 + $0xb40] sm:$0xff]
    %v5236 = vld [vmem:[#allocation17 + $0xb48] sm:$0xff]
    %v5237 = vld [vmem:[#allocation17 + $0xb50] sm:$0xff]
    %v5238 = vld [vmem:[#allocation17 + $0xb58] sm:$0xff]
    %v5239 = vld [vmem:[#allocation17 + $0xb60] sm:$0xff]
    %v5240 = vld [vmem:[#allocation17 + $0xb68] sm:$0xff]
    %v5241 = vld [vmem:[#allocation17 + $0xb70] sm:$0xff]
    %v5242 = vld [vmem:[#allocation17 + $0xb78] sm:$0xff]
    %v5243 = vld [vmem:[#allocation17 + $0xb80] sm:$0xff]
    %v5244 = vld [vmem:[#allocation17 + $0xb88] sm:$0xff]
    %v5245 = vld [vmem:[#allocation17 + $0xb90] sm:$0xff]
    %v5246 = vld [vmem:[#allocation17 + $0xb98] sm:$0xff]
    %v5247 = vld [vmem:[#allocation17 + $0xba0] sm:$0xff]
    %v5248 = vld [vmem:[#allocation17 + $0xba8] sm:$0xff]
    %v5249 = vld [vmem:[#allocation17 + $0xbb0] sm:$0xff]
    %v5250 = vld [vmem:[#allocation17 + $0xbb8] sm:$0xff]
    %v5251 = vld [vmem:[#allocation17 + $0xbc0] sm:$0xff]
    %v5252 = vld [vmem:[#allocation17 + $0xbc8] sm:$0xff]
    %v5253 = vld [vmem:[#allocation17 + $0xbd0] sm:$0xff]
    %v5254 = vld [vmem:[#allocation17 + $0xbd8] sm:$0xff]
    %v5255 = vld [vmem:[#allocation17 + $0xbe0] sm:$0xff]
    %v5256 = vld [vmem:[#allocation17 + $0xbe8] sm:$0xff]
    %v5257 = vld [vmem:[#allocation17 + $0xbf0] sm:$0xff]
    %v5258 = vld [vmem:[#allocation17 + $0xbf8] sm:$0xff]
    %v5259 = vld [vmem:[#allocation17 + $0xc00] sm:$0xff]
    %v5260 = vld [vmem:[#allocation17 + $0xc08] sm:$0xff]
    %v5261 = vld [vmem:[#allocation17 + $0xc10] sm:$0xff]
    %v5262 = vld [vmem:[#allocation17 + $0xc18] sm:$0xff]
    %v5263 = vld [vmem:[#allocation17 + $0xc20] sm:$0xff]
    %v5264 = vld [vmem:[#allocation17 + $0xc28] sm:$0xff]
    %v5265 = vld [vmem:[#allocation17 + $0xc30] sm:$0xff]
    %v5266 = vld [vmem:[#allocation17 + $0xc38] sm:$0xff]
    %v5267 = vld [vmem:[#allocation17 + $0xc40] sm:$0xff]
    %v5268 = vld [vmem:[#allocation17 + $0xc48] sm:$0xff]
    %v5269 = vld [vmem:[#allocation17 + $0xc50] sm:$0xff]
    %v5270 = vld [vmem:[#allocation17 + $0xc58] sm:$0xff]
    %v5271 = vld [vmem:[#allocation17 + $0xc60] sm:$0xff]
    %v5272 = vld [vmem:[#allocation17 + $0xc68] sm:$0xff]
    %v5273 = vld [vmem:[#allocation17 + $0xc70] sm:$0xff]
    %v5274 = vld [vmem:[#allocation17 + $0xc78] sm:$0xff]
    %v5275 = vld [vmem:[#allocation17 + $0xc80] sm:$0xff]
    %v5276 = vld [vmem:[#allocation17 + $0xc88] sm:$0xff]
    %v5277 = vld [vmem:[#allocation17 + $0xc90] sm:$0xff]
    %v5278 = vld [vmem:[#allocation17 + $0xc98] sm:$0xff]
    %v5279 = vld [vmem:[#allocation17 + $0xca0] sm:$0xff]
    %v5280 = vld [vmem:[#allocation17 + $0xca8] sm:$0xff]
    %v5281 = vld [vmem:[#allocation17 + $0xcb0] sm:$0xff]
    %v5282 = vld [vmem:[#allocation17 + $0xcb8] sm:$0xff]
    %v5283 = vld [vmem:[#allocation17 + $0xcc0] sm:$0xff]
    %v5284 = vld [vmem:[#allocation17 + $0xcc8] sm:$0xff]
    %v5285 = vld [vmem:[#allocation17 + $0xcd0] sm:$0xff]
    %v5286 = vld [vmem:[#allocation17 + $0xcd8] sm:$0xff]
    %v5287 = vld [vmem:[#allocation17 + $0xce0] sm:$0xff]
    %v5288 = vld [vmem:[#allocation17 + $0xce8] sm:$0xff]
    %v5289 = vld [vmem:[#allocation17 + $0xcf0] sm:$0xff]
    %v5290 = vld [vmem:[#allocation17 + $0xcf8] sm:$0xff]
    %v5291 = vld [vmem:[#allocation17 + $0xd00] sm:$0xff]
    %v5292 = vld [vmem:[#allocation17 + $0xd08] sm:$0xff]
    %v5293 = vld [vmem:[#allocation17 + $0xd10] sm:$0xff]
    %v5294 = vld [vmem:[#allocation17 + $0xd18] sm:$0xff]
    %v5295 = vld [vmem:[#allocation17 + $0xd20] sm:$0xff]
    %v5296 = vld [vmem:[#allocation17 + $0xd28] sm:$0xff]
    %v5297 = vld [vmem:[#allocation17 + $0xd30] sm:$0xff]
    %v5298 = vld [vmem:[#allocation17 + $0xd38] sm:$0xff]
    %v5299 = vld [vmem:[#allocation17 + $0xd40] sm:$0xff]
    %v5300 = vld [vmem:[#allocation17 + $0xd48] sm:$0xff]
    %v5301 = vld [vmem:[#allocation17 + $0xd50] sm:$0xff]
    %v5302 = vld [vmem:[#allocation17 + $0xd58] sm:$0xff]
    %v5303 = vld [vmem:[#allocation17 + $0xd60] sm:$0xff]
    %v5304 = vld [vmem:[#allocation17 + $0xd68] sm:$0xff]
    %v5305 = vld [vmem:[#allocation17 + $0xd70] sm:$0xff]
    %v5306 = vld [vmem:[#allocation17 + $0xd78] sm:$0xff]
    %v5307 = vld [vmem:[#allocation17 + $0xd80] sm:$0xff]
    %v5308 = vld [vmem:[#allocation17 + $0xd88] sm:$0xff]
    %v5309 = vld [vmem:[#allocation17 + $0xd90] sm:$0xff]
    %v5310 = vld [vmem:[#allocation17 + $0xd98] sm:$0xff]
    %v5311 = vld [vmem:[#allocation17 + $0xda0] sm:$0xff]
    %v5312 = vld [vmem:[#allocation17 + $0xda8] sm:$0xff]
    %v5313 = vld [vmem:[#allocation17 + $0xdb0] sm:$0xff]
    %v5314 = vld [vmem:[#allocation17 + $0xdb8] sm:$0xff]
    %v5315 = vld [vmem:[#allocation17 + $0xdc0] sm:$0xff]
    %v5316 = vld [vmem:[#allocation17 + $0xdc8] sm:$0xff]
    %v5317 = vld [vmem:[#allocation17 + $0xdd0] sm:$0xff]
    %v5318 = vld [vmem:[#allocation17 + $0xdd8] sm:$0xff]
    %v5319 = vld [vmem:[#allocation17 + $0xde0] sm:$0xff]
    %v5320 = vld [vmem:[#allocation17 + $0xde8] sm:$0xff]
    %v5321 = vld [vmem:[#allocation17 + $0xdf0] sm:$0xff]
    %v5322 = vld [vmem:[#allocation17 + $0xdf8] sm:$0xff]
    %v5323 = vld [vmem:[#allocation17 + $0xe00] sm:$0xff]
    %v5324 = vld [vmem:[#allocation17 + $0xe08] sm:$0xff]
    %v5325 = vld [vmem:[#allocation17 + $0xe10] sm:$0xff]
    %v5326 = vld [vmem:[#allocation17 + $0xe18] sm:$0xff]
    %v5327 = vld [vmem:[#allocation17 + $0xe20] sm:$0xff]
    %v5328 = vld [vmem:[#allocation17 + $0xe28] sm:$0xff]
    %v5329 = vld [vmem:[#allocation17 + $0xe30] sm:$0xff]
    %v5330 = vld [vmem:[#allocation17 + $0xe38] sm:$0xff]
    %v5331 = vld [vmem:[#allocation17 + $0xe40] sm:$0xff]
    %v5332 = vld [vmem:[#allocation17 + $0xe48] sm:$0xff]
    %v5333 = vld [vmem:[#allocation17 + $0xe50] sm:$0xff]
    %v5334 = vld [vmem:[#allocation17 + $0xe58] sm:$0xff]
    %v5335 = vld [vmem:[#allocation17 + $0xe60] sm:$0xff]
    %v5336 = vld [vmem:[#allocation17 + $0xe68] sm:$0xff]
    %v5337 = vld [vmem:[#allocation17 + $0xe70] sm:$0xff]
    %v5338 = vld [vmem:[#allocation17 + $0xe78] sm:$0xff]
    %v5339 = vld [vmem:[#allocation17 + $0xe80] sm:$0xff]
    %v5340 = vld [vmem:[#allocation17 + $0xe88] sm:$0xff]
    %v5341 = vld [vmem:[#allocation17 + $0xe90] sm:$0xff]
    %v5342 = vld [vmem:[#allocation17 + $0xe98] sm:$0xff]
    %v5343 = vld [vmem:[#allocation17 + $0xea0] sm:$0xff]
    %v5344 = vld [vmem:[#allocation17 + $0xea8] sm:$0xff]
    %v5345 = vld [vmem:[#allocation17 + $0xeb0] sm:$0xff]
    %v5346 = vld [vmem:[#allocation17 + $0xeb8] sm:$0xff]
    %v5347 = vld [vmem:[#allocation17 + $0xec0] sm:$0xff]
    %v5348 = vld [vmem:[#allocation17 + $0xec8] sm:$0xff]
    %v5349 = vld [vmem:[#allocation17 + $0xed0] sm:$0xff]
    %v5350 = vld [vmem:[#allocation17 + $0xed8] sm:$0xff]
    %v5351 = vld [vmem:[#allocation17 + $0xee0] sm:$0xff]
    %v5352 = vld [vmem:[#allocation17 + $0xee8] sm:$0xff]
    %v5353 = vld [vmem:[#allocation17 + $0xef0] sm:$0xff]
    %v5354 = vld [vmem:[#allocation17 + $0xef8] sm:$0xff]
    %v5355 = vld [vmem:[#allocation17 + $0xf00] sm:$0xff]
    %v5356 = vld [vmem:[#allocation17 + $0xf08] sm:$0xff]
    %v5357 = vld [vmem:[#allocation17 + $0xf10] sm:$0xff]
    %v5358 = vld [vmem:[#allocation17 + $0xf18] sm:$0xff]
    %v5359 = vld [vmem:[#allocation17 + $0xf20] sm:$0xff]
    %v5360 = vld [vmem:[#allocation17 + $0xf28] sm:$0xff]
    %v5361 = vld [vmem:[#allocation17 + $0xf30] sm:$0xff]
    %v5362 = vld [vmem:[#allocation17 + $0xf38] sm:$0xff]
    %v5363 = vld [vmem:[#allocation17 + $0xf40] sm:$0xff]
    %v5364 = vld [vmem:[#allocation17 + $0xf48] sm:$0xff]
    %v5365 = vld [vmem:[#allocation17 + $0xf50] sm:$0xff]
    %v5366 = vld [vmem:[#allocation17 + $0xf58] sm:$0xff]
    %v5367 = vld [vmem:[#allocation17 + $0xf60] sm:$0xff]
    %v5368 = vld [vmem:[#allocation17 + $0xf68] sm:$0xff]
    %v5369 = vld [vmem:[#allocation17 + $0xf70] sm:$0xff]
    %v5370 = vld [vmem:[#allocation17 + $0xf78] sm:$0xff]
    %v5371 = vld [vmem:[#allocation17 + $0xf80] sm:$0xff]
    %v5372 = vld [vmem:[#allocation17 + $0xf88] sm:$0xff]
    %v5373 = vld [vmem:[#allocation17 + $0xf90] sm:$0xff]
    %v5374 = vld [vmem:[#allocation17 + $0xf98] sm:$0xff]
    %v5375 = vld [vmem:[#allocation17 + $0xfa0] sm:$0xff]
    %v5376 = vld [vmem:[#allocation17 + $0xfa8] sm:$0xff]
    %v5377 = vld [vmem:[#allocation17 + $0xfb0] sm:$0xff]
    %v5378 = vld [vmem:[#allocation17 + $0xfb8] sm:$0xff]
    %v5379 = vld [vmem:[#allocation17 + $0xfc0] sm:$0xff]
    %v5380 = vld [vmem:[#allocation17 + $0xfc8] sm:$0xff]
    %v5381 = vld [vmem:[#allocation17 + $0xfd0] sm:$0xff]
    %v5382 = vld [vmem:[#allocation17 + $0xfd8] sm:$0xff]
    %v5383 = vld [vmem:[#allocation17 + $0xfe0] sm:$0xff]
    %v5384 = vld [vmem:[#allocation17 + $0xfe8] sm:$0xff]
    %v5385 = vld [vmem:[#allocation17 + $0xff0] sm:$0xff]
    %v5386 = vld [vmem:[#allocation17 + $0xff8] sm:$0xff]
    %v5387 = vld [vmem:[#allocation17 + $0x1000] sm:$0xff]
    %v5388 = vld [vmem:[#allocation17 + $0x1008] sm:$0xff]
    %v5389 = vld [vmem:[#allocation17 + $0x1010] sm:$0xff]
    %v5390 = vld [vmem:[#allocation17 + $0x1018] sm:$0xff]
    %v5391 = vld [vmem:[#allocation17 + $0x1020] sm:$0xff]
    %v5392 = vld [vmem:[#allocation17 + $0x1028] sm:$0xff]
    %v5393 = vld [vmem:[#allocation17 + $0x1030] sm:$0xff]
    %v5394 = vld [vmem:[#allocation17 + $0x1038] sm:$0xff]
    %v5395 = vld [vmem:[#allocation17 + $0x1040] sm:$0xff]
    %v5396 = vld [vmem:[#allocation17 + $0x1048] sm:$0xff]
    %v5397 = vld [vmem:[#allocation17 + $0x1050] sm:$0xff]
    %v5398 = vld [vmem:[#allocation17 + $0x1058] sm:$0xff]
    %v5399 = vld [vmem:[#allocation17 + $0x1060] sm:$0xff]
    %v5400 = vld [vmem:[#allocation17 + $0x1068] sm:$0xff]
    %v5401 = vld [vmem:[#allocation17 + $0x1070] sm:$0xff]
    %v5402 = vld [vmem:[#allocation17 + $0x1078] sm:$0xff]
    %v5403 = vld [vmem:[#allocation17 + $0x1080] sm:$0xff]
    %v5404 = vld [vmem:[#allocation17 + $0x1088] sm:$0xff]
    %v5405 = vld [vmem:[#allocation17 + $0x1090] sm:$0xff]
    %v5406 = vld [vmem:[#allocation17 + $0x1098] sm:$0xff]
    %v5407 = vld [vmem:[#allocation17 + $0x10a0] sm:$0xff]
    %v5408 = vld [vmem:[#allocation17 + $0x10a8] sm:$0xff]
    %v5409 = vld [vmem:[#allocation17 + $0x10b0] sm:$0xff]
    %v5410 = vld [vmem:[#allocation17 + $0x10b8] sm:$0xff]
    %v5411 = vld [vmem:[#allocation17 + $0x10c0] sm:$0xff]
    %v5412 = vld [vmem:[#allocation17 + $0x10c8] sm:$0xff]
    %v5413 = vld [vmem:[#allocation17 + $0x10d0] sm:$0xff]
    %v5414 = vld [vmem:[#allocation17 + $0x10d8] sm:$0xff]
    %v5415 = vld [vmem:[#allocation17 + $0x10e0] sm:$0xff]
    %v5416 = vld [vmem:[#allocation17 + $0x10e8] sm:$0xff]
    %v5417 = vld [vmem:[#allocation17 + $0x10f0] sm:$0xff]
    %v5418 = vld [vmem:[#allocation17 + $0x10f8] sm:$0xff]
    %v5419 = vld [vmem:[#allocation17 + $0x1100] sm:$0xff]
    %v5420 = vld [vmem:[#allocation17 + $0x1108] sm:$0xff]
    %v5421 = vld [vmem:[#allocation17 + $0x1110] sm:$0xff]
    %v5422 = vld [vmem:[#allocation17 + $0x1118] sm:$0xff]
    %v5423 = vld [vmem:[#allocation17 + $0x1120] sm:$0xff]
    %v5424 = vld [vmem:[#allocation17 + $0x1128] sm:$0xff]
    %v5425 = vld [vmem:[#allocation17 + $0x1130] sm:$0xff]
    %v5426 = vld [vmem:[#allocation17 + $0x1138] sm:$0xff]
    %v5427 = vld [vmem:[#allocation17 + $0x1140] sm:$0xff]
    %v5428 = vld [vmem:[#allocation17 + $0x1148] sm:$0xff]
    %v5429 = vld [vmem:[#allocation17 + $0x1150] sm:$0xff]
    %v5430 = vld [vmem:[#allocation17 + $0x1158] sm:$0xff]
    %v5431 = vld [vmem:[#allocation17 + $0x1160] sm:$0xff]
    %v5432 = vld [vmem:[#allocation17 + $0x1168] sm:$0xff]
    %v5433 = vld [vmem:[#allocation17 + $0x1170] sm:$0xff]
    %v5434 = vld [vmem:[#allocation17 + $0x1178] sm:$0xff]
    %v5435 = vld [vmem:[#allocation17 + $0x1180] sm:$0xff]
    %v5436 = vld [vmem:[#allocation17 + $0x1188] sm:$0xff]
    %v5437 = vld [vmem:[#allocation17 + $0x1190] sm:$0xff]
    %v5438 = vld [vmem:[#allocation17 + $0x1198] sm:$0xff]
    %v5439 = vld [vmem:[#allocation17 + $0x11a0] sm:$0xff]
    %v5440 = vld [vmem:[#allocation17 + $0x11a8] sm:$0xff]
    %v5441 = vld [vmem:[#allocation17 + $0x11b0] sm:$0xff]
    %v5442 = vld [vmem:[#allocation17 + $0x11b8] sm:$0xff]
    %v5443 = vld [vmem:[#allocation17 + $0x11c0] sm:$0xff]
    %v5444 = vld [vmem:[#allocation17 + $0x11c8] sm:$0xff]
    %v5445 = vld [vmem:[#allocation17 + $0x11d0] sm:$0xff]
    %v5446 = vld [vmem:[#allocation17 + $0x11d8] sm:$0xff]
    %v5447 = vld [vmem:[#allocation17 + $0x11e0] sm:$0xff]
    %v5448 = vld [vmem:[#allocation17 + $0x11e8] sm:$0xff]
    %v5449 = vld [vmem:[#allocation17 + $0x11f0] sm:$0xff]
    %v5450 = vld [vmem:[#allocation17 + $0x11f8] sm:$0xff]
    %v5451 = vld [vmem:[#allocation17 + $0x1200] sm:$0xff]
    %v5452 = vld [vmem:[#allocation17 + $0x1208] sm:$0xff]
    %v5453 = vld [vmem:[#allocation17 + $0x1210] sm:$0xff]
    %v5454 = vld [vmem:[#allocation17 + $0x1218] sm:$0xff]
    %v5455 = vld [vmem:[#allocation17 + $0x1220] sm:$0xff]
    %v5456 = vld [vmem:[#allocation17 + $0x1228] sm:$0xff]
    %v5457 = vld [vmem:[#allocation17 + $0x1230] sm:$0xff]
    %v5458 = vld [vmem:[#allocation17 + $0x1238] sm:$0xff]
    %v5459 = vld [vmem:[#allocation17 + $0x1240] sm:$0xff]
    %v5460 = vld [vmem:[#allocation17 + $0x1248] sm:$0xff]
    %v5461 = vld [vmem:[#allocation17 + $0x1250] sm:$0xff]
    %v5462 = vld [vmem:[#allocation17 + $0x1258] sm:$0xff]
    %v5463 = vld [vmem:[#allocation17 + $0x1260] sm:$0xff]
    %v5464 = vld [vmem:[#allocation17 + $0x1268] sm:$0xff]
    %v5465 = vld [vmem:[#allocation17 + $0x1270] sm:$0xff]
    %v5466 = vld [vmem:[#allocation17 + $0x1278] sm:$0xff]
    %v5467 = vld [vmem:[#allocation17 + $0x1280] sm:$0xff]
    %v5468 = vld [vmem:[#allocation17 + $0x1288] sm:$0xff]
    %v5469 = vld [vmem:[#allocation17 + $0x1290] sm:$0xff]
    %v5470 = vld [vmem:[#allocation17 + $0x1298] sm:$0xff]
    %v5471 = vld [vmem:[#allocation17 + $0x12a0] sm:$0xff]
    %v5472 = vld [vmem:[#allocation17 + $0x12a8] sm:$0xff]
    %v5473 = vld [vmem:[#allocation17 + $0x12b0] sm:$0xff]
    %v5474 = vld [vmem:[#allocation17 + $0x12b8] sm:$0xff]
    %v5475 = vld [vmem:[#allocation17 + $0x12c0] sm:$0xff]
    %v5476 = vld [vmem:[#allocation17 + $0x12c8] sm:$0xff]
    %v5477 = vld [vmem:[#allocation17 + $0x12d0] sm:$0xff]
    %v5478 = vld [vmem:[#allocation17 + $0x12d8] sm:$0xff]
    %v5479 = vld [vmem:[#allocation17 + $0x12e0] sm:$0xff]
    %v5480 = vld [vmem:[#allocation17 + $0x12e8] sm:$0xff]
    %v5481 = vld [vmem:[#allocation17 + $0x12f0] sm:$0xff]
    %v5482 = vld [vmem:[#allocation17 + $0x12f8] sm:$0xff]
    %v5483 = vld [vmem:[#allocation17 + $0x1300] sm:$0xff]
    %v5484 = vld [vmem:[#allocation17 + $0x1308] sm:$0xff]
    %v5485 = vld [vmem:[#allocation17 + $0x1310] sm:$0xff]
    %v5486 = vld [vmem:[#allocation17 + $0x1318] sm:$0xff]
    %v5487 = vld [vmem:[#allocation17 + $0x1320] sm:$0xff]
    %v5488 = vld [vmem:[#allocation17 + $0x1328] sm:$0xff]
    %v5489 = vld [vmem:[#allocation17 + $0x1330] sm:$0xff]
    %v5490 = vld [vmem:[#allocation17 + $0x1338] sm:$0xff]
    %v5491 = vld [vmem:[#allocation17 + $0x1340] sm:$0xff]
    %v5492 = vld [vmem:[#allocation17 + $0x1348] sm:$0xff]
    %v5493 = vld [vmem:[#allocation17 + $0x1350] sm:$0xff]
    %v5494 = vld [vmem:[#allocation17 + $0x1358] sm:$0xff]
    %v5495 = vld [vmem:[#allocation17 + $0x1360] sm:$0xff]
    %v5496 = vld [vmem:[#allocation17 + $0x1368] sm:$0xff]
    %v5497 = vld [vmem:[#allocation17 + $0x1370] sm:$0xff]
    %v5498 = vld [vmem:[#allocation17 + $0x1378] sm:$0xff]
    %v5499 = vld [vmem:[#allocation17 + $0x1380] sm:$0xff]
    %v5500 = vld [vmem:[#allocation17 + $0x1388] sm:$0xff]
    %v5501 = vld [vmem:[#allocation17 + $0x1390] sm:$0xff]
    %v5502 = vld [vmem:[#allocation17 + $0x1398] sm:$0xff]
    %v5503 = vld [vmem:[#allocation17 + $0x13a0] sm:$0xff]
    %v5504 = vld [vmem:[#allocation17 + $0x13a8] sm:$0xff]
    %v5505 = vld [vmem:[#allocation17 + $0x13b0] sm:$0xff]
    %v5506 = vld [vmem:[#allocation17 + $0x13b8] sm:$0xff]
    %v5507 = vld [vmem:[#allocation17 + $0x13c0] sm:$0xff]
    %v5508 = vld [vmem:[#allocation17 + $0x13c8] sm:$0xff]
    %v5509 = vld [vmem:[#allocation17 + $0x13d0] sm:$0xff]
    %v5510 = vld [vmem:[#allocation17 + $0x13d8] sm:$0xff]
    %v5511 = vld [vmem:[#allocation17 + $0x13e0] sm:$0xff]
    %v5512 = vld [vmem:[#allocation17 + $0x13e8] sm:$0xff]
    %v5513 = vld [vmem:[#allocation17 + $0x13f0] sm:$0xff]
    %v5514 = vld [vmem:[#allocation17 + $0x13f8] sm:$0xff]
    %v5515 = vld [vmem:[#allocation17 + $0x1400] sm:$0xff]
    %v5516 = vld [vmem:[#allocation17 + $0x1408] sm:$0xff]
    %v5517 = vld [vmem:[#allocation17 + $0x1410] sm:$0xff]
    %v5518 = vld [vmem:[#allocation17 + $0x1418] sm:$0xff]
    %v5519 = vld [vmem:[#allocation17 + $0x1420] sm:$0xff]
    %v5520 = vld [vmem:[#allocation17 + $0x1428] sm:$0xff]
    %v5521 = vld [vmem:[#allocation17 + $0x1430] sm:$0xff]
    %v5522 = vld [vmem:[#allocation17 + $0x1438] sm:$0xff]
    %v5523 = vld [vmem:[#allocation17 + $0x1440] sm:$0xff]
    %v5524 = vld [vmem:[#allocation17 + $0x1448] sm:$0xff]
    %v5525 = vld [vmem:[#allocation17 + $0x1450] sm:$0xff]
    %v5526 = vld [vmem:[#allocation17 + $0x1458] sm:$0xff]
    %v5527 = vld [vmem:[#allocation17 + $0x1460] sm:$0xff]
    %v5528 = vld [vmem:[#allocation17 + $0x1468] sm:$0xff]
    %v5529 = vld [vmem:[#allocation17 + $0x1470] sm:$0xff]
    %v5530 = vld [vmem:[#allocation17 + $0x1478] sm:$0xff]
    %v5531 = vld [vmem:[#allocation17 + $0x1480] sm:$0xff]
    %v5532 = vld [vmem:[#allocation17 + $0x1488] sm:$0xff]
    %v5533 = vld [vmem:[#allocation17 + $0x1490] sm:$0xff]
    %v5534 = vld [vmem:[#allocation17 + $0x1498] sm:$0xff]
    %v5535 = vld [vmem:[#allocation17 + $0x14a0] sm:$0xff]
    %v5536 = vld [vmem:[#allocation17 + $0x14a8] sm:$0xff]
    %v5537 = vld [vmem:[#allocation17 + $0x14b0] sm:$0xff]
    %v5538 = vld [vmem:[#allocation17 + $0x14b8] sm:$0xff]
    %v5539 = vld [vmem:[#allocation17 + $0x14c0] sm:$0xff]
    %v5540 = vld [vmem:[#allocation17 + $0x14c8] sm:$0xff]
    %v5541 = vld [vmem:[#allocation17 + $0x14d0] sm:$0xff]
    %v5542 = vld [vmem:[#allocation17 + $0x14d8] sm:$0xff]
    %v5543 = vld [vmem:[#allocation17 + $0x14e0] sm:$0xff]
    %v5544 = vld [vmem:[#allocation17 + $0x14e8] sm:$0xff]
    %v5545 = vld [vmem:[#allocation17 + $0x14f0] sm:$0xff]
    %v5546 = vld [vmem:[#allocation17 + $0x14f8] sm:$0xff]
    %v5547 = vld [vmem:[#allocation17 + $0x1500] sm:$0xff]
    %v5548 = vld [vmem:[#allocation17 + $0x1508] sm:$0xff]
    %v5549 = vld [vmem:[#allocation17 + $0x1510] sm:$0xff]
    %v5550 = vld [vmem:[#allocation17 + $0x1518] sm:$0xff]
    %v5551 = vld [vmem:[#allocation17 + $0x1520] sm:$0xff]
    %v5552 = vld [vmem:[#allocation17 + $0x1528] sm:$0xff]
    %v5553 = vld [vmem:[#allocation17 + $0x1530] sm:$0xff]
    %v5554 = vld [vmem:[#allocation17 + $0x1538] sm:$0xff]
    %v5555 = vld [vmem:[#allocation17 + $0x1540] sm:$0xff]
    %v5556 = vld [vmem:[#allocation17 + $0x1548] sm:$0xff]
    %v5557 = vld [vmem:[#allocation17 + $0x1550] sm:$0xff]
    %v5558 = vld [vmem:[#allocation17 + $0x1558] sm:$0xff]
    %v5559 = vld [vmem:[#allocation17 + $0x1560] sm:$0xff]
    %v5560 = vld [vmem:[#allocation17 + $0x1568] sm:$0xff]
    %v5561 = vld [vmem:[#allocation17 + $0x1570] sm:$0xff]
    %v5562 = vld [vmem:[#allocation17 + $0x1578] sm:$0xff]
    %v5563 = vld [vmem:[#allocation17 + $0x1580] sm:$0xff]
    %v5564 = vld [vmem:[#allocation17 + $0x1588] sm:$0xff]
    %v5565 = vld [vmem:[#allocation17 + $0x1590] sm:$0xff]
    %v5566 = vld [vmem:[#allocation17 + $0x1598] sm:$0xff]
    %v5567 = vld [vmem:[#allocation17 + $0x15a0] sm:$0xff]
    %v5568 = vld [vmem:[#allocation17 + $0x15a8] sm:$0xff]
    %v5569 = vld [vmem:[#allocation17 + $0x15b0] sm:$0xff]
    %v5570 = vld [vmem:[#allocation17 + $0x15b8] sm:$0xff]
    %v5571 = vld [vmem:[#allocation17 + $0x15c0] sm:$0xff]
    %v5572 = vld [vmem:[#allocation17 + $0x15c8] sm:$0xff]
    %v5573 = vld [vmem:[#allocation17 + $0x15d0] sm:$0xff]
    %v5574 = vld [vmem:[#allocation17 + $0x15d8] sm:$0xff]
    %v5575 = vld [vmem:[#allocation17 + $0x15e0] sm:$0xff]
    %v5576 = vld [vmem:[#allocation17 + $0x15e8] sm:$0xff]
    %v5577 = vld [vmem:[#allocation17 + $0x15f0] sm:$0xff]
    %v5578 = vld [vmem:[#allocation17 + $0x15f8] sm:$0xff]
    %v5579 = vld [vmem:[#allocation17 + $0x1600] sm:$0xff]
    %v5580 = vld [vmem:[#allocation17 + $0x1608] sm:$0xff]
    %v5581 = vld [vmem:[#allocation17 + $0x1610] sm:$0xff]
    %v5582 = vld [vmem:[#allocation17 + $0x1618] sm:$0xff]
    %v5583 = vld [vmem:[#allocation17 + $0x1620] sm:$0xff]
    %v5584 = vld [vmem:[#allocation17 + $0x1628] sm:$0xff]
    %v5585 = vld [vmem:[#allocation17 + $0x1630] sm:$0xff]
    %v5586 = vld [vmem:[#allocation17 + $0x1638] sm:$0xff]
    %v5587 = vld [vmem:[#allocation17 + $0x1640] sm:$0xff]
    %v5588 = vld [vmem:[#allocation17 + $0x1648] sm:$0xff]
    %v5589 = vld [vmem:[#allocation17 + $0x1650] sm:$0xff]
    %v5590 = vld [vmem:[#allocation17 + $0x1658] sm:$0xff]
    %v5591 = vld [vmem:[#allocation17 + $0x1660] sm:$0xff]
    %v5592 = vld [vmem:[#allocation17 + $0x1668] sm:$0xff]
    %v5593 = vld [vmem:[#allocation17 + $0x1670] sm:$0xff]
    %v5594 = vld [vmem:[#allocation17 + $0x1678] sm:$0xff]
    %v5595 = vld [vmem:[#allocation17 + $0x1680] sm:$0xff]
    %v5596 = vld [vmem:[#allocation17 + $0x1688] sm:$0xff]
    %v5597 = vld [vmem:[#allocation17 + $0x1690] sm:$0xff]
    %v5598 = vld [vmem:[#allocation17 + $0x1698] sm:$0xff]
    %v5599 = vld [vmem:[#allocation17 + $0x16a0] sm:$0xff]
    %v5600 = vld [vmem:[#allocation17 + $0x16a8] sm:$0xff]
    %v5601 = vld [vmem:[#allocation17 + $0x16b0] sm:$0xff]
    %v5602 = vld [vmem:[#allocation17 + $0x16b8] sm:$0xff]
    %v5603 = vld [vmem:[#allocation17 + $0x16c0] sm:$0xff]
    %v5604 = vld [vmem:[#allocation17 + $0x16c8] sm:$0xff]
    %v5605 = vld [vmem:[#allocation17 + $0x16d0] sm:$0xff]
    %v5606 = vld [vmem:[#allocation17 + $0x16d8] sm:$0xff]
    %v5607 = vld [vmem:[#allocation17 + $0x16e0] sm:$0xff]
    %v5608 = vld [vmem:[#allocation17 + $0x16e8] sm:$0xff]
    %v5609 = vld [vmem:[#allocation17 + $0x16f0] sm:$0xff]
    %v5610 = vld [vmem:[#allocation17 + $0x16f8] sm:$0xff]
    %v5611 = vld [vmem:[#allocation17 + $0x1700] sm:$0xff]
    %v5612 = vld [vmem:[#allocation17 + $0x1708] sm:$0xff]
    %v5613 = vld [vmem:[#allocation17 + $0x1710] sm:$0xff]
    %v5614 = vld [vmem:[#allocation17 + $0x1718] sm:$0xff]
    %v5615 = vld [vmem:[#allocation17 + $0x1720] sm:$0xff]
    %v5616 = vld [vmem:[#allocation17 + $0x1728] sm:$0xff]
    %v5617 = vld [vmem:[#allocation17 + $0x1730] sm:$0xff]
    %v5618 = vld [vmem:[#allocation17 + $0x1738] sm:$0xff]
    %v5619 = vld [vmem:[#allocation17 + $0x1740] sm:$0xff]
    %v5620 = vld [vmem:[#allocation17 + $0x1748] sm:$0xff]
    %v5621 = vld [vmem:[#allocation17 + $0x1750] sm:$0xff]
    %v5622 = vld [vmem:[#allocation17 + $0x1758] sm:$0xff]
    %v5623 = vld [vmem:[#allocation17 + $0x1760] sm:$0xff]
    %v5624 = vld [vmem:[#allocation17 + $0x1768] sm:$0xff]
    %v5625 = vld [vmem:[#allocation17 + $0x1770] sm:$0xff]
    %v5626 = vld [vmem:[#allocation17 + $0x1778] sm:$0xff]
    %v5627 = vld [vmem:[#allocation17 + $0x1780] sm:$0xff]
    %v5628 = vld [vmem:[#allocation17 + $0x1788] sm:$0xff]
    %v5629 = vld [vmem:[#allocation17 + $0x1790] sm:$0xff]
    %v5630 = vld [vmem:[#allocation17 + $0x1798] sm:$0xff]
    %v5631 = vld [vmem:[#allocation17 + $0x17a0] sm:$0xff]
    %v5632 = vld [vmem:[#allocation17 + $0x17a8] sm:$0xff]
    %v5633 = vld [vmem:[#allocation17 + $0x17b0] sm:$0xff]
    %v5634 = vld [vmem:[#allocation17 + $0x17b8] sm:$0xff]
    %v5635 = vld [vmem:[#allocation17 + $0x17c0] sm:$0xff]
    %v5636 = vld [vmem:[#allocation17 + $0x17c8] sm:$0xff]
    %v5637 = vld [vmem:[#allocation17 + $0x17d0] sm:$0xff]
    %v5638 = vld [vmem:[#allocation17 + $0x17d8] sm:$0xff]
    %v5639 = vld [vmem:[#allocation17 + $0x17e0] sm:$0xff]
    %v5640 = vld [vmem:[#allocation17 + $0x17e8] sm:$0xff]
    %v5641 = vld [vmem:[#allocation17 + $0x17f0] sm:$0xff]
    %v5642 = vld [vmem:[#allocation17 + $0x17f8] sm:$0xff]
    %v5643 = vld [vmem:[#allocation17 + $0x1800] sm:$0xff]
    %v5644 = vld [vmem:[#allocation17 + $0x1808] sm:$0xff]
    %v5645 = vld [vmem:[#allocation17 + $0x1810] sm:$0xff]
    %v5646 = vld [vmem:[#allocation17 + $0x1818] sm:$0xff]
    %v5647 = vld [vmem:[#allocation17 + $0x1820] sm:$0xff]
    %v5648 = vld [vmem:[#allocation17 + $0x1828] sm:$0xff]
    %v5649 = vld [vmem:[#allocation17 + $0x1830] sm:$0xff]
    %v5650 = vld [vmem:[#allocation17 + $0x1838] sm:$0xff]
    %v5651 = vld [vmem:[#allocation17 + $0x1840] sm:$0xff]
    %v5652 = vld [vmem:[#allocation17 + $0x1848] sm:$0xff]
    %v5653 = vld [vmem:[#allocation17 + $0x1850] sm:$0xff]
    %v5654 = vld [vmem:[#allocation17 + $0x1858] sm:$0xff]
    %v5655 = vld [vmem:[#allocation17 + $0x1860] sm:$0xff]
    %v5656 = vld [vmem:[#allocation17 + $0x1868] sm:$0xff]
    %v5657 = vld [vmem:[#allocation17 + $0x1870] sm:$0xff]
    %v5658 = vld [vmem:[#allocation17 + $0x1878] sm:$0xff]
    %v5659 = vld [vmem:[#allocation17 + $0x1880] sm:$0xff]
    %v5660 = vld [vmem:[#allocation17 + $0x1888] sm:$0xff]
    %v5661 = vld [vmem:[#allocation17 + $0x1890] sm:$0xff]
    %v5662 = vld [vmem:[#allocation17 + $0x1898] sm:$0xff]
    %v5663 = vld [vmem:[#allocation17 + $0x18a0] sm:$0xff]
    %v5664 = vld [vmem:[#allocation17 + $0x18a8] sm:$0xff]
    %v5665 = vld [vmem:[#allocation17 + $0x18b0] sm:$0xff]
    %v5666 = vld [vmem:[#allocation17 + $0x18b8] sm:$0xff]
    %v5667 = vld [vmem:[#allocation17 + $0x18c0] sm:$0xff]
    %v5668 = vld [vmem:[#allocation17 + $0x18c8] sm:$0xff]
    %v5669 = vld [vmem:[#allocation17 + $0x18d0] sm:$0xff]
    %v5670 = vld [vmem:[#allocation17 + $0x18d8] sm:$0xff]
    %v5671 = vld [vmem:[#allocation17 + $0x18e0] sm:$0xff]
    %v5672 = vld [vmem:[#allocation17 + $0x18e8] sm:$0xff]
    %v5673 = vld [vmem:[#allocation17 + $0x18f0] sm:$0xff]
    %v5674 = vld [vmem:[#allocation17 + $0x18f8] sm:$0xff]
    %v5675 = vld [vmem:[#allocation17 + $0x1900] sm:$0xff]
    %v5676 = vld [vmem:[#allocation17 + $0x1908] sm:$0xff]
    %v5677 = vld [vmem:[#allocation17 + $0x1910] sm:$0xff]
    %v5678 = vld [vmem:[#allocation17 + $0x1918] sm:$0xff]
    %v5679 = vld [vmem:[#allocation17 + $0x1920] sm:$0xff]
    %v5680 = vld [vmem:[#allocation17 + $0x1928] sm:$0xff]
    %v5681 = vld [vmem:[#allocation17 + $0x1930] sm:$0xff]
    %v5682 = vld [vmem:[#allocation17 + $0x1938] sm:$0xff]
    %v5683 = vld [vmem:[#allocation17 + $0x1940] sm:$0xff]
    %v5684 = vld [vmem:[#allocation17 + $0x1948] sm:$0xff]
    %v5685 = vld [vmem:[#allocation17 + $0x1950] sm:$0xff]
    %v5686 = vld [vmem:[#allocation17 + $0x1958] sm:$0xff]
    %v5687 = vld [vmem:[#allocation17 + $0x1960] sm:$0xff]
    %v5688 = vld [vmem:[#allocation17 + $0x1968] sm:$0xff]
    %v5689 = vld [vmem:[#allocation17 + $0x1970] sm:$0xff]
    %v5690 = vld [vmem:[#allocation17 + $0x1978] sm:$0xff]
    %v5691 = vld [vmem:[#allocation17 + $0x1980] sm:$0xff]
    %v5692 = vld [vmem:[#allocation17 + $0x1988] sm:$0xff]
    %v5693 = vld [vmem:[#allocation17 + $0x1990] sm:$0xff]
    %v5694 = vld [vmem:[#allocation17 + $0x1998] sm:$0xff]
    %v5695 = vld [vmem:[#allocation17 + $0x19a0] sm:$0xff]
    %v5696 = vld [vmem:[#allocation17 + $0x19a8] sm:$0xff]
    %v5697 = vld [vmem:[#allocation17 + $0x19b0] sm:$0xff]
    %v5698 = vld [vmem:[#allocation17 + $0x19b8] sm:$0xff]
    %v5699 = vld [vmem:[#allocation17 + $0x19c0] sm:$0xff]
    %v5700 = vld [vmem:[#allocation17 + $0x19c8] sm:$0xff]
    %v5701 = vld [vmem:[#allocation17 + $0x19d0] sm:$0xff]
    %v5702 = vld [vmem:[#allocation17 + $0x19d8] sm:$0xff]
    %v5703 = vld [vmem:[#allocation17 + $0x19e0] sm:$0xff]
    %v5704 = vld [vmem:[#allocation17 + $0x19e8] sm:$0xff]
    %v5705 = vld [vmem:[#allocation17 + $0x19f0] sm:$0xff]
    %v5706 = vld [vmem:[#allocation17 + $0x19f8] sm:$0xff]
    %v5707 = vld [vmem:[#allocation17 + $0x1a00] sm:$0xff]
    %v5708 = vld [vmem:[#allocation17 + $0x1a08] sm:$0xff]
    %v5709 = vld [vmem:[#allocation17 + $0x1a10] sm:$0xff]
    %v5710 = vld [vmem:[#allocation17 + $0x1a18] sm:$0xff]
    %v5711 = vld [vmem:[#allocation17 + $0x1a20] sm:$0xff]
    %v5712 = vld [vmem:[#allocation17 + $0x1a28] sm:$0xff]
    %v5713 = vld [vmem:[#allocation17 + $0x1a30] sm:$0xff]
    %v5714 = vld [vmem:[#allocation17 + $0x1a38] sm:$0xff]
    %v5715 = vld [vmem:[#allocation17 + $0x1a40] sm:$0xff]
    %v5716 = vld [vmem:[#allocation17 + $0x1a48] sm:$0xff]
    %v5717 = vld [vmem:[#allocation17 + $0x1a50] sm:$0xff]
    %v5718 = vld [vmem:[#allocation17 + $0x1a58] sm:$0xff]
    %v5719 = vld [vmem:[#allocation17 + $0x1a60] sm:$0xff]
    %v5720 = vld [vmem:[#allocation17 + $0x1a68] sm:$0xff]
    %v5721 = vld [vmem:[#allocation17 + $0x1a70] sm:$0xff]
    %v5722 = vld [vmem:[#allocation17 + $0x1a78] sm:$0xff]
    %v5723 = vld [vmem:[#allocation17 + $0x1a80] sm:$0xff]
    %v5724 = vld [vmem:[#allocation17 + $0x1a88] sm:$0xff]
    %v5725 = vld [vmem:[#allocation17 + $0x1a90] sm:$0xff]
    %v5726 = vld [vmem:[#allocation17 + $0x1a98] sm:$0xff]
    %v5727 = vld [vmem:[#allocation17 + $0x1aa0] sm:$0xff]
    %v5728 = vld [vmem:[#allocation17 + $0x1aa8] sm:$0xff]
    %v5729 = vld [vmem:[#allocation17 + $0x1ab0] sm:$0xff]
    %v5730 = vld [vmem:[#allocation17 + $0x1ab8] sm:$0xff]
    %v5731 = vld [vmem:[#allocation17 + $0x1ac0] sm:$0xff]
    %v5732 = vld [vmem:[#allocation17 + $0x1ac8] sm:$0xff]
    %v5733 = vld [vmem:[#allocation17 + $0x1ad0] sm:$0xff]
    %v5734 = vld [vmem:[#allocation17 + $0x1ad8] sm:$0xff]
    %v5735 = vld [vmem:[#allocation17 + $0x1ae0] sm:$0xff]
    %v5736 = vld [vmem:[#allocation17 + $0x1ae8] sm:$0xff]
    %v5737 = vld [vmem:[#allocation17 + $0x1af0] sm:$0xff]
    %v5738 = vld [vmem:[#allocation17 + $0x1af8] sm:$0xff]
    %v5739 = vld [vmem:[#allocation17 + $0x1b00] sm:$0xff]
    %v5740 = vld [vmem:[#allocation17 + $0x1b08] sm:$0xff]
    %v5741 = vld [vmem:[#allocation17 + $0x1b10] sm:$0xff]
    %v5742 = vld [vmem:[#allocation17 + $0x1b18] sm:$0xff]
    %v5743 = vld [vmem:[#allocation17 + $0x1b20] sm:$0xff]
    %v5744 = vld [vmem:[#allocation17 + $0x1b28] sm:$0xff]
    %v5745 = vld [vmem:[#allocation17 + $0x1b30] sm:$0xff]
    %v5746 = vld [vmem:[#allocation17 + $0x1b38] sm:$0xff]
    %v5747 = vld [vmem:[#allocation17 + $0x1b40] sm:$0xff]
    %v5748 = vld [vmem:[#allocation17 + $0x1b48] sm:$0xff]
    %v5749 = vld [vmem:[#allocation17 + $0x1b50] sm:$0xff]
    %v5750 = vld [vmem:[#allocation17 + $0x1b58] sm:$0xff]
    %v5751 = vld [vmem:[#allocation17 + $0x1b60] sm:$0xff]
    %v5752 = vld [vmem:[#allocation17 + $0x1b68] sm:$0xff]
    %v5753 = vld [vmem:[#allocation17 + $0x1b70] sm:$0xff]
    %v5754 = vld [vmem:[#allocation17 + $0x1b78] sm:$0xff]
    %v5755 = vld [vmem:[#allocation17 + $0x1b80] sm:$0xff]
    %v5756 = vld [vmem:[#allocation17 + $0x1b88] sm:$0xff]
    %v5757 = vld [vmem:[#allocation17 + $0x1b90] sm:$0xff]
    %v5758 = vld [vmem:[#allocation17 + $0x1b98] sm:$0xff]
    %v5759 = vld [vmem:[#allocation17 + $0x1ba0] sm:$0xff]
    %v5760 = vld [vmem:[#allocation17 + $0x1ba8] sm:$0xff]
    %v5761 = vld [vmem:[#allocation17 + $0x1bb0] sm:$0xff]
    %v5762 = vld [vmem:[#allocation17 + $0x1bb8] sm:$0xff]
    %v5763 = vld [vmem:[#allocation17 + $0x1bc0] sm:$0xff]
    %v5764 = vld [vmem:[#allocation17 + $0x1bc8] sm:$0xff]
    %v5765 = vld [vmem:[#allocation17 + $0x1bd0] sm:$0xff]
    %v5766 = vld [vmem:[#allocation17 + $0x1bd8] sm:$0xff]
    %v5767 = vld [vmem:[#allocation17 + $0x1be0] sm:$0xff]
    %v5768 = vld [vmem:[#allocation17 + $0x1be8] sm:$0xff]
    %v5769 = vld [vmem:[#allocation17 + $0x1bf0] sm:$0xff]
    %v5770 = vld [vmem:[#allocation17 + $0x1bf8] sm:$0xff]
    %v5771 = vld [vmem:[#allocation17 + $0x1c00] sm:$0xff]
    %v5772 = vld [vmem:[#allocation17 + $0x1c08] sm:$0xff]
    %v5773 = vld [vmem:[#allocation17 + $0x1c10] sm:$0xff]
    %v5774 = vld [vmem:[#allocation17 + $0x1c18] sm:$0xff]
    %v5775 = vld [vmem:[#allocation17 + $0x1c20] sm:$0xff]
    %v5776 = vld [vmem:[#allocation17 + $0x1c28] sm:$0xff]
    %v5777 = vld [vmem:[#allocation17 + $0x1c30] sm:$0xff]
    %v5778 = vld [vmem:[#allocation17 + $0x1c38] sm:$0xff]
    %v5779 = vld [vmem:[#allocation17 + $0x1c40] sm:$0xff]
    %v5780 = vld [vmem:[#allocation17 + $0x1c48] sm:$0xff]
    %v5781 = vld [vmem:[#allocation17 + $0x1c50] sm:$0xff]
    %v5782 = vld [vmem:[#allocation17 + $0x1c58] sm:$0xff]
    %v5783 = vld [vmem:[#allocation17 + $0x1c60] sm:$0xff]
    %v5784 = vld [vmem:[#allocation17 + $0x1c68] sm:$0xff]
    %v5785 = vld [vmem:[#allocation17 + $0x1c70] sm:$0xff]
    %v5786 = vld [vmem:[#allocation17 + $0x1c78] sm:$0xff]
    %v5787 = vld [vmem:[#allocation17 + $0x1c80] sm:$0xff]
    %v5788 = vld [vmem:[#allocation17 + $0x1c88] sm:$0xff]
    %v5789 = vld [vmem:[#allocation17 + $0x1c90] sm:$0xff]
    %v5790 = vld [vmem:[#allocation17 + $0x1c98] sm:$0xff]
    %v5791 = vld [vmem:[#allocation17 + $0x1ca0] sm:$0xff]
    %v5792 = vld [vmem:[#allocation17 + $0x1ca8] sm:$0xff]
    %v5793 = vld [vmem:[#allocation17 + $0x1cb0] sm:$0xff]
    %v5794 = vld [vmem:[#allocation17 + $0x1cb8] sm:$0xff]
    %v5795 = vld [vmem:[#allocation17 + $0x1cc0] sm:$0xff]
    %v5796 = vld [vmem:[#allocation17 + $0x1cc8] sm:$0xff]
    %v5797 = vld [vmem:[#allocation17 + $0x1cd0] sm:$0xff]
    %v5798 = vld [vmem:[#allocation17 + $0x1cd8] sm:$0xff]
    %v5799 = vld [vmem:[#allocation17 + $0x1ce0] sm:$0xff]
    %v5800 = vld [vmem:[#allocation17 + $0x1ce8] sm:$0xff]
    %v5801 = vld [vmem:[#allocation17 + $0x1cf0] sm:$0xff]
    %v5802 = vld [vmem:[#allocation17 + $0x1cf8] sm:$0xff]
    %v5803 = vld [vmem:[#allocation17 + $0x1d00] sm:$0xff]
    %v5804 = vld [vmem:[#allocation17 + $0x1d08] sm:$0xff]
    %v5805 = vld [vmem:[#allocation17 + $0x1d10] sm:$0xff]
    %v5806 = vld [vmem:[#allocation17 + $0x1d18] sm:$0xff]
    %v5807 = vld [vmem:[#allocation17 + $0x1d20] sm:$0xff]
    %v5808 = vld [vmem:[#allocation17 + $0x1d28] sm:$0xff]
    %v5809 = vld [vmem:[#allocation17 + $0x1d30] sm:$0xff]
    %v5810 = vld [vmem:[#allocation17 + $0x1d38] sm:$0xff]
    %v5811 = vld [vmem:[#allocation17 + $0x1d40] sm:$0xff]
    %v5812 = vld [vmem:[#allocation17 + $0x1d48] sm:$0xff]
    %v5813 = vld [vmem:[#allocation17 + $0x1d50] sm:$0xff]
    %v5814 = vld [vmem:[#allocation17 + $0x1d58] sm:$0xff]
    %v5815 = vld [vmem:[#allocation17 + $0x1d60] sm:$0xff]
    %v5816 = vld [vmem:[#allocation17 + $0x1d68] sm:$0xff]
    %v5817 = vld [vmem:[#allocation17 + $0x1d70] sm:$0xff]
    %v5818 = vld [vmem:[#allocation17 + $0x1d78] sm:$0xff]
    %v5819 = vld [vmem:[#allocation17 + $0x1d80] sm:$0xff]
    %v5820 = vld [vmem:[#allocation17 + $0x1d88] sm:$0xff]
    %v5821 = vld [vmem:[#allocation17 + $0x1d90] sm:$0xff]
    %v5822 = vld [vmem:[#allocation17 + $0x1d98] sm:$0xff]
    %v5823 = vld [vmem:[#allocation17 + $0x1da0] sm:$0xff]
    %v5824 = vld [vmem:[#allocation17 + $0x1da8] sm:$0xff]
    %v5825 = vld [vmem:[#allocation17 + $0x1db0] sm:$0xff]
    %v5826 = vld [vmem:[#allocation17 + $0x1db8] sm:$0xff]
    %v5827 = vld [vmem:[#allocation17 + $0x1dc0] sm:$0xff]
    %v5828 = vld [vmem:[#allocation17 + $0x1dc8] sm:$0xff]
    %v5829 = vld [vmem:[#allocation17 + $0x1dd0] sm:$0xff]
    %v5830 = vld [vmem:[#allocation17 + $0x1dd8] sm:$0xff]
    %v5831 = vld [vmem:[#allocation17 + $0x1de0] sm:$0xff]
    %v5832 = vld [vmem:[#allocation17 + $0x1de8] sm:$0xff]
    %v5833 = vld [vmem:[#allocation17 + $0x1df0] sm:$0xff]
    %v5834 = vld [vmem:[#allocation17 + $0x1df8] sm:$0xff]
    %v5835 = vld [vmem:[#allocation17 + $0x1e00] sm:$0xff]
    %v5836 = vld [vmem:[#allocation17 + $0x1e08] sm:$0xff]
    %v5837 = vld [vmem:[#allocation17 + $0x1e10] sm:$0xff]
    %v5838 = vld [vmem:[#allocation17 + $0x1e18] sm:$0xff]
    %v5839 = vld [vmem:[#allocation17 + $0x1e20] sm:$0xff]
    %v5840 = vld [vmem:[#allocation17 + $0x1e28] sm:$0xff]
    %v5841 = vld [vmem:[#allocation17 + $0x1e30] sm:$0xff]
    %v5842 = vld [vmem:[#allocation17 + $0x1e38] sm:$0xff]
    %v5843 = vld [vmem:[#allocation17 + $0x1e40] sm:$0xff]
    %v5844 = vld [vmem:[#allocation17 + $0x1e48] sm:$0xff]
    %v5845 = vld [vmem:[#allocation17 + $0x1e50] sm:$0xff]
    %v5846 = vld [vmem:[#allocation17 + $0x1e58] sm:$0xff]
    %v5847 = vld [vmem:[#allocation17 + $0x1e60] sm:$0xff]
    %v5848 = vld [vmem:[#allocation17 + $0x1e68] sm:$0xff]
    %v5849 = vld [vmem:[#allocation17 + $0x1e70] sm:$0xff]
    %v5850 = vld [vmem:[#allocation17 + $0x1e78] sm:$0xff]
    %v5851 = vld [vmem:[#allocation17 + $0x1e80] sm:$0xff]
    %v5852 = vld [vmem:[#allocation17 + $0x1e88] sm:$0xff]
    %v5853 = vld [vmem:[#allocation17 + $0x1e90] sm:$0xff]
    %v5854 = vld [vmem:[#allocation17 + $0x1e98] sm:$0xff]
    %v5855 = vld [vmem:[#allocation17 + $0x1ea0] sm:$0xff]
    %v5856 = vld [vmem:[#allocation17 + $0x1ea8] sm:$0xff]
    %v5857 = vld [vmem:[#allocation17 + $0x1eb0] sm:$0xff]
    %v5858 = vld [vmem:[#allocation17 + $0x1eb8] sm:$0xff]
    %v5859 = vld [vmem:[#allocation17 + $0x1ec0] sm:$0xff]
    %v5860 = vld [vmem:[#allocation17 + $0x1ec8] sm:$0xff]
    %v5861 = vld [vmem:[#allocation17 + $0x1ed0] sm:$0xff]
    %v5862 = vld [vmem:[#allocation17 + $0x1ed8] sm:$0xff]
    %v5863 = vld [vmem:[#allocation17 + $0x1ee0] sm:$0xff]
    %v5864 = vld [vmem:[#allocation17 + $0x1ee8] sm:$0xff]
    %v5865 = vld [vmem:[#allocation17 + $0x1ef0] sm:$0xff]
    %v5866 = vld [vmem:[#allocation17 + $0x1ef8] sm:$0xff]
    %v5867 = vld [vmem:[#allocation17 + $0x1f00] sm:$0xff]
    %v5868 = vld [vmem:[#allocation17 + $0x1f08] sm:$0xff]
    %v5869 = vld [vmem:[#allocation17 + $0x1f10] sm:$0xff]
    %v5870 = vld [vmem:[#allocation17 + $0x1f18] sm:$0xff]
    %v5871 = vld [vmem:[#allocation17 + $0x1f20] sm:$0xff]
    %v5872 = vld [vmem:[#allocation17 + $0x1f28] sm:$0xff]
    %v5873 = vld [vmem:[#allocation17 + $0x1f30] sm:$0xff]
    %v5874 = vld [vmem:[#allocation17 + $0x1f38] sm:$0xff]
    %v5875 = vld [vmem:[#allocation17 + $0x1f40] sm:$0xff]
    %v5876 = vld [vmem:[#allocation17 + $0x1f48] sm:$0xff]
    %v5877 = vld [vmem:[#allocation17 + $0x1f50] sm:$0xff]
    %v5878 = vld [vmem:[#allocation17 + $0x1f58] sm:$0xff]
    %v5879 = vld [vmem:[#allocation17 + $0x1f60] sm:$0xff]
    %v5880 = vld [vmem:[#allocation17 + $0x1f68] sm:$0xff]
    %v5881 = vld [vmem:[#allocation17 + $0x1f70] sm:$0xff]
    %v5882 = vld [vmem:[#allocation17 + $0x1f78] sm:$0xff]
    %v5883 = vld [vmem:[#allocation17 + $0x1f80] sm:$0xff]
    %v5884 = vld [vmem:[#allocation17 + $0x1f88] sm:$0xff]
    %v5885 = vld [vmem:[#allocation17 + $0x1f90] sm:$0xff]
    %v5886 = vld [vmem:[#allocation17 + $0x1f98] sm:$0xff]
    %v5887 = vld [vmem:[#allocation17 + $0x1fa0] sm:$0xff]
    %v5888 = vld [vmem:[#allocation17 + $0x1fa8] sm:$0xff]
    %v5889 = vld [vmem:[#allocation17 + $0x1fb0] sm:$0xff]
    %v5890 = vld [vmem:[#allocation17 + $0x1fb8] sm:$0xff]
    %v5891 = vld [vmem:[#allocation17 + $0x1fc0] sm:$0xff]
    %v5892 = vld [vmem:[#allocation17 + $0x1fc8] sm:$0xff]
    %v5893 = vld [vmem:[#allocation17 + $0x1fd0] sm:$0xff]
    %v5894 = vld [vmem:[#allocation17 + $0x1fd8] sm:$0xff]
    %v5895 = vld [vmem:[#allocation17 + $0x1fe0] sm:$0xff]
    %v5896 = vld [vmem:[#allocation17 + $0x1fe8] sm:$0xff]
    %v5897 = vld [vmem:[#allocation17 + $0x1ff0] sm:$0xff]
    %v5898 = vld [vmem:[#allocation17 + $0x1ff8] sm:$0xff]
    %v5899 = vld [vmem:[#allocation19] sm:$0xf]
    %v5901 = vlaneseq
    %v5902 = vshrl.u32 %v5901, 7
    %v5903 = vsub.s32 0, %v5902
    %v5904 = vrot.slane %v5899, %v5903
    %v5905 = vlaneseq
    %v5906 = vshrl.u32 %v5905, 7
    %v5907 = vsub.s32 1, %v5906
    %v5908 = vrot.slane %v5899, %v5907
    %v5909 = vlaneseq
    %v5910 = vshrl.u32 %v5909, 7
    %v5911 = vsub.s32 2, %v5910
    %v5912 = vrot.slane %v5899, %v5911
    %v5913 = vlaneseq
    %v5914 = vshrl.u32 %v5913, 7
    %v5915 = vsub.s32 3, %v5914
    %v5916 = vrot.slane %v5899, %v5915
    %v5925 = vcombine.high %v4871, %v4871
    %v5927 = vunpack.c.l.s4 1983009808
    %v5928 = vunpack.c.0.s8 %v5927
    %v5929 = vlaneseq
    %v5930 = vshrl.u32 %v5929, 7
    %v5931 = vsub.s32 %v5928, %v5930
    %v5932 = vrot.slane %v4871, %v5931
    %v5934 = vunpack.c.l.s4 1983009808
    %v5935 = vunpack.c.0.s8 %v5934
    %v5936 = vlaneseq
    %v5937 = vshrl.u32 %v5936, 7
    %v5938 = vsub.s32 %v5935, %v5937
    %v5939 = vrot.slane %v5925, %v5938
    %v5940 = vcombine.high %v5932, %v5932
    %v5941 = vcombine.high %v5939, %v5939
    %v5942 = vcombine.high %v4872, %v4872
    %v5944 = vunpack.c.l.s4 1983009808
    %v5945 = vunpack.c.0.s8 %v5944
    %v5946 = vlaneseq
    %v5947 = vshrl.u32 %v5946, 7
    %v5948 = vsub.s32 %v5945, %v5947
    %v5949 = vrot.slane %v4872, %v5948
    %v5951 = vunpack.c.l.s4 1983009808
    %v5952 = vunpack.c.0.s8 %v5951
    %v5953 = vlaneseq
    %v5954 = vshrl.u32 %v5953, 7
    %v5955 = vsub.s32 %v5952, %v5954
    %v5956 = vrot.slane %v5942, %v5955
    %v5957 = vcombine.high %v5949, %v5949
    %v5958 = vcombine.high %v5956, %v5956
    %v5959 = vcombine.high %v4873, %v4873
    %v5961 = vunpack.c.l.s4 1983009808
    %v5962 = vunpack.c.0.s8 %v5961
    %v5963 = vlaneseq
    %v5964 = vshrl.u32 %v5963, 7
    %v5965 = vsub.s32 %v5962, %v5964
    %v5966 = vrot.slane %v4873, %v5965
    %v5968 = vunpack.c.l.s4 1983009808
    %v5969 = vunpack.c.0.s8 %v5968
    %v5970 = vlaneseq
    %v5971 = vshrl.u32 %v5970, 7
    %v5972 = vsub.s32 %v5969, %v5971
    %v5973 = vrot.slane %v5959, %v5972
    %v5974 = vcombine.high %v5966, %v5966
    %v5975 = vcombine.high %v5973, %v5973
    %v5976 = vcombine.high %v4874, %v4874
    %v5978 = vunpack.c.l.s4 1983009808
    %v5979 = vunpack.c.0.s8 %v5978
    %v5980 = vlaneseq
    %v5981 = vshrl.u32 %v5980, 7
    %v5982 = vsub.s32 %v5979, %v5981
    %v5983 = vrot.slane %v4874, %v5982
    %v5985 = vunpack.c.l.s4 1983009808
    %v5986 = vunpack.c.0.s8 %v5985
    %v5987 = vlaneseq
    %v5988 = vshrl.u32 %v5987, 7
    %v5989 = vsub.s32 %v5986, %v5988
    %v5990 = vrot.slane %v5976, %v5989
    %v5991 = vcombine.high %v5983, %v5983
    %v5992 = vcombine.high %v5990, %v5990
    %6009 = vmatprep.subr.mxu0 %v4876
    %6010 = vmatpush1.msra.mxu0 %v4875
    %6011 = vmatprep.subr.mxu0 %v4880
    %6012 = vmatpush1.msra.mxu0 %v4879
    %6013 = vmatprep.subr.mxu0 %v4884
    %6014 = vmatpush1.msra.mxu0 %v4883
    %6015 = vmatprep.subr.mxu0 %v4888
    %6016 = vmatpush1.msra.mxu0 %v4887
    %6017 = vmatprep.subr.mxu0 %v4892
    %6018 = vmatpush1.msra.mxu0 %v4891
    %6019 = vmatprep.subr.mxu0 %v4896
    %6020 = vmatpush1.msra.mxu0 %v4895
    %6021 = vmatprep.subr.mxu0 %v4900
    %6022 = vmatpush1.msra.mxu0 %v4899
    %6023 = vmatprep.subr.mxu0 %v4904
    %6024 = vmatpush1.msra.mxu0 %v4903
    %6025 = vmatprep.subr.mxu0 %v4908
    %6026 = vmatpush1.msra.mxu0 %v4907
    %6027 = vmatprep.subr.mxu0 %v4912
    %6028 = vmatpush1.msra.mxu0 %v4911
    %6029 = vmatprep.subr.mxu0 %v4916
    %6030 = vmatpush1.msra.mxu0 %v4915
    %6031 = vmatprep.subr.mxu0 %v4920
    %6032 = vmatpush1.msra.mxu0 %v4919
    %6033 = vmatprep.subr.mxu0 %v4924
    %6034 = vmatpush1.msra.mxu0 %v4923
    %6035 = vmatprep.subr.mxu0 %v4928
    %6036 = vmatpush1.msra.mxu0 %v4927
    %6037 = vmatprep.subr.mxu0 %v4932
    %6038 = vmatpush1.msra.mxu0 %v4931
    %6039 = vmatprep.subr.mxu0 %v4936
    %6040 = vmatpush1.msra.mxu0 %v4935
    %6041 = vmatprep.subr.mxu0 %v4940
    %6042 = vmatpush1.msra.mxu0 %v4939
    %6043 = vmatprep.subr.mxu0 %v4944
    %6044 = vmatpush1.msra.mxu0 %v4943
    %6045 = vmatprep.subr.mxu0 %v4948
    %6046 = vmatpush1.msra.mxu0 %v4947
    %6047 = vmatprep.subr.mxu0 %v4952
    %6048 = vmatpush1.msra.mxu0 %v4951
    %6049 = vmatprep.subr.mxu0 %v4956
    %6050 = vmatpush1.msra.mxu0 %v4955
    %6051 = vmatprep.subr.mxu0 %v4960
    %6052 = vmatpush1.msra.mxu0 %v4959
    %6053 = vmatprep.subr.mxu0 %v4964
    %6054 = vmatpush1.msra.mxu0 %v4963
    %6055 = vmatprep.subr.mxu0 %v4968
    %6056 = vmatpush1.msra.mxu0 %v4967
    %6057 = vmatprep.subr.mxu0 %v4972
    %6058 = vmatpush1.msra.mxu0 %v4971
    %6059 = vmatprep.subr.mxu0 %v4976
    %6060 = vmatpush1.msra.mxu0 %v4975
    %6061 = vmatprep.subr.mxu0 %v4980
    %6062 = vmatpush1.msra.mxu0 %v4979
    %6063 = vmatprep.subr.mxu0 %v4984
    %6064 = vmatpush1.msra.mxu0 %v4983
    %6065 = vmatprep.subr.mxu0 %v4988
    %6066 = vmatpush1.msra.mxu0 %v4987
    %6067 = vmatprep.subr.mxu0 %v4992
    %6068 = vmatpush1.msra.mxu0 %v4991
    %6069 = vmatprep.subr.mxu0 %v4996
    %6070 = vmatpush1.msra.mxu0 %v4995
    %6071 = vmatprep.subr.mxu0 %v5000
    %6072 = vmatpush1.msra.mxu0 %v4999
    %6073 = vmatprep.mubr.f32.mxu0 %v5940
    %6074 = vmatmul.mubr.f32.gmra.mrb[0].mxu0 %v5932
    %v6075 = vpop.f32.mrb[0].mxu0
    %v6076 = vadd.f32 %v5904, %v6075
    %v6077 = vpop.f32.mrb[0].mxu0
    %v6078 = vadd.f32 %v5908, %v6077
    %6079 = vdwg.mxu0
    %6080 = vmatprep.subr.mxu0 %v5004
    %6081 = vmatpush1.msra.mxu0 %v5003
    %6082 = vmatprep.subr.mxu0 %v5008
    %6083 = vmatpush1.msra.mxu0 %v5007
    %6084 = vmatprep.subr.mxu0 %v5012
    %6085 = vmatpush1.msra.mxu0 %v5011
    %6086 = vmatprep.subr.mxu0 %v5016
    %6087 = vmatpush1.msra.mxu0 %v5015
    %6088 = vmatprep.subr.mxu0 %v5020
    %6089 = vmatpush1.msra.mxu0 %v5019
    %6090 = vmatprep.subr.mxu0 %v5024
    %6091 = vmatpush1.msra.mxu0 %v5023
    %6092 = vmatprep.subr.mxu0 %v5028
    %6093 = vmatpush1.msra.mxu0 %v5027
    %6094 = vmatprep.subr.mxu0 %v5032
    %6095 = vmatpush1.msra.mxu0 %v5031
    %6096 = vmatprep.subr.mxu0 %v5036
    %6097 = vmatpush1.msra.mxu0 %v5035
    %6098 = vmatprep.subr.mxu0 %v5040
    %6099 = vmatpush1.msra.mxu0 %v5039
    %6100 = vmatprep.subr.mxu0 %v5044
    %6101 = vmatpush1.msra.mxu0 %v5043
    %6102 = vmatprep.subr.mxu0 %v5048
    %6103 = vmatpush1.msra.mxu0 %v5047
    %6104 = vmatprep.subr.mxu0 %v5052
    %6105 = vmatpush1.msra.mxu0 %v5051
    %6106 = vmatprep.subr.mxu0 %v5056
    %6107 = vmatpush1.msra.mxu0 %v5055
    %6108 = vmatprep.subr.mxu0 %v5060
    %6109 = vmatpush1.msra.mxu0 %v5059
    %6110 = vmatprep.subr.mxu0 %v5064
    %6111 = vmatpush1.msra.mxu0 %v5063
    %6112 = vmatprep.subr.mxu0 %v5068
    %6113 = vmatpush1.msra.mxu0 %v5067
    %6114 = vmatprep.subr.mxu0 %v5072
    %6115 = vmatpush1.msra.mxu0 %v5071
    %6116 = vmatprep.subr.mxu0 %v5076
    %6117 = vmatpush1.msra.mxu0 %v5075
    %6118 = vmatprep.subr.mxu0 %v5080
    %6119 = vmatpush1.msra.mxu0 %v5079
    %6120 = vmatprep.subr.mxu0 %v5084
    %6121 = vmatpush1.msra.mxu0 %v5083
    %6122 = vmatprep.subr.mxu0 %v5088
    %6123 = vmatpush1.msra.mxu0 %v5087
    %6124 = vmatprep.subr.mxu0 %v5092
    %6125 = vmatpush1.msra.mxu0 %v5091
    %6126 = vmatprep.subr.mxu0 %v5096
    %6127 = vmatpush1.msra.mxu0 %v5095
    %6128 = vmatprep.subr.mxu0 %v5100
    %6129 = vmatpush1.msra.mxu0 %v5099
    %6130 = vmatprep.subr.mxu0 %v5104
    %6131 = vmatpush1.msra.mxu0 %v5103
    %6132 = vmatprep.subr.mxu0 %v5108
    %6133 = vmatpush1.msra.mxu0 %v5107
    %6134 = vmatprep.subr.mxu0 %v5112
    %6135 = vmatpush1.msra.mxu0 %v5111
    %6136 = vmatprep.subr.mxu0 %v5116
    %6137 = vmatpush1.msra.mxu0 %v5115
    %6138 = vmatprep.subr.mxu0 %v5120
    %6139 = vmatpush1.msra.mxu0 %v5119
    %6140 = vmatprep.subr.mxu0 %v5124
    %6141 = vmatpush1.msra.mxu0 %v5123
    %6142 = vmatprep.subr.mxu0 %v5128
    %6143 = vmatpush1.msra.mxu0 %v5127
    %6144 = vmatprep.mubr.f32.mxu0 %v5941
    %6145 = vmatmul.mubr.f32.gmra.mrb[0].mxu0 %v5939
    %v6146 = vpop.f32.mrb[0].mxu0
    %v6147 = vadd.f32 %v6076, %v6146
    %v6148 = vpop.f32.mrb[0].mxu0
    %v6149 = vadd.f32 %v6078, %v6148
    %6150 = vdwg.mxu0
    %6151 = vmatprep.subr.mxu0 %v5132
    %6152 = vmatpush1.msra.mxu0 %v5131
    %6153 = vmatprep.subr.mxu0 %v5136
    %6154 = vmatpush1.msra.mxu0 %v5135
    %6155 = vmatprep.subr.mxu0 %v5140
    %6156 = vmatpush1.msra.mxu0 %v5139
    %6157 = vmatprep.subr.mxu0 %v5144
    %6158 = vmatpush1.msra.mxu0 %v5143
    %6159 = vmatprep.subr.mxu0 %v5148
    %6160 = vmatpush1.msra.mxu0 %v5147
    %6161 = vmatprep.subr.mxu0 %v5152
    %6162 = vmatpush1.msra.mxu0 %v5151
    %6163 = vmatprep.subr.mxu0 %v5156
    %6164 = vmatpush1.msra.mxu0 %v5155
    %6165 = vmatprep.subr.mxu0 %v5160
    %6166 = vmatpush1.msra.mxu0 %v5159
    %6167 = vmatprep.subr.mxu0 %v5164
    %6168 = vmatpush1.msra.mxu0 %v5163
    %6169 = vmatprep.subr.mxu0 %v5168
    %6170 = vmatpush1.msra.mxu0 %v5167
    %6171 = vmatprep.subr.mxu0 %v5172
    %6172 = vmatpush1.msra.mxu0 %v5171
    %6173 = vmatprep.subr.mxu0 %v5176
    %6174 = vmatpush1.msra.mxu0 %v5175
    %6175 = vmatprep.subr.mxu0 %v5180
    %6176 = vmatpush1.msra.mxu0 %v5179
    %6177 = vmatprep.subr.mxu0 %v5184
    %6178 = vmatpush1.msra.mxu0 %v5183
    %6179 = vmatprep.subr.mxu0 %v5188
    %6180 = vmatpush1.msra.mxu0 %v5187
    %6181 = vmatprep.subr.mxu0 %v5192
    %6182 = vmatpush1.msra.mxu0 %v5191
    %6183 = vmatprep.subr.mxu0 %v5196
    %6184 = vmatpush1.msra.mxu0 %v5195
    %6185 = vmatprep.subr.mxu0 %v5200
    %6186 = vmatpush1.msra.mxu0 %v5199
    %6187 = vmatprep.subr.mxu0 %v5204
    %6188 = vmatpush1.msra.mxu0 %v5203
    %6189 = vmatprep.subr.mxu0 %v5208
    %6190 = vmatpush1.msra.mxu0 %v5207
    %6191 = vmatprep.subr.mxu0 %v5212
    %6192 = vmatpush1.msra.mxu0 %v5211
    %6193 = vmatprep.subr.mxu0 %v5216
    %6194 = vmatpush1.msra.mxu0 %v5215
    %6195 = vmatprep.subr.mxu0 %v5220
    %6196 = vmatpush1.msra.mxu0 %v5219
    %6197 = vmatprep.subr.mxu0 %v5224
    %6198 = vmatpush1.msra.mxu0 %v5223
    %6199 = vmatprep.subr.mxu0 %v5228
    %6200 = vmatpush1.msra.mxu0 %v5227
    %6201 = vmatprep.subr.mxu0 %v5232
    %6202 = vmatpush1.msra.mxu0 %v5231
    %6203 = vmatprep.subr.mxu0 %v5236
    %6204 = vmatpush1.msra.mxu0 %v5235
    %6205 = vmatprep.subr.mxu0 %v5240
    %6206 = vmatpush1.msra.mxu0 %v5239
    %6207 = vmatprep.subr.mxu0 %v5244
    %6208 = vmatpush1.msra.mxu0 %v5243
    %6209 = vmatprep.subr.mxu0 %v5248
    %6210 = vmatpush1.msra.mxu0 %v5247
    %6211 = vmatprep.subr.mxu0 %v5252
    %6212 = vmatpush1.msra.mxu0 %v5251
    %6213 = vmatprep.subr.mxu0 %v5256
    %6214 = vmatpush1.msra.mxu0 %v5255
    %6215 = vmatprep.mubr.f32.mxu0 %v5957
    %6216 = vmatmul.mubr.f32.gmra.mrb[0].mxu0 %v5949
    %v6217 = vpop.f32.mrb[0].mxu0
    %v6218 = vadd.f32 %v6147, %v6217
    %v6219 = vpop.f32.mrb[0].mxu0
    %v6220 = vadd.f32 %v6149, %v6219
    %6221 = vdwg.mxu0
    %6222 = vmatprep.subr.mxu0 %v5260
    %6223 = vmatpush1.msra.mxu0 %v5259
    %6224 = vmatprep.subr.mxu0 %v5264
    %6225 = vmatpush1.msra.mxu0 %v5263
    %6226 = vmatprep.subr.mxu0 %v5268
    %6227 = vmatpush1.msra.mxu0 %v5267
    %6228 = vmatprep.subr.mxu0 %v5272
    %6229 = vmatpush1.msra.mxu0 %v5271
    %6230 = vmatprep.subr.mxu0 %v5276
    %6231 = vmatpush1.msra.mxu0 %v5275
    %6232 = vmatprep.subr.mxu0 %v5280
    %6233 = vmatpush1.msra.mxu0 %v5279
    %6234 = vmatprep.subr.mxu0 %v5284
    %6235 = vmatpush1.msra.mxu0 %v5283
    %6236 = vmatprep.subr.mxu0 %v5288
    %6237 = vmatpush1.msra.mxu0 %v5287
    %6238 = vmatprep.subr.mxu0 %v5292
    %6239 = vmatpush1.msra.mxu0 %v5291
    %6240 = vmatprep.subr.mxu0 %v5296
    %6241 = vmatpush1.msra.mxu0 %v5295
    %6242 = vmatprep.subr.mxu0 %v5300
    %6243 = vmatpush1.msra.mxu0 %v5299
    %6244 = vmatprep.subr.mxu0 %v5304
    %6245 = vmatpush1.msra.mxu0 %v5303
    %6246 = vmatprep.subr.mxu0 %v5308
    %6247 = vmatpush1.msra.mxu0 %v5307
    %6248 = vmatprep.subr.mxu0 %v5312
    %6249 = vmatpush1.msra.mxu0 %v5311
    %6250 = vmatprep.subr.mxu0 %v5316
    %6251 = vmatpush1.msra.mxu0 %v5315
    %6252 = vmatprep.subr.mxu0 %v5320
    %6253 = vmatpush1.msra.mxu0 %v5319
    %6254 = vmatprep.subr.mxu0 %v5324
    %6255 = vmatpush1.msra.mxu0 %v5323
    %6256 = vmatprep.subr.mxu0 %v5328
    %6257 = vmatpush1.msra.mxu0 %v5327
    %6258 = vmatprep.subr.mxu0 %v5332
    %6259 = vmatpush1.msra.mxu0 %v5331
    %6260 = vmatprep.subr.mxu0 %v5336
    %6261 = vmatpush1.msra.mxu0 %v5335
    %6262 = vmatprep.subr.mxu0 %v5340
    %6263 = vmatpush1.msra.mxu0 %v5339
    %6264 = vmatprep.subr.mxu0 %v5344
    %6265 = vmatpush1.msra.mxu0 %v5343
    %6266 = vmatprep.subr.mxu0 %v5348
    %6267 = vmatpush1.msra.mxu0 %v5347
    %6268 = vmatprep.subr.mxu0 %v5352
    %6269 = vmatpush1.msra.mxu0 %v5351
    %6270 = vmatprep.subr.mxu0 %v5356
    %6271 = vmatpush1.msra.mxu0 %v5355
    %6272 = vmatprep.subr.mxu0 %v5360
    %6273 = vmatpush1.msra.mxu0 %v5359
    %6274 = vmatprep.subr.mxu0 %v5364
    %6275 = vmatpush1.msra.mxu0 %v5363
    %6276 = vmatprep.subr.mxu0 %v5368
    %6277 = vmatpush1.msra.mxu0 %v5367
    %6278 = vmatprep.subr.mxu0 %v5372
    %6279 = vmatpush1.msra.mxu0 %v5371
    %6280 = vmatprep.subr.mxu0 %v5376
    %6281 = vmatpush1.msra.mxu0 %v5375
    %6282 = vmatprep.subr.mxu0 %v5380
    %6283 = vmatpush1.msra.mxu0 %v5379
    %6284 = vmatprep.subr.mxu0 %v5384
    %6285 = vmatpush1.msra.mxu0 %v5383
    %6286 = vmatprep.mubr.f32.mxu0 %v5958
    %6287 = vmatmul.mubr.f32.gmra.mrb[0].mxu0 %v5956
    %v6288 = vpop.f32.mrb[0].mxu0
    %v6289 = vadd.f32 %v6218, %v6288
    %v6290 = vpop.f32.mrb[0].mxu0
    %v6291 = vadd.f32 %v6220, %v6290
    %6292 = vdwg.mxu0
    %6293 = vmatprep.subr.mxu0 %v5388
    %6294 = vmatpush1.msra.mxu0 %v5387
    %6295 = vmatprep.subr.mxu0 %v5392
    %6296 = vmatpush1.msra.mxu0 %v5391
    %6297 = vmatprep.subr.mxu0 %v5396
    %6298 = vmatpush1.msra.mxu0 %v5395
    %6299 = vmatprep.subr.mxu0 %v5400
    %6300 = vmatpush1.msra.mxu0 %v5399
    %6301 = vmatprep.subr.mxu0 %v5404
    %6302 = vmatpush1.msra.mxu0 %v5403
    %6303 = vmatprep.subr.mxu0 %v5408
    %6304 = vmatpush1.msra.mxu0 %v5407
    %6305 = vmatprep.subr.mxu0 %v5412
    %6306 = vmatpush1.msra.mxu0 %v5411
    %6307 = vmatprep.subr.mxu0 %v5416
    %6308 = vmatpush1.msra.mxu0 %v5415
    %6309 = vmatprep.subr.mxu0 %v5420
    %6310 = vmatpush1.msra.mxu0 %v5419
    %6311 = vmatprep.subr.mxu0 %v5424
    %6312 = vmatpush1.msra.mxu0 %v5423
    %6313 = vmatprep.subr.mxu0 %v5428
    %6314 = vmatpush1.msra.mxu0 %v5427
    %6315 = vmatprep.subr.mxu0 %v5432
    %6316 = vmatpush1.msra.mxu0 %v5431
    %6317 = vmatprep.subr.mxu0 %v5436
    %6318 = vmatpush1.msra.mxu0 %v5435
    %6319 = vmatprep.subr.mxu0 %v5440
    %6320 = vmatpush1.msra.mxu0 %v5439
    %6321 = vmatprep.subr.mxu0 %v5444
    %6322 = vmatpush1.msra.mxu0 %v5443
    %6323 = vmatprep.subr.mxu0 %v5448
    %6324 = vmatpush1.msra.mxu0 %v5447
    %6325 = vmatprep.subr.mxu0 %v5452
    %6326 = vmatpush1.msra.mxu0 %v5451
    %6327 = vmatprep.subr.mxu0 %v5456
    %6328 = vmatpush1.msra.mxu0 %v5455
    %6329 = vmatprep.subr.mxu0 %v5460
    %6330 = vmatpush1.msra.mxu0 %v5459
    %6331 = vmatprep.subr.mxu0 %v5464
    %6332 = vmatpush1.msra.mxu0 %v5463
    %6333 = vmatprep.subr.mxu0 %v5468
    %6334 = vmatpush1.msra.mxu0 %v5467
    %6335 = vmatprep.subr.mxu0 %v5472
    %6336 = vmatpush1.msra.mxu0 %v5471
    %6337 = vmatprep.subr.mxu0 %v5476
    %6338 = vmatpush1.msra.mxu0 %v5475
    %6339 = vmatprep.subr.mxu0 %v5480
    %6340 = vmatpush1.msra.mxu0 %v5479
    %6341 = vmatprep.subr.mxu0 %v5484
    %6342 = vmatpush1.msra.mxu0 %v5483
    %6343 = vmatprep.subr.mxu0 %v5488
    %6344 = vmatpush1.msra.mxu0 %v5487
    %6345 = vmatprep.subr.mxu0 %v5492
    %6346 = vmatpush1.msra.mxu0 %v5491
    %6347 = vmatprep.subr.mxu0 %v5496
    %6348 = vmatpush1.msra.mxu0 %v5495
    %6349 = vmatprep.subr.mxu0 %v5500
    %6350 = vmatpush1.msra.mxu0 %v5499
    %6351 = vmatprep.subr.mxu0 %v5504
    %6352 = vmatpush1.msra.mxu0 %v5503
    %6353 = vmatprep.subr.mxu0 %v5508
    %6354 = vmatpush1.msra.mxu0 %v5507
    %6355 = vmatprep.subr.mxu0 %v5512
    %6356 = vmatpush1.msra.mxu0 %v5511
    %6357 = vmatprep.mubr.f32.mxu0 %v5974
    %6358 = vmatmul.mubr.f32.gmra.mrb[0].mxu0 %v5966
    %v6359 = vpop.f32.mrb[0].mxu0
    %v6360 = vadd.f32 %v6289, %v6359
    %v6361 = vpop.f32.mrb[0].mxu0
    %v6362 = vadd.f32 %v6291, %v6361
    %6363 = vdwg.mxu0
    %6364 = vmatprep.subr.mxu0 %v5516
    %6365 = vmatpush1.msra.mxu0 %v5515
    %6366 = vmatprep.subr.mxu0 %v5520
    %6367 = vmatpush1.msra.mxu0 %v5519
    %6368 = vmatprep.subr.mxu0 %v5524
    %6369 = vmatpush1.msra.mxu0 %v5523
    %6370 = vmatprep.subr.mxu0 %v5528
    %6371 = vmatpush1.msra.mxu0 %v5527
    %6372 = vmatprep.subr.mxu0 %v5532
    %6373 = vmatpush1.msra.mxu0 %v5531
    %6374 = vmatprep.subr.mxu0 %v5536
    %6375 = vmatpush1.msra.mxu0 %v5535
    %6376 = vmatprep.subr.mxu0 %v5540
    %6377 = vmatpush1.msra.mxu0 %v5539
    %6378 = vmatprep.subr.mxu0 %v5544
    %6379 = vmatpush1.msra.mxu0 %v5543
    %6380 = vmatprep.subr.mxu0 %v5548
    %6381 = vmatpush1.msra.mxu0 %v5547
    %6382 = vmatprep.subr.mxu0 %v5552
    %6383 = vmatpush1.msra.mxu0 %v5551
    %6384 = vmatprep.subr.mxu0 %v5556
    %6385 = vmatpush1.msra.mxu0 %v5555
    %6386 = vmatprep.subr.mxu0 %v5560
    %6387 = vmatpush1.msra.mxu0 %v5559
    %6388 = vmatprep.subr.mxu0 %v5564
    %6389 = vmatpush1.msra.mxu0 %v5563
    %6390 = vmatprep.subr.mxu0 %v5568
    %6391 = vmatpush1.msra.mxu0 %v5567
    %6392 = vmatprep.subr.mxu0 %v5572
    %6393 = vmatpush1.msra.mxu0 %v5571
    %6394 = vmatprep.subr.mxu0 %v5576
    %6395 = vmatpush1.msra.mxu0 %v5575
    %6396 = vmatprep.subr.mxu0 %v5580
    %6397 = vmatpush1.msra.mxu0 %v5579
    %6398 = vmatprep.subr.mxu0 %v5584
    %6399 = vmatpush1.msra.mxu0 %v5583
    %6400 = vmatprep.subr.mxu0 %v5588
    %6401 = vmatpush1.msra.mxu0 %v5587
    %6402 = vmatprep.subr.mxu0 %v5592
    %6403 = vmatpush1.msra.mxu0 %v5591
    %6404 = vmatprep.subr.mxu0 %v5596
    %6405 = vmatpush1.msra.mxu0 %v5595
    %6406 = vmatprep.subr.mxu0 %v5600
    %6407 = vmatpush1.msra.mxu0 %v5599
    %6408 = vmatprep.subr.mxu0 %v5604
    %6409 = vmatpush1.msra.mxu0 %v5603
    %6410 = vmatprep.subr.mxu0 %v5608
    %6411 = vmatpush1.msra.mxu0 %v5607
    %6412 = vmatprep.subr.mxu0 %v5612
    %6413 = vmatpush1.msra.mxu0 %v5611
    %6414 = vmatprep.subr.mxu0 %v5616
    %6415 = vmatpush1.msra.mxu0 %v5615
    %6416 = vmatprep.subr.mxu0 %v5620
    %6417 = vmatpush1.msra.mxu0 %v5619
    %6418 = vmatprep.subr.mxu0 %v5624
    %6419 = vmatpush1.msra.mxu0 %v5623
    %6420 = vmatprep.subr.mxu0 %v5628
    %6421 = vmatpush1.msra.mxu0 %v5627
    %6422 = vmatprep.subr.mxu0 %v5632
    %6423 = vmatpush1.msra.mxu0 %v5631
    %6424 = vmatprep.subr.mxu0 %v5636
    %6425 = vmatpush1.msra.mxu0 %v5635
    %6426 = vmatprep.subr.mxu0 %v5640
    %6427 = vmatpush1.msra.mxu0 %v5639
    %6428 = vmatprep.mubr.f32.mxu0 %v5975
    %6429 = vmatmul.mubr.f32.gmra.mrb[0].mxu0 %v5973
    %v6430 = vpop.f32.mrb[0].mxu0
    %v6431 = vadd.f32 %v6360, %v6430
    %v6432 = vpop.f32.mrb[0].mxu0
    %v6433 = vadd.f32 %v6362, %v6432
    %6434 = vdwg.mxu0
    %6435 = vmatprep.subr.mxu0 %v5644
    %6436 = vmatpush1.msra.mxu0 %v5643
    %6437 = vmatprep.subr.mxu0 %v5648
    %6438 = vmatpush1.msra.mxu0 %v5647
    %6439 = vmatprep.subr.mxu0 %v5652
    %6440 = vmatpush1.msra.mxu0 %v5651
    %6441 = vmatprep.subr.mxu0 %v5656
    %6442 = vmatpush1.msra.mxu0 %v5655
    %6443 = vmatprep.subr.mxu0 %v5660
    %6444 = vmatpush1.msra.mxu0 %v5659
    %6445 = vmatprep.subr.mxu0 %v5664
    %6446 = vmatpush1.msra.mxu0 %v5663
    %6447 = vmatprep.subr.mxu0 %v5668
    %6448 = vmatpush1.msra.mxu0 %v5667
    %6449 = vmatprep.subr.mxu0 %v5672
    %6450 = vmatpush1.msra.mxu0 %v5671
    %6451 = vmatprep.subr.mxu0 %v5676
    %6452 = vmatpush1.msra.mxu0 %v5675
    %6453 = vmatprep.subr.mxu0 %v5680
    %6454 = vmatpush1.msra.mxu0 %v5679
    %6455 = vmatprep.subr.mxu0 %v5684
    %6456 = vmatpush1.msra.mxu0 %v5683
    %6457 = vmatprep.subr.mxu0 %v5688
    %6458 = vmatpush1.msra.mxu0 %v5687
    %6459 = vmatprep.subr.mxu0 %v5692
    %6460 = vmatpush1.msra.mxu0 %v5691
    %6461 = vmatprep.subr.mxu0 %v5696
    %6462 = vmatpush1.msra.mxu0 %v5695
    %6463 = vmatprep.subr.mxu0 %v5700
    %6464 = vmatpush1.msra.mxu0 %v5699
    %6465 = vmatprep.subr.mxu0 %v5704
    %6466 = vmatpush1.msra.mxu0 %v5703
    %6467 = vmatprep.subr.mxu0 %v5708
    %6468 = vmatpush1.msra.mxu0 %v5707
    %6469 = vmatprep.subr.mxu0 %v5712
    %6470 = vmatpush1.msra.mxu0 %v5711
    %6471 = vmatprep.subr.mxu0 %v5716
    %6472 = vmatpush1.msra.mxu0 %v5715
    %6473 = vmatprep.subr.mxu0 %v5720
    %6474 = vmatpush1.msra.mxu0 %v5719
    %6475 = vmatprep.subr.mxu0 %v5724
    %6476 = vmatpush1.msra.mxu0 %v5723
    %6477 = vmatprep.subr.mxu0 %v5728
    %6478 = vmatpush1.msra.mxu0 %v5727
    %6479 = vmatprep.subr.mxu0 %v5732
    %6480 = vmatpush1.msra.mxu0 %v5731
    %6481 = vmatprep.subr.mxu0 %v5736
    %6482 = vmatpush1.msra.mxu0 %v5735
    %6483 = vmatprep.subr.mxu0 %v5740
    %6484 = vmatpush1.msra.mxu0 %v5739
    %6485 = vmatprep.subr.mxu0 %v5744
    %6486 = vmatpush1.msra.mxu0 %v5743
    %6487 = vmatprep.subr.mxu0 %v5748
    %6488 = vmatpush1.msra.mxu0 %v5747
    %6489 = vmatprep.subr.mxu0 %v5752
    %6490 = vmatpush1.msra.mxu0 %v5751
    %6491 = vmatprep.subr.mxu0 %v5756
    %6492 = vmatpush1.msra.mxu0 %v5755
    %6493 = vmatprep.subr.mxu0 %v5760
    %6494 = vmatpush1.msra.mxu0 %v5759
    %6495 = vmatprep.subr.mxu0 %v5764
    %6496 = vmatpush1.msra.mxu0 %v5763
    %6497 = vmatprep.subr.mxu0 %v5768
    %6498 = vmatpush1.msra.mxu0 %v5767
    %6499 = vmatprep.mubr.f32.mxu0 %v5991
    %6500 = vmatmul.mubr.f32.gmra.mrb[0].mxu0 %v5983
    %v6501 = vpop.f32.mrb[0].mxu0
    %v6502 = vadd.f32 %v6431, %v6501
    %v6503 = vpop.f32.mrb[0].mxu0
    %v6504 = vadd.f32 %v6433, %v6503
    %6505 = vdwg.mxu0
    %6506 = vmatprep.subr.mxu0 %v5772
    %6507 = vmatpush1.msra.mxu0 %v5771
    %6508 = vmatprep.subr.mxu0 %v5776
    %6509 = vmatpush1.msra.mxu0 %v5775
    %6510 = vmatprep.subr.mxu0 %v5780
    %6511 = vmatpush1.msra.mxu0 %v5779
    %6512 = vmatprep.subr.mxu0 %v5784
    %6513 = vmatpush1.msra.mxu0 %v5783
    %6514 = vmatprep.subr.mxu0 %v5788
    %6515 = vmatpush1.msra.mxu0 %v5787
    %6516 = vmatprep.subr.mxu0 %v5792
    %6517 = vmatpush1.msra.mxu0 %v5791
    %6518 = vmatprep.subr.mxu0 %v5796
    %6519 = vmatpush1.msra.mxu0 %v5795
    %6520 = vmatprep.subr.mxu0 %v5800
    %6521 = vmatpush1.msra.mxu0 %v5799
    %6522 = vmatprep.subr.mxu0 %v5804
    %6523 = vmatpush1.msra.mxu0 %v5803
    %6524 = vmatprep.subr.mxu0 %v5808
    %6525 = vmatpush1.msra.mxu0 %v5807
    %6526 = vmatprep.subr.mxu0 %v5812
    %6527 = vmatpush1.msra.mxu0 %v5811
    %6528 = vmatprep.subr.mxu0 %v5816
    %6529 = vmatpush1.msra.mxu0 %v5815
    %6530 = vmatprep.subr.mxu0 %v5820
    %6531 = vmatpush1.msra.mxu0 %v5819
    %6532 = vmatprep.subr.mxu0 %v5824
    %6533 = vmatpush1.msra.mxu0 %v5823
    %6534 = vmatprep.subr.mxu0 %v5828
    %6535 = vmatpush1.msra.mxu0 %v5827
    %6536 = vmatprep.subr.mxu0 %v5832
    %6537 = vmatpush1.msra.mxu0 %v5831
    %6538 = vmatprep.subr.mxu0 %v5836
    %6539 = vmatpush1.msra.mxu0 %v5835
    %6540 = vmatprep.subr.mxu0 %v5840
    %6541 = vmatpush1.msra.mxu0 %v5839
    %6542 = vmatprep.subr.mxu0 %v5844
    %6543 = vmatpush1.msra.mxu0 %v5843
    %6544 = vmatprep.subr.mxu0 %v5848
    %6545 = vmatpush1.msra.mxu0 %v5847
    %6546 = vmatprep.subr.mxu0 %v5852
    %6547 = vmatpush1.msra.mxu0 %v5851
    %6548 = vmatprep.subr.mxu0 %v5856
    %6549 = vmatpush1.msra.mxu0 %v5855
    %6550 = vmatprep.subr.mxu0 %v5860
    %6551 = vmatpush1.msra.mxu0 %v5859
    %6552 = vmatprep.subr.mxu0 %v5864
    %6553 = vmatpush1.msra.mxu0 %v5863
    %6554 = vmatprep.subr.mxu0 %v5868
    %6555 = vmatpush1.msra.mxu0 %v5867
    %6556 = vmatprep.subr.mxu0 %v5872
    %6557 = vmatpush1.msra.mxu0 %v5871
    %6558 = vmatprep.subr.mxu0 %v5876
    %6559 = vmatpush1.msra.mxu0 %v5875
    %6560 = vmatprep.subr.mxu0 %v5880
    %6561 = vmatpush1.msra.mxu0 %v5879
    %6562 = vmatprep.subr.mxu0 %v5884
    %6563 = vmatpush1.msra.mxu0 %v5883
    %6564 = vmatprep.subr.mxu0 %v5888
    %6565 = vmatpush1.msra.mxu0 %v5887
    %6566 = vmatprep.subr.mxu0 %v5892
    %6567 = vmatpush1.msra.mxu0 %v5891
    %6568 = vmatprep.subr.mxu0 %v5896
    %6569 = vmatpush1.msra.mxu0 %v5895
    %6570 = vmatprep.mubr.f32.mxu0 %v5992
    %6571 = vmatmul.mubr.f32.gmra.mrb[0].mxu0 %v5990
    %v6572 = vpop.f32.mrb[0].mxu0
    %v6573 = vadd.f32 %v6502, %v6572
    %v6574 = vpop.f32.mrb[0].mxu0
    %v6575 = vadd.f32 %v6504, %v6574
    %6576 = vdwg.mxu0
    %6577 = vmatprep.subr.mxu0 %v4878
    %6578 = vmatpush1.msra.mxu0 %v4877
    %6579 = vmatprep.subr.mxu0 %v4882
    %6580 = vmatpush1.msra.mxu0 %v4881
    %6581 = vmatprep.subr.mxu0 %v4886
    %6582 = vmatpush1.msra.mxu0 %v4885
    %6583 = vmatprep.subr.mxu0 %v4890
    %6584 = vmatpush1.msra.mxu0 %v4889
    %6585 = vmatprep.subr.mxu0 %v4894
    %6586 = vmatpush1.msra.mxu0 %v4893
    %6587 = vmatprep.subr.mxu0 %v4898
    %6588 = vmatpush1.msra.mxu0 %v4897
    %6589 = vmatprep.subr.mxu0 %v4902
    %6590 = vmatpush1.msra.mxu0 %v4901
    %6591 = vmatprep.subr.mxu0 %v4906
    %6592 = vmatpush1.msra.mxu0 %v4905
    %6593 = vmatprep.subr.mxu0 %v4910
    %6594 = vmatpush1.msra.mxu0 %v4909
    %6595 = vmatprep.subr.mxu0 %v4914
    %6596 = vmatpush1.msra.mxu0 %v4913
    %6597 = vmatprep.subr.mxu0 %v4918
    %6598 = vmatpush1.msra.mxu0 %v4917
    %6599 = vmatprep.subr.mxu0 %v4922
    %6600 = vmatpush1.msra.mxu0 %v4921
    %6601 = vmatprep.subr.mxu0 %v4926
    %6602 = vmatpush1.msra.mxu0 %v4925
    %6603 = vmatprep.subr.mxu0 %v4930
    %6604 = vmatpush1.msra.mxu0 %v4929
    %6605 = vmatprep.subr.mxu0 %v4934
    %6606 = vmatpush1.msra.mxu0 %v4933
    %6607 = vmatprep.subr.mxu0 %v4938
    %6608 = vmatpush1.msra.mxu0 %v4937
    %6609 = vmatprep.subr.mxu0 %v4942
    %6610 = vmatpush1.msra.mxu0 %v4941
    %6611 = vmatprep.subr.mxu0 %v4946
    %6612 = vmatpush1.msra.mxu0 %v4945
    %6613 = vmatprep.subr.mxu0 %v4950
    %6614 = vmatpush1.msra.mxu0 %v4949
    %6615 = vmatprep.subr.mxu0 %v4954
    %6616 = vmatpush1.msra.mxu0 %v4953
    %6617 = vmatprep.subr.mxu0 %v4958
    %6618 = vmatpush1.msra.mxu0 %v4957
    %6619 = vmatprep.subr.mxu0 %v4962
    %6620 = vmatpush1.msra.mxu0 %v4961
    %6621 = vmatprep.subr.mxu0 %v4966
    %6622 = vmatpush1.msra.mxu0 %v4965
    %6623 = vmatprep.subr.mxu0 %v4970
    %6624 = vmatpush1.msra.mxu0 %v4969
    %6625 = vmatprep.subr.mxu0 %v4974
    %6626 = vmatpush1.msra.mxu0 %v4973
    %6627 = vmatprep.subr.mxu0 %v4978
    %6628 = vmatpush1.msra.mxu0 %v4977
    %6629 = vmatprep.subr.mxu0 %v4982
    %6630 = vmatpush1.msra.mxu0 %v4981
    %6631 = vmatprep.subr.mxu0 %v4986
    %6632 = vmatpush1.msra.mxu0 %v4985
    %6633 = vmatprep.subr.mxu0 %v4990
    %6634 = vmatpush1.msra.mxu0 %v4989
    %6635 = vmatprep.subr.mxu0 %v4994
    %6636 = vmatpush1.msra.mxu0 %v4993
    %6637 = vmatprep.subr.mxu0 %v4998
    %6638 = vmatpush1.msra.mxu0 %v4997
    %6639 = vmatprep.subr.mxu0 %v5002
    %6640 = vmatpush1.msra.mxu0 %v5001
    %6641 = vmatprep.mubr.f32.mxu0 %v5940
    %6642 = vmatmul.mubr.f32.gmra.mrb[0].mxu0 %v5932
    %v6643 = vpop.f32.mrb[0].mxu0
    %v6644 = vadd.f32 %v5912, %v6643
    %v6645 = vpop.f32.mrb[0].mxu0
    %v6646 = vadd.f32 %v5916, %v6645
    %6647 = vdwg.mxu0
    %6648 = vmatprep.subr.mxu0 %v5006
    %6649 = vmatpush1.msra.mxu0 %v5005
    %6650 = vmatprep.subr.mxu0 %v5010
    %6651 = vmatpush1.msra.mxu0 %v5009
    %6652 = vmatprep.subr.mxu0 %v5014
    %6653 = vmatpush1.msra.mxu0 %v5013
    %6654 = vmatprep.subr.mxu0 %v5018
    %6655 = vmatpush1.msra.mxu0 %v5017
    %6656 = vmatprep.subr.mxu0 %v5022
    %6657 = vmatpush1.msra.mxu0 %v5021
    %6658 = vmatprep.subr.mxu0 %v5026
    %6659 = vmatpush1.msra.mxu0 %v5025
    %6660 = vmatprep.subr.mxu0 %v5030
    %6661 = vmatpush1.msra.mxu0 %v5029
    %6662 = vmatprep.subr.mxu0 %v5034
    %6663 = vmatpush1.msra.mxu0 %v5033
    %6664 = vmatprep.subr.mxu0 %v5038
    %6665 = vmatpush1.msra.mxu0 %v5037
    %6666 = vmatprep.subr.mxu0 %v5042
    %6667 = vmatpush1.msra.mxu0 %v5041
    %6668 = vmatprep.subr.mxu0 %v5046
    %6669 = vmatpush1.msra.mxu0 %v5045
    %6670 = vmatprep.subr.mxu0 %v5050
    %6671 = vmatpush1.msra.mxu0 %v5049
    %6672 = vmatprep.subr.mxu0 %v5054
    %6673 = vmatpush1.msra.mxu0 %v5053
    %6674 = vmatprep.subr.mxu0 %v5058
    %6675 = vmatpush1.msra.mxu0 %v5057
    %6676 = vmatprep.subr.mxu0 %v5062
    %6677 = vmatpush1.msra.mxu0 %v5061
    %6678 = vmatprep.subr.mxu0 %v5066
    %6679 = vmatpush1.msra.mxu0 %v5065
    %6680 = vmatprep.subr.mxu0 %v5070
    %6681 = vmatpush1.msra.mxu0 %v5069
    %6682 = vmatprep.subr.mxu0 %v5074
    %6683 = vmatpush1.msra.mxu0 %v5073
    %6684 = vmatprep.subr.mxu0 %v5078
    %6685 = vmatpush1.msra.mxu0 %v5077
    %6686 = vmatprep.subr.mxu0 %v5082
    %6687 = vmatpush1.msra.mxu0 %v5081
    %6688 = vmatprep.subr.mxu0 %v5086
    %6689 = vmatpush1.msra.mxu0 %v5085
    %6690 = vmatprep.subr.mxu0 %v5090
    %6691 = vmatpush1.msra.mxu0 %v5089
    %6692 = vmatprep.subr.mxu0 %v5094
    %6693 = vmatpush1.msra.mxu0 %v5093
    %6694 = vmatprep.subr.mxu0 %v5098
    %6695 = vmatpush1.msra.mxu0 %v5097
    %6696 = vmatprep.subr.mxu0 %v5102
    %6697 = vmatpush1.msra.mxu0 %v5101
    %6698 = vmatprep.subr.mxu0 %v5106
    %6699 = vmatpush1.msra.mxu0 %v5105
    %6700 = vmatprep.subr.mxu0 %v5110
    %6701 = vmatpush1.msra.mxu0 %v5109
    %6702 = vmatprep.subr.mxu0 %v5114
    %6703 = vmatpush1.msra.mxu0 %v5113
    %6704 = vmatprep.subr.mxu0 %v5118
    %6705 = vmatpush1.msra.mxu0 %v5117
    %6706 = vmatprep.subr.mxu0 %v5122
    %6707 = vmatpush1.msra.mxu0 %v5121
    %6708 = vmatprep.subr.mxu0 %v5126
    %6709 = vmatpush1.msra.mxu0 %v5125
    %6710 = vmatprep.subr.mxu0 %v5130
    %6711 = vmatpush1.msra.mxu0 %v5129
    %6712 = vmatprep.mubr.f32.mxu0 %v5941
    %6713 = vmatmul.mubr.f32.gmra.mrb[0].mxu0 %v5939
    %v6714 = vpop.f32.mrb[0].mxu0
    %v6715 = vadd.f32 %v6644, %v6714
    %v6716 = vpop.f32.mrb[0].mxu0
    %v6717 = vadd.f32 %v6646, %v6716
    %6718 = vdwg.mxu0
    %6719 = vmatprep.subr.mxu0 %v5134
    %6720 = vmatpush1.msra.mxu0 %v5133
    %6721 = vmatprep.subr.mxu0 %v5138
    %6722 = vmatpush1.msra.mxu0 %v5137
    %6723 = vmatprep.subr.mxu0 %v5142
    %6724 = vmatpush1.msra.mxu0 %v5141
    %6725 = vmatprep.subr.mxu0 %v5146
    %6726 = vmatpush1.msra.mxu0 %v5145
    %6727 = vmatprep.subr.mxu0 %v5150
    %6728 = vmatpush1.msra.mxu0 %v5149
    %6729 = vmatprep.subr.mxu0 %v5154
    %6730 = vmatpush1.msra.mxu0 %v5153
    %6731 = vmatprep.subr.mxu0 %v5158
    %6732 = vmatpush1.msra.mxu0 %v5157
    %6733 = vmatprep.subr.mxu0 %v5162
    %6734 = vmatpush1.msra.mxu0 %v5161
    %6735 = vmatprep.subr.mxu0 %v5166
    %6736 = vmatpush1.msra.mxu0 %v5165
    %6737 = vmatprep.subr.mxu0 %v5170
    %6738 = vmatpush1.msra.mxu0 %v5169
    %6739 = vmatprep.subr.mxu0 %v5174
    %6740 = vmatpush1.msra.mxu0 %v5173
    %6741 = vmatprep.subr.mxu0 %v5178
    %6742 = vmatpush1.msra.mxu0 %v5177
    %6743 = vmatprep.subr.mxu0 %v5182
    %6744 = vmatpush1.msra.mxu0 %v5181
    %6745 = vmatprep.subr.mxu0 %v5186
    %6746 = vmatpush1.msra.mxu0 %v5185
    %6747 = vmatprep.subr.mxu0 %v5190
    %6748 = vmatpush1.msra.mxu0 %v5189
    %6749 = vmatprep.subr.mxu0 %v5194
    %6750 = vmatpush1.msra.mxu0 %v5193
    %6751 = vmatprep.subr.mxu0 %v5198
    %6752 = vmatpush1.msra.mxu0 %v5197
    %6753 = vmatprep.subr.mxu0 %v5202
    %6754 = vmatpush1.msra.mxu0 %v5201
    %6755 = vmatprep.subr.mxu0 %v5206
    %6756 = vmatpush1.msra.mxu0 %v5205
    %6757 = vmatprep.subr.mxu0 %v5210
    %6758 = vmatpush1.msra.mxu0 %v5209
    %6759 = vmatprep.subr.mxu0 %v5214
    %6760 = vmatpush1.msra.mxu0 %v5213
    %6761 = vmatprep.subr.mxu0 %v5218
    %6762 = vmatpush1.msra.mxu0 %v5217
    %6763 = vmatprep.subr.mxu0 %v5222
    %6764 = vmatpush1.msra.mxu0 %v5221
    %6765 = vmatprep.subr.mxu0 %v5226
    %6766 = vmatpush1.msra.mxu0 %v5225
    %6767 = vmatprep.subr.mxu0 %v5230
    %6768 = vmatpush1.msra.mxu0 %v5229
    %6769 = vmatprep.subr.mxu0 %v5234
    %6770 = vmatpush1.msra.mxu0 %v5233
    %6771 = vmatprep.subr.mxu0 %v5238
    %6772 = vmatpush1.msra.mxu0 %v5237
    %6773 = vmatprep.subr.mxu0 %v5242
    %6774 = vmatpush1.msra.mxu0 %v5241
    %6775 = vmatprep.subr.mxu0 %v5246
    %6776 = vmatpush1.msra.mxu0 %v5245
    %6777 = vmatprep.subr.mxu0 %v5250
    %6778 = vmatpush1.msra.mxu0 %v5249
    %6779 = vmatprep.subr.mxu0 %v5254
    %6780 = vmatpush1.msra.mxu0 %v5253
    %6781 = vmatprep.subr.mxu0 %v5258
    %6782 = vmatpush1.msra.mxu0 %v5257
    %6783 = vmatprep.mubr.f32.mxu0 %v5957
    %6784 = vmatmul.mubr.f32.gmra.mrb[0].mxu0 %v5949
    %v6785 = vpop.f32.mrb[0].mxu0
    %v6786 = vadd.f32 %v6715, %v6785
    %v6787 = vpop.f32.mrb[0].mxu0
    %v6788 = vadd.f32 %v6717, %v6787
    %6789 = vdwg.mxu0
    %6790 = vmatprep.subr.mxu0 %v5262
    %6791 = vmatpush1.msra.mxu0 %v5261
    %6792 = vmatprep.subr.mxu0 %v5266
    %6793 = vmatpush1.msra.mxu0 %v5265
    %6794 = vmatprep.subr.mxu0 %v5270
    %6795 = vmatpush1.msra.mxu0 %v5269
    %6796 = vmatprep.subr.mxu0 %v5274
    %6797 = vmatpush1.msra.mxu0 %v5273
    %6798 = vmatprep.subr.mxu0 %v5278
    %6799 = vmatpush1.msra.mxu0 %v5277
    %6800 = vmatprep.subr.mxu0 %v5282
    %6801 = vmatpush1.msra.mxu0 %v5281
    %6802 = vmatprep.subr.mxu0 %v5286
    %6803 = vmatpush1.msra.mxu0 %v5285
    %6804 = vmatprep.subr.mxu0 %v5290
    %6805 = vmatpush1.msra.mxu0 %v5289
    %6806 = vmatprep.subr.mxu0 %v5294
    %6807 = vmatpush1.msra.mxu0 %v5293
    %6808 = vmatprep.subr.mxu0 %v5298
    %6809 = vmatpush1.msra.mxu0 %v5297
    %6810 = vmatprep.subr.mxu0 %v5302
    %6811 = vmatpush1.msra.mxu0 %v5301
    %6812 = vmatprep.subr.mxu0 %v5306
    %6813 = vmatpush1.msra.mxu0 %v5305
    %6814 = vmatprep.subr.mxu0 %v5310
    %6815 = vmatpush1.msra.mxu0 %v5309
    %6816 = vmatprep.subr.mxu0 %v5314
    %6817 = vmatpush1.msra.mxu0 %v5313
    %6818 = vmatprep.subr.mxu0 %v5318
    %6819 = vmatpush1.msra.mxu0 %v5317
    %6820 = vmatprep.subr.mxu0 %v5322
    %6821 = vmatpush1.msra.mxu0 %v5321
    %6822 = vmatprep.subr.mxu0 %v5326
    %6823 = vmatpush1.msra.mxu0 %v5325
    %6824 = vmatprep.subr.mxu0 %v5330
    %6825 = vmatpush1.msra.mxu0 %v5329
    %6826 = vmatprep.subr.mxu0 %v5334
    %6827 = vmatpush1.msra.mxu0 %v5333
    %6828 = vmatprep.subr.mxu0 %v5338
    %6829 = vmatpush1.msra.mxu0 %v5337
    %6830 = vmatprep.subr.mxu0 %v5342
    %6831 = vmatpush1.msra.mxu0 %v5341
    %6832 = vmatprep.subr.mxu0 %v5346
    %6833 = vmatpush1.msra.mxu0 %v5345
    %6834 = vmatprep.subr.mxu0 %v5350
    %6835 = vmatpush1.msra.mxu0 %v5349
    %6836 = vmatprep.subr.mxu0 %v5354
    %6837 = vmatpush1.msra.mxu0 %v5353
    %6838 = vmatprep.subr.mxu0 %v5358
    %6839 = vmatpush1.msra.mxu0 %v5357
    %6840 = vmatprep.subr.mxu0 %v5362
    %6841 = vmatpush1.msra.mxu0 %v5361
    %6842 = vmatprep.subr.mxu0 %v5366
    %6843 = vmatpush1.msra.mxu0 %v5365
    %6844 = vmatprep.subr.mxu0 %v5370
    %6845 = vmatpush1.msra.mxu0 %v5369
    %6846 = vmatprep.subr.mxu0 %v5374
    %6847 = vmatpush1.msra.mxu0 %v5373
    %6848 = vmatprep.subr.mxu0 %v5378
    %6849 = vmatpush1.msra.mxu0 %v5377
    %6850 = vmatprep.subr.mxu0 %v5382
    %6851 = vmatpush1.msra.mxu0 %v5381
    %6852 = vmatprep.subr.mxu0 %v5386
    %6853 = vmatpush1.msra.mxu0 %v5385
    %6854 = vmatprep.mubr.f32.mxu0 %v5958
    %6855 = vmatmul.mubr.f32.gmra.mrb[0].mxu0 %v5956
    %v6856 = vpop.f32.mrb[0].mxu0
    %v6857 = vadd.f32 %v6786, %v6856
    %v6858 = vpop.f32.mrb[0].mxu0
    %v6859 = vadd.f32 %v6788, %v6858
    %6860 = vdwg.mxu0
    %6861 = vmatprep.subr.mxu0 %v5390
    %6862 = vmatpush1.msra.mxu0 %v5389
    %6863 = vmatprep.subr.mxu0 %v5394
    %6864 = vmatpush1.msra.mxu0 %v5393
    %6865 = vmatprep.subr.mxu0 %v5398
    %6866 = vmatpush1.msra.mxu0 %v5397
    %6867 = vmatprep.subr.mxu0 %v5402
    %6868 = vmatpush1.msra.mxu0 %v5401
    %6869 = vmatprep.subr.mxu0 %v5406
    %6870 = vmatpush1.msra.mxu0 %v5405
    %6871 = vmatprep.subr.mxu0 %v5410
    %6872 = vmatpush1.msra.mxu0 %v5409
    %6873 = vmatprep.subr.mxu0 %v5414
    %6874 = vmatpush1.msra.mxu0 %v5413
    %6875 = vmatprep.subr.mxu0 %v5418
    %6876 = vmatpush1.msra.mxu0 %v5417
    %6877 = vmatprep.subr.mxu0 %v5422
    %6878 = vmatpush1.msra.mxu0 %v5421
    %6879 = vmatprep.subr.mxu0 %v5426
    %6880 = vmatpush1.msra.mxu0 %v5425
    %6881 = vmatprep.subr.mxu0 %v5430
    %6882 = vmatpush1.msra.mxu0 %v5429
    %6883 = vmatprep.subr.mxu0 %v5434
    %6884 = vmatpush1.msra.mxu0 %v5433
    %6885 = vmatprep.subr.mxu0 %v5438
    %6886 = vmatpush1.msra.mxu0 %v5437
    %6887 = vmatprep.subr.mxu0 %v5442
    %6888 = vmatpush1.msra.mxu0 %v5441
    %6889 = vmatprep.subr.mxu0 %v5446
    %6890 = vmatpush1.msra.mxu0 %v5445
    %6891 = vmatprep.subr.mxu0 %v5450
    %6892 = vmatpush1.msra.mxu0 %v5449
    %6893 = vmatprep.subr.mxu0 %v5454
    %6894 = vmatpush1.msra.mxu0 %v5453
    %6895 = vmatprep.subr.mxu0 %v5458
    %6896 = vmatpush1.msra.mxu0 %v5457
    %6897 = vmatprep.subr.mxu0 %v5462
    %6898 = vmatpush1.msra.mxu0 %v5461
    %6899 = vmatprep.subr.mxu0 %v5466
    %6900 = vmatpush1.msra.mxu0 %v5465
    %6901 = vmatprep.subr.mxu0 %v5470
    %6902 = vmatpush1.msra.mxu0 %v5469
    %6903 = vmatprep.subr.mxu0 %v5474
    %6904 = vmatpush1.msra.mxu0 %v5473
    %6905 = vmatprep.subr.mxu0 %v5478
    %6906 = vmatpush1.msra.mxu0 %v5477
    %6907 = vmatprep.subr.mxu0 %v5482
    %6908 = vmatpush1.msra.mxu0 %v5481
    %6909 = vmatprep.subr.mxu0 %v5486
    %6910 = vmatpush1.msra.mxu0 %v5485
    %6911 = vmatprep.subr.mxu0 %v5490
    %6912 = vmatpush1.msra.mxu0 %v5489
    %6913 = vmatprep.subr.mxu0 %v5494
    %6914 = vmatpush1.msra.mxu0 %v5493
    %6915 = vmatprep.subr.mxu0 %v5498
    %6916 = vmatpush1.msra.mxu0 %v5497
    %6917 = vmatprep.subr.mxu0 %v5502
    %6918 = vmatpush1.msra.mxu0 %v5501
    %6919 = vmatprep.subr.mxu0 %v5506
    %6920 = vmatpush1.msra.mxu0 %v5505
    %6921 = vmatprep.subr.mxu0 %v5510
    %6922 = vmatpush1.msra.mxu0 %v5509
    %6923 = vmatprep.subr.mxu0 %v5514
    %6924 = vmatpush1.msra.mxu0 %v5513
    %6925 = vmatprep.mubr.f32.mxu0 %v5974
    %6926 = vmatmul.mubr.f32.gmra.mrb[0].mxu0 %v5966
    %v6927 = vpop.f32.mrb[0].mxu0
    %v6928 = vadd.f32 %v6857, %v6927
    %v6929 = vpop.f32.mrb[0].mxu0
    %v6930 = vadd.f32 %v6859, %v6929
    %6931 = vdwg.mxu0
    %6932 = vmatprep.subr.mxu0 %v5518
    %6933 = vmatpush1.msra.mxu0 %v5517
    %6934 = vmatprep.subr.mxu0 %v5522
    %6935 = vmatpush1.msra.mxu0 %v5521
    %6936 = vmatprep.subr.mxu0 %v5526
    %6937 = vmatpush1.msra.mxu0 %v5525
    %6938 = vmatprep.subr.mxu0 %v5530
    %6939 = vmatpush1.msra.mxu0 %v5529
    %6940 = vmatprep.subr.mxu0 %v5534
    %6941 = vmatpush1.msra.mxu0 %v5533
    %6942 = vmatprep.subr.mxu0 %v5538
    %6943 = vmatpush1.msra.mxu0 %v5537
    %6944 = vmatprep.subr.mxu0 %v5542
    %6945 = vmatpush1.msra.mxu0 %v5541
    %6946 = vmatprep.subr.mxu0 %v5546
    %6947 = vmatpush1.msra.mxu0 %v5545
    %6948 = vmatprep.subr.mxu0 %v5550
    %6949 = vmatpush1.msra.mxu0 %v5549
    %6950 = vmatprep.subr.mxu0 %v5554
    %6951 = vmatpush1.msra.mxu0 %v5553
    %6952 = vmatprep.subr.mxu0 %v5558
    %6953 = vmatpush1.msra.mxu0 %v5557
    %6954 = vmatprep.subr.mxu0 %v5562
    %6955 = vmatpush1.msra.mxu0 %v5561
    %6956 = vmatprep.subr.mxu0 %v5566
    %6957 = vmatpush1.msra.mxu0 %v5565
    %6958 = vmatprep.subr.mxu0 %v5570
    %6959 = vmatpush1.msra.mxu0 %v5569
    %6960 = vmatprep.subr.mxu0 %v5574
    %6961 = vmatpush1.msra.mxu0 %v5573
    %6962 = vmatprep.subr.mxu0 %v5578
    %6963 = vmatpush1.msra.mxu0 %v5577
    %6964 = vmatprep.subr.mxu0 %v5582
    %6965 = vmatpush1.msra.mxu0 %v5581
    %6966 = vmatprep.subr.mxu0 %v5586
    %6967 = vmatpush1.msra.mxu0 %v5585
    %6968 = vmatprep.subr.mxu0 %v5590
    %6969 = vmatpush1.msra.mxu0 %v5589
    %6970 = vmatprep.subr.mxu0 %v5594
    %6971 = vmatpush1.msra.mxu0 %v5593
    %6972 = vmatprep.subr.mxu0 %v5598
    %6973 = vmatpush1.msra.mxu0 %v5597
    %6974 = vmatprep.subr.mxu0 %v5602
    %6975 = vmatpush1.msra.mxu0 %v5601
    %6976 = vmatprep.subr.mxu0 %v5606
    %6977 = vmatpush1.msra.mxu0 %v5605
    %6978 = vmatprep.subr.mxu0 %v5610
    %6979 = vmatpush1.msra.mxu0 %v5609
    %6980 = vmatprep.subr.mxu0 %v5614
    %6981 = vmatpush1.msra.mxu0 %v5613
    %6982 = vmatprep.subr.mxu0 %v5618
    %6983 = vmatpush1.msra.mxu0 %v5617
    %6984 = vmatprep.subr.mxu0 %v5622
    %6985 = vmatpush1.msra.mxu0 %v5621
    %6986 = vmatprep.subr.mxu0 %v5626
    %6987 = vmatpush1.msra.mxu0 %v5625
    %6988 = vmatprep.subr.mxu0 %v5630
    %6989 = vmatpush1.msra.mxu0 %v5629
    %6990 = vmatprep.subr.mxu0 %v5634
    %6991 = vmatpush1.msra.mxu0 %v5633
    %6992 = vmatprep.subr.mxu0 %v5638
    %6993 = vmatpush1.msra.mxu0 %v5637
    %6994 = vmatprep.subr.mxu0 %v5642
    %6995 = vmatpush1.msra.mxu0 %v5641
    %6996 = vmatprep.mubr.f32.mxu0 %v5975
    %6997 = vmatmul.mubr.f32.gmra.mrb[0].mxu0 %v5973
    %v6998 = vpop.f32.mrb[0].mxu0
    %v6999 = vadd.f32 %v6928, %v6998
    %v7000 = vpop.f32.mrb[0].mxu0
    %v7001 = vadd.f32 %v6930, %v7000
    %7002 = vdwg.mxu0
    %7003 = vmatprep.subr.mxu0 %v5646
    %7004 = vmatpush1.msra.mxu0 %v5645
    %7005 = vmatprep.subr.mxu0 %v5650
    %7006 = vmatpush1.msra.mxu0 %v5649
    %7007 = vmatprep.subr.mxu0 %v5654
    %7008 = vmatpush1.msra.mxu0 %v5653
    %7009 = vmatprep.subr.mxu0 %v5658
    %7010 = vmatpush1.msra.mxu0 %v5657
    %7011 = vmatprep.subr.mxu0 %v5662
    %7012 = vmatpush1.msra.mxu0 %v5661
    %7013 = vmatprep.subr.mxu0 %v5666
    %7014 = vmatpush1.msra.mxu0 %v5665
    %7015 = vmatprep.subr.mxu0 %v5670
    %7016 = vmatpush1.msra.mxu0 %v5669
    %7017 = vmatprep.subr.mxu0 %v5674
    %7018 = vmatpush1.msra.mxu0 %v5673
    %7019 = vmatprep.subr.mxu0 %v5678
    %7020 = vmatpush1.msra.mxu0 %v5677
    %7021 = vmatprep.subr.mxu0 %v5682
    %7022 = vmatpush1.msra.mxu0 %v5681
    %7023 = vmatprep.subr.mxu0 %v5686
    %7024 = vmatpush1.msra.mxu0 %v5685
    %7025 = vmatprep.subr.mxu0 %v5690
    %7026 = vmatpush1.msra.mxu0 %v5689
    %7027 = vmatprep.subr.mxu0 %v5694
    %7028 = vmatpush1.msra.mxu0 %v5693
    %7029 = vmatprep.subr.mxu0 %v5698
    %7030 = vmatpush1.msra.mxu0 %v5697
    %7031 = vmatprep.subr.mxu0 %v5702
    %7032 = vmatpush1.msra.mxu0 %v5701
    %7033 = vmatprep.subr.mxu0 %v5706
    %7034 = vmatpush1.msra.mxu0 %v5705
    %7035 = vmatprep.subr.mxu0 %v5710
    %7036 = vmatpush1.msra.mxu0 %v5709
    %7037 = vmatprep.subr.mxu0 %v5714
    %7038 = vmatpush1.msra.mxu0 %v5713
    %7039 = vmatprep.subr.mxu0 %v5718
    %7040 = vmatpush1.msra.mxu0 %v5717
    %7041 = vmatprep.subr.mxu0 %v5722
    %7042 = vmatpush1.msra.mxu0 %v5721
    %7043 = vmatprep.subr.mxu0 %v5726
    %7044 = vmatpush1.msra.mxu0 %v5725
    %7045 = vmatprep.subr.mxu0 %v5730
    %7046 = vmatpush1.msra.mxu0 %v5729
    %7047 = vmatprep.subr.mxu0 %v5734
    %7048 = vmatpush1.msra.mxu0 %v5733
    %7049 = vmatprep.subr.mxu0 %v5738
    %7050 = vmatpush1.msra.mxu0 %v5737
    %7051 = vmatprep.subr.mxu0 %v5742
    %7052 = vmatpush1.msra.mxu0 %v5741
    %7053 = vmatprep.subr.mxu0 %v5746
    %7054 = vmatpush1.msra.mxu0 %v5745
    %7055 = vmatprep.subr.mxu0 %v5750
    %7056 = vmatpush1.msra.mxu0 %v5749
    %7057 = vmatprep.subr.mxu0 %v5754
    %7058 = vmatpush1.msra.mxu0 %v5753
    %7059 = vmatprep.subr.mxu0 %v5758
    %7060 = vmatpush1.msra.mxu0 %v5757
    %7061 = vmatprep.subr.mxu0 %v5762
    %7062 = vmatpush1.msra.mxu0 %v5761
    %7063 = vmatprep.subr.mxu0 %v5766
    %7064 = vmatpush1.msra.mxu0 %v5765
    %7065 = vmatprep.subr.mxu0 %v5770
    %7066 = vmatpush1.msra.mxu0 %v5769
    %7067 = vmatprep.mubr.f32.mxu0 %v5991
    %7068 = vmatmul.mubr.f32.gmra.mrb[0].mxu0 %v5983
    %v7069 = vpop.f32.mrb[0].mxu0
    %v7070 = vadd.f32 %v6999, %v7069
    %v7071 = vpop.f32.mrb[0].mxu0
    %v7072 = vadd.f32 %v7001, %v7071
    %7073 = vdwg.mxu0
    %7074 = vmatprep.subr.mxu0 %v5774
    %7075 = vmatpush1.msra.mxu0 %v5773
    %7076 = vmatprep.subr.mxu0 %v5778
    %7077 = vmatpush1.msra.mxu0 %v5777
    %7078 = vmatprep.subr.mxu0 %v5782
    %7079 = vmatpush1.msra.mxu0 %v5781
    %7080 = vmatprep.subr.mxu0 %v5786
    %7081 = vmatpush1.msra.mxu0 %v5785
    %7082 = vmatprep.subr.mxu0 %v5790
    %7083 = vmatpush1.msra.mxu0 %v5789
    %7084 = vmatprep.subr.mxu0 %v5794
    %7085 = vmatpush1.msra.mxu0 %v5793
    %7086 = vmatprep.subr.mxu0 %v5798
    %7087 = vmatpush1.msra.mxu0 %v5797
    %7088 = vmatprep.subr.mxu0 %v5802
    %7089 = vmatpush1.msra.mxu0 %v5801
    %7090 = vmatprep.subr.mxu0 %v5806
    %7091 = vmatpush1.msra.mxu0 %v5805
    %7092 = vmatprep.subr.mxu0 %v5810
    %7093 = vmatpush1.msra.mxu0 %v5809
    %7094 = vmatprep.subr.mxu0 %v5814
    %7095 = vmatpush1.msra.mxu0 %v5813
    %7096 = vmatprep.subr.mxu0 %v5818
    %7097 = vmatpush1.msra.mxu0 %v5817
    %7098 = vmatprep.subr.mxu0 %v5822
    %7099 = vmatpush1.msra.mxu0 %v5821
    %7100 = vmatprep.subr.mxu0 %v5826
    %7101 = vmatpush1.msra.mxu0 %v5825
    %7102 = vmatprep.subr.mxu0 %v5830
    %7103 = vmatpush1.msra.mxu0 %v5829
    %7104 = vmatprep.subr.mxu0 %v5834
    %7105 = vmatpush1.msra.mxu0 %v5833
    %7106 = vmatprep.subr.mxu0 %v5838
    %7107 = vmatpush1.msra.mxu0 %v5837
    %7108 = vmatprep.subr.mxu0 %v5842
    %7109 = vmatpush1.msra.mxu0 %v5841
    %7110 = vmatprep.subr.mxu0 %v5846
    %7111 = vmatpush1.msra.mxu0 %v5845
    %7112 = vmatprep.subr.mxu0 %v5850
    %7113 = vmatpush1.msra.mxu0 %v5849
    %7114 = vmatprep.subr.mxu0 %v5854
    %7115 = vmatpush1.msra.mxu0 %v5853
    %7116 = vmatprep.subr.mxu0 %v5858
    %7117 = vmatpush1.msra.mxu0 %v5857
    %7118 = vmatprep.subr.mxu0 %v5862
    %7119 = vmatpush1.msra.mxu0 %v5861
    %7120 = vmatprep.subr.mxu0 %v5866
    %7121 = vmatpush1.msra.mxu0 %v5865
    %7122 = vmatprep.subr.mxu0 %v5870
    %7123 = vmatpush1.msra.mxu0 %v5869
    %7124 = vmatprep.subr.mxu0 %v5874
    %7125 = vmatpush1.msra.mxu0 %v5873
    %7126 = vmatprep.subr.mxu0 %v5878
    %7127 = vmatpush1.msra.mxu0 %v5877
    %7128 = vmatprep.subr.mxu0 %v5882
    %7129 = vmatpush1.msra.mxu0 %v5881
    %7130 = vmatprep.subr.mxu0 %v5886
    %7131 = vmatpush1.msra.mxu0 %v5885
    %7132 = vmatprep.subr.mxu0 %v5890
    %7133 = vmatpush1.msra.mxu0 %v5889
    %7134 = vmatprep.subr.mxu0 %v5894
    %7135 = vmatpush1.msra.mxu0 %v5893
    %7136 = vmatprep.subr.mxu0 %v5898
    %7137 = vmatpush1.msra.mxu0 %v5897
    %7138 = vmatprep.mubr.f32.mxu0 %v5992
    %7139 = vmatmul.mubr.f32.gmra.mrb[0].mxu0 %v5990
    %v7140 = vpop.f32.mrb[0].mxu0
    %v7141 = vadd.f32 %v7070, %v7140
    %v7142 = vpop.f32.mrb[0].mxu0
    %v7143 = vadd.f32 %v7072, %v7142
    %7144 = vdwg.mxu0
    %v7145 = vmax.f32 %v6573, 0.0
    %v7146 = vmax.f32 %v6575, 0.0
    %v7147 = vmax.f32 %v7141, 0.0
    %v7148 = vmax.f32 %v7143, 0.0
    %v7149 = vld [vmem:[#allocation20] sm:$0xff]
    %v7150 = vld [vmem:[#allocation20 + $0x8] sm:$0xff]
    %v7151 = vld [vmem:[#allocation20 + $0x10] sm:$0xff]
    %v7152 = vld [vmem:[#allocation20 + $0x18] sm:$0xff]
    %v7153 = vld [vmem:[#allocation20 + $0x20] sm:$0xff]
    %v7154 = vld [vmem:[#allocation20 + $0x28] sm:$0xff]
    %v7155 = vld [vmem:[#allocation20 + $0x30] sm:$0xff]
    %v7156 = vld [vmem:[#allocation20 + $0x38] sm:$0xff]
    %v7157 = vld [vmem:[#allocation20 + $0x40] sm:$0xff]
    %v7158 = vld [vmem:[#allocation20 + $0x48] sm:$0xff]
    %v7159 = vld [vmem:[#allocation20 + $0x50] sm:$0xff]
    %v7160 = vld [vmem:[#allocation20 + $0x58] sm:$0xff]
    %v7161 = vld [vmem:[#allocation20 + $0x60] sm:$0xff]
    %v7162 = vld [vmem:[#allocation20 + $0x68] sm:$0xff]
    %v7163 = vld [vmem:[#allocation20 + $0x70] sm:$0xff]
    %v7164 = vld [vmem:[#allocation20 + $0x78] sm:$0xff]
    %v7165 = vld [vmem:[#allocation20 + $0x80] sm:$0xff]
    %v7166 = vld [vmem:[#allocation20 + $0x88] sm:$0xff]
    %v7167 = vld [vmem:[#allocation20 + $0x90] sm:$0xff]
    %v7168 = vld [vmem:[#allocation20 + $0x98] sm:$0xff]
    %v7169 = vld [vmem:[#allocation20 + $0xa0] sm:$0xff]
    %v7170 = vld [vmem:[#allocation20 + $0xa8] sm:$0xff]
    %v7171 = vld [vmem:[#allocation20 + $0xb0] sm:$0xff]
    %v7172 = vld [vmem:[#allocation20 + $0xb8] sm:$0xff]
    %v7173 = vld [vmem:[#allocation20 + $0xc0] sm:$0xff]
    %v7174 = vld [vmem:[#allocation20 + $0xc8] sm:$0xff]
    %v7175 = vld [vmem:[#allocation20 + $0xd0] sm:$0xff]
    %v7176 = vld [vmem:[#allocation20 + $0xd8] sm:$0xff]
    %v7177 = vld [vmem:[#allocation20 + $0xe0] sm:$0xff]
    %v7178 = vld [vmem:[#allocation20 + $0xe8] sm:$0xff]
    %v7179 = vld [vmem:[#allocation20 + $0xf0] sm:$0xff]
    %v7180 = vld [vmem:[#allocation20 + $0xf8] sm:$0xff]
    %v7181 = vld [vmem:[#allocation20 + $0x100] sm:$0xff]
    %v7182 = vld [vmem:[#allocation20 + $0x108] sm:$0xff]
    %v7183 = vld [vmem:[#allocation20 + $0x110] sm:$0xff]
    %v7184 = vld [vmem:[#allocation20 + $0x118] sm:$0xff]
    %v7185 = vld [vmem:[#allocation20 + $0x120] sm:$0xff]
    %v7186 = vld [vmem:[#allocation20 + $0x128] sm:$0xff]
    %v7187 = vld [vmem:[#allocation20 + $0x130] sm:$0xff]
    %v7188 = vld [vmem:[#allocation20 + $0x138] sm:$0xff]
    %v7189 = vld [vmem:[#allocation20 + $0x140] sm:$0xff]
    %v7190 = vld [vmem:[#allocation20 + $0x148] sm:$0xff]
    %v7191 = vld [vmem:[#allocation20 + $0x150] sm:$0xff]
    %v7192 = vld [vmem:[#allocation20 + $0x158] sm:$0xff]
    %v7193 = vld [vmem:[#allocation20 + $0x160] sm:$0xff]
    %v7194 = vld [vmem:[#allocation20 + $0x168] sm:$0xff]
    %v7195 = vld [vmem:[#allocation20 + $0x170] sm:$0xff]
    %v7196 = vld [vmem:[#allocation20 + $0x178] sm:$0xff]
    %v7197 = vld [vmem:[#allocation20 + $0x180] sm:$0xff]
    %v7198 = vld [vmem:[#allocation20 + $0x188] sm:$0xff]
    %v7199 = vld [vmem:[#allocation20 + $0x190] sm:$0xff]
    %v7200 = vld [vmem:[#allocation20 + $0x198] sm:$0xff]
    %v7201 = vld [vmem:[#allocation20 + $0x1a0] sm:$0xff]
    %v7202 = vld [vmem:[#allocation20 + $0x1a8] sm:$0xff]
    %v7203 = vld [vmem:[#allocation20 + $0x1b0] sm:$0xff]
    %v7204 = vld [vmem:[#allocation20 + $0x1b8] sm:$0xff]
    %v7205 = vld [vmem:[#allocation20 + $0x1c0] sm:$0xff]
    %v7206 = vld [vmem:[#allocation20 + $0x1c8] sm:$0xff]
    %v7207 = vld [vmem:[#allocation20 + $0x1d0] sm:$0xff]
    %v7208 = vld [vmem:[#allocation20 + $0x1d8] sm:$0xff]
    %v7209 = vld [vmem:[#allocation20 + $0x1e0] sm:$0xff]
    %v7210 = vld [vmem:[#allocation20 + $0x1e8] sm:$0xff]
    %v7211 = vld [vmem:[#allocation20 + $0x1f0] sm:$0xff]
    %v7212 = vld [vmem:[#allocation20 + $0x1f8] sm:$0xff]
    %v7213 = vld [vmem:[#allocation20 + $0x200] sm:$0xff]
    %v7214 = vld [vmem:[#allocation20 + $0x208] sm:$0xff]
    %v7215 = vld [vmem:[#allocation20 + $0x210] sm:$0xff]
    %v7216 = vld [vmem:[#allocation20 + $0x218] sm:$0xff]
    %v7217 = vld [vmem:[#allocation20 + $0x220] sm:$0xff]
    %v7218 = vld [vmem:[#allocation20 + $0x228] sm:$0xff]
    %v7219 = vld [vmem:[#allocation20 + $0x230] sm:$0xff]
    %v7220 = vld [vmem:[#allocation20 + $0x238] sm:$0xff]
    %v7221 = vld [vmem:[#allocation20 + $0x240] sm:$0xff]
    %v7222 = vld [vmem:[#allocation20 + $0x248] sm:$0xff]
    %v7223 = vld [vmem:[#allocation20 + $0x250] sm:$0xff]
    %v7224 = vld [vmem:[#allocation20 + $0x258] sm:$0xff]
    %v7225 = vld [vmem:[#allocation20 + $0x260] sm:$0xff]
    %v7226 = vld [vmem:[#allocation20 + $0x268] sm:$0xff]
    %v7227 = vld [vmem:[#allocation20 + $0x270] sm:$0xff]
    %v7228 = vld [vmem:[#allocation20 + $0x278] sm:$0xff]
    %v7229 = vld [vmem:[#allocation20 + $0x280] sm:$0xff]
    %v7230 = vld [vmem:[#allocation20 + $0x288] sm:$0xff]
    %v7231 = vld [vmem:[#allocation20 + $0x290] sm:$0xff]
    %v7232 = vld [vmem:[#allocation20 + $0x298] sm:$0xff]
    %v7233 = vld [vmem:[#allocation20 + $0x2a0] sm:$0xff]
    %v7234 = vld [vmem:[#allocation20 + $0x2a8] sm:$0xff]
    %v7235 = vld [vmem:[#allocation20 + $0x2b0] sm:$0xff]
    %v7236 = vld [vmem:[#allocation20 + $0x2b8] sm:$0xff]
    %v7237 = vld [vmem:[#allocation20 + $0x2c0] sm:$0xff]
    %v7238 = vld [vmem:[#allocation20 + $0x2c8] sm:$0xff]
    %v7239 = vld [vmem:[#allocation20 + $0x2d0] sm:$0xff]
    %v7240 = vld [vmem:[#allocation20 + $0x2d8] sm:$0xff]
    %v7241 = vld [vmem:[#allocation20 + $0x2e0] sm:$0xff]
    %v7242 = vld [vmem:[#allocation20 + $0x2e8] sm:$0xff]
    %v7243 = vld [vmem:[#allocation20 + $0x2f0] sm:$0xff]
    %v7244 = vld [vmem:[#allocation20 + $0x2f8] sm:$0xff]
    %v7245 = vld [vmem:[#allocation20 + $0x300] sm:$0xff]
    %v7246 = vld [vmem:[#allocation20 + $0x308] sm:$0xff]
    %v7247 = vld [vmem:[#allocation20 + $0x310] sm:$0xff]
    %v7248 = vld [vmem:[#allocation20 + $0x318] sm:$0xff]
    %v7249 = vld [vmem:[#allocation20 + $0x320] sm:$0xff]
    %v7250 = vld [vmem:[#allocation20 + $0x328] sm:$0xff]
    %v7251 = vld [vmem:[#allocation20 + $0x330] sm:$0xff]
    %v7252 = vld [vmem:[#allocation20 + $0x338] sm:$0xff]
    %v7253 = vld [vmem:[#allocation20 + $0x340] sm:$0xff]
    %v7254 = vld [vmem:[#allocation20 + $0x348] sm:$0xff]
    %v7255 = vld [vmem:[#allocation20 + $0x350] sm:$0xff]
    %v7256 = vld [vmem:[#allocation20 + $0x358] sm:$0xff]
    %v7257 = vld [vmem:[#allocation20 + $0x360] sm:$0xff]
    %v7258 = vld [vmem:[#allocation20 + $0x368] sm:$0xff]
    %v7259 = vld [vmem:[#allocation20 + $0x370] sm:$0xff]
    %v7260 = vld [vmem:[#allocation20 + $0x378] sm:$0xff]
    %v7261 = vld [vmem:[#allocation20 + $0x380] sm:$0xff]
    %v7262 = vld [vmem:[#allocation20 + $0x388] sm:$0xff]
    %v7263 = vld [vmem:[#allocation20 + $0x390] sm:$0xff]
    %v7264 = vld [vmem:[#allocation20 + $0x398] sm:$0xff]
    %v7265 = vld [vmem:[#allocation20 + $0x3a0] sm:$0xff]
    %v7266 = vld [vmem:[#allocation20 + $0x3a8] sm:$0xff]
    %v7267 = vld [vmem:[#allocation20 + $0x3b0] sm:$0xff]
    %v7268 = vld [vmem:[#allocation20 + $0x3b8] sm:$0xff]
    %v7269 = vld [vmem:[#allocation20 + $0x3c0] sm:$0xff]
    %v7270 = vld [vmem:[#allocation20 + $0x3c8] sm:$0xff]
    %v7271 = vld [vmem:[#allocation20 + $0x3d0] sm:$0xff]
    %v7272 = vld [vmem:[#allocation20 + $0x3d8] sm:$0xff]
    %v7273 = vld [vmem:[#allocation20 + $0x3e0] sm:$0xff]
    %v7274 = vld [vmem:[#allocation20 + $0x3e8] sm:$0xff]
    %v7275 = vld [vmem:[#allocation20 + $0x3f0] sm:$0xff]
    %v7276 = vld [vmem:[#allocation20 + $0x3f8] sm:$0xff]
    %v7277 = vld [vmem:[#allocation22] sm:$0xff]
    %v7278 = vld [vmem:[#allocation22 + $0x8] sm:$0xff]
    %v7279 = vld [vmem:[#allocation22 + $0x10] sm:$0xff]
    %v7280 = vld [vmem:[#allocation22 + $0x18] sm:$0xff]
    %v7281 = vld [vmem:[#allocation22 + $0x20] sm:$0xff]
    %v7282 = vld [vmem:[#allocation22 + $0x28] sm:$0xff]
    %v7283 = vld [vmem:[#allocation22 + $0x30] sm:$0xff]
    %v7284 = vld [vmem:[#allocation22 + $0x38] sm:$0xff]
    %v7285 = vld [vmem:[#allocation22 + $0x40] sm:$0xff]
    %v7286 = vld [vmem:[#allocation22 + $0x48] sm:$0xff]
    %v7287 = vld [vmem:[#allocation22 + $0x50] sm:$0xff]
    %v7288 = vld [vmem:[#allocation22 + $0x58] sm:$0xff]
    %v7289 = vld [vmem:[#allocation22 + $0x60] sm:$0xff]
    %v7290 = vld [vmem:[#allocation22 + $0x68] sm:$0xff]
    %v7291 = vld [vmem:[#allocation22 + $0x70] sm:$0xff]
    %v7292 = vld [vmem:[#allocation22 + $0x78] sm:$0xff]
    %v7293 = vld [vmem:[#allocation22 + $0x80] sm:$0xff]
    %v7294 = vld [vmem:[#allocation22 + $0x88] sm:$0xff]
    %v7295 = vld [vmem:[#allocation22 + $0x90] sm:$0xff]
    %v7296 = vld [vmem:[#allocation22 + $0x98] sm:$0xff]
    %v7297 = vld [vmem:[#allocation22 + $0xa0] sm:$0xff]
    %v7298 = vld [vmem:[#allocation22 + $0xa8] sm:$0xff]
    %v7299 = vld [vmem:[#allocation22 + $0xb0] sm:$0xff]
    %v7300 = vld [vmem:[#allocation22 + $0xb8] sm:$0xff]
    %v7301 = vld [vmem:[#allocation22 + $0xc0] sm:$0xff]
    %v7302 = vld [vmem:[#allocation22 + $0xc8] sm:$0xff]
    %v7303 = vld [vmem:[#allocation22 + $0xd0] sm:$0xff]
    %v7304 = vld [vmem:[#allocation22 + $0xd8] sm:$0xff]
    %v7305 = vld [vmem:[#allocation22 + $0xe0] sm:$0xff]
    %v7306 = vld [vmem:[#allocation22 + $0xe8] sm:$0xff]
    %v7307 = vld [vmem:[#allocation22 + $0xf0] sm:$0xff]
    %v7308 = vld [vmem:[#allocation22 + $0xf8] sm:$0xff]
    %v7309 = vld [vmem:[#allocation22 + $0x100] sm:$0xff]
    %v7310 = vld [vmem:[#allocation22 + $0x108] sm:$0xff]
    %v7311 = vld [vmem:[#allocation22 + $0x110] sm:$0xff]
    %v7312 = vld [vmem:[#allocation22 + $0x118] sm:$0xff]
    %v7313 = vld [vmem:[#allocation22 + $0x120] sm:$0xff]
    %v7314 = vld [vmem:[#allocation22 + $0x128] sm:$0xff]
    %v7315 = vld [vmem:[#allocation22 + $0x130] sm:$0xff]
    %v7316 = vld [vmem:[#allocation22 + $0x138] sm:$0xff]
    %v7317 = vld [vmem:[#allocation22 + $0x140] sm:$0xff]
    %v7318 = vld [vmem:[#allocation22 + $0x148] sm:$0xff]
    %v7319 = vld [vmem:[#allocation22 + $0x150] sm:$0xff]
    %v7320 = vld [vmem:[#allocation22 + $0x158] sm:$0xff]
    %v7321 = vld [vmem:[#allocation22 + $0x160] sm:$0xff]
    %v7322 = vld [vmem:[#allocation22 + $0x168] sm:$0xff]
    %v7323 = vld [vmem:[#allocation22 + $0x170] sm:$0xff]
    %v7324 = vld [vmem:[#allocation22 + $0x178] sm:$0xff]
    %v7325 = vld [vmem:[#allocation22 + $0x180] sm:$0xff]
    %v7326 = vld [vmem:[#allocation22 + $0x188] sm:$0xff]
    %v7327 = vld [vmem:[#allocation22 + $0x190] sm:$0xff]
    %v7328 = vld [vmem:[#allocation22 + $0x198] sm:$0xff]
    %v7329 = vld [vmem:[#allocation22 + $0x1a0] sm:$0xff]
    %v7330 = vld [vmem:[#allocation22 + $0x1a8] sm:$0xff]
    %v7331 = vld [vmem:[#allocation22 + $0x1b0] sm:$0xff]
    %v7332 = vld [vmem:[#allocation22 + $0x1b8] sm:$0xff]
    %v7333 = vld [vmem:[#allocation22 + $0x1c0] sm:$0xff]
    %v7334 = vld [vmem:[#allocation22 + $0x1c8] sm:$0xff]
    %v7335 = vld [vmem:[#allocation22 + $0x1d0] sm:$0xff]
    %v7336 = vld [vmem:[#allocation22 + $0x1d8] sm:$0xff]
    %v7337 = vld [vmem:[#allocation22 + $0x1e0] sm:$0xff]
    %v7338 = vld [vmem:[#allocation22 + $0x1e8] sm:$0xff]
    %v7339 = vld [vmem:[#allocation22 + $0x1f0] sm:$0xff]
    %v7340 = vld [vmem:[#allocation22 + $0x1f8] sm:$0xff]
    %v7341 = vld [vmem:[#allocation22 + $0x200] sm:$0xff]
    %v7342 = vld [vmem:[#allocation22 + $0x208] sm:$0xff]
    %v7343 = vld [vmem:[#allocation22 + $0x210] sm:$0xff]
    %v7344 = vld [vmem:[#allocation22 + $0x218] sm:$0xff]
    %v7345 = vld [vmem:[#allocation22 + $0x220] sm:$0xff]
    %v7346 = vld [vmem:[#allocation22 + $0x228] sm:$0xff]
    %v7347 = vld [vmem:[#allocation22 + $0x230] sm:$0xff]
    %v7348 = vld [vmem:[#allocation22 + $0x238] sm:$0xff]
    %v7349 = vld [vmem:[#allocation22 + $0x240] sm:$0xff]
    %v7350 = vld [vmem:[#allocation22 + $0x248] sm:$0xff]
    %v7351 = vld [vmem:[#allocation22 + $0x250] sm:$0xff]
    %v7352 = vld [vmem:[#allocation22 + $0x258] sm:$0xff]
    %v7353 = vld [vmem:[#allocation22 + $0x260] sm:$0xff]
    %v7354 = vld [vmem:[#allocation22 + $0x268] sm:$0xff]
    %v7355 = vld [vmem:[#allocation22 + $0x270] sm:$0xff]
    %v7356 = vld [vmem:[#allocation22 + $0x278] sm:$0xff]
    %v7357 = vld [vmem:[#allocation22 + $0x280] sm:$0xff]
    %v7358 = vld [vmem:[#allocation22 + $0x288] sm:$0xff]
    %v7359 = vld [vmem:[#allocation22 + $0x290] sm:$0xff]
    %v7360 = vld [vmem:[#allocation22 + $0x298] sm:$0xff]
    %v7361 = vld [vmem:[#allocation22 + $0x2a0] sm:$0xff]
    %v7362 = vld [vmem:[#allocation22 + $0x2a8] sm:$0xff]
    %v7363 = vld [vmem:[#allocation22 + $0x2b0] sm:$0xff]
    %v7364 = vld [vmem:[#allocation22 + $0x2b8] sm:$0xff]
    %v7365 = vld [vmem:[#allocation22 + $0x2c0] sm:$0xff]
    %v7366 = vld [vmem:[#allocation22 + $0x2c8] sm:$0xff]
    %v7367 = vld [vmem:[#allocation22 + $0x2d0] sm:$0xff]
    %v7368 = vld [vmem:[#allocation22 + $0x2d8] sm:$0xff]
    %v7369 = vld [vmem:[#allocation22 + $0x2e0] sm:$0xff]
    %v7370 = vld [vmem:[#allocation22 + $0x2e8] sm:$0xff]
    %v7371 = vld [vmem:[#allocation22 + $0x2f0] sm:$0xff]
    %v7372 = vld [vmem:[#allocation22 + $0x2f8] sm:$0xff]
    %v7373 = vld [vmem:[#allocation22 + $0x300] sm:$0xff]
    %v7374 = vld [vmem:[#allocation22 + $0x308] sm:$0xff]
    %v7375 = vld [vmem:[#allocation22 + $0x310] sm:$0xff]
    %v7376 = vld [vmem:[#allocation22 + $0x318] sm:$0xff]
    %v7377 = vld [vmem:[#allocation22 + $0x320] sm:$0xff]
    %v7378 = vld [vmem:[#allocation22 + $0x328] sm:$0xff]
    %v7379 = vld [vmem:[#allocation22 + $0x330] sm:$0xff]
    %v7380 = vld [vmem:[#allocation22 + $0x338] sm:$0xff]
    %v7381 = vld [vmem:[#allocation22 + $0x340] sm:$0xff]
    %v7382 = vld [vmem:[#allocation22 + $0x348] sm:$0xff]
    %v7383 = vld [vmem:[#allocation22 + $0x350] sm:$0xff]
    %v7384 = vld [vmem:[#allocation22 + $0x358] sm:$0xff]
    %v7385 = vld [vmem:[#allocation22 + $0x360] sm:$0xff]
    %v7386 = vld [vmem:[#allocation22 + $0x368] sm:$0xff]
    %v7387 = vld [vmem:[#allocation22 + $0x370] sm:$0xff]
    %v7388 = vld [vmem:[#allocation22 + $0x378] sm:$0xff]
    %v7389 = vld [vmem:[#allocation22 + $0x380] sm:$0xff]
    %v7390 = vld [vmem:[#allocation22 + $0x388] sm:$0xff]
    %v7391 = vld [vmem:[#allocation22 + $0x390] sm:$0xff]
    %v7392 = vld [vmem:[#allocation22 + $0x398] sm:$0xff]
    %v7393 = vld [vmem:[#allocation22 + $0x3a0] sm:$0xff]
    %v7394 = vld [vmem:[#allocation22 + $0x3a8] sm:$0xff]
    %v7395 = vld [vmem:[#allocation22 + $0x3b0] sm:$0xff]
    %v7396 = vld [vmem:[#allocation22 + $0x3b8] sm:$0xff]
    %v7397 = vld [vmem:[#allocation22 + $0x3c0] sm:$0xff]
    %v7398 = vld [vmem:[#allocation22 + $0x3c8] sm:$0xff]
    %v7399 = vld [vmem:[#allocation22 + $0x3d0] sm:$0xff]
    %v7400 = vld [vmem:[#allocation22 + $0x3d8] sm:$0xff]
    %v7401 = vld [vmem:[#allocation22 + $0x3e0] sm:$0xff]
    %v7402 = vld [vmem:[#allocation22 + $0x3e8] sm:$0xff]
    %v7403 = vld [vmem:[#allocation22 + $0x3f0] sm:$0xff]
    %v7404 = vld [vmem:[#allocation22 + $0x3f8] sm:$0xff]
    %7405 = vmatprep.subr.mxu0 %v7278
    %7406 = vmatpush1.msra.mxu0 %v7277
    %7407 = vmatprep.subr.mxu0 %v7280
    %7408 = vmatpush1.msra.mxu0 %v7279
    %7409 = vmatprep.subr.mxu0 %v7282
    %7410 = vmatpush1.msra.mxu0 %v7281
    %7411 = vmatprep.subr.mxu0 %v7284
    %7412 = vmatpush1.msra.mxu0 %v7283
    %7413 = vmatprep.subr.mxu0 %v7286
    %7414 = vmatpush1.msra.mxu0 %v7285
    %7415 = vmatprep.subr.mxu0 %v7288
    %7416 = vmatpush1.msra.mxu0 %v7287
    %7417 = vmatprep.subr.mxu0 %v7290
    %7418 = vmatpush1.msra.mxu0 %v7289
    %7419 = vmatprep.subr.mxu0 %v7292
    %7420 = vmatpush1.msra.mxu0 %v7291
    %7421 = vmatprep.subr.mxu0 %v7294
    %7422 = vmatpush1.msra.mxu0 %v7293
    %7423 = vmatprep.subr.mxu0 %v7296
    %7424 = vmatpush1.msra.mxu0 %v7295
    %7425 = vmatprep.subr.mxu0 %v7298
    %7426 = vmatpush1.msra.mxu0 %v7297
    %7427 = vmatprep.subr.mxu0 %v7300
    %7428 = vmatpush1.msra.mxu0 %v7299
    %7429 = vmatprep.subr.mxu0 %v7302
    %7430 = vmatpush1.msra.mxu0 %v7301
    %7431 = vmatprep.subr.mxu0 %v7304
    %7432 = vmatpush1.msra.mxu0 %v7303
    %7433 = vmatprep.subr.mxu0 %v7306
    %7434 = vmatpush1.msra.mxu0 %v7305
    %7435 = vmatprep.subr.mxu0 %v7308
    %7436 = vmatpush1.msra.mxu0 %v7307
    %7437 = vmatprep.subr.mxu0 %v7310
    %7438 = vmatpush1.msra.mxu0 %v7309
    %7439 = vmatprep.subr.mxu0 %v7312
    %7440 = vmatpush1.msra.mxu0 %v7311
    %7441 = vmatprep.subr.mxu0 %v7314
    %7442 = vmatpush1.msra.mxu0 %v7313
    %7443 = vmatprep.subr.mxu0 %v7316
    %7444 = vmatpush1.msra.mxu0 %v7315
    %7445 = vmatprep.subr.mxu0 %v7318
    %7446 = vmatpush1.msra.mxu0 %v7317
    %7447 = vmatprep.subr.mxu0 %v7320
    %7448 = vmatpush1.msra.mxu0 %v7319
    %7449 = vmatprep.subr.mxu0 %v7322
    %7450 = vmatpush1.msra.mxu0 %v7321
    %7451 = vmatprep.subr.mxu0 %v7324
    %7452 = vmatpush1.msra.mxu0 %v7323
    %7453 = vmatprep.subr.mxu0 %v7326
    %7454 = vmatpush1.msra.mxu0 %v7325
    %7455 = vmatprep.subr.mxu0 %v7328
    %7456 = vmatpush1.msra.mxu0 %v7327
    %7457 = vmatprep.subr.mxu0 %v7330
    %7458 = vmatpush1.msra.mxu0 %v7329
    %7459 = vmatprep.subr.mxu0 %v7332
    %7460 = vmatpush1.msra.mxu0 %v7331
    %7461 = vmatprep.subr.mxu0 %v7334
    %7462 = vmatpush1.msra.mxu0 %v7333
    %7463 = vmatprep.subr.mxu0 %v7336
    %7464 = vmatpush1.msra.mxu0 %v7335
    %7465 = vmatprep.subr.mxu0 %v7338
    %7466 = vmatpush1.msra.mxu0 %v7337
    %7467 = vmatprep.subr.mxu0 %v7340
    %7468 = vmatpush1.msra.mxu0 %v7339
    %7469 = vmatprep.mubr.f32.mxu0 %v7146
    %7470 = vmatmul.mubr.f32.gmra.mrb[0].mxu0 %v7145
    %v7471 = vpop.f32.mrb[0].mxu0
    %v7472 = vadd.f32 0.0, %v7471
    %v7473 = vpop.f32.mrb[0].mxu0
    %v7474 = vadd.f32 0.0, %v7473
    %7475 = vdwg.mxu0
    %7476 = vmatprep.subr.mxu0 %v7342
    %7477 = vmatpush1.msra.mxu0 %v7341
    %7478 = vmatprep.subr.mxu0 %v7344
    %7479 = vmatpush1.msra.mxu0 %v7343
    %7480 = vmatprep.subr.mxu0 %v7346
    %7481 = vmatpush1.msra.mxu0 %v7345
    %7482 = vmatprep.subr.mxu0 %v7348
    %7483 = vmatpush1.msra.mxu0 %v7347
    %7484 = vmatprep.subr.mxu0 %v7350
    %7485 = vmatpush1.msra.mxu0 %v7349
    %7486 = vmatprep.subr.mxu0 %v7352
    %7487 = vmatpush1.msra.mxu0 %v7351
    %7488 = vmatprep.subr.mxu0 %v7354
    %7489 = vmatpush1.msra.mxu0 %v7353
    %7490 = vmatprep.subr.mxu0 %v7356
    %7491 = vmatpush1.msra.mxu0 %v7355
    %7492 = vmatprep.subr.mxu0 %v7358
    %7493 = vmatpush1.msra.mxu0 %v7357
    %7494 = vmatprep.subr.mxu0 %v7360
    %7495 = vmatpush1.msra.mxu0 %v7359
    %7496 = vmatprep.subr.mxu0 %v7362
    %7497 = vmatpush1.msra.mxu0 %v7361
    %7498 = vmatprep.subr.mxu0 %v7364
    %7499 = vmatpush1.msra.mxu0 %v7363
    %7500 = vmatprep.subr.mxu0 %v7366
    %7501 = vmatpush1.msra.mxu0 %v7365
    %7502 = vmatprep.subr.mxu0 %v7368
    %7503 = vmatpush1.msra.mxu0 %v7367
    %7504 = vmatprep.subr.mxu0 %v7370
    %7505 = vmatpush1.msra.mxu0 %v7369
    %7506 = vmatprep.subr.mxu0 %v7372
    %7507 = vmatpush1.msra.mxu0 %v7371
    %7508 = vmatprep.subr.mxu0 %v7374
    %7509 = vmatpush1.msra.mxu0 %v7373
    %7510 = vmatprep.subr.mxu0 %v7376
    %7511 = vmatpush1.msra.mxu0 %v7375
    %7512 = vmatprep.subr.mxu0 %v7378
    %7513 = vmatpush1.msra.mxu0 %v7377
    %7514 = vmatprep.subr.mxu0 %v7380
    %7515 = vmatpush1.msra.mxu0 %v7379
    %7516 = vmatprep.subr.mxu0 %v7382
    %7517 = vmatpush1.msra.mxu0 %v7381
    %7518 = vmatprep.subr.mxu0 %v7384
    %7519 = vmatpush1.msra.mxu0 %v7383
    %7520 = vmatprep.subr.mxu0 %v7386
    %7521 = vmatpush1.msra.mxu0 %v7385
    %7522 = vmatprep.subr.mxu0 %v7388
    %7523 = vmatpush1.msra.mxu0 %v7387
    %7524 = vmatprep.subr.mxu0 %v7390
    %7525 = vmatpush1.msra.mxu0 %v7389
    %7526 = vmatprep.subr.mxu0 %v7392
    %7527 = vmatpush1.msra.mxu0 %v7391
    %7528 = vmatprep.subr.mxu0 %v7394
    %7529 = vmatpush1.msra.mxu0 %v7393
    %7530 = vmatprep.subr.mxu0 %v7396
    %7531 = vmatpush1.msra.mxu0 %v7395
    %7532 = vmatprep.subr.mxu0 %v7398
    %7533 = vmatpush1.msra.mxu0 %v7397
    %7534 = vmatprep.subr.mxu0 %v7400
    %7535 = vmatpush1.msra.mxu0 %v7399
    %7536 = vmatprep.subr.mxu0 %v7402
    %7537 = vmatpush1.msra.mxu0 %v7401
    %7538 = vmatprep.subr.mxu0 %v7404
    %7539 = vmatpush1.msra.mxu0 %v7403
    %7540 = vmatprep.mubr.f32.mxu0 %v7148
    %7541 = vmatmul.mubr.f32.gmra.mrb[0].mxu0 %v7147
    %v7542 = vpop.f32.mrb[0].mxu0
    %v7543 = vadd.f32 %v7472, %v7542
    %v7544 = vpop.f32.mrb[0].mxu0
    %v7545 = vadd.f32 %v7474, %v7544
    %7546 = vdwg.mxu0
    %7547 = vmatprep.subr.mxu0 %v7150
    %7548 = vmatpush1.msra.mxu0 %v7149
    %7549 = vmatprep.subr.mxu0 %v7152
    %7550 = vmatpush1.msra.mxu0 %v7151
    %7551 = vmatprep.subr.mxu0 %v7154
    %7552 = vmatpush1.msra.mxu0 %v7153
    %7553 = vmatprep.subr.mxu0 %v7156
    %7554 = vmatpush1.msra.mxu0 %v7155
    %7555 = vmatprep.subr.mxu0 %v7158
    %7556 = vmatpush1.msra.mxu0 %v7157
    %7557 = vmatprep.subr.mxu0 %v7160
    %7558 = vmatpush1.msra.mxu0 %v7159
    %7559 = vmatprep.subr.mxu0 %v7162
    %7560 = vmatpush1.msra.mxu0 %v7161
    %7561 = vmatprep.subr.mxu0 %v7164
    %7562 = vmatpush1.msra.mxu0 %v7163
    %7563 = vmatprep.subr.mxu0 %v7166
    %7564 = vmatpush1.msra.mxu0 %v7165
    %7565 = vmatprep.subr.mxu0 %v7168
    %7566 = vmatpush1.msra.mxu0 %v7167
    %7567 = vmatprep.subr.mxu0 %v7170
    %7568 = vmatpush1.msra.mxu0 %v7169
    %7569 = vmatprep.subr.mxu0 %v7172
    %7570 = vmatpush1.msra.mxu0 %v7171
    %7571 = vmatprep.subr.mxu0 %v7174
    %7572 = vmatpush1.msra.mxu0 %v7173
    %7573 = vmatprep.subr.mxu0 %v7176
    %7574 = vmatpush1.msra.mxu0 %v7175
    %7575 = vmatprep.subr.mxu0 %v7178
    %7576 = vmatpush1.msra.mxu0 %v7177
    %7577 = vmatprep.subr.mxu0 %v7180
    %7578 = vmatpush1.msra.mxu0 %v7179
    %7579 = vmatprep.subr.mxu0 %v7182
    %7580 = vmatpush1.msra.mxu0 %v7181
    %7581 = vmatprep.subr.mxu0 %v7184
    %7582 = vmatpush1.msra.mxu0 %v7183
    %7583 = vmatprep.subr.mxu0 %v7186
    %7584 = vmatpush1.msra.mxu0 %v7185
    %7585 = vmatprep.subr.mxu0 %v7188
    %7586 = vmatpush1.msra.mxu0 %v7187
    %7587 = vmatprep.subr.mxu0 %v7190
    %7588 = vmatpush1.msra.mxu0 %v7189
    %7589 = vmatprep.subr.mxu0 %v7192
    %7590 = vmatpush1.msra.mxu0 %v7191
    %7591 = vmatprep.subr.mxu0 %v7194
    %7592 = vmatpush1.msra.mxu0 %v7193
    %7593 = vmatprep.subr.mxu0 %v7196
    %7594 = vmatpush1.msra.mxu0 %v7195
    %7595 = vmatprep.subr.mxu0 %v7198
    %7596 = vmatpush1.msra.mxu0 %v7197
    %7597 = vmatprep.subr.mxu0 %v7200
    %7598 = vmatpush1.msra.mxu0 %v7199
    %7599 = vmatprep.subr.mxu0 %v7202
    %7600 = vmatpush1.msra.mxu0 %v7201
    %7601 = vmatprep.subr.mxu0 %v7204
    %7602 = vmatpush1.msra.mxu0 %v7203
    %7603 = vmatprep.subr.mxu0 %v7206
    %7604 = vmatpush1.msra.mxu0 %v7205
    %7605 = vmatprep.subr.mxu0 %v7208
    %7606 = vmatpush1.msra.mxu0 %v7207
    %7607 = vmatprep.subr.mxu0 %v7210
    %7608 = vmatpush1.msra.mxu0 %v7209
    %7609 = vmatprep.subr.mxu0 %v7212
    %7610 = vmatpush1.msra.mxu0 %v7211
    %7611 = vmatprep.mubr.f32.mxu0 %v4868
    %7612 = vmatmul.mubr.f32.gmra.mrb[0].mxu0 %v4867
    %v7613 = vpop.f32.mrb[0].mxu0
    %v7614 = vadd.f32 %v7543, %v7613
    %v7615 = vpop.f32.mrb[0].mxu0
    %v7616 = vadd.f32 %v7545, %v7615
    %7617 = vdwg.mxu0
    %7618 = vmatprep.subr.mxu0 %v7214
    %7619 = vmatpush1.msra.mxu0 %v7213
    %7620 = vmatprep.subr.mxu0 %v7216
    %7621 = vmatpush1.msra.mxu0 %v7215
    %7622 = vmatprep.subr.mxu0 %v7218
    %7623 = vmatpush1.msra.mxu0 %v7217
    %7624 = vmatprep.subr.mxu0 %v7220
    %7625 = vmatpush1.msra.mxu0 %v7219
    %7626 = vmatprep.subr.mxu0 %v7222
    %7627 = vmatpush1.msra.mxu0 %v7221
    %7628 = vmatprep.subr.mxu0 %v7224
    %7629 = vmatpush1.msra.mxu0 %v7223
    %7630 = vmatprep.subr.mxu0 %v7226
    %7631 = vmatpush1.msra.mxu0 %v7225
    %7632 = vmatprep.subr.mxu0 %v7228
    %7633 = vmatpush1.msra.mxu0 %v7227
    %7634 = vmatprep.subr.mxu0 %v7230
    %7635 = vmatpush1.msra.mxu0 %v7229
    %7636 = vmatprep.subr.mxu0 %v7232
    %7637 = vmatpush1.msra.mxu0 %v7231
    %7638 = vmatprep.subr.mxu0 %v7234
    %7639 = vmatpush1.msra.mxu0 %v7233
    %7640 = vmatprep.subr.mxu0 %v7236
    %7641 = vmatpush1.msra.mxu0 %v7235
    %7642 = vmatprep.subr.mxu0 %v7238
    %7643 = vmatpush1.msra.mxu0 %v7237
    %7644 = vmatprep.subr.mxu0 %v7240
    %7645 = vmatpush1.msra.mxu0 %v7239
    %7646 = vmatprep.subr.mxu0 %v7242
    %7647 = vmatpush1.msra.mxu0 %v7241
    %7648 = vmatprep.subr.mxu0 %v7244
    %7649 = vmatpush1.msra.mxu0 %v7243
    %7650 = vmatprep.subr.mxu0 %v7246
    %7651 = vmatpush1.msra.mxu0 %v7245
    %7652 = vmatprep.subr.mxu0 %v7248
    %7653 = vmatpush1.msra.mxu0 %v7247
    %7654 = vmatprep.subr.mxu0 %v7250
    %7655 = vmatpush1.msra.mxu0 %v7249
    %7656 = vmatprep.subr.mxu0 %v7252
    %7657 = vmatpush1.msra.mxu0 %v7251
    %7658 = vmatprep.subr.mxu0 %v7254
    %7659 = vmatpush1.msra.mxu0 %v7253
    %7660 = vmatprep.subr.mxu0 %v7256
    %7661 = vmatpush1.msra.mxu0 %v7255
    %7662 = vmatprep.subr.mxu0 %v7258
    %7663 = vmatpush1.msra.mxu0 %v7257
    %7664 = vmatprep.subr.mxu0 %v7260
    %7665 = vmatpush1.msra.mxu0 %v7259
    %7666 = vmatprep.subr.mxu0 %v7262
    %7667 = vmatpush1.msra.mxu0 %v7261
    %7668 = vmatprep.subr.mxu0 %v7264
    %7669 = vmatpush1.msra.mxu0 %v7263
    %7670 = vmatprep.subr.mxu0 %v7266
    %7671 = vmatpush1.msra.mxu0 %v7265
    %7672 = vmatprep.subr.mxu0 %v7268
    %7673 = vmatpush1.msra.mxu0 %v7267
    %7674 = vmatprep.subr.mxu0 %v7270
    %7675 = vmatpush1.msra.mxu0 %v7269
    %7676 = vmatprep.subr.mxu0 %v7272
    %7677 = vmatpush1.msra.mxu0 %v7271
    %7678 = vmatprep.subr.mxu0 %v7274
    %7679 = vmatpush1.msra.mxu0 %v7273
    %7680 = vmatprep.subr.mxu0 %v7276
    %7681 = vmatpush1.msra.mxu0 %v7275
    %7682 = vmatprep.mubr.f32.mxu0 %v4870
    %7683 = vmatmul.mubr.f32.gmra.mrb[0].mxu0 %v4869
    %v7684 = vpop.f32.mrb[0].mxu0
    %v7685 = vadd.f32 %v7614, %v7684
    %v7686 = vpop.f32.mrb[0].mxu0
    %v7687 = vadd.f32 %v7616, %v7686
    %7688 = vdwg.mxu0
    %v7689 = vld [vmem:[#allocation23] sm:$0x3]
    %v7691 = vlaneseq
    %v7692 = vshrl.u32 %v7691, 7
    %v7693 = vsub.s32 0, %v7692
    %v7694 = vrot.slane %v7689, %v7693
    %v7695 = vlaneseq
    %v7696 = vshrl.u32 %v7695, 7
    %v7697 = vsub.s32 1, %v7696
    %v7698 = vrot.slane %v7689, %v7697
    %v7701 = vadd.f32 %v7685, %v7694
    %v7702 = vadd.f32 %v7687, %v7698
    %v7703 = vmax.f32 %v7701, 0.0
    %v7704 = vmax.f32 %v7702, 0.0
    %v7705 = vld [vmem:[#allocation25] sm:$0xff]
    %v7706 = vld [vmem:[#allocation25 + $0x8] sm:$0xff]
    %v7707 = vld [vmem:[#allocation25 + $0x10] sm:$0xff]
    %v7708 = vld [vmem:[#allocation25 + $0x18] sm:$0xff]
    %v7709 = vld [vmem:[#allocation25 + $0x20] sm:$0xff]
    %v7710 = vld [vmem:[#allocation25 + $0x28] sm:$0xff]
    %v7711 = vld [vmem:[#allocation25 + $0x30] sm:$0xff]
    %v7712 = vld [vmem:[#allocation25 + $0x38] sm:$0xff]
    %v7713 = vld [vmem:[#allocation25 + $0x40] sm:$0xff]
    %v7714 = vld [vmem:[#allocation25 + $0x48] sm:$0xff]
    %v7715 = vld [vmem:[#allocation25 + $0x50] sm:$0xff]
    %v7716 = vld [vmem:[#allocation25 + $0x58] sm:$0xff]
    %v7717 = vld [vmem:[#allocation25 + $0x60] sm:$0xff]
    %v7718 = vld [vmem:[#allocation25 + $0x68] sm:$0xff]
    %v7719 = vld [vmem:[#allocation25 + $0x70] sm:$0xff]
    %v7720 = vld [vmem:[#allocation25 + $0x78] sm:$0xff]
    %v7721 = vld [vmem:[#allocation25 + $0x80] sm:$0xff]
    %v7722 = vld [vmem:[#allocation25 + $0x88] sm:$0xff]
    %v7723 = vld [vmem:[#allocation25 + $0x90] sm:$0xff]
    %v7724 = vld [vmem:[#allocation25 + $0x98] sm:$0xff]
    %v7725 = vld [vmem:[#allocation25 + $0xa0] sm:$0xff]
    %v7726 = vld [vmem:[#allocation25 + $0xa8] sm:$0xff]
    %v7727 = vld [vmem:[#allocation25 + $0xb0] sm:$0xff]
    %v7728 = vld [vmem:[#allocation25 + $0xb8] sm:$0xff]
    %v7729 = vld [vmem:[#allocation25 + $0xc0] sm:$0xff]
    %v7730 = vld [vmem:[#allocation25 + $0xc8] sm:$0xff]
    %v7731 = vld [vmem:[#allocation25 + $0xd0] sm:$0xff]
    %v7732 = vld [vmem:[#allocation25 + $0xd8] sm:$0xff]
    %v7733 = vld [vmem:[#allocation25 + $0xe0] sm:$0xff]
    %v7734 = vld [vmem:[#allocation25 + $0xe8] sm:$0xff]
    %v7735 = vld [vmem:[#allocation25 + $0xf0] sm:$0xff]
    %v7736 = vld [vmem:[#allocation25 + $0xf8] sm:$0xff]
    %v7737 = vld [vmem:[#allocation26] sm:$0x1]
    %v7739 = vlaneseq
    %v7740 = vshrl.u32 %v7739, 7
    %v7741 = vsub.s32 0, %v7740
    %v7742 = vrot.slane %v7737, %v7741
    %7744 = vmatprep.subr.mxu0 0.0
    %7745 = vmatpush1.msra.mxu0 %v7705
    %7746 = vmatprep.subr.mxu0 0.0
    %7747 = vmatpush1.msra.mxu0 %v7706
    %7748 = vmatprep.subr.mxu0 0.0
    %7749 = vmatpush1.msra.mxu0 %v7707
    %7750 = vmatprep.subr.mxu0 0.0
    %7751 = vmatpush1.msra.mxu0 %v7708
    %7752 = vmatprep.subr.mxu0 0.0
    %7753 = vmatpush1.msra.mxu0 %v7709
    %7754 = vmatprep.subr.mxu0 0.0
    %7755 = vmatpush1.msra.mxu0 %v7710
    %7756 = vmatprep.subr.mxu0 0.0
    %7757 = vmatpush1.msra.mxu0 %v7711
    %7758 = vmatprep.subr.mxu0 0.0
    %7759 = vmatpush1.msra.mxu0 %v7712
    %7760 = vmatprep.subr.mxu0 0.0
    %7761 = vmatpush1.msra.mxu0 %v7713
    %7762 = vmatprep.subr.mxu0 0.0
    %7763 = vmatpush1.msra.mxu0 %v7714
    %7764 = vmatprep.subr.mxu0 0.0
    %7765 = vmatpush1.msra.mxu0 %v7715
    %7766 = vmatprep.subr.mxu0 0.0
    %7767 = vmatpush1.msra.mxu0 %v7716
    %7768 = vmatprep.subr.mxu0 0.0
    %7769 = vmatpush1.msra.mxu0 %v7717
    %7770 = vmatprep.subr.mxu0 0.0
    %7771 = vmatpush1.msra.mxu0 %v7718
    %7772 = vmatprep.subr.mxu0 0.0
    %7773 = vmatpush1.msra.mxu0 %v7719
    %7774 = vmatprep.subr.mxu0 0.0
    %7775 = vmatpush1.msra.mxu0 %v7720
    %7776 = vmatprep.subr.mxu0 0.0
    %7777 = vmatpush1.msra.mxu0 %v7721
    %7778 = vmatprep.subr.mxu0 0.0
    %7779 = vmatpush1.msra.mxu0 %v7722
    %7780 = vmatprep.subr.mxu0 0.0
    %7781 = vmatpush1.msra.mxu0 %v7723
    %7782 = vmatprep.subr.mxu0 0.0
    %7783 = vmatpush1.msra.mxu0 %v7724
    %7784 = vmatprep.subr.mxu0 0.0
    %7785 = vmatpush1.msra.mxu0 %v7725
    %7786 = vmatprep.subr.mxu0 0.0
    %7787 = vmatpush1.msra.mxu0 %v7726
    %7788 = vmatprep.subr.mxu0 0.0
    %7789 = vmatpush1.msra.mxu0 %v7727
    %7790 = vmatprep.subr.mxu0 0.0
    %7791 = vmatpush1.msra.mxu0 %v7728
    %7792 = vmatprep.subr.mxu0 0.0
    %7793 = vmatpush1.msra.mxu0 %v7729
    %7794 = vmatprep.subr.mxu0 0.0
    %7795 = vmatpush1.msra.mxu0 %v7730
    %7796 = vmatprep.subr.mxu0 0.0
    %7797 = vmatpush1.msra.mxu0 %v7731
    %7798 = vmatprep.subr.mxu0 0.0
    %7799 = vmatpush1.msra.mxu0 %v7732
    %7800 = vmatprep.subr.mxu0 0.0
    %7801 = vmatpush1.msra.mxu0 %v7733
    %7802 = vmatprep.subr.mxu0 0.0
    %7803 = vmatpush1.msra.mxu0 %v7734
    %7804 = vmatprep.subr.mxu0 0.0
    %7805 = vmatpush1.msra.mxu0 %v7735
    %7806 = vmatprep.subr.mxu0 0.0
    %7807 = vmatpush1.msra.mxu0 %v7736
    %7808 = vmatprep.mubr.f32.mxu0 %v7704
    %7809 = vmatmul.mubr.f32.gmra.mrb[0].mxu0 %v7703
    %v7810 = vpop.f32.mrb[0].mxu0
    %v7811 = vadd.f32 %v7742, %v7810
    %v7812 = vpop.f32.mrb[0].mxu0
    %7813 = vdwg.mxu0
    %v7814 = vmax.f32 %v7811, 0.0
    %v7815 = vld [vmem:[%s15] sm:$0xff]
    %v7816 = vld [vmem:[%s15 + $0x8] sm:$0xff]
    %v7817 = vld [vmem:[%s15 + $0x10] sm:$0xff]
    %v7818 = vld [vmem:[%s15 + $0x18] sm:$0xff]
    %v7819 = vld [vmem:[%s15 + $0x20] sm:$0xff]
    %v7820 = vld [vmem:[%s15 + $0x28] sm:$0xff]
    %v7821 = vld [vmem:[%s15 + $0x30] sm:$0xff]
    %v7822 = vld [vmem:[%s15 + $0x38] sm:$0xff]
    %v7823 = vld [vmem:[%s15 + $0x40] sm:$0xff]
    %v7824 = vld [vmem:[%s15 + $0x48] sm:$0xff]
    %v7825 = vld [vmem:[%s15 + $0x50] sm:$0xff]
    %v7826 = vld [vmem:[%s15 + $0x58] sm:$0xff]
    %v7827 = vld [vmem:[%s15 + $0x60] sm:$0xff]
    %v7828 = vld [vmem:[%s15 + $0x68] sm:$0xff]
    %v7829 = vld [vmem:[%s15 + $0x70] sm:$0xff]
    %v7830 = vld [vmem:[%s15 + $0x78] sm:$0xff]
    %v7831 = vld [vmem:[#allocation28] sm:$0x1]
    %v7833 = vlaneseq
    %v7834 = vshrl.u32 %v7833, 7
    %v7835 = vsub.s32 0, %v7834
    %v7836 = vrot.slane %v7831, %v7835
    %7838 = vmatprep.subr.mxu0 0.0
    %7839 = vmatpush1.msra.mxu0 %v7815
    %7840 = vmatprep.subr.mxu0 0.0
    %7841 = vmatpush1.msra.mxu0 %v7816
    %7842 = vmatprep.subr.mxu0 0.0
    %7843 = vmatpush1.msra.mxu0 %v7817
    %7844 = vmatprep.subr.mxu0 0.0
    %7845 = vmatpush1.msra.mxu0 %v7818
    %7846 = vmatprep.subr.mxu0 0.0
    %7847 = vmatpush1.msra.mxu0 %v7819
    %7848 = vmatprep.subr.mxu0 0.0
    %7849 = vmatpush1.msra.mxu0 %v7820
    %7850 = vmatprep.subr.mxu0 0.0
    %7851 = vmatpush1.msra.mxu0 %v7821
    %7852 = vmatprep.subr.mxu0 0.0
    %7853 = vmatpush1.msra.mxu0 %v7822
    %7854 = vmatprep.subr.mxu0 0.0
    %7855 = vmatpush1.msra.mxu0 %v7823
    %7856 = vmatprep.subr.mxu0 0.0
    %7857 = vmatpush1.msra.mxu0 %v7824
    %7858 = vmatprep.subr.mxu0 0.0
    %7859 = vmatpush1.msra.mxu0 %v7825
    %7860 = vmatprep.subr.mxu0 0.0
    %7861 = vmatpush1.msra.mxu0 %v7826
    %7862 = vmatprep.subr.mxu0 0.0
    %7863 = vmatpush1.msra.mxu0 %v7827
    %7864 = vmatprep.subr.mxu0 0.0
    %7865 = vmatpush1.msra.mxu0 %v7828
    %7866 = vmatprep.subr.mxu0 0.0
    %7867 = vmatpush1.msra.mxu0 %v7829
    %7868 = vmatprep.subr.mxu0 0.0
    %7869 = vmatpush1.msra.mxu0 %v7830
    %7870 = vmatprep.subr.mxu0 0.0
    %7871 = vmatpush1.msra.mxu0 0.0
    %7872 = vmatprep.subr.mxu0 0.0
    %7873 = vmatpush1.msra.mxu0 0.0
    %7874 = vmatprep.subr.mxu0 0.0
    %7875 = vmatpush1.msra.mxu0 0.0
    %7876 = vmatprep.subr.mxu0 0.0
    %7877 = vmatpush1.msra.mxu0 0.0
    %7878 = vmatprep.subr.mxu0 0.0
    %7879 = vmatpush1.msra.mxu0 0.0
    %7880 = vmatprep.subr.mxu0 0.0
    %7881 = vmatpush1.msra.mxu0 0.0
    %7882 = vmatprep.subr.mxu0 0.0
    %7883 = vmatpush1.msra.mxu0 0.0
    %7884 = vmatprep.subr.mxu0 0.0
    %7885 = vmatpush1.msra.mxu0 0.0
    %7886 = vmatprep.subr.mxu0 0.0
    %7887 = vmatpush1.msra.mxu0 0.0
    %7888 = vmatprep.subr.mxu0 0.0
    %7889 = vmatpush1.msra.mxu0 0.0
    %7890 = vmatprep.subr.mxu0 0.0
    %7891 = vmatpush1.msra.mxu0 0.0
    %7892 = vmatprep.subr.mxu0 0.0
    %7893 = vmatpush1.msra.mxu0 0.0
    %7894 = vmatprep.subr.mxu0 0.0
    %7895 = vmatpush1.msra.mxu0 0.0
    %7896 = vmatprep.subr.mxu0 0.0
    %7897 = vmatpush1.msra.mxu0 0.0
    %7898 = vmatprep.subr.mxu0 0.0
    %7899 = vmatpush1.msra.mxu0 0.0
    %7900 = vmatprep.subr.mxu0 0.0
    %7901 = vmatpush1.msra.mxu0 0.0
    %7902 = vmatprep.mubr.f32.mxu0 0.0
    %7903 = vmatmul.mubr.f32.gmra.mrb[0].mxu0 %v7814
    %v7904 = vpop.f32.mrb[0].mxu0
    %v7905 = vadd.f32 %v7836, %v7904
    %v7906 = vpop.f32.mrb[0].mxu0
    %7907 = vdwg.mxu0
    %v7908 = vmax.f32 %v7905, 0.0
    %v7909 = vld [vmem:[#allocation29] sm:$0xff]
    %v7910 = vld [vmem:[#allocation29 + $0x8] sm:$0xff]
    %v7911 = vld [vmem:[#allocation29 + $0x10] sm:$0xff]
    %v7912 = vld [vmem:[#allocation29 + $0x18] sm:$0xff]
    %v7913 = vld [vmem:[#allocation29 + $0x20] sm:$0xff]
    %v7914 = vld [vmem:[#allocation29 + $0x28] sm:$0xff]
    %v7915 = vld [vmem:[#allocation29 + $0x30] sm:$0xff]
    %v7916 = vld [vmem:[#allocation29 + $0x38] sm:$0xff]
    %v7917 = vld [vmem:[#allocation31] sm:$0x1]
    %v7919 = vlaneseq
    %v7920 = vshrl.u32 %v7919, 7
    %v7921 = vsub.s32 0, %v7920
    %v7922 = vrot.slane %v7917, %v7921
    %v7925 = vsel %vm1836, %v7908, 0
    %7927 = vmatprep.subr.mxu0 0.0
    %7928 = vmatpush1.msra.mxu0 %v7909
    %7929 = vmatprep.subr.mxu0 0.0
    %7930 = vmatpush1.msra.mxu0 %v7910
    %7931 = vmatprep.subr.mxu0 0.0
    %7932 = vmatpush1.msra.mxu0 %v7911
    %7933 = vmatprep.subr.mxu0 0.0
    %7934 = vmatpush1.msra.mxu0 %v7912
    %7935 = vmatprep.subr.mxu0 0.0
    %7936 = vmatpush1.msra.mxu0 %v7913
    %7937 = vmatprep.subr.mxu0 0.0
    %7938 = vmatpush1.msra.mxu0 %v7914
    %7939 = vmatprep.subr.mxu0 0.0
    %7940 = vmatpush1.msra.mxu0 %v7915
    %7941 = vmatprep.subr.mxu0 0.0
    %7942 = vmatpush1.msra.mxu0 %v7916
    %7943 = vmatprep.subr.mxu0 0.0
    %7944 = vmatpush1.msra.mxu0 0.0
    %7945 = vmatprep.subr.mxu0 0.0
    %7946 = vmatpush1.msra.mxu0 0.0
    %7947 = vmatprep.subr.mxu0 0.0
    %7948 = vmatpush1.msra.mxu0 0.0
    %7949 = vmatprep.subr.mxu0 0.0
    %7950 = vmatpush1.msra.mxu0 0.0
    %7951 = vmatprep.subr.mxu0 0.0
    %7952 = vmatpush1.msra.mxu0 0.0
    %7953 = vmatprep.subr.mxu0 0.0
    %7954 = vmatpush1.msra.mxu0 0.0
    %7955 = vmatprep.subr.mxu0 0.0
    %7956 = vmatpush1.msra.mxu0 0.0
    %7957 = vmatprep.subr.mxu0 0.0
    %7958 = vmatpush1.msra.mxu0 0.0
    %7959 = vmatprep.subr.mxu0 0.0
    %7960 = vmatpush1.msra.mxu0 0.0
    %7961 = vmatprep.subr.mxu0 0.0
    %7962 = vmatpush1.msra.mxu0 0.0
    %7963 = vmatprep.subr.mxu0 0.0
    %7964 = vmatpush1.msra.mxu0 0.0
    %7965 = vmatprep.subr.mxu0 0.0
    %7966 = vmatpush1.msra.mxu0 0.0
    %7967 = vmatprep.subr.mxu0 0.0
    %7968 = vmatpush1.msra.mxu0 0.0
    %7969 = vmatprep.subr.mxu0 0.0
    %7970 = vmatpush1.msra.mxu0 0.0
    %7971 = vmatprep.subr.mxu0 0.0
    %7972 = vmatpush1.msra.mxu0 0.0
    %7973 = vmatprep.subr.mxu0 0.0
    %7974 = vmatpush1.msra.mxu0 0.0
    %7975 = vmatprep.subr.mxu0 0.0
    %7976 = vmatpush1.msra.mxu0 0.0
    %7977 = vmatprep.subr.mxu0 0.0
    %7978 = vmatpush1.msra.mxu0 0.0
    %7979 = vmatprep.subr.mxu0 0.0
    %7980 = vmatpush1.msra.mxu0 0.0
    %7981 = vmatprep.subr.mxu0 0.0
    %7982 = vmatpush1.msra.mxu0 0.0
    %7983 = vmatprep.subr.mxu0 0.0
    %7984 = vmatpush1.msra.mxu0 0.0
    %7985 = vmatprep.subr.mxu0 0.0
    %7986 = vmatpush1.msra.mxu0 0.0
    %7987 = vmatprep.subr.mxu0 0.0
    %7988 = vmatpush1.msra.mxu0 0.0
    %7989 = vmatprep.subr.mxu0 0.0
    %7990 = vmatpush1.msra.mxu0 0.0
    %7991 = vmatprep.mubr.f32.mxu0 0.0
    %7992 = vmatmul.mubr.f32.gmra.mrb[0].mxu0 %v7925
    %v7993 = vpop.f32.mrb[0].mxu0
    %v7994 = vadd.f32 %v7922, %v7993
    %v7995 = vpop.f32.mrb[0].mxu0
    %7996 = vdwg.mxu0
    %7997 = vst [vmem:[#allocation32] sm:$0x3] %v7994
    // Predicated region
    $region146: #{net_forward.1} parent=1 // pred_check
      _
    $region147: #{net_forward.1} parent=1 // pred_check_branch
      %7999 = sbr.rel (0) target = $region149
    $region148: #{net_forward.1} parent=1 // pred_region
      %s8001 = ssub.s32 32, 32
      %8002 = vsyncadd [#allocation7], %s8001
      %s8004 = sshll.u32 [#allocation32], 4
      %s8005 = int_to_ptr.vmem [resolvable:$true] %s8004
      %8007 = dma.vmem_to_hbm [thread:$0]  %s8005, 32, %s19, [#allocation7]
    $region149: #{net_forward.1} parent=1 // pred_fallthru
      _
    // Predicated region
    $region150: #{net_forward.1} parent=1 // pred_check
      _
    $region151: #{net_forward.1} parent=1 // pred_check_branch
      %8009 = sbr.rel (0) target = $region153
    $region152: #{net_forward.1} parent=1 // pred_region
      %8010 = dma.done [#allocation7], 32
    $region153: #{net_forward.1} parent=1 // pred_fallthru
      _
    %8011 = vsyncpa [#allocation6], 1
    %8012 = vsyncpa [#allocation9], 1
    %8013 = vsyncpa [#allocation12], 1
    %8014 = vsyncpa [#allocation15], 1
    %8015 = vsyncpa [#allocation18], 1
    %8016 = vsyncpa [#allocation21], 1
    %8017 = vsyncpa [#allocation24], 1
    %8018 = vsyncpa [#allocation27], 1
    %8019 = vsyncpa [#allocation30], 1
    %8020 = vsyncpa [#allocation7], 1

</llo_original>
